<compile_context>
chip_gen: v7x
topology: tpu7x:2x2x1
jax: 0.10.0
libtpu: 0.0.40
codegen_flags: <defaults>
</compile_context>

<pallas_src>
import functools

import jax
import jax.numpy as jnp
from jax.experimental import pallas as pl
from jax.experimental.pallas import tpu as pltpu

EPS = 1e-5
LANE = 128
SUBLANE = 8


def _round_up(x, m):
    return (x + m - 1) // m * m


def _skip_connect_kernel(x_ref, w_ref, o_ref, pad_ref, p_ref, y_ref, *,
                         compute_dtype, strip_rows):
    # x_ref:   (1, H, W, Cp)   input image, lane-dense channels
    # w_ref:   (9*Cp, Cp)      fused im2col weight, rows ordered (ky, kx, cin)
    # o_ref:   (1, H*W, Cp)    submodule output, lane-dense (HW, Cp) store
    # pad_ref: (H+2, Wp2, Cp)  reflect-padded image, sublane-aligned row planes
    # p_ref:   (TH*W, 9*Cp)    per-strip im2col patches (MXU operand dtype)
    # y_ref:   (H*W, Cp)       f32 conv output, resident for InstanceNorm
    _, H, W, Cp = x_ref.shape
    HW = H * W
    TH = strip_rows
    n_strips = H // TH
    inv_hw = 1.0 / float(HW)

    wm = w_ref[...]                      # resident, shared by both convs

    def fill_edges():
        # ReflectionPad2d(1): left/right columns first, then top/bottom rows
        # (corners then pick up the already-reflected columns).
        pad_ref[1:H + 1, 0:1, :] = pad_ref[1:H + 1, 2:3, :]
        pad_ref[1:H + 1, W + 1:W + 2, :] = pad_ref[1:H + 1, W - 1:W, :]
        pad_ref[0:1, :, :] = pad_ref[2:3, :, :]
        pad_ref[H + 1:H + 2, :, :] = pad_ref[H - 1:H, :, :]

    def conv():
        # Strip-wise im2col + one fused MXU matmul per strip
        # (M=TH*W, K=9*Cp, N=Cp) with f32 accumulation.  No bias: InstanceNorm
        # (affine=False) cancels a per-channel bias exactly.  Stats accumulated
        # from the in-register strip result (single pass, clamped variance).
        s1 = jnp.zeros((1, Cp), jnp.float32)
        s2 = jnp.zeros((1, Cp), jnp.float32)
        for s in range(n_strips):
            r0 = s * TH
            for ky in range(3):
                for kx in range(3):
                    t = ky * 3 + kx
                    tap = pad_ref[r0 + ky:r0 + ky + TH, kx:kx + W, :]
                    p_ref[:, t * Cp:(t + 1) * Cp] = (
                        tap.reshape(TH * W, Cp).astype(compute_dtype))
            ys = jnp.dot(p_ref[...], wm, preferred_element_type=jnp.float32)
            y_ref[r0 * W:r0 * W + TH * W, :] = ys
            s1 = s1 + jnp.sum(ys, axis=0, keepdims=True)
            s2 = s2 + jnp.sum(ys * ys, axis=0, keepdims=True)
        mean = s1 * inv_hw
        var = jnp.maximum(s2 * inv_hw - mean * mean, 0.0)
        return mean, jax.lax.rsqrt(var + EPS)

    # conv1 -> InstanceNorm -> ReLU, normalized value written straight into
    # pad_ref's interior (no materialized intermediate image).
    pad_ref[1:H + 1, 1:W + 1, :] = x_ref[0]
    fill_edges()
    mean1, inv_std1 = conv()
    h = jnp.maximum((y_ref[...] - mean1) * inv_std1, 0.0)
    pad_ref[1:H + 1, 1:W + 1, :] = h.reshape(H, W, Cp)
    fill_edges()

    # conv2 (same shared weights) -> InstanceNorm, residual add,
    # lane-dense (HW, Cp) output store.
    mean2, inv_std2 = conv()
    o_ref[0] = x_ref[0].reshape(HW, Cp) + (y_ref[...] - mean2) * inv_std2


def _pick_strip_rows(H, W, Cp, itemsize, strip_rows=None, budget_bytes=4 << 20):
    """Largest divisor of H whose (TH*W, 9*Cp) patch scratch fits the budget."""
    if strip_rows is not None:
        if H % strip_rows != 0:
            raise ValueError("strip_rows must divide H")
        return strip_rows
    for th in sorted((d for d in range(1, H + 1) if H % d == 0), reverse=True):
        if th * W * 9 * Cp * itemsize <= budget_bytes:
            return th
    return 1


def skip_connect(x_nchw, w_oihw, bias, *, compute_dtype=jnp.float32,
                 strip_rows=None):
    """SkipConnect forward: concat([x, ResnetBlock(x)], dim=1).

    x_nchw: (B, C, H, W) f32; w_oihw: (C, C, 3, 3); bias: (C,) (accepted for
    API parity but unused: InstanceNorm affine=False cancels it exactly).
    compute_dtype=jnp.bfloat16 feeds the MXU bf16 operands with f32
    accumulation (recommended on v5e/v6e/v7x when ~1e-2 tolerance is OK);
    default f32 preserves tight numerical tolerance.
    """
    del bias  # exactly cancelled by InstanceNorm(affine=False) after each conv
    B, C, H, W = x_nchw.shape
    assert H >= 2 and W >= 2, "ReflectionPad2d(1) needs H, W >= 2"

    Cp = _round_up(C, LANE)              # lane-dense channel padding (C>=128 ideal)
    Wp2 = _round_up(W + 2, SUBLANE)      # sublane-aligned padded-row planes
    HW = H * W
    cbytes = jnp.dtype(compute_dtype).itemsize
    th = _pick_strip_rows(H, W, Cp, cbytes, strip_rows)

    # NCHW -> NHWC, zero-pad channels (zero weight rows/cols keep them 0).
    x = jnp.transpose(x_nchw, (0, 2, 3, 1)).astype(jnp.float32)
    x = jnp.pad(x, ((0, 0), (0, 0), (0, 0), (0, Cp - C)))

    # OIHW -> HWIO -> fused im2col weight (9*Cp, Cp), rows ordered (ky, kx, cin),
    # cast once to the MXU operand dtype.
    w = jnp.transpose(w_oihw, (2, 3, 1, 0)).astype(jnp.float32)
    w = jnp.pad(w, ((0, 0), (0, 0), (0, Cp - C), (0, Cp - C)))
    wm = w.reshape(9 * Cp, Cp).astype(compute_dtype)

    # VMEM budget: scratch + double-buffered I/O blocks, generous headroom for
    # compiler temporaries, capped per-generation when get_tpu_info is available.
    scratch_bytes = ((H + 2) * Wp2 * Cp * 4        # reflect-padded image
                     + th * W * 9 * Cp * cbytes    # strip im2col patches
                     + HW * Cp * 4)                # resident conv output
    io_bytes = 2 * (H * W * Cp * 4) + 2 * (HW * Cp * 4) + 2 * (9 * Cp * Cp * cbytes)
    needed = scratch_bytes + io_bytes
    try:
        phys = int(pltpu.get_tpu_info().vmem_capacity_bytes)
    except Exception:  # pragma: no cover - conservative fallback (v7x-sized)
        phys = 64 * 1024 * 1024
    vmem_limit = int(min(max(2 * needed + (16 << 20), 32 << 20), phys * 3 // 4))

    kernel = functools.partial(_skip_connect_kernel,
                               compute_dtype=compute_dtype, strip_rows=th)

    sub = pl.pallas_call(
        kernel,
        out_shape=jax.ShapeDtypeStruct((B, HW, Cp), jnp.float32),
        grid_spec=pltpu.PrefetchScalarGridSpec(
            num_scalar_prefetch=0,
            grid=(B,),
            in_specs=[
                pl.BlockSpec((1, H, W, Cp), lambda b_: (b_, 0, 0, 0)),
                pl.BlockSpec((9 * Cp, Cp), lambda b_: (0, 0)),
            ],
            out_specs=pl.BlockSpec((1, HW, Cp), lambda b_: (b_, 0, 0)),
            scratch_shapes=[
                pltpu.VMEM((H + 2, Wp2, Cp), jnp.float32),   # reflect-padded img
                pltpu.VMEM((th * W, 9 * Cp), compute_dtype), # strip im2col patches
                pltpu.VMEM((HW, Cp), jnp.float32),           # conv output (stats)
            ],
        ),
        compiler_params=pltpu.CompilerParams(
            dimension_semantics=("parallel",),
            vmem_limit_bytes=vmem_limit,
        ),
    )(x, wm)

    # Drop channel padding, back to NCHW; SkipConnect's channel concat.
    sub = sub.reshape(B, H, W, Cp)[:, :, :, :C]
    sub = jnp.transpose(sub, (0, 3, 1, 2))
    return jnp.concatenate([x_nchw, sub], axis=1)


def skip_connect_ref(x_nchw, w_oihw, bias):
    """Pure-JAX reference matching the PyTorch forward (bias included)."""
    x = jnp.transpose(x_nchw, (0, 2, 3, 1))
    w = jnp.transpose(w_oihw, (2, 3, 1, 0))

    def conv(a):
        a = jnp.pad(a, ((0, 0), (1, 1), (1, 1), (0, 0)), mode="reflect")
        y = jax.lax.conv_general_dilated(
            a, w, (1, 1), "VALID",
            dimension_numbers=("NHWC", "HWIO", "NHWC"))
        return y + bias

    def inorm(a):
        m = a.mean(axis=(1, 2), keepdims=True)
        v = ((a - m) ** 2).mean(axis=(1, 2), keepdims=True)
        return (a - m) * jax.lax.rsqrt(v + EPS)

    h = jax.nn.relu(inorm(conv(x)))
    h = inorm(conv(h))
    sub = jnp.transpose(x + h, (0, 3, 1, 2))
    return jnp.concatenate([x_nchw, sub], axis=1)


if __name__ == "__main__":
    key = jax.random.PRNGKey(0)
    k1, k2, k3 = jax.random.split(key, 3)

    B, C, H, W = 2, 4, 16, 16
    x = jax.random.normal(k1, (B, C, H, W), dtype=jnp.float32)
    # Deterministic synthetic submodule parameters (shared conv used twice).
    w = 0.1 * jax.random.normal(k2, (C, C, 3, 3), dtype=jnp.float32)
    b = 0.1 * jax.random.normal(k3, (C,), dtype=jnp.float32)

    ref = skip_connect_ref(x, w, b)

    # f32 MXU path (tight tolerance); strip_rows=8 exercises the strip loop.
    out = jax.block_until_ready(skip_connect(x, w, b, strip_rows=8))
    assert out.shape == (B, 2 * C, H, W)
    assert jnp.allclose(out, ref, atol=1e-4, rtol=1e-4), "f32 mismatch vs reference"

    # bf16 MXU-operand path (f32 accumulation + f32 elementwise), loose tolerance.
    out_bf16 = jax.block_until_ready(skip_connect(x, w, b, compute_dtype=jnp.bfloat16))
    assert out_bf16.shape == (B, 2 * C, H, W)
    assert jnp.allclose(out_bf16, ref, atol=1e-1, rtol=1e-1), "bf16 mismatch vs reference"

    print("KERNEL_OK")
</pallas_src>

<mosaic_0001>
module attributes {stable_mosaic.version = 11 : i64} {
  func.func @_skip_connect_kernel(%arg0: i32, %arg1: memref<1x16x16x128xf32, #tpu.memory_space<vmem>>, %arg2: memref<1152x128xf32, #tpu.memory_space<vmem>>, %arg3: memref<1x256x128xf32, #tpu.memory_space<vmem>>, %arg4: memref<18x24x128xf32, #tpu.memory_space<vmem>>, %arg5: memref<128x1152xf32, #tpu.memory_space<vmem>>, %arg6: memref<256x128xf32, #tpu.memory_space<vmem>>) attributes {dimension_semantics = [#tpu.dimension_semantics<parallel>], iteration_bounds = array<i64: 2>, scalar_prefetch = 0 : i64, scratch_operands = 3 : i64, tpu.core_type = #tpu.core_type<tc>, window_params = [{transform_indices = @transform_0, window_bounds = array<i64: 1, 16, 16, 128>}, {pipeline_mode = #tpu.pipeline_mode<synchronous>, transform_indices = @transform_1, window_bounds = array<i64: 1152, 128>}, {transform_indices = @transform_2, window_bounds = array<i64: 1, 256, 128>}]} {
    %c0 = arith.constant 0 : index
    %c0_0 = arith.constant 0 : index
    %0 = vector.load %arg2[%c0, %c0_0] : memref<1152x128xf32, #tpu.memory_space<vmem>>, vector<1152x128xf32>
    %c0_1 = arith.constant 0 : index
    %c0_2 = arith.constant 0 : index
    %c0_3 = arith.constant 0 : index
    %c0_4 = arith.constant 0 : index
    %1 = vector.load %arg1[%c0_1, %c0_2, %c0_3, %c0_4] : memref<1x16x16x128xf32, #tpu.memory_space<vmem>>, vector<1x16x16x128xf32>
    %2 = vector.shape_cast %1 : vector<1x16x16x128xf32> to vector<16x16x128xf32>
    %c1 = arith.constant 1 : index
    %c1_5 = arith.constant 1 : index
    %c0_6 = arith.constant 0 : index
    %3 = vector.load %arg4[%c1, %c1_5, %c0_6] : memref<18x24x128xf32, #tpu.memory_space<vmem>>, vector<16x16x128xf32>
    tpu.vector_store %arg4[%c1, %c1_5, %c0_6], %2 {strides = array<i32>} : memref<18x24x128xf32, #tpu.memory_space<vmem>>, vector<16x16x128xf32>,
    %c1_7 = arith.constant 1 : index
    %c2 = arith.constant 2 : index
    %c0_8 = arith.constant 0 : index
    %4 = vector.load %arg4[%c1_7, %c2, %c0_8] : memref<18x24x128xf32, #tpu.memory_space<vmem>>, vector<16x1x128xf32>
    %c1_9 = arith.constant 1 : index
    %c0_10 = arith.constant 0 : index
    %c0_11 = arith.constant 0 : index
    %5 = vector.load %arg4[%c1_9, %c0_10, %c0_11] : memref<18x24x128xf32, #tpu.memory_space<vmem>>, vector<16x1x128xf32>
    tpu.vector_store %arg4[%c1_9, %c0_10, %c0_11], %4 {strides = array<i32>} : memref<18x24x128xf32, #tpu.memory_space<vmem>>, vector<16x1x128xf32>,
    %c1_12 = arith.constant 1 : index
    %c15 = arith.constant 15 : index
    %c0_13 = arith.constant 0 : index
    %6 = vector.load %arg4[%c1_12, %c15, %c0_13] : memref<18x24x128xf32, #tpu.memory_space<vmem>>, vector<16x1x128xf32>
    %c1_14 = arith.constant 1 : index
    %c17 = arith.constant 17 : index
    %c0_15 = arith.constant 0 : index
    %7 = vector.load %arg4[%c1_14, %c17, %c0_15] : memref<18x24x128xf32, #tpu.memory_space<vmem>>, vector<16x1x128xf32>
    tpu.vector_store %arg4[%c1_14, %c17, %c0_15], %6 {strides = array<i32>} : memref<18x24x128xf32, #tpu.memory_space<vmem>>, vector<16x1x128xf32>,
    %c2_16 = arith.constant 2 : index
    %c0_17 = arith.constant 0 : index
    %c0_18 = arith.constant 0 : index
    %8 = vector.load %arg4[%c2_16, %c0_17, %c0_18] : memref<18x24x128xf32, #tpu.memory_space<vmem>>, vector<1x24x128xf32>
    %c0_19 = arith.constant 0 : index
    %c0_20 = arith.constant 0 : index
    %c0_21 = arith.constant 0 : index
    %9 = vector.load %arg4[%c0_19, %c0_20, %c0_21] : memref<18x24x128xf32, #tpu.memory_space<vmem>>, vector<1x24x128xf32>
    tpu.vector_store %arg4[%c0_19, %c0_20, %c0_21], %8 {strides = array<i32>} : memref<18x24x128xf32, #tpu.memory_space<vmem>>, vector<1x24x128xf32>,
    %c15_22 = arith.constant 15 : index
    %c0_23 = arith.constant 0 : index
    %c0_24 = arith.constant 0 : index
    %10 = vector.load %arg4[%c15_22, %c0_23, %c0_24] : memref<18x24x128xf32, #tpu.memory_space<vmem>>, vector<1x24x128xf32>
    %c17_25 = arith.constant 17 : index
    %c0_26 = arith.constant 0 : index
    %c0_27 = arith.constant 0 : index
    %11 = vector.load %arg4[%c17_25, %c0_26, %c0_27] : memref<18x24x128xf32, #tpu.memory_space<vmem>>, vector<1x24x128xf32>
    tpu.vector_store %arg4[%c17_25, %c0_26, %c0_27], %10 {strides = array<i32>} : memref<18x24x128xf32, #tpu.memory_space<vmem>>, vector<1x24x128xf32>,
    %cst = arith.constant 0.000000e+00 : f32
    %12 = vector.broadcast %cst : f32 to vector<1x128xf32>
    %cst_28 = arith.constant 0.000000e+00 : f32
    %13 = vector.broadcast %cst_28 : f32 to vector<1x128xf32>
    %c0_29 = arith.constant 0 : index
    %c0_30 = arith.constant 0 : index
    %c0_31 = arith.constant 0 : index
    %14 = vector.load %arg4[%c0_29, %c0_30, %c0_31] : memref<18x24x128xf32, #tpu.memory_space<vmem>>, vector<8x16x128xf32>
    %15 = vector.shape_cast %14 : vector<8x16x128xf32> to vector<128x128xf32>
    %c0_32 = arith.constant 0 : index
    %c0_33 = arith.constant 0 : index
    %16 = vector.load %arg5[%c0_32, %c0_33] : memref<128x1152xf32, #tpu.memory_space<vmem>>, vector<128x128xf32>
    tpu.vector_store %arg5[%c0_32, %c0_33], %15 {strides = array<i32>} : memref<128x1152xf32, #tpu.memory_space<vmem>>, vector<128x128xf32>,
    %c0_34 = arith.constant 0 : index
    %c1_35 = arith.constant 1 : index
    %c0_36 = arith.constant 0 : index
    %17 = vector.load %arg4[%c0_34, %c1_35, %c0_36] : memref<18x24x128xf32, #tpu.memory_space<vmem>>, vector<8x16x128xf32>
    %18 = vector.shape_cast %17 : vector<8x16x128xf32> to vector<128x128xf32>
    %c0_37 = arith.constant 0 : index
    %c128 = arith.constant 128 : index
    %19 = vector.load %arg5[%c0_37, %c128] : memref<128x1152xf32, #tpu.memory_space<vmem>>, vector<128x128xf32>
    tpu.vector_store %arg5[%c0_37, %c128], %18 {strides = array<i32>} : memref<128x1152xf32, #tpu.memory_space<vmem>>, vector<128x128xf32>,
    %c0_38 = arith.constant 0 : index
    %c2_39 = arith.constant 2 : index
    %c0_40 = arith.constant 0 : index
    %20 = vector.load %arg4[%c0_38, %c2_39, %c0_40] : memref<18x24x128xf32, #tpu.memory_space<vmem>>, vector<8x16x128xf32>
    %21 = vector.shape_cast %20 : vector<8x16x128xf32> to vector<128x128xf32>
    %c0_41 = arith.constant 0 : index
    %c256 = arith.constant 256 : index
    %22 = vector.load %arg5[%c0_41, %c256] : memref<128x1152xf32, #tpu.memory_space<vmem>>, vector<128x128xf32>
    tpu.vector_store %arg5[%c0_41, %c256], %21 {strides = array<i32>} : memref<128x1152xf32, #tpu.memory_space<vmem>>, vector<128x128xf32>,
    %c1_42 = arith.constant 1 : index
    %c0_43 = arith.constant 0 : index
    %c0_44 = arith.constant 0 : index
    %23 = vector.load %arg4[%c1_42, %c0_43, %c0_44] : memref<18x24x128xf32, #tpu.memory_space<vmem>>, vector<8x16x128xf32>
    %24 = vector.shape_cast %23 : vector<8x16x128xf32> to vector<128x128xf32>
    %c0_45 = arith.constant 0 : index
    %c384 = arith.constant 384 : index
    %25 = vector.load %arg5[%c0_45, %c384] : memref<128x1152xf32, #tpu.memory_space<vmem>>, vector<128x128xf32>
    tpu.vector_store %arg5[%c0_45, %c384], %24 {strides = array<i32>} : memref<128x1152xf32, #tpu.memory_space<vmem>>, vector<128x128xf32>,
    %c1_46 = arith.constant 1 : index
    %c1_47 = arith.constant 1 : index
    %c0_48 = arith.constant 0 : index
    %26 = vector.load %arg4[%c1_46, %c1_47, %c0_48] : memref<18x24x128xf32, #tpu.memory_space<vmem>>, vector<8x16x128xf32>
    %27 = vector.shape_cast %26 : vector<8x16x128xf32> to vector<128x128xf32>
    %c0_49 = arith.constant 0 : index
    %c512 = arith.constant 512 : index
    %28 = vector.load %arg5[%c0_49, %c512] : memref<128x1152xf32, #tpu.memory_space<vmem>>, vector<128x128xf32>
    tpu.vector_store %arg5[%c0_49, %c512], %27 {strides = array<i32>} : memref<128x1152xf32, #tpu.memory_space<vmem>>, vector<128x128xf32>,
    %c1_50 = arith.constant 1 : index
    %c2_51 = arith.constant 2 : index
    %c0_52 = arith.constant 0 : index
    %29 = vector.load %arg4[%c1_50, %c2_51, %c0_52] : memref<18x24x128xf32, #tpu.memory_space<vmem>>, vector<8x16x128xf32>
    %30 = vector.shape_cast %29 : vector<8x16x128xf32> to vector<128x128xf32>
    %c0_53 = arith.constant 0 : index
    %c640 = arith.constant 640 : index
    %31 = vector.load %arg5[%c0_53, %c640] : memref<128x1152xf32, #tpu.memory_space<vmem>>, vector<128x128xf32>
    tpu.vector_store %arg5[%c0_53, %c640], %30 {strides = array<i32>} : memref<128x1152xf32, #tpu.memory_space<vmem>>, vector<128x128xf32>,
    %c2_54 = arith.constant 2 : index
    %c0_55 = arith.constant 0 : index
    %c0_56 = arith.constant 0 : index
    %32 = vector.load %arg4[%c2_54, %c0_55, %c0_56] : memref<18x24x128xf32, #tpu.memory_space<vmem>>, vector<8x16x128xf32>
    %33 = vector.shape_cast %32 : vector<8x16x128xf32> to vector<128x128xf32>
    %c0_57 = arith.constant 0 : index
    %c768 = arith.constant 768 : index
    %34 = vector.load %arg5[%c0_57, %c768] : memref<128x1152xf32, #tpu.memory_space<vmem>>, vector<128x128xf32>
    tpu.vector_store %arg5[%c0_57, %c768], %33 {strides = array<i32>} : memref<128x1152xf32, #tpu.memory_space<vmem>>, vector<128x128xf32>,
    %c2_58 = arith.constant 2 : index
    %c1_59 = arith.constant 1 : index
    %c0_60 = arith.constant 0 : index
    %35 = vector.load %arg4[%c2_58, %c1_59, %c0_60] : memref<18x24x128xf32, #tpu.memory_space<vmem>>, vector<8x16x128xf32>
    %36 = vector.shape_cast %35 : vector<8x16x128xf32> to vector<128x128xf32>
    %c0_61 = arith.constant 0 : index
    %c896 = arith.constant 896 : index
    %37 = vector.load %arg5[%c0_61, %c896] : memref<128x1152xf32, #tpu.memory_space<vmem>>, vector<128x128xf32>
    tpu.vector_store %arg5[%c0_61, %c896], %36 {strides = array<i32>} : memref<128x1152xf32, #tpu.memory_space<vmem>>, vector<128x128xf32>,
    %c2_62 = arith.constant 2 : index
    %c2_63 = arith.constant 2 : index
    %c0_64 = arith.constant 0 : index
    %38 = vector.load %arg4[%c2_62, %c2_63, %c0_64] : memref<18x24x128xf32, #tpu.memory_space<vmem>>, vector<8x16x128xf32>
    %39 = vector.shape_cast %38 : vector<8x16x128xf32> to vector<128x128xf32>
    %c0_65 = arith.constant 0 : index
    %c1024 = arith.constant 1024 : index
    %40 = vector.load %arg5[%c0_65, %c1024] : memref<128x1152xf32, #tpu.memory_space<vmem>>, vector<128x128xf32>
    tpu.vector_store %arg5[%c0_65, %c1024], %39 {strides = array<i32>} : memref<128x1152xf32, #tpu.memory_space<vmem>>, vector<128x128xf32>,
    %c0_66 = arith.constant 0 : index
    %c0_67 = arith.constant 0 : index
    %41 = vector.load %arg5[%c0_66, %c0_67] : memref<128x1152xf32, #tpu.memory_space<vmem>>, vector<128x1152xf32>
    %cst_68 = arith.constant dense<0.000000e+00> : vector<128x128xf32>
    %42 = tpu.matmul %41, %0, %cst_68 {dimension_numbers = #tpu.dot_dimension_numbers<[1], [0], [0], [1], [0, 0, 1, 1], [], []>} : vector<128x1152xf32>, vector<1152x128xf32>, vector<128x128xf32> -> vector<128x128xf32>
    %c0_69 = arith.constant 0 : index
    %c0_70 = arith.constant 0 : index
    %43 = vector.load %arg6[%c0_69, %c0_70] : memref<256x128xf32, #tpu.memory_space<vmem>>, vector<128x128xf32>
    tpu.vector_store %arg6[%c0_69, %c0_70], %42 {strides = array<i32>} : memref<256x128xf32, #tpu.memory_space<vmem>>, vector<128x128xf32>,
    %cst_71 = arith.constant dense<0.000000e+00> : vector<128xf32>
    %44 = vector.multi_reduction <add>, %42, %cst_71 [0] : vector<128x128xf32> to vector<128xf32>
    %45 = vector.shape_cast %44 : vector<128xf32> to vector<1x128xf32>
    %46 = arith.addf %12, %45 : vector<1x128xf32>
    %47 = arith.mulf %42, %42 : vector<128x128xf32>
    %cst_72 = arith.constant dense<0.000000e+00> : vector<128xf32>
    %48 = vector.multi_reduction <add>, %47, %cst_72 [0] : vector<128x128xf32> to vector<128xf32>
    %49 = vector.shape_cast %48 : vector<128xf32> to vector<1x128xf32>
    %50 = arith.addf %13, %49 : vector<1x128xf32>
    %c8 = arith.constant 8 : index
    %c0_73 = arith.constant 0 : index
    %c0_74 = arith.constant 0 : index
    %51 = vector.load %arg4[%c8, %c0_73, %c0_74] : memref<18x24x128xf32, #tpu.memory_space<vmem>>, vector<8x16x128xf32>
    %52 = vector.shape_cast %51 : vector<8x16x128xf32> to vector<128x128xf32>
    %c0_75 = arith.constant 0 : index
    %c0_76 = arith.constant 0 : index
    %53 = vector.load %arg5[%c0_75, %c0_76] : memref<128x1152xf32, #tpu.memory_space<vmem>>, vector<128x128xf32>
    tpu.vector_store %arg5[%c0_75, %c0_76], %52 {strides = array<i32>} : memref<128x1152xf32, #tpu.memory_space<vmem>>, vector<128x128xf32>,
    %c8_77 = arith.constant 8 : index
    %c1_78 = arith.constant 1 : index
    %c0_79 = arith.constant 0 : index
    %54 = vector.load %arg4[%c8_77, %c1_78, %c0_79] : memref<18x24x128xf32, #tpu.memory_space<vmem>>, vector<8x16x128xf32>
    %55 = vector.shape_cast %54 : vector<8x16x128xf32> to vector<128x128xf32>
    %c0_80 = arith.constant 0 : index
    %c128_81 = arith.constant 128 : index
    %56 = vector.load %arg5[%c0_80, %c128_81] : memref<128x1152xf32, #tpu.memory_space<vmem>>, vector<128x128xf32>
    tpu.vector_store %arg5[%c0_80, %c128_81], %55 {strides = array<i32>} : memref<128x1152xf32, #tpu.memory_space<vmem>>, vector<128x128xf32>,
    %c8_82 = arith.constant 8 : index
    %c2_83 = arith.constant 2 : index
    %c0_84 = arith.constant 0 : index
    %57 = vector.load %arg4[%c8_82, %c2_83, %c0_84] : memref<18x24x128xf32, #tpu.memory_space<vmem>>, vector<8x16x128xf32>
    %58 = vector.shape_cast %57 : vector<8x16x128xf32> to vector<128x128xf32>
    %c0_85 = arith.constant 0 : index
    %c256_86 = arith.constant 256 : index
    %59 = vector.load %arg5[%c0_85, %c256_86] : memref<128x1152xf32, #tpu.memory_space<vmem>>, vector<128x128xf32>
    tpu.vector_store %arg5[%c0_85, %c256_86], %58 {strides = array<i32>} : memref<128x1152xf32, #tpu.memory_space<vmem>>, vector<128x128xf32>,
    %c9 = arith.constant 9 : index
    %c0_87 = arith.constant 0 : index
    %c0_88 = arith.constant 0 : index
    %60 = vector.load %arg4[%c9, %c0_87, %c0_88] : memref<18x24x128xf32, #tpu.memory_space<vmem>>, vector<8x16x128xf32>
    %61 = vector.shape_cast %60 : vector<8x16x128xf32> to vector<128x128xf32>
    %c0_89 = arith.constant 0 : index
    %c384_90 = arith.constant 384 : index
    %62 = vector.load %arg5[%c0_89, %c384_90] : memref<128x1152xf32, #tpu.memory_space<vmem>>, vector<128x128xf32>
    tpu.vector_store %arg5[%c0_89, %c384_90], %61 {strides = array<i32>} : memref<128x1152xf32, #tpu.memory_space<vmem>>, vector<128x128xf32>,
    %c9_91 = arith.constant 9 : index
    %c1_92 = arith.constant 1 : index
    %c0_93 = arith.constant 0 : index
    %63 = vector.load %arg4[%c9_91, %c1_92, %c0_93] : memref<18x24x128xf32, #tpu.memory_space<vmem>>, vector<8x16x128xf32>
    %64 = vector.shape_cast %63 : vector<8x16x128xf32> to vector<128x128xf32>
    %c0_94 = arith.constant 0 : index
    %c512_95 = arith.constant 512 : index
    %65 = vector.load %arg5[%c0_94, %c512_95] : memref<128x1152xf32, #tpu.memory_space<vmem>>, vector<128x128xf32>
    tpu.vector_store %arg5[%c0_94, %c512_95], %64 {strides = array<i32>} : memref<128x1152xf32, #tpu.memory_space<vmem>>, vector<128x128xf32>,
    %c9_96 = arith.constant 9 : index
    %c2_97 = arith.constant 2 : index
    %c0_98 = arith.constant 0 : index
    %66 = vector.load %arg4[%c9_96, %c2_97, %c0_98] : memref<18x24x128xf32, #tpu.memory_space<vmem>>, vector<8x16x128xf32>
    %67 = vector.shape_cast %66 : vector<8x16x128xf32> to vector<128x128xf32>
    %c0_99 = arith.constant 0 : index
    %c640_100 = arith.constant 640 : index
    %68 = vector.load %arg5[%c0_99, %c640_100] : memref<128x1152xf32, #tpu.memory_space<vmem>>, vector<128x128xf32>
    tpu.vector_store %arg5[%c0_99, %c640_100], %67 {strides = array<i32>} : memref<128x1152xf32, #tpu.memory_space<vmem>>, vector<128x128xf32>,
    %c10 = arith.constant 10 : index
    %c0_101 = arith.constant 0 : index
    %c0_102 = arith.constant 0 : index
    %69 = vector.load %arg4[%c10, %c0_101, %c0_102] : memref<18x24x128xf32, #tpu.memory_space<vmem>>, vector<8x16x128xf32>
    %70 = vector.shape_cast %69 : vector<8x16x128xf32> to vector<128x128xf32>
    %c0_103 = arith.constant 0 : index
    %c768_104 = arith.constant 768 : index
    %71 = vector.load %arg5[%c0_103, %c768_104] : memref<128x1152xf32, #tpu.memory_space<vmem>>, vector<128x128xf32>
    tpu.vector_store %arg5[%c0_103, %c768_104], %70 {strides = array<i32>} : memref<128x1152xf32, #tpu.memory_space<vmem>>, vector<128x128xf32>,
    %c10_105 = arith.constant 10 : index
    %c1_106 = arith.constant 1 : index
    %c0_107 = arith.constant 0 : index
    %72 = vector.load %arg4[%c10_105, %c1_106, %c0_107] : memref<18x24x128xf32, #tpu.memory_space<vmem>>, vector<8x16x128xf32>
    %73 = vector.shape_cast %72 : vector<8x16x128xf32> to vector<128x128xf32>
    %c0_108 = arith.constant 0 : index
    %c896_109 = arith.constant 896 : index
    %74 = vector.load %arg5[%c0_108, %c896_109] : memref<128x1152xf32, #tpu.memory_space<vmem>>, vector<128x128xf32>
    tpu.vector_store %arg5[%c0_108, %c896_109], %73 {strides = array<i32>} : memref<128x1152xf32, #tpu.memory_space<vmem>>, vector<128x128xf32>,
    %c10_110 = arith.constant 10 : index
    %c2_111 = arith.constant 2 : index
    %c0_112 = arith.constant 0 : index
    %75 = vector.load %arg4[%c10_110, %c2_111, %c0_112] : memref<18x24x128xf32, #tpu.memory_space<vmem>>, vector<8x16x128xf32>
    %76 = vector.shape_cast %75 : vector<8x16x128xf32> to vector<128x128xf32>
    %c0_113 = arith.constant 0 : index
    %c1024_114 = arith.constant 1024 : index
    %77 = vector.load %arg5[%c0_113, %c1024_114] : memref<128x1152xf32, #tpu.memory_space<vmem>>, vector<128x128xf32>
    tpu.vector_store %arg5[%c0_113, %c1024_114], %76 {strides = array<i32>} : memref<128x1152xf32, #tpu.memory_space<vmem>>, vector<128x128xf32>,
    %c0_115 = arith.constant 0 : index
    %c0_116 = arith.constant 0 : index
    %78 = vector.load %arg5[%c0_115, %c0_116] : memref<128x1152xf32, #tpu.memory_space<vmem>>, vector<128x1152xf32>
    %cst_117 = arith.constant dense<0.000000e+00> : vector<128x128xf32>
    %79 = tpu.matmul %78, %0, %cst_117 {dimension_numbers = #tpu.dot_dimension_numbers<[1], [0], [0], [1], [0, 0, 1, 1], [], []>} : vector<128x1152xf32>, vector<1152x128xf32>, vector<128x128xf32> -> vector<128x128xf32>
    %c128_118 = arith.constant 128 : index
    %c0_119 = arith.constant 0 : index
    %80 = vector.load %arg6[%c128_118, %c0_119] : memref<256x128xf32, #tpu.memory_space<vmem>>, vector<128x128xf32>
    tpu.vector_store %arg6[%c128_118, %c0_119], %79 {strides = array<i32>} : memref<256x128xf32, #tpu.memory_space<vmem>>, vector<128x128xf32>,
    %cst_120 = arith.constant dense<0.000000e+00> : vector<128xf32>
    %81 = vector.multi_reduction <add>, %79, %cst_120 [0] : vector<128x128xf32> to vector<128xf32>
    %82 = vector.shape_cast %81 : vector<128xf32> to vector<1x128xf32>
    %83 = arith.addf %46, %82 : vector<1x128xf32>
    %84 = arith.mulf %79, %79 : vector<128x128xf32>
    %cst_121 = arith.constant dense<0.000000e+00> : vector<128xf32>
    %85 = vector.multi_reduction <add>, %84, %cst_121 [0] : vector<128x128xf32> to vector<128xf32>
    %86 = vector.shape_cast %85 : vector<128xf32> to vector<1x128xf32>
    %87 = arith.addf %50, %86 : vector<1x128xf32>
    %cst_122 = arith.constant 3.906250e-03 : f32
    %88 = vector.broadcast %cst_122 : f32 to vector<1x128xf32>
    %89 = arith.mulf %83, %88 : vector<1x128xf32>
    %cst_123 = arith.constant 3.906250e-03 : f32
    %90 = vector.broadcast %cst_123 : f32 to vector<1x128xf32>
    %91 = arith.mulf %87, %90 : vector<1x128xf32>
    %92 = arith.mulf %89, %89 : vector<1x128xf32>
    %93 = arith.subf %91, %92 : vector<1x128xf32>
    %cst_124 = arith.constant 0.000000e+00 : f32
    %94 = vector.broadcast %cst_124 : f32 to vector<1x128xf32>
    %95 = arith.maximumf %93, %94 : vector<1x128xf32>
    %cst_125 = arith.constant 9.99999974E-6 : f32
    %96 = vector.broadcast %cst_125 : f32 to vector<1x128xf32>
    %97 = arith.addf %95, %96 : vector<1x128xf32>
    %98 = math.rsqrt %97 : vector<1x128xf32>
    %c0_126 = arith.constant 0 : index
    %c0_127 = arith.constant 0 : index
    %99 = vector.load %arg6[%c0_126, %c0_127] : memref<256x128xf32, #tpu.memory_space<vmem>>, vector<256x128xf32>
    %100 = vector.broadcast %89 : vector<1x128xf32> to vector<256x128xf32>
    %101 = arith.subf %99, %100 : vector<256x128xf32>
    %102 = vector.broadcast %98 : vector<1x128xf32> to vector<256x128xf32>
    %103 = arith.mulf %101, %102 : vector<256x128xf32>
    %cst_128 = arith.constant 0.000000e+00 : f32
    %104 = vector.broadcast %cst_128 : f32 to vector<256x128xf32>
    %105 = arith.maximumf %103, %104 : vector<256x128xf32>
    %106 = vector.shape_cast %105 : vector<256x128xf32> to vector<16x16x128xf32>
    %c1_129 = arith.constant 1 : index
    %c1_130 = arith.constant 1 : index
    %c0_131 = arith.constant 0 : index
    %107 = vector.load %arg4[%c1_129, %c1_130, %c0_131] : memref<18x24x128xf32, #tpu.memory_space<vmem>>, vector<16x16x128xf32>
    tpu.vector_store %arg4[%c1_129, %c1_130, %c0_131], %106 {strides = array<i32>} : memref<18x24x128xf32, #tpu.memory_space<vmem>>, vector<16x16x128xf32>,
    %c1_132 = arith.constant 1 : index
    %c2_133 = arith.constant 2 : index
    %c0_134 = arith.constant 0 : index
    %108 = vector.load %arg4[%c1_132, %c2_133, %c0_134] : memref<18x24x128xf32, #tpu.memory_space<vmem>>, vector<16x1x128xf32>
    %c1_135 = arith.constant 1 : index
    %c0_136 = arith.constant 0 : index
    %c0_137 = arith.constant 0 : index
    %109 = vector.load %arg4[%c1_135, %c0_136, %c0_137] : memref<18x24x128xf32, #tpu.memory_space<vmem>>, vector<16x1x128xf32>
    tpu.vector_store %arg4[%c1_135, %c0_136, %c0_137], %108 {strides = array<i32>} : memref<18x24x128xf32, #tpu.memory_space<vmem>>, vector<16x1x128xf32>,
    %c1_138 = arith.constant 1 : index
    %c15_139 = arith.constant 15 : index
    %c0_140 = arith.constant 0 : index
    %110 = vector.load %arg4[%c1_138, %c15_139, %c0_140] : memref<18x24x128xf32, #tpu.memory_space<vmem>>, vector<16x1x128xf32>
    %c1_141 = arith.constant 1 : index
    %c17_142 = arith.constant 17 : index
    %c0_143 = arith.constant 0 : index
    %111 = vector.load %arg4[%c1_141, %c17_142, %c0_143] : memref<18x24x128xf32, #tpu.memory_space<vmem>>, vector<16x1x128xf32>
    tpu.vector_store %arg4[%c1_141, %c17_142, %c0_143], %110 {strides = array<i32>} : memref<18x24x128xf32, #tpu.memory_space<vmem>>, vector<16x1x128xf32>,
    %c2_144 = arith.constant 2 : index
    %c0_145 = arith.constant 0 : index
    %c0_146 = arith.constant 0 : index
    %112 = vector.load %arg4[%c2_144, %c0_145, %c0_146] : memref<18x24x128xf32, #tpu.memory_space<vmem>>, vector<1x24x128xf32>
    %c0_147 = arith.constant 0 : index
    %c0_148 = arith.constant 0 : index
    %c0_149 = arith.constant 0 : index
    %113 = vector.load %arg4[%c0_147, %c0_148, %c0_149] : memref<18x24x128xf32, #tpu.memory_space<vmem>>, vector<1x24x128xf32>
    tpu.vector_store %arg4[%c0_147, %c0_148, %c0_149], %112 {strides = array<i32>} : memref<18x24x128xf32, #tpu.memory_space<vmem>>, vector<1x24x128xf32>,
    %c15_150 = arith.constant 15 : index
    %c0_151 = arith.constant 0 : index
    %c0_152 = arith.constant 0 : index
    %114 = vector.load %arg4[%c15_150, %c0_151, %c0_152] : memref<18x24x128xf32, #tpu.memory_space<vmem>>, vector<1x24x128xf32>
    %c17_153 = arith.constant 17 : index
    %c0_154 = arith.constant 0 : index
    %c0_155 = arith.constant 0 : index
    %115 = vector.load %arg4[%c17_153, %c0_154, %c0_155] : memref<18x24x128xf32, #tpu.memory_space<vmem>>, vector<1x24x128xf32>
    tpu.vector_store %arg4[%c17_153, %c0_154, %c0_155], %114 {strides = array<i32>} : memref<18x24x128xf32, #tpu.memory_space<vmem>>, vector<1x24x128xf32>,
    %cst_156 = arith.constant 0.000000e+00 : f32
    %116 = vector.broadcast %cst_156 : f32 to vector<1x128xf32>
    %cst_157 = arith.constant 0.000000e+00 : f32
    %117 = vector.broadcast %cst_157 : f32 to vector<1x128xf32>
    %c0_158 = arith.constant 0 : index
    %c0_159 = arith.constant 0 : index
    %c0_160 = arith.constant 0 : index
    %118 = vector.load %arg4[%c0_158, %c0_159, %c0_160] : memref<18x24x128xf32, #tpu.memory_space<vmem>>, vector<8x16x128xf32>
    %119 = vector.shape_cast %118 : vector<8x16x128xf32> to vector<128x128xf32>
    %c0_161 = arith.constant 0 : index
    %c0_162 = arith.constant 0 : index
    %120 = vector.load %arg5[%c0_161, %c0_162] : memref<128x1152xf32, #tpu.memory_space<vmem>>, vector<128x128xf32>
    tpu.vector_store %arg5[%c0_161, %c0_162], %119 {strides = array<i32>} : memref<128x1152xf32, #tpu.memory_space<vmem>>, vector<128x128xf32>,
    %c0_163 = arith.constant 0 : index
    %c1_164 = arith.constant 1 : index
    %c0_165 = arith.constant 0 : index
    %121 = vector.load %arg4[%c0_163, %c1_164, %c0_165] : memref<18x24x128xf32, #tpu.memory_space<vmem>>, vector<8x16x128xf32>
    %122 = vector.shape_cast %121 : vector<8x16x128xf32> to vector<128x128xf32>
    %c0_166 = arith.constant 0 : index
    %c128_167 = arith.constant 128 : index
    %123 = vector.load %arg5[%c0_166, %c128_167] : memref<128x1152xf32, #tpu.memory_space<vmem>>, vector<128x128xf32>
    tpu.vector_store %arg5[%c0_166, %c128_167], %122 {strides = array<i32>} : memref<128x1152xf32, #tpu.memory_space<vmem>>, vector<128x128xf32>,
    %c0_168 = arith.constant 0 : index
    %c2_169 = arith.constant 2 : index
    %c0_170 = arith.constant 0 : index
    %124 = vector.load %arg4[%c0_168, %c2_169, %c0_170] : memref<18x24x128xf32, #tpu.memory_space<vmem>>, vector<8x16x128xf32>
    %125 = vector.shape_cast %124 : vector<8x16x128xf32> to vector<128x128xf32>
    %c0_171 = arith.constant 0 : index
    %c256_172 = arith.constant 256 : index
    %126 = vector.load %arg5[%c0_171, %c256_172] : memref<128x1152xf32, #tpu.memory_space<vmem>>, vector<128x128xf32>
    tpu.vector_store %arg5[%c0_171, %c256_172], %125 {strides = array<i32>} : memref<128x1152xf32, #tpu.memory_space<vmem>>, vector<128x128xf32>,
    %c1_173 = arith.constant 1 : index
    %c0_174 = arith.constant 0 : index
    %c0_175 = arith.constant 0 : index
    %127 = vector.load %arg4[%c1_173, %c0_174, %c0_175] : memref<18x24x128xf32, #tpu.memory_space<vmem>>, vector<8x16x128xf32>
    %128 = vector.shape_cast %127 : vector<8x16x128xf32> to vector<128x128xf32>
    %c0_176 = arith.constant 0 : index
    %c384_177 = arith.constant 384 : index
    %129 = vector.load %arg5[%c0_176, %c384_177] : memref<128x1152xf32, #tpu.memory_space<vmem>>, vector<128x128xf32>
    tpu.vector_store %arg5[%c0_176, %c384_177], %128 {strides = array<i32>} : memref<128x1152xf32, #tpu.memory_space<vmem>>, vector<128x128xf32>,
    %c1_178 = arith.constant 1 : index
    %c1_179 = arith.constant 1 : index
    %c0_180 = arith.constant 0 : index
    %130 = vector.load %arg4[%c1_178, %c1_179, %c0_180] : memref<18x24x128xf32, #tpu.memory_space<vmem>>, vector<8x16x128xf32>
    %131 = vector.shape_cast %130 : vector<8x16x128xf32> to vector<128x128xf32>
    %c0_181 = arith.constant 0 : index
    %c512_182 = arith.constant 512 : index
    %132 = vector.load %arg5[%c0_181, %c512_182] : memref<128x1152xf32, #tpu.memory_space<vmem>>, vector<128x128xf32>
    tpu.vector_store %arg5[%c0_181, %c512_182], %131 {strides = array<i32>} : memref<128x1152xf32, #tpu.memory_space<vmem>>, vector<128x128xf32>,
    %c1_183 = arith.constant 1 : index
    %c2_184 = arith.constant 2 : index
    %c0_185 = arith.constant 0 : index
    %133 = vector.load %arg4[%c1_183, %c2_184, %c0_185] : memref<18x24x128xf32, #tpu.memory_space<vmem>>, vector<8x16x128xf32>
    %134 = vector.shape_cast %133 : vector<8x16x128xf32> to vector<128x128xf32>
    %c0_186 = arith.constant 0 : index
    %c640_187 = arith.constant 640 : index
    %135 = vector.load %arg5[%c0_186, %c640_187] : memref<128x1152xf32, #tpu.memory_space<vmem>>, vector<128x128xf32>
    tpu.vector_store %arg5[%c0_186, %c640_187], %134 {strides = array<i32>} : memref<128x1152xf32, #tpu.memory_space<vmem>>, vector<128x128xf32>,
    %c2_188 = arith.constant 2 : index
    %c0_189 = arith.constant 0 : index
    %c0_190 = arith.constant 0 : index
    %136 = vector.load %arg4[%c2_188, %c0_189, %c0_190] : memref<18x24x128xf32, #tpu.memory_space<vmem>>, vector<8x16x128xf32>
    %137 = vector.shape_cast %136 : vector<8x16x128xf32> to vector<128x128xf32>
    %c0_191 = arith.constant 0 : index
    %c768_192 = arith.constant 768 : index
    %138 = vector.load %arg5[%c0_191, %c768_192] : memref<128x1152xf32, #tpu.memory_space<vmem>>, vector<128x128xf32>
    tpu.vector_store %arg5[%c0_191, %c768_192], %137 {strides = array<i32>} : memref<128x1152xf32, #tpu.memory_space<vmem>>, vector<128x128xf32>,
    %c2_193 = arith.constant 2 : index
    %c1_194 = arith.constant 1 : index
    %c0_195 = arith.constant 0 : index
    %139 = vector.load %arg4[%c2_193, %c1_194, %c0_195] : memref<18x24x128xf32, #tpu.memory_space<vmem>>, vector<8x16x128xf32>
    %140 = vector.shape_cast %139 : vector<8x16x128xf32> to vector<128x128xf32>
    %c0_196 = arith.constant 0 : index
    %c896_197 = arith.constant 896 : index
    %141 = vector.load %arg5[%c0_196, %c896_197] : memref<128x1152xf32, #tpu.memory_space<vmem>>, vector<128x128xf32>
    tpu.vector_store %arg5[%c0_196, %c896_197], %140 {strides = array<i32>} : memref<128x1152xf32, #tpu.memory_space<vmem>>, vector<128x128xf32>,
    %c2_198 = arith.constant 2 : index
    %c2_199 = arith.constant 2 : index
    %c0_200 = arith.constant 0 : index
    %142 = vector.load %arg4[%c2_198, %c2_199, %c0_200] : memref<18x24x128xf32, #tpu.memory_space<vmem>>, vector<8x16x128xf32>
    %143 = vector.shape_cast %142 : vector<8x16x128xf32> to vector<128x128xf32>
    %c0_201 = arith.constant 0 : index
    %c1024_202 = arith.constant 1024 : index
    %144 = vector.load %arg5[%c0_201, %c1024_202] : memref<128x1152xf32, #tpu.memory_space<vmem>>, vector<128x128xf32>
    tpu.vector_store %arg5[%c0_201, %c1024_202], %143 {strides = array<i32>} : memref<128x1152xf32, #tpu.memory_space<vmem>>, vector<128x128xf32>,
    %c0_203 = arith.constant 0 : index
    %c0_204 = arith.constant 0 : index
    %145 = vector.load %arg5[%c0_203, %c0_204] : memref<128x1152xf32, #tpu.memory_space<vmem>>, vector<128x1152xf32>
    %cst_205 = arith.constant dense<0.000000e+00> : vector<128x128xf32>
    %146 = tpu.matmul %145, %0, %cst_205 {dimension_numbers = #tpu.dot_dimension_numbers<[1], [0], [0], [1], [0, 0, 1, 1], [], []>} : vector<128x1152xf32>, vector<1152x128xf32>, vector<128x128xf32> -> vector<128x128xf32>
    %c0_206 = arith.constant 0 : index
    %c0_207 = arith.constant 0 : index
    %147 = vector.load %arg6[%c0_206, %c0_207] : memref<256x128xf32, #tpu.memory_space<vmem>>, vector<128x128xf32>
    tpu.vector_store %arg6[%c0_206, %c0_207], %146 {strides = array<i32>} : memref<256x128xf32, #tpu.memory_space<vmem>>, vector<128x128xf32>,
    %cst_208 = arith.constant dense<0.000000e+00> : vector<128xf32>
    %148 = vector.multi_reduction <add>, %146, %cst_208 [0] : vector<128x128xf32> to vector<128xf32>
    %149 = vector.shape_cast %148 : vector<128xf32> to vector<1x128xf32>
    %150 = arith.addf %116, %149 : vector<1x128xf32>
    %151 = arith.mulf %146, %146 : vector<128x128xf32>
    %cst_209 = arith.constant dense<0.000000e+00> : vector<128xf32>
    %152 = vector.multi_reduction <add>, %151, %cst_209 [0] : vector<128x128xf32> to vector<128xf32>
    %153 = vector.shape_cast %152 : vector<128xf32> to vector<1x128xf32>
    %154 = arith.addf %117, %153 : vector<1x128xf32>
    %c8_210 = arith.constant 8 : index
    %c0_211 = arith.constant 0 : index
    %c0_212 = arith.constant 0 : index
    %155 = vector.load %arg4[%c8_210, %c0_211, %c0_212] : memref<18x24x128xf32, #tpu.memory_space<vmem>>, vector<8x16x128xf32>
    %156 = vector.shape_cast %155 : vector<8x16x128xf32> to vector<128x128xf32>
    %c0_213 = arith.constant 0 : index
    %c0_214 = arith.constant 0 : index
    %157 = vector.load %arg5[%c0_213, %c0_214] : memref<128x1152xf32, #tpu.memory_space<vmem>>, vector<128x128xf32>
    tpu.vector_store %arg5[%c0_213, %c0_214], %156 {strides = array<i32>} : memref<128x1152xf32, #tpu.memory_space<vmem>>, vector<128x128xf32>,
    %c8_215 = arith.constant 8 : index
    %c1_216 = arith.constant 1 : index
    %c0_217 = arith.constant 0 : index
    %158 = vector.load %arg4[%c8_215, %c1_216, %c0_217] : memref<18x24x128xf32, #tpu.memory_space<vmem>>, vector<8x16x128xf32>
    %159 = vector.shape_cast %158 : vector<8x16x128xf32> to vector<128x128xf32>
    %c0_218 = arith.constant 0 : index
    %c128_219 = arith.constant 128 : index
    %160 = vector.load %arg5[%c0_218, %c128_219] : memref<128x1152xf32, #tpu.memory_space<vmem>>, vector<128x128xf32>
    tpu.vector_store %arg5[%c0_218, %c128_219], %159 {strides = array<i32>} : memref<128x1152xf32, #tpu.memory_space<vmem>>, vector<128x128xf32>,
    %c8_220 = arith.constant 8 : index
    %c2_221 = arith.constant 2 : index
    %c0_222 = arith.constant 0 : index
    %161 = vector.load %arg4[%c8_220, %c2_221, %c0_222] : memref<18x24x128xf32, #tpu.memory_space<vmem>>, vector<8x16x128xf32>
    %162 = vector.shape_cast %161 : vector<8x16x128xf32> to vector<128x128xf32>
    %c0_223 = arith.constant 0 : index
    %c256_224 = arith.constant 256 : index
    %163 = vector.load %arg5[%c0_223, %c256_224] : memref<128x1152xf32, #tpu.memory_space<vmem>>, vector<128x128xf32>
    tpu.vector_store %arg5[%c0_223, %c256_224], %162 {strides = array<i32>} : memref<128x1152xf32, #tpu.memory_space<vmem>>, vector<128x128xf32>,
    %c9_225 = arith.constant 9 : index
    %c0_226 = arith.constant 0 : index
    %c0_227 = arith.constant 0 : index
    %164 = vector.load %arg4[%c9_225, %c0_226, %c0_227] : memref<18x24x128xf32, #tpu.memory_space<vmem>>, vector<8x16x128xf32>
    %165 = vector.shape_cast %164 : vector<8x16x128xf32> to vector<128x128xf32>
    %c0_228 = arith.constant 0 : index
    %c384_229 = arith.constant 384 : index
    %166 = vector.load %arg5[%c0_228, %c384_229] : memref<128x1152xf32, #tpu.memory_space<vmem>>, vector<128x128xf32>
    tpu.vector_store %arg5[%c0_228, %c384_229], %165 {strides = array<i32>} : memref<128x1152xf32, #tpu.memory_space<vmem>>, vector<128x128xf32>,
    %c9_230 = arith.constant 9 : index
    %c1_231 = arith.constant 1 : index
    %c0_232 = arith.constant 0 : index
    %167 = vector.load %arg4[%c9_230, %c1_231, %c0_232] : memref<18x24x128xf32, #tpu.memory_space<vmem>>, vector<8x16x128xf32>
    %168 = vector.shape_cast %167 : vector<8x16x128xf32> to vector<128x128xf32>
    %c0_233 = arith.constant 0 : index
    %c512_234 = arith.constant 512 : index
    %169 = vector.load %arg5[%c0_233, %c512_234] : memref<128x1152xf32, #tpu.memory_space<vmem>>, vector<128x128xf32>
    tpu.vector_store %arg5[%c0_233, %c512_234], %168 {strides = array<i32>} : memref<128x1152xf32, #tpu.memory_space<vmem>>, vector<128x128xf32>,
    %c9_235 = arith.constant 9 : index
    %c2_236 = arith.constant 2 : index
    %c0_237 = arith.constant 0 : index
    %170 = vector.load %arg4[%c9_235, %c2_236, %c0_237] : memref<18x24x128xf32, #tpu.memory_space<vmem>>, vector<8x16x128xf32>
    %171 = vector.shape_cast %170 : vector<8x16x128xf32> to vector<128x128xf32>
    %c0_238 = arith.constant 0 : index
    %c640_239 = arith.constant 640 : index
    %172 = vector.load %arg5[%c0_238, %c640_239] : memref<128x1152xf32, #tpu.memory_space<vmem>>, vector<128x128xf32>
    tpu.vector_store %arg5[%c0_238, %c640_239], %171 {strides = array<i32>} : memref<128x1152xf32, #tpu.memory_space<vmem>>, vector<128x128xf32>,
    %c10_240 = arith.constant 10 : index
    %c0_241 = arith.constant 0 : index
    %c0_242 = arith.constant 0 : index
    %173 = vector.load %arg4[%c10_240, %c0_241, %c0_242] : memref<18x24x128xf32, #tpu.memory_space<vmem>>, vector<8x16x128xf32>
    %174 = vector.shape_cast %173 : vector<8x16x128xf32> to vector<128x128xf32>
    %c0_243 = arith.constant 0 : index
    %c768_244 = arith.constant 768 : index
    %175 = vector.load %arg5[%c0_243, %c768_244] : memref<128x1152xf32, #tpu.memory_space<vmem>>, vector<128x128xf32>
    tpu.vector_store %arg5[%c0_243, %c768_244], %174 {strides = array<i32>} : memref<128x1152xf32, #tpu.memory_space<vmem>>, vector<128x128xf32>,
    %c10_245 = arith.constant 10 : index
    %c1_246 = arith.constant 1 : index
    %c0_247 = arith.constant 0 : index
    %176 = vector.load %arg4[%c10_245, %c1_246, %c0_247] : memref<18x24x128xf32, #tpu.memory_space<vmem>>, vector<8x16x128xf32>
    %177 = vector.shape_cast %176 : vector<8x16x128xf32> to vector<128x128xf32>
    %c0_248 = arith.constant 0 : index
    %c896_249 = arith.constant 896 : index
    %178 = vector.load %arg5[%c0_248, %c896_249] : memref<128x1152xf32, #tpu.memory_space<vmem>>, vector<128x128xf32>
    tpu.vector_store %arg5[%c0_248, %c896_249], %177 {strides = array<i32>} : memref<128x1152xf32, #tpu.memory_space<vmem>>, vector<128x128xf32>,
    %c10_250 = arith.constant 10 : index
    %c2_251 = arith.constant 2 : index
    %c0_252 = arith.constant 0 : index
    %179 = vector.load %arg4[%c10_250, %c2_251, %c0_252] : memref<18x24x128xf32, #tpu.memory_space<vmem>>, vector<8x16x128xf32>
    %180 = vector.shape_cast %179 : vector<8x16x128xf32> to vector<128x128xf32>
    %c0_253 = arith.constant 0 : index
    %c1024_254 = arith.constant 1024 : index
    %181 = vector.load %arg5[%c0_253, %c1024_254] : memref<128x1152xf32, #tpu.memory_space<vmem>>, vector<128x128xf32>
    tpu.vector_store %arg5[%c0_253, %c1024_254], %180 {strides = array<i32>} : memref<128x1152xf32, #tpu.memory_space<vmem>>, vector<128x128xf32>,
    %c0_255 = arith.constant 0 : index
    %c0_256 = arith.constant 0 : index
    %182 = vector.load %arg5[%c0_255, %c0_256] : memref<128x1152xf32, #tpu.memory_space<vmem>>, vector<128x1152xf32>
    %cst_257 = arith.constant dense<0.000000e+00> : vector<128x128xf32>
    %183 = tpu.matmul %182, %0, %cst_257 {dimension_numbers = #tpu.dot_dimension_numbers<[1], [0], [0], [1], [0, 0, 1, 1], [], []>} : vector<128x1152xf32>, vector<1152x128xf32>, vector<128x128xf32> -> vector<128x128xf32>
    %c128_258 = arith.constant 128 : index
    %c0_259 = arith.constant 0 : index
    %184 = vector.load %arg6[%c128_258, %c0_259] : memref<256x128xf32, #tpu.memory_space<vmem>>, vector<128x128xf32>
    tpu.vector_store %arg6[%c128_258, %c0_259], %183 {strides = array<i32>} : memref<256x128xf32, #tpu.memory_space<vmem>>, vector<128x128xf32>,
    %cst_260 = arith.constant dense<0.000000e+00> : vector<128xf32>
    %185 = vector.multi_reduction <add>, %183, %cst_260 [0] : vector<128x128xf32> to vector<128xf32>
    %186 = vector.shape_cast %185 : vector<128xf32> to vector<1x128xf32>
    %187 = arith.addf %150, %186 : vector<1x128xf32>
    %188 = arith.mulf %183, %183 : vector<128x128xf32>
    %cst_261 = arith.constant dense<0.000000e+00> : vector<128xf32>
    %189 = vector.multi_reduction <add>, %188, %cst_261 [0] : vector<128x128xf32> to vector<128xf32>
    %190 = vector.shape_cast %189 : vector<128xf32> to vector<1x128xf32>
    %191 = arith.addf %154, %190 : vector<1x128xf32>
    %cst_262 = arith.constant 3.906250e-03 : f32
    %192 = vector.broadcast %cst_262 : f32 to vector<1x128xf32>
    %193 = arith.mulf %187, %192 : vector<1x128xf32>
    %cst_263 = arith.constant 3.906250e-03 : f32
    %194 = vector.broadcast %cst_263 : f32 to vector<1x128xf32>
    %195 = arith.mulf %191, %194 : vector<1x128xf32>
    %196 = arith.mulf %193, %193 : vector<1x128xf32>
    %197 = arith.subf %195, %196 : vector<1x128xf32>
    %cst_264 = arith.constant 0.000000e+00 : f32
    %198 = vector.broadcast %cst_264 : f32 to vector<1x128xf32>
    %199 = arith.maximumf %197, %198 : vector<1x128xf32>
    %cst_265 = arith.constant 9.99999974E-6 : f32
    %200 = vector.broadcast %cst_265 : f32 to vector<1x128xf32>
    %201 = arith.addf %199, %200 : vector<1x128xf32>
    %202 = math.rsqrt %201 : vector<1x128xf32>
    %c0_266 = arith.constant 0 : index
    %c0_267 = arith.constant 0 : index
    %c0_268 = arith.constant 0 : index
    %c0_269 = arith.constant 0 : index
    %203 = vector.load %arg1[%c0_266, %c0_267, %c0_268, %c0_269] : memref<1x16x16x128xf32, #tpu.memory_space<vmem>>, vector<1x16x16x128xf32>
    %204 = vector.shape_cast %203 : vector<1x16x16x128xf32> to vector<16x16x128xf32>
    %205 = vector.shape_cast %204 : vector<16x16x128xf32> to vector<256x128xf32>
    %c0_270 = arith.constant 0 : index
    %c0_271 = arith.constant 0 : index
    %206 = vector.load %arg6[%c0_270, %c0_271] : memref<256x128xf32, #tpu.memory_space<vmem>>, vector<256x128xf32>
    %207 = vector.broadcast %193 : vector<1x128xf32> to vector<256x128xf32>
    %208 = arith.subf %206, %207 : vector<256x128xf32>
    %209 = vector.broadcast %202 : vector<1x128xf32> to vector<256x128xf32>
    %210 = arith.mulf %208, %209 : vector<256x128xf32>
    %211 = arith.addf %205, %210 : vector<256x128xf32>
    %c0_272 = arith.constant 0 : index
    %c0_273 = arith.constant 0 : index
    %c0_274 = arith.constant 0 : index
    %212 = vector.load %arg3[%c0_272, %c0_273, %c0_274] : memref<1x256x128xf32, #tpu.memory_space<vmem>>, vector<1x256x128xf32>
    %213 = vector.shape_cast %212 : vector<1x256x128xf32> to vector<256x128xf32>
    %214 = vector.shape_cast %211 : vector<256x128xf32> to vector<1x256x128xf32>
    tpu.vector_store %arg3[%c0_272, %c0_273, %c0_274], %214 {strides = array<i32>} : memref<1x256x128xf32, #tpu.memory_space<vmem>>, vector<1x256x128xf32>,
    return
  }
  func.func @transform_0(%arg0: i32) -> (i32, i32, i32, i32) {
    %c0_i32 = arith.constant 0 : i32
    %c0_i32_0 = arith.constant 0 : i32
    %c0_i32_1 = arith.constant 0 : i32
    %c0_i32_2 = arith.constant 0 : i32
    return %arg0, %c0_i32, %c0_i32_0, %c0_i32_1 : i32, i32, i32, i32
  }
  func.func @transform_1(%arg0: i32) -> (i32, i32) {
    %c0_i32 = arith.constant 0 : i32
    %c0_i32_0 = arith.constant 0 : i32
    %c0_i32_1 = arith.constant 0 : i32
    return %c0_i32, %c0_i32_0 : i32, i32
  }
  func.func @transform_2(%arg0: i32) -> (i32, i32, i32) {
    %c0_i32 = arith.constant 0 : i32
    %c0_i32_0 = arith.constant 0 : i32
    %c0_i32_1 = arith.constant 0 : i32
    return %arg0, %c0_i32, %c0_i32_0 : i32, i32, i32
  }
}

</mosaic_0001>

<llo_original>
// kernel: tpu_custom_call.1
$region0: #{tpu_custom_call.1}
  #allocation0 [shape = 'u32[]', space=smem, size = 0x4, offset = 0x4, fixed_abs, tag = 'smem constant byte address 0x4 - core index']
  #allocation1 [shape = 'u32[144,128]{1,0:T(1,128)}', space=vmem, size = 0x12000, scoped, tag = 'internal scratch']
  #allocation2 [shape = 'f32[18,24,128]{2,1,0:T(8,128)}', space=vmem, size = 0x36000, scoped, tag = 'scratch operand']
  #allocation3 [shape = 'f32[128,1152]{1,0:T(8,128)}', space=vmem, size = 0x90000, scoped, tag = 'scratch operand']
  #allocation4 [shape = 'f32[256,128]{1,0:T(8,128)}', space=vmem, size = 0x20000, scoped, tag = 'scratch operand']
  %s0 = inlined_call_operand.hbm [shape: f32[2,16,16,128], index: 0, kind: input, shape index: {}]
  %s1 = inlined_call_operand.hbm [shape: f32[1152,128], index: 1, kind: input, shape index: {}]
  %s2 = inlined_call_operand.hbm [shape: f32[2,256,128], index: 2, kind: output, shape index: {}]
  %s3 = sld [smem:[#allocation0]]
  $region49: #{tpu_custom_call.1} parent=0
    _
  %s5 = ssub.s32 1, %s3
  %s6 = scalar_select 0, %s5, %s3
  $region1: #{tpu_custom_call.1} parent=0
    #allocation5 [shape = 'u8[262144]{0}', space=vmem, size = 0x40000, scoped, tag = 'input window, operand 0']
    #allocation6 [shape = 's32[2]{0}', space=sflag, size = 0x8, scoped, tag = 'scoped memory for tpu_custom_call.1']
    #allocation7 [shape = 's32[2]{0}', space=sflag, size = 0x8, scoped, tag = 'scoped memory for tpu_custom_call.1']
    #allocation8 [shape = 'u8[589824]{0}', space=vmem, size = 0x90000, scoped, tag = 'input window, operand 1, single buffered']
    #allocation9 [shape = 's32[1]{0}', space=sflag, size = 0x4, scoped, tag = 'scoped memory for tpu_custom_call.1']
    #allocation10 [shape = 'u8[262144]{0}', space=vmem, size = 0x40000, scoped, tag = 'output window, operand 0']
    %7 = vsyncpa [#allocation6], 0
    %s8 = scalar_lea.sflag [#allocation6], 1
    %9 = vsyncpa %s8, 0
    %10 = vsyncpa [#allocation9], 0
    %11 = vsyncpa [#allocation7], 0
    %s12 = scalar_lea.sflag [#allocation7], 1
    %13 = vsyncpa %s12, 0
    loop: start=0, step=1, limit=4
    $region2: #{tpu_custom_call.1} parent=1 // loop_pre_header
      _
    $region3: #{tpu_custom_call.1} parent=1 // loop_header
      %s15 = sphi 0, %s19
      %p16 = scmp.ge.s32.totalorder %s15, 4
      %s25 = sphi 0, %s27
      %s28 = sphi 0, %s25
      %s29 = sphi 0, %s28
      %s45 = sphi 0, %s29
      %s49 = sphi 0, %s49
      %s51 = sphi 0, %s49
      %s52 = sphi 0, %s51
      %s66 = sphi 0, %s52
      %s72 = sphi 0, %s74
      %s75 = sphi 0, %s72
      %s76 = sphi 0, %s75
      %s92 = sphi 0, %s76
    $region4: #{tpu_custom_call.1} parent=1 // loop_header_branch
      %18 = sbr.rel (%p16) target = $region8
    $region5: #{tpu_custom_call.1} parent=1 // loop_body
      %s20 = ssub.s32 %s15, 1
      %s21 = ssub.s32 %s15, 2
      %s22 = sadd.s32 %s15, 1
      %s23 = ssub.s32 %s15, %s22
      %p24 = scmp.eq.s32.totalorder %s23, 0
      %s26 = sadd.s32 %s25, 1
      %s27 = scalar_select %p24, %s25, %s26
      %p30 = pneg %p24
      %p31 = scmp.eq.s32.totalorder %s15, 1
      %p32 = por %p30, %p31
      %p33 = scmp.ne.s32.totalorder %s25, %s28
      %p34 = scmp.eq.s32.totalorder %s15, 0
      %p35 = por %p33, %p34
      %p36 = scmp.ne.s32.totalorder %s25, %s28
      %p37 = scmp.eq.s32.totalorder %s20, 1
      %p38 = por %p36, %p37
      %p39 = scmp.ne.s32.totalorder %s28, %s29
      %p40 = scmp.eq.s32.totalorder %s20, 0
      %p41 = por %p39, %p40
      %p42 = scmp.ne.s32.totalorder %s28, %s29
      %p43 = scmp.eq.s32.totalorder %s21, 1
      %p44 = por %p42, %p43
      %p46 = scmp.ne.s32.totalorder %s29, %s45
      %p47 = scmp.eq.s32.totalorder %s21, 0
      %p48 = por %p46, %p47
      %s50 = sadd.s32 %s49, 1
      %p53 = scmp.eq.s32.totalorder %s15, 1
      %p54 = scmp.ne.s32.totalorder %s49, %s51
      %p55 = scmp.eq.s32.totalorder %s15, 0
      %p56 = por %p54, %p55
      %p57 = scmp.ne.s32.totalorder %s49, %s51
      %p58 = scmp.eq.s32.totalorder %s20, 1
      %p59 = por %p57, %p58
      %p60 = scmp.ne.s32.totalorder %s51, %s52
      %p61 = scmp.eq.s32.totalorder %s20, 0
      %p62 = por %p60, %p61
      %p63 = scmp.ne.s32.totalorder %s51, %s52
      %p64 = scmp.eq.s32.totalorder %s21, 1
      %p65 = por %p63, %p64
      %p67 = scmp.ne.s32.totalorder %s52, %s66
      %p68 = scmp.eq.s32.totalorder %s21, 0
      %p69 = por %p67, %p68
      %s70 = ssub.s32 %s15, %s22
      %p71 = scmp.eq.s32.totalorder %s70, 0
      %s73 = sadd.s32 %s72, 1
      %s74 = scalar_select %p71, %s72, %s73
      %p77 = pneg %p71
      %p78 = scmp.eq.s32.totalorder %s15, 1
      %p79 = por %p77, %p78
      %p80 = scmp.ne.s32.totalorder %s72, %s75
      %p81 = scmp.eq.s32.totalorder %s15, 0
      %p82 = por %p80, %p81
      %p83 = scmp.ne.s32.totalorder %s72, %s75
      %p84 = scmp.eq.s32.totalorder %s20, 1
      %p85 = por %p83, %p84
      %p86 = scmp.ne.s32.totalorder %s75, %s76
      %p87 = scmp.eq.s32.totalorder %s20, 0
      %p88 = por %p86, %p87
      %p89 = scmp.ne.s32.totalorder %s75, %s76
      %p90 = scmp.eq.s32.totalorder %s21, 1
      %p91 = por %p89, %p90
      %p93 = scmp.ne.s32.totalorder %s76, %s92
      %p94 = scmp.eq.s32.totalorder %s21, 0
      %p95 = por %p93, %p94
      %p96 = scmp.le.s32.totalorder 1, %s15
      %p97 = scmp.lt.s32.totalorder %s15, 3
      %p98 = pnand %p96, %p97
      %p99 = pneg %p98
      // Predicated region
      $region9: #{tpu_custom_call.1} parent=5 // pred_check
        _
      $region10: #{tpu_custom_call.1} parent=5 // pred_check_branch
        %101 = sbr.rel (%p98) target = $region12
      $region11: #{tpu_custom_call.1} parent=5 // pred_region
        %s102 = ssub.s32 %s15, 1
        // Predicated region
        $region13: #{tpu_custom_call.1} parent=11 // pred_check
          %p103 = pneg %p62
        $region14: #{tpu_custom_call.1} parent=11 // pred_check_branch
          %105 = sbr.rel (%p103) target = $region16
        $region15: #{tpu_custom_call.1} parent=11 // pred_region
          %s107 = ssub.s32 18432, 18432
          %108 = vsyncadd [#allocation9], %s107
          %s109 = sshll.u32 [#allocation8], 4
          %s110 = int_to_ptr.vmem [resolvable:$true] %s109
          %115 = dma.hbm_to_vmem [thread:$0]  %s1, 18432, %s110, [#allocation9], 128, 128, 8
        $region16: #{tpu_custom_call.1} parent=11 // pred_fallthru
          _
      $region12: #{tpu_custom_call.1} parent=5 // pred_fallthru
        _
      %p116 = scmp.lt.s32.totalorder %s15, 2
      // Predicated region
      $region17: #{tpu_custom_call.1} parent=5 // pred_check
        %p117 = pneg %p116
      $region18: #{tpu_custom_call.1} parent=5 // pred_check_branch
        %119 = sbr.rel (%p117) target = $region20
      $region19: #{tpu_custom_call.1} parent=5 // pred_region
        // Predicated region
        $region21: #{tpu_custom_call.1} parent=19 // pred_check
          %p120 = pneg %p35
        $region22: #{tpu_custom_call.1} parent=19 // pred_check_branch
          %122 = sbr.rel (%p120) target = $region24
        $region23: #{tpu_custom_call.1} parent=19 // pred_region
          %s123 = sand.u32 %s25, 1
          %s124 = scalar_lea.sflag [#allocation6], %s123
          %s125 = sand.u32 %s25, 1
          %s126 = smul.addr %s125, 256
          %s127 = scalar_lea.vmem [#allocation5], %s126
          %s129 = ssub.s32 4096, 4096
          %130 = vsyncadd %s124, %s129
          %s131 = smul.addr %s15, 32
          %s132 = smul.addr %s131, 128
          %s133 = scalar_lea.hbm %s0, %s132
          %s134 = sshll.u32 %s127, 4
          %s135 = int_to_ptr.vmem [resolvable:$true] %s134
          %140 = dma.hbm_to_vmem [thread:$0]  %s133, 4096, %s135, %s124, 128, 128, 8
        $region24: #{tpu_custom_call.1} parent=19 // pred_fallthru
          _
      $region20: #{tpu_custom_call.1} parent=5 // pred_fallthru
        _
      %p141 = scmp.le.s32.totalorder 1, %s15
      %p142 = scmp.lt.s32.totalorder %s15, 3
      %p143 = pnand %p141, %p142
      %p144 = pneg %p143
      // Predicated region
      $region25: #{tpu_custom_call.1} parent=5 // pred_check
        _
      $region26: #{tpu_custom_call.1} parent=5 // pred_check_branch
        %146 = sbr.rel (%p143) target = $region28
      $region27: #{tpu_custom_call.1} parent=5 // pred_region
        %s147 = ssub.s32 %s15, 1
        %s148 = sand.u32 %s28, 1
        %s149 = scalar_lea.sflag [#allocation6], %s148
        %s150 = sand.u32 %s28, 1
        %s151 = smul.addr %s150, 256
        %s152 = scalar_lea.vmem [#allocation5], %s151
        // Predicated region
        $region29: #{tpu_custom_call.1} parent=27 // pred_check
          %p153 = pneg %p41
        $region30: #{tpu_custom_call.1} parent=27 // pred_check_branch
          %155 = sbr.rel (%p153) target = $region32
        $region31: #{tpu_custom_call.1} parent=27 // pred_region
          %156 = dma.done %s149, 4096
        $region32: #{tpu_custom_call.1} parent=27 // pred_fallthru
          _
        // Predicated region
        $region33: #{tpu_custom_call.1} parent=27 // pred_check
          %p157 = pneg %p62
        $region34: #{tpu_custom_call.1} parent=27 // pred_check_branch
          %159 = sbr.rel (%p157) target = $region36
        $region35: #{tpu_custom_call.1} parent=27 // pred_region
          %160 = dma.done [#allocation9], 18432
        $region36: #{tpu_custom_call.1} parent=27 // pred_fallthru
          _
        %s161 = sand.u32 %s28, 1
        %s162 = scalar_lea.sflag [#allocation6], %s161
        %s163 = sand.u32 %s28, 1
        %s164 = smul.addr %s163, 256
        %s165 = scalar_lea.vmem [#allocation5], %s164
        %p166 = pneg %p41
        %p167 = pneg %p38
        %p168 = pneg %p62
        %p169 = pneg %p59
        %p170 = pneg %p88
        %p171 = pneg %p85
        %s172 = sand.u32 %s75, 1
        %s173 = scalar_lea.sflag [#allocation7], %s172
        %s174 = sand.u32 %s75, 1
        %s175 = smul.addr %s174, 256
        %s176 = scalar_lea.vmem [#allocation10], %s175
        %v177 = vld [vmem:[#allocation8] sm:$0xff]
        %v178 = vld [vmem:[#allocation8 + $0x8] sm:$0xff]
        %v179 = vld [vmem:[#allocation8 + $0x10] sm:$0xff]
        %v180 = vld [vmem:[#allocation8 + $0x18] sm:$0xff]
        %v181 = vld [vmem:[#allocation8 + $0x20] sm:$0xff]
        %v182 = vld [vmem:[#allocation8 + $0x28] sm:$0xff]
        %v183 = vld [vmem:[#allocation8 + $0x30] sm:$0xff]
        %v184 = vld [vmem:[#allocation8 + $0x38] sm:$0xff]
        %v185 = vld [vmem:[#allocation8 + $0x40] sm:$0xff]
        %v186 = vld [vmem:[#allocation8 + $0x48] sm:$0xff]
        %v187 = vld [vmem:[#allocation8 + $0x50] sm:$0xff]
        %v188 = vld [vmem:[#allocation8 + $0x58] sm:$0xff]
        %v189 = vld [vmem:[#allocation8 + $0x60] sm:$0xff]
        %v190 = vld [vmem:[#allocation8 + $0x68] sm:$0xff]
        %v191 = vld [vmem:[#allocation8 + $0x70] sm:$0xff]
        %v192 = vld [vmem:[#allocation8 + $0x78] sm:$0xff]
        %v193 = vld [vmem:[#allocation8 + $0x80] sm:$0xff]
        %v194 = vld [vmem:[#allocation8 + $0x88] sm:$0xff]
        %v195 = vld [vmem:[#allocation8 + $0x90] sm:$0xff]
        %v196 = vld [vmem:[#allocation8 + $0x98] sm:$0xff]
        %v197 = vld [vmem:[#allocation8 + $0xa0] sm:$0xff]
        %v198 = vld [vmem:[#allocation8 + $0xa8] sm:$0xff]
        %v199 = vld [vmem:[#allocation8 + $0xb0] sm:$0xff]
        %v200 = vld [vmem:[#allocation8 + $0xb8] sm:$0xff]
        %v201 = vld [vmem:[#allocation8 + $0xc0] sm:$0xff]
        %v202 = vld [vmem:[#allocation8 + $0xc8] sm:$0xff]
        %v203 = vld [vmem:[#allocation8 + $0xd0] sm:$0xff]
        %v204 = vld [vmem:[#allocation8 + $0xd8] sm:$0xff]
        %v205 = vld [vmem:[#allocation8 + $0xe0] sm:$0xff]
        %v206 = vld [vmem:[#allocation8 + $0xe8] sm:$0xff]
        %v207 = vld [vmem:[#allocation8 + $0xf0] sm:$0xff]
        %v208 = vld [vmem:[#allocation8 + $0xf8] sm:$0xff]
        %v209 = vld [vmem:[#allocation8 + $0x100] sm:$0xff]
        %v210 = vld [vmem:[#allocation8 + $0x108] sm:$0xff]
        %v211 = vld [vmem:[#allocation8 + $0x110] sm:$0xff]
        %v212 = vld [vmem:[#allocation8 + $0x118] sm:$0xff]
        %v213 = vld [vmem:[#allocation8 + $0x120] sm:$0xff]
        %v214 = vld [vmem:[#allocation8 + $0x128] sm:$0xff]
        %v215 = vld [vmem:[#allocation8 + $0x130] sm:$0xff]
        %v216 = vld [vmem:[#allocation8 + $0x138] sm:$0xff]
        %v217 = vld [vmem:[#allocation8 + $0x140] sm:$0xff]
        %v218 = vld [vmem:[#allocation8 + $0x148] sm:$0xff]
        %v219 = vld [vmem:[#allocation8 + $0x150] sm:$0xff]
        %v220 = vld [vmem:[#allocation8 + $0x158] sm:$0xff]
        %v221 = vld [vmem:[#allocation8 + $0x160] sm:$0xff]
        %v222 = vld [vmem:[#allocation8 + $0x168] sm:$0xff]
        %v223 = vld [vmem:[#allocation8 + $0x170] sm:$0xff]
        %v224 = vld [vmem:[#allocation8 + $0x178] sm:$0xff]
        %v225 = vld [vmem:[#allocation8 + $0x180] sm:$0xff]
        %v226 = vld [vmem:[#allocation8 + $0x188] sm:$0xff]
        %v227 = vld [vmem:[#allocation8 + $0x190] sm:$0xff]
        %v228 = vld [vmem:[#allocation8 + $0x198] sm:$0xff]
        %v229 = vld [vmem:[#allocation8 + $0x1a0] sm:$0xff]
        %v230 = vld [vmem:[#allocation8 + $0x1a8] sm:$0xff]
        %v231 = vld [vmem:[#allocation8 + $0x1b0] sm:$0xff]
        %v232 = vld [vmem:[#allocation8 + $0x1b8] sm:$0xff]
        %v233 = vld [vmem:[#allocation8 + $0x1c0] sm:$0xff]
        %v234 = vld [vmem:[#allocation8 + $0x1c8] sm:$0xff]
        %v235 = vld [vmem:[#allocation8 + $0x1d0] sm:$0xff]
        %v236 = vld [vmem:[#allocation8 + $0x1d8] sm:$0xff]
        %v237 = vld [vmem:[#allocation8 + $0x1e0] sm:$0xff]
        %v238 = vld [vmem:[#allocation8 + $0x1e8] sm:$0xff]
        %v239 = vld [vmem:[#allocation8 + $0x1f0] sm:$0xff]
        %v240 = vld [vmem:[#allocation8 + $0x1f8] sm:$0xff]
        %v241 = vld [vmem:[#allocation8 + $0x200] sm:$0xff]
        %v242 = vld [vmem:[#allocation8 + $0x208] sm:$0xff]
        %v243 = vld [vmem:[#allocation8 + $0x210] sm:$0xff]
        %v244 = vld [vmem:[#allocation8 + $0x218] sm:$0xff]
        %v245 = vld [vmem:[#allocation8 + $0x220] sm:$0xff]
        %v246 = vld [vmem:[#allocation8 + $0x228] sm:$0xff]
        %v247 = vld [vmem:[#allocation8 + $0x230] sm:$0xff]
        %v248 = vld [vmem:[#allocation8 + $0x238] sm:$0xff]
        %v249 = vld [vmem:[#allocation8 + $0x240] sm:$0xff]
        %v250 = vld [vmem:[#allocation8 + $0x248] sm:$0xff]
        %v251 = vld [vmem:[#allocation8 + $0x250] sm:$0xff]
        %v252 = vld [vmem:[#allocation8 + $0x258] sm:$0xff]
        %v253 = vld [vmem:[#allocation8 + $0x260] sm:$0xff]
        %v254 = vld [vmem:[#allocation8 + $0x268] sm:$0xff]
        %v255 = vld [vmem:[#allocation8 + $0x270] sm:$0xff]
        %v256 = vld [vmem:[#allocation8 + $0x278] sm:$0xff]
        %v257 = vld [vmem:[#allocation8 + $0x280] sm:$0xff]
        %v258 = vld [vmem:[#allocation8 + $0x288] sm:$0xff]
        %v259 = vld [vmem:[#allocation8 + $0x290] sm:$0xff]
        %v260 = vld [vmem:[#allocation8 + $0x298] sm:$0xff]
        %v261 = vld [vmem:[#allocation8 + $0x2a0] sm:$0xff]
        %v262 = vld [vmem:[#allocation8 + $0x2a8] sm:$0xff]
        %v263 = vld [vmem:[#allocation8 + $0x2b0] sm:$0xff]
        %v264 = vld [vmem:[#allocation8 + $0x2b8] sm:$0xff]
        %v265 = vld [vmem:[#allocation8 + $0x2c0] sm:$0xff]
        %v266 = vld [vmem:[#allocation8 + $0x2c8] sm:$0xff]
        %v267 = vld [vmem:[#allocation8 + $0x2d0] sm:$0xff]
        %v268 = vld [vmem:[#allocation8 + $0x2d8] sm:$0xff]
        %v269 = vld [vmem:[#allocation8 + $0x2e0] sm:$0xff]
        %v270 = vld [vmem:[#allocation8 + $0x2e8] sm:$0xff]
        %v271 = vld [vmem:[#allocation8 + $0x2f0] sm:$0xff]
        %v272 = vld [vmem:[#allocation8 + $0x2f8] sm:$0xff]
        %v273 = vld [vmem:[#allocation8 + $0x300] sm:$0xff]
        %v274 = vld [vmem:[#allocation8 + $0x308] sm:$0xff]
        %v275 = vld [vmem:[#allocation8 + $0x310] sm:$0xff]
        %v276 = vld [vmem:[#allocation8 + $0x318] sm:$0xff]
        %v277 = vld [vmem:[#allocation8 + $0x320] sm:$0xff]
        %v278 = vld [vmem:[#allocation8 + $0x328] sm:$0xff]
        %v279 = vld [vmem:[#allocation8 + $0x330] sm:$0xff]
        %v280 = vld [vmem:[#allocation8 + $0x338] sm:$0xff]
        %v281 = vld [vmem:[#allocation8 + $0x340] sm:$0xff]
        %v282 = vld [vmem:[#allocation8 + $0x348] sm:$0xff]
        %v283 = vld [vmem:[#allocation8 + $0x350] sm:$0xff]
        %v284 = vld [vmem:[#allocation8 + $0x358] sm:$0xff]
        %v285 = vld [vmem:[#allocation8 + $0x360] sm:$0xff]
        %v286 = vld [vmem:[#allocation8 + $0x368] sm:$0xff]
        %v287 = vld [vmem:[#allocation8 + $0x370] sm:$0xff]
        %v288 = vld [vmem:[#allocation8 + $0x378] sm:$0xff]
        %v289 = vld [vmem:[#allocation8 + $0x380] sm:$0xff]
        %v290 = vld [vmem:[#allocation8 + $0x388] sm:$0xff]
        %v291 = vld [vmem:[#allocation8 + $0x390] sm:$0xff]
        %v292 = vld [vmem:[#allocation8 + $0x398] sm:$0xff]
        %v293 = vld [vmem:[#allocation8 + $0x3a0] sm:$0xff]
        %v294 = vld [vmem:[#allocation8 + $0x3a8] sm:$0xff]
        %v295 = vld [vmem:[#allocation8 + $0x3b0] sm:$0xff]
        %v296 = vld [vmem:[#allocation8 + $0x3b8] sm:$0xff]
        %v297 = vld [vmem:[#allocation8 + $0x3c0] sm:$0xff]
        %v298 = vld [vmem:[#allocation8 + $0x3c8] sm:$0xff]
        %v299 = vld [vmem:[#allocation8 + $0x3d0] sm:$0xff]
        %v300 = vld [vmem:[#allocation8 + $0x3d8] sm:$0xff]
        %v301 = vld [vmem:[#allocation8 + $0x3e0] sm:$0xff]
        %v302 = vld [vmem:[#allocation8 + $0x3e8] sm:$0xff]
        %v303 = vld [vmem:[#allocation8 + $0x3f0] sm:$0xff]
        %v304 = vld [vmem:[#allocation8 + $0x3f8] sm:$0xff]
        %v305 = vld [vmem:[#allocation8 + $0x400] sm:$0xff]
        %v306 = vld [vmem:[#allocation8 + $0x408] sm:$0xff]
        %v307 = vld [vmem:[#allocation8 + $0x410] sm:$0xff]
        %v308 = vld [vmem:[#allocation8 + $0x418] sm:$0xff]
        %v309 = vld [vmem:[#allocation8 + $0x420] sm:$0xff]
        %v310 = vld [vmem:[#allocation8 + $0x428] sm:$0xff]
        %v311 = vld [vmem:[#allocation8 + $0x430] sm:$0xff]
        %v312 = vld [vmem:[#allocation8 + $0x438] sm:$0xff]
        %v313 = vld [vmem:[#allocation8 + $0x440] sm:$0xff]
        %v314 = vld [vmem:[#allocation8 + $0x448] sm:$0xff]
        %v315 = vld [vmem:[#allocation8 + $0x450] sm:$0xff]
        %v316 = vld [vmem:[#allocation8 + $0x458] sm:$0xff]
        %v317 = vld [vmem:[#allocation8 + $0x460] sm:$0xff]
        %v318 = vld [vmem:[#allocation8 + $0x468] sm:$0xff]
        %v319 = vld [vmem:[#allocation8 + $0x470] sm:$0xff]
        %v320 = vld [vmem:[#allocation8 + $0x478] sm:$0xff]
        %v321 = vld [vmem:[%s152] sm:$0xff]
        %v322 = vld [vmem:[%s152 + $0x8] sm:$0xff]
        %v323 = vld [vmem:[%s152 + $0x10] sm:$0xff]
        %v324 = vld [vmem:[%s152 + $0x18] sm:$0xff]
        %v325 = vld [vmem:[%s152 + $0x20] sm:$0xff]
        %v326 = vld [vmem:[%s152 + $0x28] sm:$0xff]
        %v327 = vld [vmem:[%s152 + $0x30] sm:$0xff]
        %v328 = vld [vmem:[%s152 + $0x38] sm:$0xff]
        %v329 = vld [vmem:[%s152 + $0x40] sm:$0xff]
        %v330 = vld [vmem:[%s152 + $0x48] sm:$0xff]
        %v331 = vld [vmem:[%s152 + $0x50] sm:$0xff]
        %v332 = vld [vmem:[%s152 + $0x58] sm:$0xff]
        %v333 = vld [vmem:[%s152 + $0x60] sm:$0xff]
        %v334 = vld [vmem:[%s152 + $0x68] sm:$0xff]
        %v335 = vld [vmem:[%s152 + $0x70] sm:$0xff]
        %v336 = vld [vmem:[%s152 + $0x78] sm:$0xff]
        %v337 = vld [vmem:[%s152 + $0x80] sm:$0xff]
        %v338 = vld [vmem:[%s152 + $0x88] sm:$0xff]
        %v339 = vld [vmem:[%s152 + $0x90] sm:$0xff]
        %v340 = vld [vmem:[%s152 + $0x98] sm:$0xff]
        %v341 = vld [vmem:[%s152 + $0xa0] sm:$0xff]
        %v342 = vld [vmem:[%s152 + $0xa8] sm:$0xff]
        %v343 = vld [vmem:[%s152 + $0xb0] sm:$0xff]
        %v344 = vld [vmem:[%s152 + $0xb8] sm:$0xff]
        %v345 = vld [vmem:[%s152 + $0xc0] sm:$0xff]
        %v346 = vld [vmem:[%s152 + $0xc8] sm:$0xff]
        %v347 = vld [vmem:[%s152 + $0xd0] sm:$0xff]
        %v348 = vld [vmem:[%s152 + $0xd8] sm:$0xff]
        %v349 = vld [vmem:[%s152 + $0xe0] sm:$0xff]
        %v350 = vld [vmem:[%s152 + $0xe8] sm:$0xff]
        %v351 = vld [vmem:[%s152 + $0xf0] sm:$0xff]
        %v352 = vld [vmem:[%s152 + $0xf8] sm:$0xff]
        %s353 = scalar_lea.vmem [#allocation2], 24
        %354 = vst [vmem:[%s353 + $0x1] sm:$0xff] %v321
        %355 = vst [vmem:[%s353 + $0x9] sm:$0xff] %v322
        %356 = vst [vmem:[%s353 + $0x19] sm:$0xff] %v323
        %357 = vst [vmem:[%s353 + $0x21] sm:$0xff] %v324
        %358 = vst [vmem:[%s353 + $0x31] sm:$0xff] %v325
        %359 = vst [vmem:[%s353 + $0x39] sm:$0xff] %v326
        %360 = vst [vmem:[%s353 + $0x49] sm:$0xff] %v327
        %361 = vst [vmem:[%s353 + $0x51] sm:$0xff] %v328
        %362 = vst [vmem:[%s353 + $0x61] sm:$0xff] %v329
        %363 = vst [vmem:[%s353 + $0x69] sm:$0xff] %v330
        %364 = vst [vmem:[%s353 + $0x79] sm:$0xff] %v331
        %365 = vst [vmem:[%s353 + $0x81] sm:$0xff] %v332
        %366 = vst [vmem:[%s353 + $0x91] sm:$0xff] %v333
        %367 = vst [vmem:[%s353 + $0x99] sm:$0xff] %v334
        %368 = vst [vmem:[%s353 + $0xa9] sm:$0xff] %v335
        %369 = vst [vmem:[%s353 + $0xb1] sm:$0xff] %v336
        %370 = vst [vmem:[%s353 + $0xc1] sm:$0xff] %v337
        %371 = vst [vmem:[%s353 + $0xc9] sm:$0xff] %v338
        %372 = vst [vmem:[%s353 + $0xd9] sm:$0xff] %v339
        %373 = vst [vmem:[%s353 + $0xe1] sm:$0xff] %v340
        %374 = vst [vmem:[%s353 + $0xf1] sm:$0xff] %v341
        %375 = vst [vmem:[%s353 + $0xf9] sm:$0xff] %v342
        %376 = vst [vmem:[%s353 + $0x109] sm:$0xff] %v343
        %377 = vst [vmem:[%s353 + $0x111] sm:$0xff] %v344
        %378 = vst [vmem:[%s353 + $0x121] sm:$0xff] %v345
        %379 = vst [vmem:[%s353 + $0x129] sm:$0xff] %v346
        %380 = vst [vmem:[%s353 + $0x139] sm:$0xff] %v347
        %381 = vst [vmem:[%s353 + $0x141] sm:$0xff] %v348
        %382 = vst [vmem:[%s353 + $0x151] sm:$0xff] %v349
        %383 = vst [vmem:[%s353 + $0x159] sm:$0xff] %v350
        %384 = vst [vmem:[%s353 + $0x169] sm:$0xff] %v351
        %385 = vst [vmem:[%s353 + $0x171] sm:$0xff] %v352
        %v386 = vld [vmem:[%s353 + $0x2] sm:$0x1]
        %v387 = vld [vmem:[%s353 + $0x1a] sm:$0x1]
        %v388 = vld [vmem:[%s353 + $0x32] sm:$0x1]
        %v389 = vld [vmem:[%s353 + $0x4a] sm:$0x1]
        %v390 = vld [vmem:[%s353 + $0x62] sm:$0x1]
        %v391 = vld [vmem:[%s353 + $0x7a] sm:$0x1]
        %v392 = vld [vmem:[%s353 + $0x92] sm:$0x1]
        %v393 = vld [vmem:[%s353 + $0xaa] sm:$0x1]
        %v394 = vld [vmem:[%s353 + $0xc2] sm:$0x1]
        %v395 = vld [vmem:[%s353 + $0xda] sm:$0x1]
        %v396 = vld [vmem:[%s353 + $0xf2] sm:$0x1]
        %v397 = vld [vmem:[%s353 + $0x10a] sm:$0x1]
        %v398 = vld [vmem:[%s353 + $0x122] sm:$0x1]
        %v399 = vld [vmem:[%s353 + $0x13a] sm:$0x1]
        %v400 = vld [vmem:[%s353 + $0x152] sm:$0x1]
        %v401 = vld [vmem:[%s353 + $0x16a] sm:$0x1]
        %402 = vst [vmem:[%s353] sm:$0x1] %v386
        %403 = vst [vmem:[%s353 + $0x18] sm:$0x1] %v387
        %404 = vst [vmem:[%s353 + $0x30] sm:$0x1] %v388
        %405 = vst [vmem:[%s353 + $0x48] sm:$0x1] %v389
        %406 = vst [vmem:[%s353 + $0x60] sm:$0x1] %v390
        %407 = vst [vmem:[%s353 + $0x78] sm:$0x1] %v391
        %408 = vst [vmem:[%s353 + $0x90] sm:$0x1] %v392
        %409 = vst [vmem:[%s353 + $0xa8] sm:$0x1] %v393
        %410 = vst [vmem:[%s353 + $0xc0] sm:$0x1] %v394
        %411 = vst [vmem:[%s353 + $0xd8] sm:$0x1] %v395
        %412 = vst [vmem:[%s353 + $0xf0] sm:$0x1] %v396
        %413 = vst [vmem:[%s353 + $0x108] sm:$0x1] %v397
        %414 = vst [vmem:[%s353 + $0x120] sm:$0x1] %v398
        %415 = vst [vmem:[%s353 + $0x138] sm:$0x1] %v399
        %416 = vst [vmem:[%s353 + $0x150] sm:$0x1] %v400
        %417 = vst [vmem:[%s353 + $0x168] sm:$0x1] %v401
        %v418 = vld [vmem:[%s353 + $0xf] sm:$0x1]
        %v419 = vld [vmem:[%s353 + $0x27] sm:$0x1]
        %v420 = vld [vmem:[%s353 + $0x3f] sm:$0x1]
        %v421 = vld [vmem:[%s353 + $0x57] sm:$0x1]
        %v422 = vld [vmem:[%s353 + $0x6f] sm:$0x1]
        %v423 = vld [vmem:[%s353 + $0x87] sm:$0x1]
        %v424 = vld [vmem:[%s353 + $0x9f] sm:$0x1]
        %v425 = vld [vmem:[%s353 + $0xb7] sm:$0x1]
        %v426 = vld [vmem:[%s353 + $0xcf] sm:$0x1]
        %v427 = vld [vmem:[%s353 + $0xe7] sm:$0x1]
        %v428 = vld [vmem:[%s353 + $0xff] sm:$0x1]
        %v429 = vld [vmem:[%s353 + $0x117] sm:$0x1]
        %v430 = vld [vmem:[%s353 + $0x12f] sm:$0x1]
        %v431 = vld [vmem:[%s353 + $0x147] sm:$0x1]
        %v432 = vld [vmem:[%s353 + $0x15f] sm:$0x1]
        %v433 = vld [vmem:[%s353 + $0x177] sm:$0x1]
        %434 = vst [vmem:[%s353 + $0x11] sm:$0x1] %v418
        %435 = vst [vmem:[%s353 + $0x29] sm:$0x1] %v419
        %436 = vst [vmem:[%s353 + $0x41] sm:$0x1] %v420
        %437 = vst [vmem:[%s353 + $0x59] sm:$0x1] %v421
        %438 = vst [vmem:[%s353 + $0x71] sm:$0x1] %v422
        %439 = vst [vmem:[%s353 + $0x89] sm:$0x1] %v423
        %440 = vst [vmem:[%s353 + $0xa1] sm:$0x1] %v424
        %441 = vst [vmem:[%s353 + $0xb9] sm:$0x1] %v425
        %442 = vst [vmem:[%s353 + $0xd1] sm:$0x1] %v426
        %443 = vst [vmem:[%s353 + $0xe9] sm:$0x1] %v427
        %444 = vst [vmem:[%s353 + $0x101] sm:$0x1] %v428
        %445 = vst [vmem:[%s353 + $0x119] sm:$0x1] %v429
        %446 = vst [vmem:[%s353 + $0x131] sm:$0x1] %v430
        %447 = vst [vmem:[%s353 + $0x149] sm:$0x1] %v431
        %448 = vst [vmem:[%s353 + $0x161] sm:$0x1] %v432
        %449 = vst [vmem:[%s353 + $0x179] sm:$0x1] %v433
        %s450 = scalar_lea.vmem [#allocation2], 48
        %v451 = vld [vmem:[%s450] sm:$0xff]
        %v452 = vld [vmem:[%s450 + $0x8] sm:$0xff]
        %v453 = vld [vmem:[%s450 + $0x10] sm:$0xff]
        %454 = vst [vmem:[#allocation2] sm:$0xff] %v451
        %455 = vst [vmem:[#allocation2 + $0x8] sm:$0xff] %v452
        %456 = vst [vmem:[#allocation2 + $0x10] sm:$0xff] %v453
        %s457 = scalar_lea.vmem [#allocation2], 360
        %v458 = vld [vmem:[%s457] sm:$0xff]
        %v459 = vld [vmem:[%s457 + $0x8] sm:$0xff]
        %v460 = vld [vmem:[%s457 + $0x10] sm:$0xff]
        %s461 = scalar_lea.vmem [#allocation2], 408
        %462 = vst [vmem:[%s461] sm:$0xff] %v458
        %463 = vst [vmem:[%s461 + $0x8] sm:$0xff] %v459
        %464 = vst [vmem:[%s461 + $0x10] sm:$0xff] %v460
        %v465 = vld [vmem:[#allocation2] sm:$0xff]
        %v466 = vld [vmem:[#allocation2 + $0x8] sm:$0xff]
        %v467 = vld [vmem:[#allocation2 + $0x18] sm:$0xff]
        %v468 = vld [vmem:[#allocation2 + $0x20] sm:$0xff]
        %v469 = vld [vmem:[#allocation2 + $0x30] sm:$0xff]
        %v470 = vld [vmem:[#allocation2 + $0x38] sm:$0xff]
        %v471 = vld [vmem:[#allocation2 + $0x48] sm:$0xff]
        %v472 = vld [vmem:[#allocation2 + $0x50] sm:$0xff]
        %v473 = vld [vmem:[#allocation2 + $0x60] sm:$0xff]
        %v474 = vld [vmem:[#allocation2 + $0x68] sm:$0xff]
        %v475 = vld [vmem:[#allocation2 + $0x78] sm:$0xff]
        %v476 = vld [vmem:[#allocation2 + $0x80] sm:$0xff]
        %v477 = vld [vmem:[#allocation2 + $0x90] sm:$0xff]
        %v478 = vld [vmem:[#allocation2 + $0x98] sm:$0xff]
        %v479 = vld [vmem:[#allocation2 + $0xa8] sm:$0xff]
        %v480 = vld [vmem:[#allocation2 + $0xb0] sm:$0xff]
        %481 = vst [vmem:[#allocation3] sm:$0xff] %v465
        %482 = vst [vmem:[#allocation3 + $0x48] sm:$0xff] %v466
        %483 = vst [vmem:[#allocation3 + $0x90] sm:$0xff] %v467
        %484 = vst [vmem:[#allocation3 + $0xd8] sm:$0xff] %v468
        %485 = vst [vmem:[#allocation3 + $0x120] sm:$0xff] %v469
        %486 = vst [vmem:[#allocation3 + $0x168] sm:$0xff] %v470
        %487 = vst [vmem:[#allocation3 + $0x1b0] sm:$0xff] %v471
        %488 = vst [vmem:[#allocation3 + $0x1f8] sm:$0xff] %v472
        %489 = vst [vmem:[#allocation3 + $0x240] sm:$0xff] %v473
        %490 = vst [vmem:[#allocation3 + $0x288] sm:$0xff] %v474
        %491 = vst [vmem:[#allocation3 + $0x2d0] sm:$0xff] %v475
        %492 = vst [vmem:[#allocation3 + $0x318] sm:$0xff] %v476
        %493 = vst [vmem:[#allocation3 + $0x360] sm:$0xff] %v477
        %494 = vst [vmem:[#allocation3 + $0x3a8] sm:$0xff] %v478
        %495 = vst [vmem:[#allocation3 + $0x3f0] sm:$0xff] %v479
        %496 = vst [vmem:[#allocation3 + $0x438] sm:$0xff] %v480
        %v497 = vld [vmem:[#allocation2 + $0x1] sm:$0xff]
        %v498 = vld [vmem:[#allocation2 + $0x9] sm:$0xff]
        %v499 = vld [vmem:[#allocation2 + $0x19] sm:$0xff]
        %v500 = vld [vmem:[#allocation2 + $0x21] sm:$0xff]
        %v501 = vld [vmem:[#allocation2 + $0x31] sm:$0xff]
        %v502 = vld [vmem:[#allocation2 + $0x39] sm:$0xff]
        %v503 = vld [vmem:[#allocation2 + $0x49] sm:$0xff]
        %v504 = vld [vmem:[#allocation2 + $0x51] sm:$0xff]
        %v505 = vld [vmem:[#allocation2 + $0x61] sm:$0xff]
        %v506 = vld [vmem:[#allocation2 + $0x69] sm:$0xff]
        %v507 = vld [vmem:[#allocation2 + $0x79] sm:$0xff]
        %v508 = vld [vmem:[#allocation2 + $0x81] sm:$0xff]
        %v509 = vld [vmem:[#allocation2 + $0x91] sm:$0xff]
        %v510 = vld [vmem:[#allocation2 + $0x99] sm:$0xff]
        %v511 = vld [vmem:[#allocation2 + $0xa9] sm:$0xff]
        %v512 = vld [vmem:[#allocation2 + $0xb1] sm:$0xff]
        %513 = vst [vmem:[#allocation3 + $0x8] sm:$0xff] %v497
        %514 = vst [vmem:[#allocation3 + $0x50] sm:$0xff] %v498
        %515 = vst [vmem:[#allocation3 + $0x98] sm:$0xff] %v499
        %516 = vst [vmem:[#allocation3 + $0xe0] sm:$0xff] %v500
        %517 = vst [vmem:[#allocation3 + $0x128] sm:$0xff] %v501
        %518 = vst [vmem:[#allocation3 + $0x170] sm:$0xff] %v502
        %519 = vst [vmem:[#allocation3 + $0x1b8] sm:$0xff] %v503
        %520 = vst [vmem:[#allocation3 + $0x200] sm:$0xff] %v504
        %521 = vst [vmem:[#allocation3 + $0x248] sm:$0xff] %v505
        %522 = vst [vmem:[#allocation3 + $0x290] sm:$0xff] %v506
        %523 = vst [vmem:[#allocation3 + $0x2d8] sm:$0xff] %v507
        %524 = vst [vmem:[#allocation3 + $0x320] sm:$0xff] %v508
        %525 = vst [vmem:[#allocation3 + $0x368] sm:$0xff] %v509
        %526 = vst [vmem:[#allocation3 + $0x3b0] sm:$0xff] %v510
        %527 = vst [vmem:[#allocation3 + $0x3f8] sm:$0xff] %v511
        %528 = vst [vmem:[#allocation3 + $0x440] sm:$0xff] %v512
        %v529 = vld [vmem:[#allocation2 + $0x2] sm:$0xff]
        %v530 = vld [vmem:[#allocation2 + $0xa] sm:$0xff]
        %v531 = vld [vmem:[#allocation2 + $0x1a] sm:$0xff]
        %v532 = vld [vmem:[#allocation2 + $0x22] sm:$0xff]
        %v533 = vld [vmem:[#allocation2 + $0x32] sm:$0xff]
        %v534 = vld [vmem:[#allocation2 + $0x3a] sm:$0xff]
        %v535 = vld [vmem:[#allocation2 + $0x4a] sm:$0xff]
        %v536 = vld [vmem:[#allocation2 + $0x52] sm:$0xff]
        %v537 = vld [vmem:[#allocation2 + $0x62] sm:$0xff]
        %v538 = vld [vmem:[#allocation2 + $0x6a] sm:$0xff]
        %v539 = vld [vmem:[#allocation2 + $0x7a] sm:$0xff]
        %v540 = vld [vmem:[#allocation2 + $0x82] sm:$0xff]
        %v541 = vld [vmem:[#allocation2 + $0x92] sm:$0xff]
        %v542 = vld [vmem:[#allocation2 + $0x9a] sm:$0xff]
        %v543 = vld [vmem:[#allocation2 + $0xaa] sm:$0xff]
        %v544 = vld [vmem:[#allocation2 + $0xb2] sm:$0xff]
        %545 = vst [vmem:[#allocation3 + $0x10] sm:$0xff] %v529
        %546 = vst [vmem:[#allocation3 + $0x58] sm:$0xff] %v530
        %547 = vst [vmem:[#allocation3 + $0xa0] sm:$0xff] %v531
        %548 = vst [vmem:[#allocation3 + $0xe8] sm:$0xff] %v532
        %549 = vst [vmem:[#allocation3 + $0x130] sm:$0xff] %v533
        %550 = vst [vmem:[#allocation3 + $0x178] sm:$0xff] %v534
        %551 = vst [vmem:[#allocation3 + $0x1c0] sm:$0xff] %v535
        %552 = vst [vmem:[#allocation3 + $0x208] sm:$0xff] %v536
        %553 = vst [vmem:[#allocation3 + $0x250] sm:$0xff] %v537
        %554 = vst [vmem:[#allocation3 + $0x298] sm:$0xff] %v538
        %555 = vst [vmem:[#allocation3 + $0x2e0] sm:$0xff] %v539
        %556 = vst [vmem:[#allocation3 + $0x328] sm:$0xff] %v540
        %557 = vst [vmem:[#allocation3 + $0x370] sm:$0xff] %v541
        %558 = vst [vmem:[#allocation3 + $0x3b8] sm:$0xff] %v542
        %559 = vst [vmem:[#allocation3 + $0x400] sm:$0xff] %v543
        %560 = vst [vmem:[#allocation3 + $0x448] sm:$0xff] %v544
        %v561 = vld [vmem:[%s353] sm:$0xff]
        %v562 = vld [vmem:[%s353 + $0x8] sm:$0xff]
        %v563 = vld [vmem:[%s353 + $0x18] sm:$0xff]
        %v564 = vld [vmem:[%s353 + $0x20] sm:$0xff]
        %v565 = vld [vmem:[%s353 + $0x30] sm:$0xff]
        %v566 = vld [vmem:[%s353 + $0x38] sm:$0xff]
        %v567 = vld [vmem:[%s353 + $0x48] sm:$0xff]
        %v568 = vld [vmem:[%s353 + $0x50] sm:$0xff]
        %v569 = vld [vmem:[%s353 + $0x60] sm:$0xff]
        %v570 = vld [vmem:[%s353 + $0x68] sm:$0xff]
        %v571 = vld [vmem:[%s353 + $0x78] sm:$0xff]
        %v572 = vld [vmem:[%s353 + $0x80] sm:$0xff]
        %v573 = vld [vmem:[%s353 + $0x90] sm:$0xff]
        %v574 = vld [vmem:[%s353 + $0x98] sm:$0xff]
        %v575 = vld [vmem:[%s353 + $0xa8] sm:$0xff]
        %v576 = vld [vmem:[%s353 + $0xb0] sm:$0xff]
        %577 = vst [vmem:[#allocation3 + $0x18] sm:$0xff] %v561
        %578 = vst [vmem:[#allocation3 + $0x60] sm:$0xff] %v562
        %579 = vst [vmem:[#allocation3 + $0xa8] sm:$0xff] %v563
        %580 = vst [vmem:[#allocation3 + $0xf0] sm:$0xff] %v564
        %581 = vst [vmem:[#allocation3 + $0x138] sm:$0xff] %v565
        %582 = vst [vmem:[#allocation3 + $0x180] sm:$0xff] %v566
        %583 = vst [vmem:[#allocation3 + $0x1c8] sm:$0xff] %v567
        %584 = vst [vmem:[#allocation3 + $0x210] sm:$0xff] %v568
        %585 = vst [vmem:[#allocation3 + $0x258] sm:$0xff] %v569
        %586 = vst [vmem:[#allocation3 + $0x2a0] sm:$0xff] %v570
        %587 = vst [vmem:[#allocation3 + $0x2e8] sm:$0xff] %v571
        %588 = vst [vmem:[#allocation3 + $0x330] sm:$0xff] %v572
        %589 = vst [vmem:[#allocation3 + $0x378] sm:$0xff] %v573
        %590 = vst [vmem:[#allocation3 + $0x3c0] sm:$0xff] %v574
        %591 = vst [vmem:[#allocation3 + $0x408] sm:$0xff] %v575
        %592 = vst [vmem:[#allocation3 + $0x450] sm:$0xff] %v576
        %v593 = vld [vmem:[%s353 + $0x1] sm:$0xff]
        %v594 = vld [vmem:[%s353 + $0x9] sm:$0xff]
        %v595 = vld [vmem:[%s353 + $0x19] sm:$0xff]
        %v596 = vld [vmem:[%s353 + $0x21] sm:$0xff]
        %v597 = vld [vmem:[%s353 + $0x31] sm:$0xff]
        %v598 = vld [vmem:[%s353 + $0x39] sm:$0xff]
        %v599 = vld [vmem:[%s353 + $0x49] sm:$0xff]
        %v600 = vld [vmem:[%s353 + $0x51] sm:$0xff]
        %v601 = vld [vmem:[%s353 + $0x61] sm:$0xff]
        %v602 = vld [vmem:[%s353 + $0x69] sm:$0xff]
        %v603 = vld [vmem:[%s353 + $0x79] sm:$0xff]
        %v604 = vld [vmem:[%s353 + $0x81] sm:$0xff]
        %v605 = vld [vmem:[%s353 + $0x91] sm:$0xff]
        %v606 = vld [vmem:[%s353 + $0x99] sm:$0xff]
        %v607 = vld [vmem:[%s353 + $0xa9] sm:$0xff]
        %v608 = vld [vmem:[%s353 + $0xb1] sm:$0xff]
        %609 = vst [vmem:[#allocation3 + $0x20] sm:$0xff] %v593
        %610 = vst [vmem:[#allocation3 + $0x68] sm:$0xff] %v594
        %611 = vst [vmem:[#allocation3 + $0xb0] sm:$0xff] %v595
        %612 = vst [vmem:[#allocation3 + $0xf8] sm:$0xff] %v596
        %613 = vst [vmem:[#allocation3 + $0x140] sm:$0xff] %v597
        %614 = vst [vmem:[#allocation3 + $0x188] sm:$0xff] %v598
        %615 = vst [vmem:[#allocation3 + $0x1d0] sm:$0xff] %v599
        %616 = vst [vmem:[#allocation3 + $0x218] sm:$0xff] %v600
        %617 = vst [vmem:[#allocation3 + $0x260] sm:$0xff] %v601
        %618 = vst [vmem:[#allocation3 + $0x2a8] sm:$0xff] %v602
        %619 = vst [vmem:[#allocation3 + $0x2f0] sm:$0xff] %v603
        %620 = vst [vmem:[#allocation3 + $0x338] sm:$0xff] %v604
        %621 = vst [vmem:[#allocation3 + $0x380] sm:$0xff] %v605
        %622 = vst [vmem:[#allocation3 + $0x3c8] sm:$0xff] %v606
        %623 = vst [vmem:[#allocation3 + $0x410] sm:$0xff] %v607
        %624 = vst [vmem:[#allocation3 + $0x458] sm:$0xff] %v608
        %v625 = vld [vmem:[%s353 + $0x2] sm:$0xff]
        %v626 = vld [vmem:[%s353 + $0xa] sm:$0xff]
        %v627 = vld [vmem:[%s353 + $0x1a] sm:$0xff]
        %v628 = vld [vmem:[%s353 + $0x22] sm:$0xff]
        %v629 = vld [vmem:[%s353 + $0x32] sm:$0xff]
        %v630 = vld [vmem:[%s353 + $0x3a] sm:$0xff]
        %v631 = vld [vmem:[%s353 + $0x4a] sm:$0xff]
        %v632 = vld [vmem:[%s353 + $0x52] sm:$0xff]
        %v633 = vld [vmem:[%s353 + $0x62] sm:$0xff]
        %v634 = vld [vmem:[%s353 + $0x6a] sm:$0xff]
        %v635 = vld [vmem:[%s353 + $0x7a] sm:$0xff]
        %v636 = vld [vmem:[%s353 + $0x82] sm:$0xff]
        %v637 = vld [vmem:[%s353 + $0x92] sm:$0xff]
        %v638 = vld [vmem:[%s353 + $0x9a] sm:$0xff]
        %v639 = vld [vmem:[%s353 + $0xaa] sm:$0xff]
        %v640 = vld [vmem:[%s353 + $0xb2] sm:$0xff]
        %641 = vst [vmem:[#allocation3 + $0x28] sm:$0xff] %v625
        %642 = vst [vmem:[#allocation3 + $0x70] sm:$0xff] %v626
        %643 = vst [vmem:[#allocation3 + $0xb8] sm:$0xff] %v627
        %644 = vst [vmem:[#allocation3 + $0x100] sm:$0xff] %v628
        %645 = vst [vmem:[#allocation3 + $0x148] sm:$0xff] %v629
        %646 = vst [vmem:[#allocation3 + $0x190] sm:$0xff] %v630
        %647 = vst [vmem:[#allocation3 + $0x1d8] sm:$0xff] %v631
        %648 = vst [vmem:[#allocation3 + $0x220] sm:$0xff] %v632
        %649 = vst [vmem:[#allocation3 + $0x268] sm:$0xff] %v633
        %650 = vst [vmem:[#allocation3 + $0x2b0] sm:$0xff] %v634
        %651 = vst [vmem:[#allocation3 + $0x2f8] sm:$0xff] %v635
        %652 = vst [vmem:[#allocation3 + $0x340] sm:$0xff] %v636
        %653 = vst [vmem:[#allocation3 + $0x388] sm:$0xff] %v637
        %654 = vst [vmem:[#allocation3 + $0x3d0] sm:$0xff] %v638
        %655 = vst [vmem:[#allocation3 + $0x418] sm:$0xff] %v639
        %656 = vst [vmem:[#allocation3 + $0x460] sm:$0xff] %v640
        %v657 = vld [vmem:[%s450] sm:$0xff]
        %v658 = vld [vmem:[%s450 + $0x8] sm:$0xff]
        %v659 = vld [vmem:[%s450 + $0x18] sm:$0xff]
        %v660 = vld [vmem:[%s450 + $0x20] sm:$0xff]
        %v661 = vld [vmem:[%s450 + $0x30] sm:$0xff]
        %v662 = vld [vmem:[%s450 + $0x38] sm:$0xff]
        %v663 = vld [vmem:[%s450 + $0x48] sm:$0xff]
        %v664 = vld [vmem:[%s450 + $0x50] sm:$0xff]
        %v665 = vld [vmem:[%s450 + $0x60] sm:$0xff]
        %v666 = vld [vmem:[%s450 + $0x68] sm:$0xff]
        %v667 = vld [vmem:[%s450 + $0x78] sm:$0xff]
        %v668 = vld [vmem:[%s450 + $0x80] sm:$0xff]
        %v669 = vld [vmem:[%s450 + $0x90] sm:$0xff]
        %v670 = vld [vmem:[%s450 + $0x98] sm:$0xff]
        %v671 = vld [vmem:[%s450 + $0xa8] sm:$0xff]
        %v672 = vld [vmem:[%s450 + $0xb0] sm:$0xff]
        %673 = vst [vmem:[#allocation3 + $0x30] sm:$0xff] %v657
        %674 = vst [vmem:[#allocation3 + $0x78] sm:$0xff] %v658
        %675 = vst [vmem:[#allocation3 + $0xc0] sm:$0xff] %v659
        %676 = vst [vmem:[#allocation3 + $0x108] sm:$0xff] %v660
        %677 = vst [vmem:[#allocation3 + $0x150] sm:$0xff] %v661
        %678 = vst [vmem:[#allocation3 + $0x198] sm:$0xff] %v662
        %679 = vst [vmem:[#allocation3 + $0x1e0] sm:$0xff] %v663
        %680 = vst [vmem:[#allocation3 + $0x228] sm:$0xff] %v664
        %681 = vst [vmem:[#allocation3 + $0x270] sm:$0xff] %v665
        %682 = vst [vmem:[#allocation3 + $0x2b8] sm:$0xff] %v666
        %683 = vst [vmem:[#allocation3 + $0x300] sm:$0xff] %v667
        %684 = vst [vmem:[#allocation3 + $0x348] sm:$0xff] %v668
        %685 = vst [vmem:[#allocation3 + $0x390] sm:$0xff] %v669
        %686 = vst [vmem:[#allocation3 + $0x3d8] sm:$0xff] %v670
        %687 = vst [vmem:[#allocation3 + $0x420] sm:$0xff] %v671
        %688 = vst [vmem:[#allocation3 + $0x468] sm:$0xff] %v672
        %v689 = vld [vmem:[%s450 + $0x1] sm:$0xff]
        %v690 = vld [vmem:[%s450 + $0x9] sm:$0xff]
        %v691 = vld [vmem:[%s450 + $0x19] sm:$0xff]
        %v692 = vld [vmem:[%s450 + $0x21] sm:$0xff]
        %v693 = vld [vmem:[%s450 + $0x31] sm:$0xff]
        %v694 = vld [vmem:[%s450 + $0x39] sm:$0xff]
        %v695 = vld [vmem:[%s450 + $0x49] sm:$0xff]
        %v696 = vld [vmem:[%s450 + $0x51] sm:$0xff]
        %v697 = vld [vmem:[%s450 + $0x61] sm:$0xff]
        %v698 = vld [vmem:[%s450 + $0x69] sm:$0xff]
        %v699 = vld [vmem:[%s450 + $0x79] sm:$0xff]
        %v700 = vld [vmem:[%s450 + $0x81] sm:$0xff]
        %v701 = vld [vmem:[%s450 + $0x91] sm:$0xff]
        %v702 = vld [vmem:[%s450 + $0x99] sm:$0xff]
        %v703 = vld [vmem:[%s450 + $0xa9] sm:$0xff]
        %v704 = vld [vmem:[%s450 + $0xb1] sm:$0xff]
        %705 = vst [vmem:[#allocation3 + $0x38] sm:$0xff] %v689
        %706 = vst [vmem:[#allocation3 + $0x80] sm:$0xff] %v690
        %707 = vst [vmem:[#allocation3 + $0xc8] sm:$0xff] %v691
        %708 = vst [vmem:[#allocation3 + $0x110] sm:$0xff] %v692
        %709 = vst [vmem:[#allocation3 + $0x158] sm:$0xff] %v693
        %710 = vst [vmem:[#allocation3 + $0x1a0] sm:$0xff] %v694
        %711 = vst [vmem:[#allocation3 + $0x1e8] sm:$0xff] %v695
        %712 = vst [vmem:[#allocation3 + $0x230] sm:$0xff] %v696
        %713 = vst [vmem:[#allocation3 + $0x278] sm:$0xff] %v697
        %714 = vst [vmem:[#allocation3 + $0x2c0] sm:$0xff] %v698
        %715 = vst [vmem:[#allocation3 + $0x308] sm:$0xff] %v699
        %716 = vst [vmem:[#allocation3 + $0x350] sm:$0xff] %v700
        %717 = vst [vmem:[#allocation3 + $0x398] sm:$0xff] %v701
        %718 = vst [vmem:[#allocation3 + $0x3e0] sm:$0xff] %v702
        %719 = vst [vmem:[#allocation3 + $0x428] sm:$0xff] %v703
        %720 = vst [vmem:[#allocation3 + $0x470] sm:$0xff] %v704
        %v721 = vld [vmem:[%s450 + $0x2] sm:$0xff]
        %v722 = vld [vmem:[%s450 + $0xa] sm:$0xff]
        %v723 = vld [vmem:[%s450 + $0x1a] sm:$0xff]
        %v724 = vld [vmem:[%s450 + $0x22] sm:$0xff]
        %v725 = vld [vmem:[%s450 + $0x32] sm:$0xff]
        %v726 = vld [vmem:[%s450 + $0x3a] sm:$0xff]
        %v727 = vld [vmem:[%s450 + $0x4a] sm:$0xff]
        %v728 = vld [vmem:[%s450 + $0x52] sm:$0xff]
        %v729 = vld [vmem:[%s450 + $0x62] sm:$0xff]
        %v730 = vld [vmem:[%s450 + $0x6a] sm:$0xff]
        %v731 = vld [vmem:[%s450 + $0x7a] sm:$0xff]
        %v732 = vld [vmem:[%s450 + $0x82] sm:$0xff]
        %v733 = vld [vmem:[%s450 + $0x92] sm:$0xff]
        %v734 = vld [vmem:[%s450 + $0x9a] sm:$0xff]
        %v735 = vld [vmem:[%s450 + $0xaa] sm:$0xff]
        %v736 = vld [vmem:[%s450 + $0xb2] sm:$0xff]
        %737 = vst [vmem:[#allocation3 + $0x40] sm:$0xff] %v721
        %738 = vst [vmem:[#allocation3 + $0x88] sm:$0xff] %v722
        %739 = vst [vmem:[#allocation3 + $0xd0] sm:$0xff] %v723
        %740 = vst [vmem:[#allocation3 + $0x118] sm:$0xff] %v724
        %741 = vst [vmem:[#allocation3 + $0x160] sm:$0xff] %v725
        %742 = vst [vmem:[#allocation3 + $0x1a8] sm:$0xff] %v726
        %743 = vst [vmem:[#allocation3 + $0x1f0] sm:$0xff] %v727
        %744 = vst [vmem:[#allocation3 + $0x238] sm:$0xff] %v728
        %745 = vst [vmem:[#allocation3 + $0x280] sm:$0xff] %v729
        %746 = vst [vmem:[#allocation3 + $0x2c8] sm:$0xff] %v730
        %747 = vst [vmem:[#allocation3 + $0x310] sm:$0xff] %v731
        %748 = vst [vmem:[#allocation3 + $0x358] sm:$0xff] %v732
        %749 = vst [vmem:[#allocation3 + $0x3a0] sm:$0xff] %v733
        %750 = vst [vmem:[#allocation3 + $0x3e8] sm:$0xff] %v734
        %751 = vst [vmem:[#allocation3 + $0x430] sm:$0xff] %v735
        %752 = vst [vmem:[#allocation3 + $0x478] sm:$0xff] %v736
        %v753 = vld [vmem:[#allocation3] sm:$0xff]
        %v754 = vld [vmem:[#allocation3 + $0x8] sm:$0xff]
        %v755 = vld [vmem:[#allocation3 + $0x10] sm:$0xff]
        %v756 = vld [vmem:[#allocation3 + $0x18] sm:$0xff]
        %v757 = vld [vmem:[#allocation3 + $0x20] sm:$0xff]
        %v758 = vld [vmem:[#allocation3 + $0x28] sm:$0xff]
        %v759 = vld [vmem:[#allocation3 + $0x30] sm:$0xff]
        %v760 = vld [vmem:[#allocation3 + $0x38] sm:$0xff]
        %v761 = vld [vmem:[#allocation3 + $0x40] sm:$0xff]
        %v762 = vld [vmem:[#allocation3 + $0x48] sm:$0xff]
        %v763 = vld [vmem:[#allocation3 + $0x50] sm:$0xff]
        %v764 = vld [vmem:[#allocation3 + $0x58] sm:$0xff]
        %v765 = vld [vmem:[#allocation3 + $0x60] sm:$0xff]
        %v766 = vld [vmem:[#allocation3 + $0x68] sm:$0xff]
        %v767 = vld [vmem:[#allocation3 + $0x70] sm:$0xff]
        %v768 = vld [vmem:[#allocation3 + $0x78] sm:$0xff]
        %v769 = vld [vmem:[#allocation3 + $0x80] sm:$0xff]
        %v770 = vld [vmem:[#allocation3 + $0x88] sm:$0xff]
        %v771 = vld [vmem:[#allocation3 + $0x90] sm:$0xff]
        %v772 = vld [vmem:[#allocation3 + $0x98] sm:$0xff]
        %v773 = vld [vmem:[#allocation3 + $0xa0] sm:$0xff]
        %v774 = vld [vmem:[#allocation3 + $0xa8] sm:$0xff]
        %v775 = vld [vmem:[#allocation3 + $0xb0] sm:$0xff]
        %v776 = vld [vmem:[#allocation3 + $0xb8] sm:$0xff]
        %v777 = vld [vmem:[#allocation3 + $0xc0] sm:$0xff]
        %v778 = vld [vmem:[#allocation3 + $0xc8] sm:$0xff]
        %v779 = vld [vmem:[#allocation3 + $0xd0] sm:$0xff]
        %v780 = vld [vmem:[#allocation3 + $0xd8] sm:$0xff]
        %v781 = vld [vmem:[#allocation3 + $0xe0] sm:$0xff]
        %v782 = vld [vmem:[#allocation3 + $0xe8] sm:$0xff]
        %v783 = vld [vmem:[#allocation3 + $0xf0] sm:$0xff]
        %v784 = vld [vmem:[#allocation3 + $0xf8] sm:$0xff]
        %v785 = vld [vmem:[#allocation3 + $0x100] sm:$0xff]
        %v786 = vld [vmem:[#allocation3 + $0x108] sm:$0xff]
        %v787 = vld [vmem:[#allocation3 + $0x110] sm:$0xff]
        %v788 = vld [vmem:[#allocation3 + $0x118] sm:$0xff]
        %v789 = vld [vmem:[#allocation3 + $0x120] sm:$0xff]
        %v790 = vld [vmem:[#allocation3 + $0x128] sm:$0xff]
        %v791 = vld [vmem:[#allocation3 + $0x130] sm:$0xff]
        %v792 = vld [vmem:[#allocation3 + $0x138] sm:$0xff]
        %v793 = vld [vmem:[#allocation3 + $0x140] sm:$0xff]
        %v794 = vld [vmem:[#allocation3 + $0x148] sm:$0xff]
        %v795 = vld [vmem:[#allocation3 + $0x150] sm:$0xff]
        %v796 = vld [vmem:[#allocation3 + $0x158] sm:$0xff]
        %v797 = vld [vmem:[#allocation3 + $0x160] sm:$0xff]
        %v798 = vld [vmem:[#allocation3 + $0x168] sm:$0xff]
        %v799 = vld [vmem:[#allocation3 + $0x170] sm:$0xff]
        %v800 = vld [vmem:[#allocation3 + $0x178] sm:$0xff]
        %v801 = vld [vmem:[#allocation3 + $0x180] sm:$0xff]
        %v802 = vld [vmem:[#allocation3 + $0x188] sm:$0xff]
        %v803 = vld [vmem:[#allocation3 + $0x190] sm:$0xff]
        %v804 = vld [vmem:[#allocation3 + $0x198] sm:$0xff]
        %v805 = vld [vmem:[#allocation3 + $0x1a0] sm:$0xff]
        %v806 = vld [vmem:[#allocation3 + $0x1a8] sm:$0xff]
        %v807 = vld [vmem:[#allocation3 + $0x1b0] sm:$0xff]
        %v808 = vld [vmem:[#allocation3 + $0x1b8] sm:$0xff]
        %v809 = vld [vmem:[#allocation3 + $0x1c0] sm:$0xff]
        %v810 = vld [vmem:[#allocation3 + $0x1c8] sm:$0xff]
        %v811 = vld [vmem:[#allocation3 + $0x1d0] sm:$0xff]
        %v812 = vld [vmem:[#allocation3 + $0x1d8] sm:$0xff]
        %v813 = vld [vmem:[#allocation3 + $0x1e0] sm:$0xff]
        %v814 = vld [vmem:[#allocation3 + $0x1e8] sm:$0xff]
        %v815 = vld [vmem:[#allocation3 + $0x1f0] sm:$0xff]
        %v816 = vld [vmem:[#allocation3 + $0x1f8] sm:$0xff]
        %v817 = vld [vmem:[#allocation3 + $0x200] sm:$0xff]
        %v818 = vld [vmem:[#allocation3 + $0x208] sm:$0xff]
        %v819 = vld [vmem:[#allocation3 + $0x210] sm:$0xff]
        %v820 = vld [vmem:[#allocation3 + $0x218] sm:$0xff]
        %v821 = vld [vmem:[#allocation3 + $0x220] sm:$0xff]
        %v822 = vld [vmem:[#allocation3 + $0x228] sm:$0xff]
        %v823 = vld [vmem:[#allocation3 + $0x230] sm:$0xff]
        %v824 = vld [vmem:[#allocation3 + $0x238] sm:$0xff]
        %v825 = vld [vmem:[#allocation3 + $0x240] sm:$0xff]
        %v826 = vld [vmem:[#allocation3 + $0x248] sm:$0xff]
        %v827 = vld [vmem:[#allocation3 + $0x250] sm:$0xff]
        %v828 = vld [vmem:[#allocation3 + $0x258] sm:$0xff]
        %v829 = vld [vmem:[#allocation3 + $0x260] sm:$0xff]
        %v830 = vld [vmem:[#allocation3 + $0x268] sm:$0xff]
        %v831 = vld [vmem:[#allocation3 + $0x270] sm:$0xff]
        %v832 = vld [vmem:[#allocation3 + $0x278] sm:$0xff]
        %v833 = vld [vmem:[#allocation3 + $0x280] sm:$0xff]
        %v834 = vld [vmem:[#allocation3 + $0x288] sm:$0xff]
        %v835 = vld [vmem:[#allocation3 + $0x290] sm:$0xff]
        %v836 = vld [vmem:[#allocation3 + $0x298] sm:$0xff]
        %v837 = vld [vmem:[#allocation3 + $0x2a0] sm:$0xff]
        %v838 = vld [vmem:[#allocation3 + $0x2a8] sm:$0xff]
        %v839 = vld [vmem:[#allocation3 + $0x2b0] sm:$0xff]
        %v840 = vld [vmem:[#allocation3 + $0x2b8] sm:$0xff]
        %v841 = vld [vmem:[#allocation3 + $0x2c0] sm:$0xff]
        %v842 = vld [vmem:[#allocation3 + $0x2c8] sm:$0xff]
        %v843 = vld [vmem:[#allocation3 + $0x2d0] sm:$0xff]
        %v844 = vld [vmem:[#allocation3 + $0x2d8] sm:$0xff]
        %v845 = vld [vmem:[#allocation3 + $0x2e0] sm:$0xff]
        %v846 = vld [vmem:[#allocation3 + $0x2e8] sm:$0xff]
        %v847 = vld [vmem:[#allocation3 + $0x2f0] sm:$0xff]
        %v848 = vld [vmem:[#allocation3 + $0x2f8] sm:$0xff]
        %v849 = vld [vmem:[#allocation3 + $0x300] sm:$0xff]
        %v850 = vld [vmem:[#allocation3 + $0x308] sm:$0xff]
        %v851 = vld [vmem:[#allocation3 + $0x310] sm:$0xff]
        %v852 = vld [vmem:[#allocation3 + $0x318] sm:$0xff]
        %v853 = vld [vmem:[#allocation3 + $0x320] sm:$0xff]
        %v854 = vld [vmem:[#allocation3 + $0x328] sm:$0xff]
        %v855 = vld [vmem:[#allocation3 + $0x330] sm:$0xff]
        %v856 = vld [vmem:[#allocation3 + $0x338] sm:$0xff]
        %v857 = vld [vmem:[#allocation3 + $0x340] sm:$0xff]
        %v858 = vld [vmem:[#allocation3 + $0x348] sm:$0xff]
        %v859 = vld [vmem:[#allocation3 + $0x350] sm:$0xff]
        %v860 = vld [vmem:[#allocation3 + $0x358] sm:$0xff]
        %v861 = vld [vmem:[#allocation3 + $0x360] sm:$0xff]
        %v862 = vld [vmem:[#allocation3 + $0x368] sm:$0xff]
        %v863 = vld [vmem:[#allocation3 + $0x370] sm:$0xff]
        %v864 = vld [vmem:[#allocation3 + $0x378] sm:$0xff]
        %v865 = vld [vmem:[#allocation3 + $0x380] sm:$0xff]
        %v866 = vld [vmem:[#allocation3 + $0x388] sm:$0xff]
        %v867 = vld [vmem:[#allocation3 + $0x390] sm:$0xff]
        %v868 = vld [vmem:[#allocation3 + $0x398] sm:$0xff]
        %v869 = vld [vmem:[#allocation3 + $0x3a0] sm:$0xff]
        %v870 = vld [vmem:[#allocation3 + $0x3a8] sm:$0xff]
        %v871 = vld [vmem:[#allocation3 + $0x3b0] sm:$0xff]
        %v872 = vld [vmem:[#allocation3 + $0x3b8] sm:$0xff]
        %v873 = vld [vmem:[#allocation3 + $0x3c0] sm:$0xff]
        %v874 = vld [vmem:[#allocation3 + $0x3c8] sm:$0xff]
        %v875 = vld [vmem:[#allocation3 + $0x3d0] sm:$0xff]
        %v876 = vld [vmem:[#allocation3 + $0x3d8] sm:$0xff]
        %v877 = vld [vmem:[#allocation3 + $0x3e0] sm:$0xff]
        %v878 = vld [vmem:[#allocation3 + $0x3e8] sm:$0xff]
        %v879 = vld [vmem:[#allocation3 + $0x3f0] sm:$0xff]
        %v880 = vld [vmem:[#allocation3 + $0x3f8] sm:$0xff]
        %v881 = vld [vmem:[#allocation3 + $0x400] sm:$0xff]
        %v882 = vld [vmem:[#allocation3 + $0x408] sm:$0xff]
        %v883 = vld [vmem:[#allocation3 + $0x410] sm:$0xff]
        %v884 = vld [vmem:[#allocation3 + $0x418] sm:$0xff]
        %v885 = vld [vmem:[#allocation3 + $0x420] sm:$0xff]
        %v886 = vld [vmem:[#allocation3 + $0x428] sm:$0xff]
        %v887 = vld [vmem:[#allocation3 + $0x430] sm:$0xff]
        %v888 = vld [vmem:[#allocation3 + $0x438] sm:$0xff]
        %v889 = vld [vmem:[#allocation3 + $0x440] sm:$0xff]
        %v890 = vld [vmem:[#allocation3 + $0x448] sm:$0xff]
        %v891 = vld [vmem:[#allocation3 + $0x450] sm:$0xff]
        %v892 = vld [vmem:[#allocation3 + $0x458] sm:$0xff]
        %v893 = vld [vmem:[#allocation3 + $0x460] sm:$0xff]
        %v894 = vld [vmem:[#allocation3 + $0x468] sm:$0xff]
        %v895 = vld [vmem:[#allocation3 + $0x470] sm:$0xff]
        %v896 = vld [vmem:[#allocation3 + $0x478] sm:$0xff]
        %897 = vmatprep.subr.mxu0 0.0
        %898 = vmatpush1.msra.mxu0 %v177
        %899 = vmatprep.subr.mxu0 0.0
        %900 = vmatpush1.msra.mxu0 %v178
        %901 = vmatprep.subr.mxu0 0.0
        %902 = vmatpush1.msra.mxu0 %v179
        %903 = vmatprep.subr.mxu0 0.0
        %904 = vmatpush1.msra.mxu0 %v180
        %905 = vmatprep.subr.mxu0 0.0
        %906 = vmatpush1.msra.mxu0 %v181
        %907 = vmatprep.subr.mxu0 0.0
        %908 = vmatpush1.msra.mxu0 %v182
        %909 = vmatprep.subr.mxu0 0.0
        %910 = vmatpush1.msra.mxu0 %v183
        %911 = vmatprep.subr.mxu0 0.0
        %912 = vmatpush1.msra.mxu0 %v184
        %913 = vmatprep.subr.mxu0 0.0
        %914 = vmatpush1.msra.mxu0 %v185
        %915 = vmatprep.subr.mxu0 0.0
        %916 = vmatpush1.msra.mxu0 %v186
        %917 = vmatprep.subr.mxu0 0.0
        %918 = vmatpush1.msra.mxu0 %v187
        %919 = vmatprep.subr.mxu0 0.0
        %920 = vmatpush1.msra.mxu0 %v188
        %921 = vmatprep.subr.mxu0 0.0
        %922 = vmatpush1.msra.mxu0 %v189
        %923 = vmatprep.subr.mxu0 0.0
        %924 = vmatpush1.msra.mxu0 %v190
        %925 = vmatprep.subr.mxu0 0.0
        %926 = vmatpush1.msra.mxu0 %v191
        %927 = vmatprep.subr.mxu0 0.0
        %928 = vmatpush1.msra.mxu0 %v192
        %929 = vmatprep.subr.mxu0 0.0
        %930 = vmatpush1.msra.mxu0 %v193
        %931 = vmatprep.subr.mxu0 0.0
        %932 = vmatpush1.msra.mxu0 %v194
        %933 = vmatprep.subr.mxu0 0.0
        %934 = vmatpush1.msra.mxu0 %v195
        %935 = vmatprep.subr.mxu0 0.0
        %936 = vmatpush1.msra.mxu0 %v196
        %937 = vmatprep.subr.mxu0 0.0
        %938 = vmatpush1.msra.mxu0 %v197
        %939 = vmatprep.subr.mxu0 0.0
        %940 = vmatpush1.msra.mxu0 %v198
        %941 = vmatprep.subr.mxu0 0.0
        %942 = vmatpush1.msra.mxu0 %v199
        %943 = vmatprep.subr.mxu0 0.0
        %944 = vmatpush1.msra.mxu0 %v200
        %945 = vmatprep.subr.mxu0 0.0
        %946 = vmatpush1.msra.mxu0 %v201
        %947 = vmatprep.subr.mxu0 0.0
        %948 = vmatpush1.msra.mxu0 %v202
        %949 = vmatprep.subr.mxu0 0.0
        %950 = vmatpush1.msra.mxu0 %v203
        %951 = vmatprep.subr.mxu0 0.0
        %952 = vmatpush1.msra.mxu0 %v204
        %953 = vmatprep.subr.mxu0 0.0
        %954 = vmatpush1.msra.mxu0 %v205
        %955 = vmatprep.subr.mxu0 0.0
        %956 = vmatpush1.msra.mxu0 %v206
        %957 = vmatprep.subr.mxu0 0.0
        %958 = vmatpush1.msra.mxu0 %v207
        %959 = vmatprep.subr.mxu0 0.0
        %960 = vmatpush1.msra.mxu0 %v208
        %961 = vmatprep.mubr.f32.mxu0 %v754
        %962 = vmatmul.mubr.f32.gmra.mrb[0].mxu0 %v753
        %v963 = vpop.f32.mrb[0].mxu0
        %v964 = vadd.f32 0.0, %v963
        %v965 = vpop.f32.mrb[0].mxu0
        %966 = vmatprep.mubr.f32.mxu0 %v763
        %967 = vmatmul.mubr.f32.gmra.mrb[0].mxu0 %v762
        %v968 = vpop.f32.mrb[0].mxu0
        %v969 = vadd.f32 0.0, %v968
        %v970 = vpop.f32.mrb[0].mxu0
        %971 = vmatprep.mubr.f32.mxu0 %v772
        %972 = vmatmul.mubr.f32.gmra.mrb[0].mxu0 %v771
        %v973 = vpop.f32.mrb[0].mxu0
        %v974 = vadd.f32 0.0, %v973
        %v975 = vpop.f32.mrb[0].mxu0
        %976 = vmatprep.mubr.f32.mxu0 %v781
        %977 = vmatmul.mubr.f32.gmra.mrb[0].mxu0 %v780
        %v978 = vpop.f32.mrb[0].mxu0
        %v979 = vadd.f32 0.0, %v978
        %v980 = vpop.f32.mrb[0].mxu0
        %981 = vmatprep.mubr.f32.mxu0 %v790
        %982 = vmatmul.mubr.f32.gmra.mrb[0].mxu0 %v789
        %v983 = vpop.f32.mrb[0].mxu0
        %v984 = vadd.f32 0.0, %v983
        %v985 = vpop.f32.mrb[0].mxu0
        %986 = vmatprep.mubr.f32.mxu0 %v799
        %987 = vmatmul.mubr.f32.gmra.mrb[0].mxu0 %v798
        %v988 = vpop.f32.mrb[0].mxu0
        %v989 = vadd.f32 0.0, %v988
        %v990 = vpop.f32.mrb[0].mxu0
        %991 = vmatprep.mubr.f32.mxu0 %v808
        %992 = vmatmul.mubr.f32.gmra.mrb[0].mxu0 %v807
        %v993 = vpop.f32.mrb[0].mxu0
        %v994 = vadd.f32 0.0, %v993
        %v995 = vpop.f32.mrb[0].mxu0
        %996 = vmatprep.mubr.f32.mxu0 %v817
        %997 = vmatmul.mubr.f32.gmra.mrb[0].mxu0 %v816
        %v998 = vpop.f32.mrb[0].mxu0
        %v999 = vadd.f32 0.0, %v998
        %v1000 = vpop.f32.mrb[0].mxu0
        %1001 = vmatprep.mubr.f32.mxu0 %v826
        %1002 = vmatmul.mubr.f32.gmra.mrb[0].mxu0 %v825
        %v1003 = vpop.f32.mrb[0].mxu0
        %v1004 = vadd.f32 0.0, %v1003
        %v1005 = vpop.f32.mrb[0].mxu0
        %1006 = vmatprep.mubr.f32.mxu0 %v835
        %1007 = vmatmul.mubr.f32.gmra.mrb[0].mxu0 %v834
        %v1008 = vpop.f32.mrb[0].mxu0
        %v1009 = vadd.f32 0.0, %v1008
        %v1010 = vpop.f32.mrb[0].mxu0
        %1011 = vmatprep.mubr.f32.mxu0 %v844
        %1012 = vmatmul.mubr.f32.gmra.mrb[0].mxu0 %v843
        %v1013 = vpop.f32.mrb[0].mxu0
        %v1014 = vadd.f32 0.0, %v1013
        %v1015 = vpop.f32.mrb[0].mxu0
        %1016 = vmatprep.mubr.f32.mxu0 %v853
        %1017 = vmatmul.mubr.f32.gmra.mrb[0].mxu0 %v852
        %v1018 = vpop.f32.mrb[0].mxu0
        %v1019 = vadd.f32 0.0, %v1018
        %v1020 = vpop.f32.mrb[0].mxu0
        %1021 = vmatprep.mubr.f32.mxu0 %v862
        %1022 = vmatmul.mubr.f32.gmra.mrb[0].mxu0 %v861
        %v1023 = vpop.f32.mrb[0].mxu0
        %v1024 = vadd.f32 0.0, %v1023
        %v1025 = vpop.f32.mrb[0].mxu0
        %1026 = vmatprep.mubr.f32.mxu0 %v871
        %1027 = vmatmul.mubr.f32.gmra.mrb[0].mxu0 %v870
        %v1028 = vpop.f32.mrb[0].mxu0
        %v1029 = vadd.f32 0.0, %v1028
        %v1030 = vpop.f32.mrb[0].mxu0
        %1031 = vmatprep.mubr.f32.mxu0 %v880
        %1032 = vmatmul.mubr.f32.gmra.mrb[0].mxu0 %v879
        %v1033 = vpop.f32.mrb[0].mxu0
        %v1034 = vadd.f32 0.0, %v1033
        %v1035 = vpop.f32.mrb[0].mxu0
        %1036 = vmatprep.mubr.f32.mxu0 %v889
        %1037 = vmatmul.mubr.f32.gmra.mrb[0].mxu0 %v888
        %v1038 = vpop.f32.mrb[0].mxu0
        %v1039 = vadd.f32 0.0, %v1038
        %v1040 = vpop.f32.mrb[0].mxu0
        %1041 = vdwg.mxu0
        %1042 = vmatprep.subr.mxu0 0.0
        %1043 = vmatpush1.msra.mxu0 %v209
        %1044 = vmatprep.subr.mxu0 0.0
        %1045 = vmatpush1.msra.mxu0 %v210
        %1046 = vmatprep.subr.mxu0 0.0
        %1047 = vmatpush1.msra.mxu0 %v211
        %1048 = vmatprep.subr.mxu0 0.0
        %1049 = vmatpush1.msra.mxu0 %v212
        %1050 = vmatprep.subr.mxu0 0.0
        %1051 = vmatpush1.msra.mxu0 %v213
        %1052 = vmatprep.subr.mxu0 0.0
        %1053 = vmatpush1.msra.mxu0 %v214
        %1054 = vmatprep.subr.mxu0 0.0
        %1055 = vmatpush1.msra.mxu0 %v215
        %1056 = vmatprep.subr.mxu0 0.0
        %1057 = vmatpush1.msra.mxu0 %v216
        %1058 = vmatprep.subr.mxu0 0.0
        %1059 = vmatpush1.msra.mxu0 %v217
        %1060 = vmatprep.subr.mxu0 0.0
        %1061 = vmatpush1.msra.mxu0 %v218
        %1062 = vmatprep.subr.mxu0 0.0
        %1063 = vmatpush1.msra.mxu0 %v219
        %1064 = vmatprep.subr.mxu0 0.0
        %1065 = vmatpush1.msra.mxu0 %v220
        %1066 = vmatprep.subr.mxu0 0.0
        %1067 = vmatpush1.msra.mxu0 %v221
        %1068 = vmatprep.subr.mxu0 0.0
        %1069 = vmatpush1.msra.mxu0 %v222
        %1070 = vmatprep.subr.mxu0 0.0
        %1071 = vmatpush1.msra.mxu0 %v223
        %1072 = vmatprep.subr.mxu0 0.0
        %1073 = vmatpush1.msra.mxu0 %v224
        %1074 = vmatprep.subr.mxu0 0.0
        %1075 = vmatpush1.msra.mxu0 %v225
        %1076 = vmatprep.subr.mxu0 0.0
        %1077 = vmatpush1.msra.mxu0 %v226
        %1078 = vmatprep.subr.mxu0 0.0
        %1079 = vmatpush1.msra.mxu0 %v227
        %1080 = vmatprep.subr.mxu0 0.0
        %1081 = vmatpush1.msra.mxu0 %v228
        %1082 = vmatprep.subr.mxu0 0.0
        %1083 = vmatpush1.msra.mxu0 %v229
        %1084 = vmatprep.subr.mxu0 0.0
        %1085 = vmatpush1.msra.mxu0 %v230
        %1086 = vmatprep.subr.mxu0 0.0
        %1087 = vmatpush1.msra.mxu0 %v231
        %1088 = vmatprep.subr.mxu0 0.0
        %1089 = vmatpush1.msra.mxu0 %v232
        %1090 = vmatprep.subr.mxu0 0.0
        %1091 = vmatpush1.msra.mxu0 %v233
        %1092 = vmatprep.subr.mxu0 0.0
        %1093 = vmatpush1.msra.mxu0 %v234
        %1094 = vmatprep.subr.mxu0 0.0
        %1095 = vmatpush1.msra.mxu0 %v235
        %1096 = vmatprep.subr.mxu0 0.0
        %1097 = vmatpush1.msra.mxu0 %v236
        %1098 = vmatprep.subr.mxu0 0.0
        %1099 = vmatpush1.msra.mxu0 %v237
        %1100 = vmatprep.subr.mxu0 0.0
        %1101 = vmatpush1.msra.mxu0 %v238
        %1102 = vmatprep.subr.mxu0 0.0
        %1103 = vmatpush1.msra.mxu0 %v239
        %1104 = vmatprep.subr.mxu0 0.0
        %1105 = vmatpush1.msra.mxu0 %v240
        %1106 = vmatprep.mubr.f32.mxu0 %v756
        %1107 = vmatmul.mubr.f32.gmra.mrb[0].mxu0 %v755
        %v1108 = vpop.f32.mrb[0].mxu0
        %v1109 = vadd.f32 %v964, %v1108
        %v1110 = vpop.f32.mrb[0].mxu0
        %1111 = vmatprep.mubr.f32.mxu0 %v765
        %1112 = vmatmul.mubr.f32.gmra.mrb[0].mxu0 %v764
        %v1113 = vpop.f32.mrb[0].mxu0
        %v1114 = vadd.f32 %v969, %v1113
        %v1115 = vpop.f32.mrb[0].mxu0
        %1116 = vmatprep.mubr.f32.mxu0 %v774
        %1117 = vmatmul.mubr.f32.gmra.mrb[0].mxu0 %v773
        %v1118 = vpop.f32.mrb[0].mxu0
        %v1119 = vadd.f32 %v974, %v1118
        %v1120 = vpop.f32.mrb[0].mxu0
        %1121 = vmatprep.mubr.f32.mxu0 %v783
        %1122 = vmatmul.mubr.f32.gmra.mrb[0].mxu0 %v782
        %v1123 = vpop.f32.mrb[0].mxu0
        %v1124 = vadd.f32 %v979, %v1123
        %v1125 = vpop.f32.mrb[0].mxu0
        %1126 = vmatprep.mubr.f32.mxu0 %v792
        %1127 = vmatmul.mubr.f32.gmra.mrb[0].mxu0 %v791
        %v1128 = vpop.f32.mrb[0].mxu0
        %v1129 = vadd.f32 %v984, %v1128
        %v1130 = vpop.f32.mrb[0].mxu0
        %1131 = vmatprep.mubr.f32.mxu0 %v801
        %1132 = vmatmul.mubr.f32.gmra.mrb[0].mxu0 %v800
        %v1133 = vpop.f32.mrb[0].mxu0
        %v1134 = vadd.f32 %v989, %v1133
        %v1135 = vpop.f32.mrb[0].mxu0
        %1136 = vmatprep.mubr.f32.mxu0 %v810
        %1137 = vmatmul.mubr.f32.gmra.mrb[0].mxu0 %v809
        %v1138 = vpop.f32.mrb[0].mxu0
        %v1139 = vadd.f32 %v994, %v1138
        %v1140 = vpop.f32.mrb[0].mxu0
        %1141 = vmatprep.mubr.f32.mxu0 %v819
        %1142 = vmatmul.mubr.f32.gmra.mrb[0].mxu0 %v818
        %v1143 = vpop.f32.mrb[0].mxu0
        %v1144 = vadd.f32 %v999, %v1143
        %v1145 = vpop.f32.mrb[0].mxu0
        %1146 = vmatprep.mubr.f32.mxu0 %v828
        %1147 = vmatmul.mubr.f32.gmra.mrb[0].mxu0 %v827
        %v1148 = vpop.f32.mrb[0].mxu0
        %v1149 = vadd.f32 %v1004, %v1148
        %v1150 = vpop.f32.mrb[0].mxu0
        %1151 = vmatprep.mubr.f32.mxu0 %v837
        %1152 = vmatmul.mubr.f32.gmra.mrb[0].mxu0 %v836
        %v1153 = vpop.f32.mrb[0].mxu0
        %v1154 = vadd.f32 %v1009, %v1153
        %v1155 = vpop.f32.mrb[0].mxu0
        %1156 = vmatprep.mubr.f32.mxu0 %v846
        %1157 = vmatmul.mubr.f32.gmra.mrb[0].mxu0 %v845
        %v1158 = vpop.f32.mrb[0].mxu0
        %v1159 = vadd.f32 %v1014, %v1158
        %v1160 = vpop.f32.mrb[0].mxu0
        %1161 = vmatprep.mubr.f32.mxu0 %v855
        %1162 = vmatmul.mubr.f32.gmra.mrb[0].mxu0 %v854
        %v1163 = vpop.f32.mrb[0].mxu0
        %v1164 = vadd.f32 %v1019, %v1163
        %v1165 = vpop.f32.mrb[0].mxu0
        %1166 = vmatprep.mubr.f32.mxu0 %v864
        %1167 = vmatmul.mubr.f32.gmra.mrb[0].mxu0 %v863
        %v1168 = vpop.f32.mrb[0].mxu0
        %v1169 = vadd.f32 %v1024, %v1168
        %v1170 = vpop.f32.mrb[0].mxu0
        %1171 = vmatprep.mubr.f32.mxu0 %v873
        %1172 = vmatmul.mubr.f32.gmra.mrb[0].mxu0 %v872
        %v1173 = vpop.f32.mrb[0].mxu0
        %v1174 = vadd.f32 %v1029, %v1173
        %v1175 = vpop.f32.mrb[0].mxu0
        %1176 = vmatprep.mubr.f32.mxu0 %v882
        %1177 = vmatmul.mubr.f32.gmra.mrb[0].mxu0 %v881
        %v1178 = vpop.f32.mrb[0].mxu0
        %v1179 = vadd.f32 %v1034, %v1178
        %v1180 = vpop.f32.mrb[0].mxu0
        %1181 = vmatprep.mubr.f32.mxu0 %v891
        %1182 = vmatmul.mubr.f32.gmra.mrb[0].mxu0 %v890
        %v1183 = vpop.f32.mrb[0].mxu0
        %v1184 = vadd.f32 %v1039, %v1183
        %v1185 = vpop.f32.mrb[0].mxu0
        %1186 = vdwg.mxu0
        %1187 = vmatprep.subr.mxu0 0.0
        %1188 = vmatpush1.msra.mxu0 %v241
        %1189 = vmatprep.subr.mxu0 0.0
        %1190 = vmatpush1.msra.mxu0 %v242
        %1191 = vmatprep.subr.mxu0 0.0
        %1192 = vmatpush1.msra.mxu0 %v243
        %1193 = vmatprep.subr.mxu0 0.0
        %1194 = vmatpush1.msra.mxu0 %v244
        %1195 = vmatprep.subr.mxu0 0.0
        %1196 = vmatpush1.msra.mxu0 %v245
        %1197 = vmatprep.subr.mxu0 0.0
        %1198 = vmatpush1.msra.mxu0 %v246
        %1199 = vmatprep.subr.mxu0 0.0
        %1200 = vmatpush1.msra.mxu0 %v247
        %1201 = vmatprep.subr.mxu0 0.0
        %1202 = vmatpush1.msra.mxu0 %v248
        %1203 = vmatprep.subr.mxu0 0.0
        %1204 = vmatpush1.msra.mxu0 %v249
        %1205 = vmatprep.subr.mxu0 0.0
        %1206 = vmatpush1.msra.mxu0 %v250
        %1207 = vmatprep.subr.mxu0 0.0
        %1208 = vmatpush1.msra.mxu0 %v251
        %1209 = vmatprep.subr.mxu0 0.0
        %1210 = vmatpush1.msra.mxu0 %v252
        %1211 = vmatprep.subr.mxu0 0.0
        %1212 = vmatpush1.msra.mxu0 %v253
        %1213 = vmatprep.subr.mxu0 0.0
        %1214 = vmatpush1.msra.mxu0 %v254
        %1215 = vmatprep.subr.mxu0 0.0
        %1216 = vmatpush1.msra.mxu0 %v255
        %1217 = vmatprep.subr.mxu0 0.0
        %1218 = vmatpush1.msra.mxu0 %v256
        %1219 = vmatprep.subr.mxu0 0.0
        %1220 = vmatpush1.msra.mxu0 %v257
        %1221 = vmatprep.subr.mxu0 0.0
        %1222 = vmatpush1.msra.mxu0 %v258
        %1223 = vmatprep.subr.mxu0 0.0
        %1224 = vmatpush1.msra.mxu0 %v259
        %1225 = vmatprep.subr.mxu0 0.0
        %1226 = vmatpush1.msra.mxu0 %v260
        %1227 = vmatprep.subr.mxu0 0.0
        %1228 = vmatpush1.msra.mxu0 %v261
        %1229 = vmatprep.subr.mxu0 0.0
        %1230 = vmatpush1.msra.mxu0 %v262
        %1231 = vmatprep.subr.mxu0 0.0
        %1232 = vmatpush1.msra.mxu0 %v263
        %1233 = vmatprep.subr.mxu0 0.0
        %1234 = vmatpush1.msra.mxu0 %v264
        %1235 = vmatprep.subr.mxu0 0.0
        %1236 = vmatpush1.msra.mxu0 %v265
        %1237 = vmatprep.subr.mxu0 0.0
        %1238 = vmatpush1.msra.mxu0 %v266
        %1239 = vmatprep.subr.mxu0 0.0
        %1240 = vmatpush1.msra.mxu0 %v267
        %1241 = vmatprep.subr.mxu0 0.0
        %1242 = vmatpush1.msra.mxu0 %v268
        %1243 = vmatprep.subr.mxu0 0.0
        %1244 = vmatpush1.msra.mxu0 %v269
        %1245 = vmatprep.subr.mxu0 0.0
        %1246 = vmatpush1.msra.mxu0 %v270
        %1247 = vmatprep.subr.mxu0 0.0
        %1248 = vmatpush1.msra.mxu0 %v271
        %1249 = vmatprep.subr.mxu0 0.0
        %1250 = vmatpush1.msra.mxu0 %v272
        %1251 = vmatprep.mubr.f32.mxu0 %v758
        %1252 = vmatmul.mubr.f32.gmra.mrb[0].mxu0 %v757
        %v1253 = vpop.f32.mrb[0].mxu0
        %v1254 = vadd.f32 %v1109, %v1253
        %v1255 = vpop.f32.mrb[0].mxu0
        %1256 = vmatprep.mubr.f32.mxu0 %v767
        %1257 = vmatmul.mubr.f32.gmra.mrb[0].mxu0 %v766
        %v1258 = vpop.f32.mrb[0].mxu0
        %v1259 = vadd.f32 %v1114, %v1258
        %v1260 = vpop.f32.mrb[0].mxu0
        %1261 = vmatprep.mubr.f32.mxu0 %v776
        %1262 = vmatmul.mubr.f32.gmra.mrb[0].mxu0 %v775
        %v1263 = vpop.f32.mrb[0].mxu0
        %v1264 = vadd.f32 %v1119, %v1263
        %v1265 = vpop.f32.mrb[0].mxu0
        %1266 = vmatprep.mubr.f32.mxu0 %v785
        %1267 = vmatmul.mubr.f32.gmra.mrb[0].mxu0 %v784
        %v1268 = vpop.f32.mrb[0].mxu0
        %v1269 = vadd.f32 %v1124, %v1268
        %v1270 = vpop.f32.mrb[0].mxu0
        %1271 = vmatprep.mubr.f32.mxu0 %v794
        %1272 = vmatmul.mubr.f32.gmra.mrb[0].mxu0 %v793
        %v1273 = vpop.f32.mrb[0].mxu0
        %v1274 = vadd.f32 %v1129, %v1273
        %v1275 = vpop.f32.mrb[0].mxu0
        %1276 = vmatprep.mubr.f32.mxu0 %v803
        %1277 = vmatmul.mubr.f32.gmra.mrb[0].mxu0 %v802
        %v1278 = vpop.f32.mrb[0].mxu0
        %v1279 = vadd.f32 %v1134, %v1278
        %v1280 = vpop.f32.mrb[0].mxu0
        %1281 = vmatprep.mubr.f32.mxu0 %v812
        %1282 = vmatmul.mubr.f32.gmra.mrb[0].mxu0 %v811
        %v1283 = vpop.f32.mrb[0].mxu0
        %v1284 = vadd.f32 %v1139, %v1283
        %v1285 = vpop.f32.mrb[0].mxu0
        %1286 = vmatprep.mubr.f32.mxu0 %v821
        %1287 = vmatmul.mubr.f32.gmra.mrb[0].mxu0 %v820
        %v1288 = vpop.f32.mrb[0].mxu0
        %v1289 = vadd.f32 %v1144, %v1288
        %v1290 = vpop.f32.mrb[0].mxu0
        %1291 = vmatprep.mubr.f32.mxu0 %v830
        %1292 = vmatmul.mubr.f32.gmra.mrb[0].mxu0 %v829
        %v1293 = vpop.f32.mrb[0].mxu0
        %v1294 = vadd.f32 %v1149, %v1293
        %v1295 = vpop.f32.mrb[0].mxu0
        %1296 = vmatprep.mubr.f32.mxu0 %v839
        %1297 = vmatmul.mubr.f32.gmra.mrb[0].mxu0 %v838
        %v1298 = vpop.f32.mrb[0].mxu0
        %v1299 = vadd.f32 %v1154, %v1298
        %v1300 = vpop.f32.mrb[0].mxu0
        %1301 = vmatprep.mubr.f32.mxu0 %v848
        %1302 = vmatmul.mubr.f32.gmra.mrb[0].mxu0 %v847
        %v1303 = vpop.f32.mrb[0].mxu0
        %v1304 = vadd.f32 %v1159, %v1303
        %v1305 = vpop.f32.mrb[0].mxu0
        %1306 = vmatprep.mubr.f32.mxu0 %v857
        %1307 = vmatmul.mubr.f32.gmra.mrb[0].mxu0 %v856
        %v1308 = vpop.f32.mrb[0].mxu0
        %v1309 = vadd.f32 %v1164, %v1308
        %v1310 = vpop.f32.mrb[0].mxu0
        %1311 = vmatprep.mubr.f32.mxu0 %v866
        %1312 = vmatmul.mubr.f32.gmra.mrb[0].mxu0 %v865
        %v1313 = vpop.f32.mrb[0].mxu0
        %v1314 = vadd.f32 %v1169, %v1313
        %v1315 = vpop.f32.mrb[0].mxu0
        %1316 = vmatprep.mubr.f32.mxu0 %v875
        %1317 = vmatmul.mubr.f32.gmra.mrb[0].mxu0 %v874
        %v1318 = vpop.f32.mrb[0].mxu0
        %v1319 = vadd.f32 %v1174, %v1318
        %v1320 = vpop.f32.mrb[0].mxu0
        %1321 = vmatprep.mubr.f32.mxu0 %v884
        %1322 = vmatmul.mubr.f32.gmra.mrb[0].mxu0 %v883
        %v1323 = vpop.f32.mrb[0].mxu0
        %v1324 = vadd.f32 %v1179, %v1323
        %v1325 = vpop.f32.mrb[0].mxu0
        %1326 = vmatprep.mubr.f32.mxu0 %v893
        %1327 = vmatmul.mubr.f32.gmra.mrb[0].mxu0 %v892
        %v1328 = vpop.f32.mrb[0].mxu0
        %v1329 = vadd.f32 %v1184, %v1328
        %v1330 = vpop.f32.mrb[0].mxu0
        %1331 = vdwg.mxu0
        %1332 = vmatprep.subr.mxu0 0.0
        %1333 = vmatpush1.msra.mxu0 %v273
        %1334 = vmatprep.subr.mxu0 0.0
        %1335 = vmatpush1.msra.mxu0 %v274
        %1336 = vmatprep.subr.mxu0 0.0
        %1337 = vmatpush1.msra.mxu0 %v275
        %1338 = vmatprep.subr.mxu0 0.0
        %1339 = vmatpush1.msra.mxu0 %v276
        %1340 = vmatprep.subr.mxu0 0.0
        %1341 = vmatpush1.msra.mxu0 %v277
        %1342 = vmatprep.subr.mxu0 0.0
        %1343 = vmatpush1.msra.mxu0 %v278
        %1344 = vmatprep.subr.mxu0 0.0
        %1345 = vmatpush1.msra.mxu0 %v279
        %1346 = vmatprep.subr.mxu0 0.0
        %1347 = vmatpush1.msra.mxu0 %v280
        %1348 = vmatprep.subr.mxu0 0.0
        %1349 = vmatpush1.msra.mxu0 %v281
        %1350 = vmatprep.subr.mxu0 0.0
        %1351 = vmatpush1.msra.mxu0 %v282
        %1352 = vmatprep.subr.mxu0 0.0
        %1353 = vmatpush1.msra.mxu0 %v283
        %1354 = vmatprep.subr.mxu0 0.0
        %1355 = vmatpush1.msra.mxu0 %v284
        %1356 = vmatprep.subr.mxu0 0.0
        %1357 = vmatpush1.msra.mxu0 %v285
        %1358 = vmatprep.subr.mxu0 0.0
        %1359 = vmatpush1.msra.mxu0 %v286
        %1360 = vmatprep.subr.mxu0 0.0
        %1361 = vmatpush1.msra.mxu0 %v287
        %1362 = vmatprep.subr.mxu0 0.0
        %1363 = vmatpush1.msra.mxu0 %v288
        %1364 = vmatprep.subr.mxu0 0.0
        %1365 = vmatpush1.msra.mxu0 %v289
        %1366 = vmatprep.subr.mxu0 0.0
        %1367 = vmatpush1.msra.mxu0 %v290
        %1368 = vmatprep.subr.mxu0 0.0
        %1369 = vmatpush1.msra.mxu0 %v291
        %1370 = vmatprep.subr.mxu0 0.0
        %1371 = vmatpush1.msra.mxu0 %v292
        %1372 = vmatprep.subr.mxu0 0.0
        %1373 = vmatpush1.msra.mxu0 %v293
        %1374 = vmatprep.subr.mxu0 0.0
        %1375 = vmatpush1.msra.mxu0 %v294
        %1376 = vmatprep.subr.mxu0 0.0
        %1377 = vmatpush1.msra.mxu0 %v295
        %1378 = vmatprep.subr.mxu0 0.0
        %1379 = vmatpush1.msra.mxu0 %v296
        %1380 = vmatprep.subr.mxu0 0.0
        %1381 = vmatpush1.msra.mxu0 %v297
        %1382 = vmatprep.subr.mxu0 0.0
        %1383 = vmatpush1.msra.mxu0 %v298
        %1384 = vmatprep.subr.mxu0 0.0
        %1385 = vmatpush1.msra.mxu0 %v299
        %1386 = vmatprep.subr.mxu0 0.0
        %1387 = vmatpush1.msra.mxu0 %v300
        %1388 = vmatprep.subr.mxu0 0.0
        %1389 = vmatpush1.msra.mxu0 %v301
        %1390 = vmatprep.subr.mxu0 0.0
        %1391 = vmatpush1.msra.mxu0 %v302
        %1392 = vmatprep.subr.mxu0 0.0
        %1393 = vmatpush1.msra.mxu0 %v303
        %1394 = vmatprep.subr.mxu0 0.0
        %1395 = vmatpush1.msra.mxu0 %v304
        %1396 = vmatprep.mubr.f32.mxu0 %v760
        %1397 = vmatmul.mubr.f32.gmra.mrb[0].mxu0 %v759
        %v1398 = vpop.f32.mrb[0].mxu0
        %v1399 = vadd.f32 %v1254, %v1398
        %v1400 = vpop.f32.mrb[0].mxu0
        %1401 = vmatprep.mubr.f32.mxu0 %v769
        %1402 = vmatmul.mubr.f32.gmra.mrb[0].mxu0 %v768
        %v1403 = vpop.f32.mrb[0].mxu0
        %v1404 = vadd.f32 %v1259, %v1403
        %v1405 = vpop.f32.mrb[0].mxu0
        %1406 = vmatprep.mubr.f32.mxu0 %v778
        %1407 = vmatmul.mubr.f32.gmra.mrb[0].mxu0 %v777
        %v1408 = vpop.f32.mrb[0].mxu0
        %v1409 = vadd.f32 %v1264, %v1408
        %v1410 = vpop.f32.mrb[0].mxu0
        %1411 = vmatprep.mubr.f32.mxu0 %v787
        %1412 = vmatmul.mubr.f32.gmra.mrb[0].mxu0 %v786
        %v1413 = vpop.f32.mrb[0].mxu0
        %v1414 = vadd.f32 %v1269, %v1413
        %v1415 = vpop.f32.mrb[0].mxu0
        %1416 = vmatprep.mubr.f32.mxu0 %v796
        %1417 = vmatmul.mubr.f32.gmra.mrb[0].mxu0 %v795
        %v1418 = vpop.f32.mrb[0].mxu0
        %v1419 = vadd.f32 %v1274, %v1418
        %v1420 = vpop.f32.mrb[0].mxu0
        %1421 = vmatprep.mubr.f32.mxu0 %v805
        %1422 = vmatmul.mubr.f32.gmra.mrb[0].mxu0 %v804
        %v1423 = vpop.f32.mrb[0].mxu0
        %v1424 = vadd.f32 %v1279, %v1423
        %v1425 = vpop.f32.mrb[0].mxu0
        %1426 = vmatprep.mubr.f32.mxu0 %v814
        %1427 = vmatmul.mubr.f32.gmra.mrb[0].mxu0 %v813
        %v1428 = vpop.f32.mrb[0].mxu0
        %v1429 = vadd.f32 %v1284, %v1428
        %v1430 = vpop.f32.mrb[0].mxu0
        %1431 = vmatprep.mubr.f32.mxu0 %v823
        %1432 = vmatmul.mubr.f32.gmra.mrb[0].mxu0 %v822
        %v1433 = vpop.f32.mrb[0].mxu0
        %v1434 = vadd.f32 %v1289, %v1433
        %v1435 = vpop.f32.mrb[0].mxu0
        %1436 = vmatprep.mubr.f32.mxu0 %v832
        %1437 = vmatmul.mubr.f32.gmra.mrb[0].mxu0 %v831
        %v1438 = vpop.f32.mrb[0].mxu0
        %v1439 = vadd.f32 %v1294, %v1438
        %v1440 = vpop.f32.mrb[0].mxu0
        %1441 = vmatprep.mubr.f32.mxu0 %v841
        %1442 = vmatmul.mubr.f32.gmra.mrb[0].mxu0 %v840
        %v1443 = vpop.f32.mrb[0].mxu0
        %v1444 = vadd.f32 %v1299, %v1443
        %v1445 = vpop.f32.mrb[0].mxu0
        %1446 = vmatprep.mubr.f32.mxu0 %v850
        %1447 = vmatmul.mubr.f32.gmra.mrb[0].mxu0 %v849
        %v1448 = vpop.f32.mrb[0].mxu0
        %v1449 = vadd.f32 %v1304, %v1448
        %v1450 = vpop.f32.mrb[0].mxu0
        %1451 = vmatprep.mubr.f32.mxu0 %v859
        %1452 = vmatmul.mubr.f32.gmra.mrb[0].mxu0 %v858
        %v1453 = vpop.f32.mrb[0].mxu0
        %v1454 = vadd.f32 %v1309, %v1453
        %v1455 = vpop.f32.mrb[0].mxu0
        %1456 = vmatprep.mubr.f32.mxu0 %v868
        %1457 = vmatmul.mubr.f32.gmra.mrb[0].mxu0 %v867
        %v1458 = vpop.f32.mrb[0].mxu0
        %v1459 = vadd.f32 %v1314, %v1458
        %v1460 = vpop.f32.mrb[0].mxu0
        %1461 = vmatprep.mubr.f32.mxu0 %v877
        %1462 = vmatmul.mubr.f32.gmra.mrb[0].mxu0 %v876
        %v1463 = vpop.f32.mrb[0].mxu0
        %v1464 = vadd.f32 %v1319, %v1463
        %v1465 = vpop.f32.mrb[0].mxu0
        %1466 = vmatprep.mubr.f32.mxu0 %v886
        %1467 = vmatmul.mubr.f32.gmra.mrb[0].mxu0 %v885
        %v1468 = vpop.f32.mrb[0].mxu0
        %v1469 = vadd.f32 %v1324, %v1468
        %v1470 = vpop.f32.mrb[0].mxu0
        %1471 = vmatprep.mubr.f32.mxu0 %v895
        %1472 = vmatmul.mubr.f32.gmra.mrb[0].mxu0 %v894
        %v1473 = vpop.f32.mrb[0].mxu0
        %v1474 = vadd.f32 %v1329, %v1473
        %v1475 = vpop.f32.mrb[0].mxu0
        %1476 = vdwg.mxu0
        %1477 = vmatprep.subr.mxu0 0.0
        %1478 = vmatpush1.msra.mxu0 %v305
        %1479 = vmatprep.subr.mxu0 0.0
        %1480 = vmatpush1.msra.mxu0 %v306
        %1481 = vmatprep.subr.mxu0 0.0
        %1482 = vmatpush1.msra.mxu0 %v307
        %1483 = vmatprep.subr.mxu0 0.0
        %1484 = vmatpush1.msra.mxu0 %v308
        %1485 = vmatprep.subr.mxu0 0.0
        %1486 = vmatpush1.msra.mxu0 %v309
        %1487 = vmatprep.subr.mxu0 0.0
        %1488 = vmatpush1.msra.mxu0 %v310
        %1489 = vmatprep.subr.mxu0 0.0
        %1490 = vmatpush1.msra.mxu0 %v311
        %1491 = vmatprep.subr.mxu0 0.0
        %1492 = vmatpush1.msra.mxu0 %v312
        %1493 = vmatprep.subr.mxu0 0.0
        %1494 = vmatpush1.msra.mxu0 %v313
        %1495 = vmatprep.subr.mxu0 0.0
        %1496 = vmatpush1.msra.mxu0 %v314
        %1497 = vmatprep.subr.mxu0 0.0
        %1498 = vmatpush1.msra.mxu0 %v315
        %1499 = vmatprep.subr.mxu0 0.0
        %1500 = vmatpush1.msra.mxu0 %v316
        %1501 = vmatprep.subr.mxu0 0.0
        %1502 = vmatpush1.msra.mxu0 %v317
        %1503 = vmatprep.subr.mxu0 0.0
        %1504 = vmatpush1.msra.mxu0 %v318
        %1505 = vmatprep.subr.mxu0 0.0
        %1506 = vmatpush1.msra.mxu0 %v319
        %1507 = vmatprep.subr.mxu0 0.0
        %1508 = vmatpush1.msra.mxu0 %v320
        %1509 = vmatprep.subr.mxu0 0.0
        %1510 = vmatpush1.msra.mxu0 0.0
        %1511 = vmatprep.subr.mxu0 0.0
        %1512 = vmatpush1.msra.mxu0 0.0
        %1513 = vmatprep.subr.mxu0 0.0
        %1514 = vmatpush1.msra.mxu0 0.0
        %1515 = vmatprep.subr.mxu0 0.0
        %1516 = vmatpush1.msra.mxu0 0.0
        %1517 = vmatprep.subr.mxu0 0.0
        %1518 = vmatpush1.msra.mxu0 0.0
        %1519 = vmatprep.subr.mxu0 0.0
        %1520 = vmatpush1.msra.mxu0 0.0
        %1521 = vmatprep.subr.mxu0 0.0
        %1522 = vmatpush1.msra.mxu0 0.0
        %1523 = vmatprep.subr.mxu0 0.0
        %1524 = vmatpush1.msra.mxu0 0.0
        %1525 = vmatprep.subr.mxu0 0.0
        %1526 = vmatpush1.msra.mxu0 0.0
        %1527 = vmatprep.subr.mxu0 0.0
        %1528 = vmatpush1.msra.mxu0 0.0
        %1529 = vmatprep.subr.mxu0 0.0
        %1530 = vmatpush1.msra.mxu0 0.0
        %1531 = vmatprep.subr.mxu0 0.0
        %1532 = vmatpush1.msra.mxu0 0.0
        %1533 = vmatprep.subr.mxu0 0.0
        %1534 = vmatpush1.msra.mxu0 0.0
        %1535 = vmatprep.subr.mxu0 0.0
        %1536 = vmatpush1.msra.mxu0 0.0
        %1537 = vmatprep.subr.mxu0 0.0
        %1538 = vmatpush1.msra.mxu0 0.0
        %1539 = vmatprep.subr.mxu0 0.0
        %1540 = vmatpush1.msra.mxu0 0.0
        %1541 = vmatprep.mubr.f32.mxu0 0.0
        %1542 = vmatmul.mubr.f32.gmra.mrb[0].mxu0 %v761
        %v1543 = vpop.f32.mrb[0].mxu0
        %v1544 = vadd.f32 %v1399, %v1543
        %v1545 = vpop.f32.mrb[0].mxu0
        %1546 = vmatprep.mubr.f32.mxu0 0.0
        %1547 = vmatmul.mubr.f32.gmra.mrb[0].mxu0 %v770
        %v1548 = vpop.f32.mrb[0].mxu0
        %v1549 = vadd.f32 %v1404, %v1548
        %v1550 = vpop.f32.mrb[0].mxu0
        %1551 = vmatprep.mubr.f32.mxu0 0.0
        %1552 = vmatmul.mubr.f32.gmra.mrb[0].mxu0 %v779
        %v1553 = vpop.f32.mrb[0].mxu0
        %v1554 = vadd.f32 %v1409, %v1553
        %v1555 = vpop.f32.mrb[0].mxu0
        %1556 = vmatprep.mubr.f32.mxu0 0.0
        %1557 = vmatmul.mubr.f32.gmra.mrb[0].mxu0 %v788
        %v1558 = vpop.f32.mrb[0].mxu0
        %v1559 = vadd.f32 %v1414, %v1558
        %v1560 = vpop.f32.mrb[0].mxu0
        %1561 = vmatprep.mubr.f32.mxu0 0.0
        %1562 = vmatmul.mubr.f32.gmra.mrb[0].mxu0 %v797
        %v1563 = vpop.f32.mrb[0].mxu0
        %v1564 = vadd.f32 %v1419, %v1563
        %v1565 = vpop.f32.mrb[0].mxu0
        %1566 = vmatprep.mubr.f32.mxu0 0.0
        %1567 = vmatmul.mubr.f32.gmra.mrb[0].mxu0 %v806
        %v1568 = vpop.f32.mrb[0].mxu0
        %v1569 = vadd.f32 %v1424, %v1568
        %v1570 = vpop.f32.mrb[0].mxu0
        %1571 = vmatprep.mubr.f32.mxu0 0.0
        %1572 = vmatmul.mubr.f32.gmra.mrb[0].mxu0 %v815
        %v1573 = vpop.f32.mrb[0].mxu0
        %v1574 = vadd.f32 %v1429, %v1573
        %v1575 = vpop.f32.mrb[0].mxu0
        %1576 = vmatprep.mubr.f32.mxu0 0.0
        %1577 = vmatmul.mubr.f32.gmra.mrb[0].mxu0 %v824
        %v1578 = vpop.f32.mrb[0].mxu0
        %v1579 = vadd.f32 %v1434, %v1578
        %v1580 = vpop.f32.mrb[0].mxu0
        %1581 = vmatprep.mubr.f32.mxu0 0.0
        %1582 = vmatmul.mubr.f32.gmra.mrb[0].mxu0 %v833
        %v1583 = vpop.f32.mrb[0].mxu0
        %v1584 = vadd.f32 %v1439, %v1583
        %v1585 = vpop.f32.mrb[0].mxu0
        %1586 = vmatprep.mubr.f32.mxu0 0.0
        %1587 = vmatmul.mubr.f32.gmra.mrb[0].mxu0 %v842
        %v1588 = vpop.f32.mrb[0].mxu0
        %v1589 = vadd.f32 %v1444, %v1588
        %v1590 = vpop.f32.mrb[0].mxu0
        %1591 = vmatprep.mubr.f32.mxu0 0.0
        %1592 = vmatmul.mubr.f32.gmra.mrb[0].mxu0 %v851
        %v1593 = vpop.f32.mrb[0].mxu0
        %v1594 = vadd.f32 %v1449, %v1593
        %v1595 = vpop.f32.mrb[0].mxu0
        %1596 = vmatprep.mubr.f32.mxu0 0.0
        %1597 = vmatmul.mubr.f32.gmra.mrb[0].mxu0 %v860
        %v1598 = vpop.f32.mrb[0].mxu0
        %v1599 = vadd.f32 %v1454, %v1598
        %v1600 = vpop.f32.mrb[0].mxu0
        %1601 = vmatprep.mubr.f32.mxu0 0.0
        %1602 = vmatmul.mubr.f32.gmra.mrb[0].mxu0 %v869
        %v1603 = vpop.f32.mrb[0].mxu0
        %v1604 = vadd.f32 %v1459, %v1603
        %v1605 = vpop.f32.mrb[0].mxu0
        %1606 = vmatprep.mubr.f32.mxu0 0.0
        %1607 = vmatmul.mubr.f32.gmra.mrb[0].mxu0 %v878
        %v1608 = vpop.f32.mrb[0].mxu0
        %v1609 = vadd.f32 %v1464, %v1608
        %v1610 = vpop.f32.mrb[0].mxu0
        %1611 = vmatprep.mubr.f32.mxu0 0.0
        %1612 = vmatmul.mubr.f32.gmra.mrb[0].mxu0 %v887
        %v1613 = vpop.f32.mrb[0].mxu0
        %v1614 = vadd.f32 %v1469, %v1613
        %v1615 = vpop.f32.mrb[0].mxu0
        %1616 = vmatprep.mubr.f32.mxu0 0.0
        %1617 = vmatmul.mubr.f32.gmra.mrb[0].mxu0 %v896
        %v1618 = vpop.f32.mrb[0].mxu0
        %v1619 = vadd.f32 %v1474, %v1618
        %v1620 = vpop.f32.mrb[0].mxu0
        %1621 = vdwg.mxu0
        %1622 = vst [vmem:[#allocation4] sm:$0xff] %v1544
        %1623 = vst [vmem:[#allocation4 + $0x8] sm:$0xff] %v1549
        %1624 = vst [vmem:[#allocation4 + $0x10] sm:$0xff] %v1554
        %1625 = vst [vmem:[#allocation4 + $0x18] sm:$0xff] %v1559
        %1626 = vst [vmem:[#allocation4 + $0x20] sm:$0xff] %v1564
        %1627 = vst [vmem:[#allocation4 + $0x28] sm:$0xff] %v1569
        %1628 = vst [vmem:[#allocation4 + $0x30] sm:$0xff] %v1574
        %1629 = vst [vmem:[#allocation4 + $0x38] sm:$0xff] %v1579
        %1630 = vst [vmem:[#allocation4 + $0x40] sm:$0xff] %v1584
        %1631 = vst [vmem:[#allocation4 + $0x48] sm:$0xff] %v1589
        %1632 = vst [vmem:[#allocation4 + $0x50] sm:$0xff] %v1594
        %1633 = vst [vmem:[#allocation4 + $0x58] sm:$0xff] %v1599
        %1634 = vst [vmem:[#allocation4 + $0x60] sm:$0xff] %v1604
        %1635 = vst [vmem:[#allocation4 + $0x68] sm:$0xff] %v1609
        %1636 = vst [vmem:[#allocation4 + $0x70] sm:$0xff] %v1614
        %1637 = vst [vmem:[#allocation4 + $0x78] sm:$0xff] %v1619
        %v1638 = vadd.f32 %v1544, %v1549
        %v1639 = vadd.f32 %v1638, %v1554
        %v1640 = vadd.f32 %v1639, %v1559
        %v1641 = vadd.f32 %v1640, %v1564
        %v1642 = vadd.f32 %v1641, %v1569
        %v1643 = vadd.f32 %v1642, %v1574
        %v1644 = vadd.f32 %v1643, %v1579
        %v1645 = vadd.f32 %v1644, %v1584
        %v1646 = vadd.f32 %v1645, %v1589
        %v1647 = vadd.f32 %v1646, %v1594
        %v1648 = vadd.f32 %v1647, %v1599
        %v1649 = vadd.f32 %v1648, %v1604
        %v1650 = vadd.f32 %v1649, %v1609
        %v1651 = vadd.f32 %v1650, %v1614
        %v1652 = vadd.f32 %v1651, %v1619
        %v1653 = vrot.slane %v1652, 4
        %v1654 = vadd.f32 %v1652, %v1653
        %v1655 = vrot.slane %v1654, 2
        %v1656 = vadd.f32 %v1654, %v1655
        %v1657 = vrot.slane %v1656, 1
        %v1658 = vadd.f32 %v1656, %v1657
        %v1659 = vadd.f32 %v1658, 0.0
        %v1660 = vmul.f32 %v1544, %v1544
        %v1661 = vmul.f32 %v1549, %v1549
        %v1662 = vmul.f32 %v1554, %v1554
        %v1663 = vmul.f32 %v1559, %v1559
        %v1664 = vmul.f32 %v1564, %v1564
        %v1665 = vmul.f32 %v1569, %v1569
        %v1666 = vmul.f32 %v1574, %v1574
        %v1667 = vmul.f32 %v1579, %v1579
        %v1668 = vmul.f32 %v1584, %v1584
        %v1669 = vmul.f32 %v1589, %v1589
        %v1670 = vmul.f32 %v1594, %v1594
        %v1671 = vmul.f32 %v1599, %v1599
        %v1672 = vmul.f32 %v1604, %v1604
        %v1673 = vmul.f32 %v1609, %v1609
        %v1674 = vmul.f32 %v1614, %v1614
        %v1675 = vmul.f32 %v1619, %v1619
        %v1676 = vadd.f32 %v1660, %v1661
        %v1677 = vadd.f32 %v1676, %v1662
        %v1678 = vadd.f32 %v1677, %v1663
        %v1679 = vadd.f32 %v1678, %v1664
        %v1680 = vadd.f32 %v1679, %v1665
        %v1681 = vadd.f32 %v1680, %v1666
        %v1682 = vadd.f32 %v1681, %v1667
        %v1683 = vadd.f32 %v1682, %v1668
        %v1684 = vadd.f32 %v1683, %v1669
        %v1685 = vadd.f32 %v1684, %v1670
        %v1686 = vadd.f32 %v1685, %v1671
        %v1687 = vadd.f32 %v1686, %v1672
        %v1688 = vadd.f32 %v1687, %v1673
        %v1689 = vadd.f32 %v1688, %v1674
        %v1690 = vadd.f32 %v1689, %v1675
        %v1691 = vrot.slane %v1690, 4
        %v1692 = vadd.f32 %v1690, %v1691
        %v1693 = vrot.slane %v1692, 2
        %v1694 = vadd.f32 %v1692, %v1693
        %v1695 = vrot.slane %v1694, 1
        %v1696 = vadd.f32 %v1694, %v1695
        %v1697 = vadd.f32 %v1696, 0.0
        %s1698 = scalar_lea.vmem [#allocation2], 192
        %v1699 = vld [vmem:[%s1698] sm:$0xff]
        %v1700 = vld [vmem:[%s1698 + $0x8] sm:$0xff]
        %v1701 = vld [vmem:[%s1698 + $0x18] sm:$0xff]
        %v1702 = vld [vmem:[%s1698 + $0x20] sm:$0xff]
        %v1703 = vld [vmem:[%s1698 + $0x30] sm:$0xff]
        %v1704 = vld [vmem:[%s1698 + $0x38] sm:$0xff]
        %v1705 = vld [vmem:[%s1698 + $0x48] sm:$0xff]
        %v1706 = vld [vmem:[%s1698 + $0x50] sm:$0xff]
        %v1707 = vld [vmem:[%s1698 + $0x60] sm:$0xff]
        %v1708 = vld [vmem:[%s1698 + $0x68] sm:$0xff]
        %v1709 = vld [vmem:[%s1698 + $0x78] sm:$0xff]
        %v1710 = vld [vmem:[%s1698 + $0x80] sm:$0xff]
        %v1711 = vld [vmem:[%s1698 + $0x90] sm:$0xff]
        %v1712 = vld [vmem:[%s1698 + $0x98] sm:$0xff]
        %v1713 = vld [vmem:[%s1698 + $0xa8] sm:$0xff]
        %v1714 = vld [vmem:[%s1698 + $0xb0] sm:$0xff]
        %1715 = vst [vmem:[#allocation3] sm:$0xff] %v1699
        %1716 = vst [vmem:[#allocation3 + $0x48] sm:$0xff] %v1700
        %1717 = vst [vmem:[#allocation3 + $0x90] sm:$0xff] %v1701
        %1718 = vst [vmem:[#allocation3 + $0xd8] sm:$0xff] %v1702
        %1719 = vst [vmem:[#allocation3 + $0x120] sm:$0xff] %v1703
        %1720 = vst [vmem:[#allocation3 + $0x168] sm:$0xff] %v1704
        %1721 = vst [vmem:[#allocation3 + $0x1b0] sm:$0xff] %v1705
        %1722 = vst [vmem:[#allocation3 + $0x1f8] sm:$0xff] %v1706
        %1723 = vst [vmem:[#allocation3 + $0x240] sm:$0xff] %v1707
        %1724 = vst [vmem:[#allocation3 + $0x288] sm:$0xff] %v1708
        %1725 = vst [vmem:[#allocation3 + $0x2d0] sm:$0xff] %v1709
        %1726 = vst [vmem:[#allocation3 + $0x318] sm:$0xff] %v1710
        %1727 = vst [vmem:[#allocation3 + $0x360] sm:$0xff] %v1711
        %1728 = vst [vmem:[#allocation3 + $0x3a8] sm:$0xff] %v1712
        %1729 = vst [vmem:[#allocation3 + $0x3f0] sm:$0xff] %v1713
        %1730 = vst [vmem:[#allocation3 + $0x438] sm:$0xff] %v1714
        %v1731 = vld [vmem:[%s1698 + $0x1] sm:$0xff]
        %v1732 = vld [vmem:[%s1698 + $0x9] sm:$0xff]
        %v1733 = vld [vmem:[%s1698 + $0x19] sm:$0xff]
        %v1734 = vld [vmem:[%s1698 + $0x21] sm:$0xff]
        %v1735 = vld [vmem:[%s1698 + $0x31] sm:$0xff]
        %v1736 = vld [vmem:[%s1698 + $0x39] sm:$0xff]
        %v1737 = vld [vmem:[%s1698 + $0x49] sm:$0xff]
        %v1738 = vld [vmem:[%s1698 + $0x51] sm:$0xff]
        %v1739 = vld [vmem:[%s1698 + $0x61] sm:$0xff]
        %v1740 = vld [vmem:[%s1698 + $0x69] sm:$0xff]
        %v1741 = vld [vmem:[%s1698 + $0x79] sm:$0xff]
        %v1742 = vld [vmem:[%s1698 + $0x81] sm:$0xff]
        %v1743 = vld [vmem:[%s1698 + $0x91] sm:$0xff]
        %v1744 = vld [vmem:[%s1698 + $0x99] sm:$0xff]
        %v1745 = vld [vmem:[%s1698 + $0xa9] sm:$0xff]
        %v1746 = vld [vmem:[%s1698 + $0xb1] sm:$0xff]
        %1747 = vst [vmem:[#allocation3 + $0x8] sm:$0xff] %v1731
        %1748 = vst [vmem:[#allocation3 + $0x50] sm:$0xff] %v1732
        %1749 = vst [vmem:[#allocation3 + $0x98] sm:$0xff] %v1733
        %1750 = vst [vmem:[#allocation3 + $0xe0] sm:$0xff] %v1734
        %1751 = vst [vmem:[#allocation3 + $0x128] sm:$0xff] %v1735
        %1752 = vst [vmem:[#allocation3 + $0x170] sm:$0xff] %v1736
        %1753 = vst [vmem:[#allocation3 + $0x1b8] sm:$0xff] %v1737
        %1754 = vst [vmem:[#allocation3 + $0x200] sm:$0xff] %v1738
        %1755 = vst [vmem:[#allocation3 + $0x248] sm:$0xff] %v1739
        %1756 = vst [vmem:[#allocation3 + $0x290] sm:$0xff] %v1740
        %1757 = vst [vmem:[#allocation3 + $0x2d8] sm:$0xff] %v1741
        %1758 = vst [vmem:[#allocation3 + $0x320] sm:$0xff] %v1742
        %1759 = vst [vmem:[#allocation3 + $0x368] sm:$0xff] %v1743
        %1760 = vst [vmem:[#allocation3 + $0x3b0] sm:$0xff] %v1744
        %1761 = vst [vmem:[#allocation3 + $0x3f8] sm:$0xff] %v1745
        %1762 = vst [vmem:[#allocation3 + $0x440] sm:$0xff] %v1746
        %v1763 = vld [vmem:[%s1698 + $0x2] sm:$0xff]
        %v1764 = vld [vmem:[%s1698 + $0xa] sm:$0xff]
        %v1765 = vld [vmem:[%s1698 + $0x1a] sm:$0xff]
        %v1766 = vld [vmem:[%s1698 + $0x22] sm:$0xff]
        %v1767 = vld [vmem:[%s1698 + $0x32] sm:$0xff]
        %v1768 = vld [vmem:[%s1698 + $0x3a] sm:$0xff]
        %v1769 = vld [vmem:[%s1698 + $0x4a] sm:$0xff]
        %v1770 = vld [vmem:[%s1698 + $0x52] sm:$0xff]
        %v1771 = vld [vmem:[%s1698 + $0x62] sm:$0xff]
        %v1772 = vld [vmem:[%s1698 + $0x6a] sm:$0xff]
        %v1773 = vld [vmem:[%s1698 + $0x7a] sm:$0xff]
        %v1774 = vld [vmem:[%s1698 + $0x82] sm:$0xff]
        %v1775 = vld [vmem:[%s1698 + $0x92] sm:$0xff]
        %v1776 = vld [vmem:[%s1698 + $0x9a] sm:$0xff]
        %v1777 = vld [vmem:[%s1698 + $0xaa] sm:$0xff]
        %v1778 = vld [vmem:[%s1698 + $0xb2] sm:$0xff]
        %1779 = vst [vmem:[#allocation3 + $0x10] sm:$0xff] %v1763
        %1780 = vst [vmem:[#allocation3 + $0x58] sm:$0xff] %v1764
        %1781 = vst [vmem:[#allocation3 + $0xa0] sm:$0xff] %v1765
        %1782 = vst [vmem:[#allocation3 + $0xe8] sm:$0xff] %v1766
        %1783 = vst [vmem:[#allocation3 + $0x130] sm:$0xff] %v1767
        %1784 = vst [vmem:[#allocation3 + $0x178] sm:$0xff] %v1768
        %1785 = vst [vmem:[#allocation3 + $0x1c0] sm:$0xff] %v1769
        %1786 = vst [vmem:[#allocation3 + $0x208] sm:$0xff] %v1770
        %1787 = vst [vmem:[#allocation3 + $0x250] sm:$0xff] %v1771
        %1788 = vst [vmem:[#allocation3 + $0x298] sm:$0xff] %v1772
        %1789 = vst [vmem:[#allocation3 + $0x2e0] sm:$0xff] %v1773
        %1790 = vst [vmem:[#allocation3 + $0x328] sm:$0xff] %v1774
        %1791 = vst [vmem:[#allocation3 + $0x370] sm:$0xff] %v1775
        %1792 = vst [vmem:[#allocation3 + $0x3b8] sm:$0xff] %v1776
        %1793 = vst [vmem:[#allocation3 + $0x400] sm:$0xff] %v1777
        %1794 = vst [vmem:[#allocation3 + $0x448] sm:$0xff] %v1778
        %s1795 = scalar_lea.vmem [#allocation2], 216
        %v1796 = vld [vmem:[%s1795] sm:$0xff]
        %v1797 = vld [vmem:[%s1795 + $0x8] sm:$0xff]
        %v1798 = vld [vmem:[%s1795 + $0x18] sm:$0xff]
        %v1799 = vld [vmem:[%s1795 + $0x20] sm:$0xff]
        %v1800 = vld [vmem:[%s1795 + $0x30] sm:$0xff]
        %v1801 = vld [vmem:[%s1795 + $0x38] sm:$0xff]
        %v1802 = vld [vmem:[%s1795 + $0x48] sm:$0xff]
        %v1803 = vld [vmem:[%s1795 + $0x50] sm:$0xff]
        %v1804 = vld [vmem:[%s1795 + $0x60] sm:$0xff]
        %v1805 = vld [vmem:[%s1795 + $0x68] sm:$0xff]
        %v1806 = vld [vmem:[%s1795 + $0x78] sm:$0xff]
        %v1807 = vld [vmem:[%s1795 + $0x80] sm:$0xff]
        %v1808 = vld [vmem:[%s1795 + $0x90] sm:$0xff]
        %v1809 = vld [vmem:[%s1795 + $0x98] sm:$0xff]
        %v1810 = vld [vmem:[%s1795 + $0xa8] sm:$0xff]
        %v1811 = vld [vmem:[%s1795 + $0xb0] sm:$0xff]
        %1812 = vst [vmem:[#allocation3 + $0x18] sm:$0xff] %v1796
        %1813 = vst [vmem:[#allocation3 + $0x60] sm:$0xff] %v1797
        %1814 = vst [vmem:[#allocation3 + $0xa8] sm:$0xff] %v1798
        %1815 = vst [vmem:[#allocation3 + $0xf0] sm:$0xff] %v1799
        %1816 = vst [vmem:[#allocation3 + $0x138] sm:$0xff] %v1800
        %1817 = vst [vmem:[#allocation3 + $0x180] sm:$0xff] %v1801
        %1818 = vst [vmem:[#allocation3 + $0x1c8] sm:$0xff] %v1802
        %1819 = vst [vmem:[#allocation3 + $0x210] sm:$0xff] %v1803
        %1820 = vst [vmem:[#allocation3 + $0x258] sm:$0xff] %v1804
        %1821 = vst [vmem:[#allocation3 + $0x2a0] sm:$0xff] %v1805
        %1822 = vst [vmem:[#allocation3 + $0x2e8] sm:$0xff] %v1806
        %1823 = vst [vmem:[#allocation3 + $0x330] sm:$0xff] %v1807
        %1824 = vst [vmem:[#allocation3 + $0x378] sm:$0xff] %v1808
        %1825 = vst [vmem:[#allocation3 + $0x3c0] sm:$0xff] %v1809
        %1826 = vst [vmem:[#allocation3 + $0x408] sm:$0xff] %v1810
        %1827 = vst [vmem:[#allocation3 + $0x450] sm:$0xff] %v1811
        %v1828 = vld [vmem:[%s1795 + $0x1] sm:$0xff]
        %v1829 = vld [vmem:[%s1795 + $0x9] sm:$0xff]
        %v1830 = vld [vmem:[%s1795 + $0x19] sm:$0xff]
        %v1831 = vld [vmem:[%s1795 + $0x21] sm:$0xff]
        %v1832 = vld [vmem:[%s1795 + $0x31] sm:$0xff]
        %v1833 = vld [vmem:[%s1795 + $0x39] sm:$0xff]
        %v1834 = vld [vmem:[%s1795 + $0x49] sm:$0xff]
        %v1835 = vld [vmem:[%s1795 + $0x51] sm:$0xff]
        %v1836 = vld [vmem:[%s1795 + $0x61] sm:$0xff]
        %v1837 = vld [vmem:[%s1795 + $0x69] sm:$0xff]
        %v1838 = vld [vmem:[%s1795 + $0x79] sm:$0xff]
        %v1839 = vld [vmem:[%s1795 + $0x81] sm:$0xff]
        %v1840 = vld [vmem:[%s1795 + $0x91] sm:$0xff]
        %v1841 = vld [vmem:[%s1795 + $0x99] sm:$0xff]
        %v1842 = vld [vmem:[%s1795 + $0xa9] sm:$0xff]
        %v1843 = vld [vmem:[%s1795 + $0xb1] sm:$0xff]
        %1844 = vst [vmem:[#allocation3 + $0x20] sm:$0xff] %v1828
        %1845 = vst [vmem:[#allocation3 + $0x68] sm:$0xff] %v1829
        %1846 = vst [vmem:[#allocation3 + $0xb0] sm:$0xff] %v1830
        %1847 = vst [vmem:[#allocation3 + $0xf8] sm:$0xff] %v1831
        %1848 = vst [vmem:[#allocation3 + $0x140] sm:$0xff] %v1832
        %1849 = vst [vmem:[#allocation3 + $0x188] sm:$0xff] %v1833
        %1850 = vst [vmem:[#allocation3 + $0x1d0] sm:$0xff] %v1834
        %1851 = vst [vmem:[#allocation3 + $0x218] sm:$0xff] %v1835
        %1852 = vst [vmem:[#allocation3 + $0x260] sm:$0xff] %v1836
        %1853 = vst [vmem:[#allocation3 + $0x2a8] sm:$0xff] %v1837
        %1854 = vst [vmem:[#allocation3 + $0x2f0] sm:$0xff] %v1838
        %1855 = vst [vmem:[#allocation3 + $0x338] sm:$0xff] %v1839
        %1856 = vst [vmem:[#allocation3 + $0x380] sm:$0xff] %v1840
        %1857 = vst [vmem:[#allocation3 + $0x3c8] sm:$0xff] %v1841
        %1858 = vst [vmem:[#allocation3 + $0x410] sm:$0xff] %v1842
        %1859 = vst [vmem:[#allocation3 + $0x458] sm:$0xff] %v1843
        %v1860 = vld [vmem:[%s1795 + $0x2] sm:$0xff]
        %v1861 = vld [vmem:[%s1795 + $0xa] sm:$0xff]
        %v1862 = vld [vmem:[%s1795 + $0x1a] sm:$0xff]
        %v1863 = vld [vmem:[%s1795 + $0x22] sm:$0xff]
        %v1864 = vld [vmem:[%s1795 + $0x32] sm:$0xff]
        %v1865 = vld [vmem:[%s1795 + $0x3a] sm:$0xff]
        %v1866 = vld [vmem:[%s1795 + $0x4a] sm:$0xff]
        %v1867 = vld [vmem:[%s1795 + $0x52] sm:$0xff]
        %v1868 = vld [vmem:[%s1795 + $0x62] sm:$0xff]
        %v1869 = vld [vmem:[%s1795 + $0x6a] sm:$0xff]
        %v1870 = vld [vmem:[%s1795 + $0x7a] sm:$0xff]
        %v1871 = vld [vmem:[%s1795 + $0x82] sm:$0xff]
        %v1872 = vld [vmem:[%s1795 + $0x92] sm:$0xff]
        %v1873 = vld [vmem:[%s1795 + $0x9a] sm:$0xff]
        %v1874 = vld [vmem:[%s1795 + $0xaa] sm:$0xff]
        %v1875 = vld [vmem:[%s1795 + $0xb2] sm:$0xff]
        %1876 = vst [vmem:[#allocation3 + $0x28] sm:$0xff] %v1860
        %1877 = vst [vmem:[#allocation3 + $0x70] sm:$0xff] %v1861
        %1878 = vst [vmem:[#allocation3 + $0xb8] sm:$0xff] %v1862
        %1879 = vst [vmem:[#allocation3 + $0x100] sm:$0xff] %v1863
        %1880 = vst [vmem:[#allocation3 + $0x148] sm:$0xff] %v1864
        %1881 = vst [vmem:[#allocation3 + $0x190] sm:$0xff] %v1865
        %1882 = vst [vmem:[#allocation3 + $0x1d8] sm:$0xff] %v1866
        %1883 = vst [vmem:[#allocation3 + $0x220] sm:$0xff] %v1867
        %1884 = vst [vmem:[#allocation3 + $0x268] sm:$0xff] %v1868
        %1885 = vst [vmem:[#allocation3 + $0x2b0] sm:$0xff] %v1869
        %1886 = vst [vmem:[#allocation3 + $0x2f8] sm:$0xff] %v1870
        %1887 = vst [vmem:[#allocation3 + $0x340] sm:$0xff] %v1871
        %1888 = vst [vmem:[#allocation3 + $0x388] sm:$0xff] %v1872
        %1889 = vst [vmem:[#allocation3 + $0x3d0] sm:$0xff] %v1873
        %1890 = vst [vmem:[#allocation3 + $0x418] sm:$0xff] %v1874
        %1891 = vst [vmem:[#allocation3 + $0x460] sm:$0xff] %v1875
        %s1892 = scalar_lea.vmem [#allocation2], 240
        %v1893 = vld [vmem:[%s1892] sm:$0xff]
        %v1894 = vld [vmem:[%s1892 + $0x8] sm:$0xff]
        %v1895 = vld [vmem:[%s1892 + $0x18] sm:$0xff]
        %v1896 = vld [vmem:[%s1892 + $0x20] sm:$0xff]
        %v1897 = vld [vmem:[%s1892 + $0x30] sm:$0xff]
        %v1898 = vld [vmem:[%s1892 + $0x38] sm:$0xff]
        %v1899 = vld [vmem:[%s1892 + $0x48] sm:$0xff]
        %v1900 = vld [vmem:[%s1892 + $0x50] sm:$0xff]
        %v1901 = vld [vmem:[%s1892 + $0x60] sm:$0xff]
        %v1902 = vld [vmem:[%s1892 + $0x68] sm:$0xff]
        %v1903 = vld [vmem:[%s1892 + $0x78] sm:$0xff]
        %v1904 = vld [vmem:[%s1892 + $0x80] sm:$0xff]
        %v1905 = vld [vmem:[%s1892 + $0x90] sm:$0xff]
        %v1906 = vld [vmem:[%s1892 + $0x98] sm:$0xff]
        %v1907 = vld [vmem:[%s1892 + $0xa8] sm:$0xff]
        %v1908 = vld [vmem:[%s1892 + $0xb0] sm:$0xff]
        %1909 = vst [vmem:[#allocation3 + $0x30] sm:$0xff] %v1893
        %1910 = vst [vmem:[#allocation3 + $0x78] sm:$0xff] %v1894
        %1911 = vst [vmem:[#allocation3 + $0xc0] sm:$0xff] %v1895
        %1912 = vst [vmem:[#allocation3 + $0x108] sm:$0xff] %v1896
        %1913 = vst [vmem:[#allocation3 + $0x150] sm:$0xff] %v1897
        %1914 = vst [vmem:[#allocation3 + $0x198] sm:$0xff] %v1898
        %1915 = vst [vmem:[#allocation3 + $0x1e0] sm:$0xff] %v1899
        %1916 = vst [vmem:[#allocation3 + $0x228] sm:$0xff] %v1900
        %1917 = vst [vmem:[#allocation3 + $0x270] sm:$0xff] %v1901
        %1918 = vst [vmem:[#allocation3 + $0x2b8] sm:$0xff] %v1902
        %1919 = vst [vmem:[#allocation3 + $0x300] sm:$0xff] %v1903
        %1920 = vst [vmem:[#allocation3 + $0x348] sm:$0xff] %v1904
        %1921 = vst [vmem:[#allocation3 + $0x390] sm:$0xff] %v1905
        %1922 = vst [vmem:[#allocation3 + $0x3d8] sm:$0xff] %v1906
        %1923 = vst [vmem:[#allocation3 + $0x420] sm:$0xff] %v1907
        %1924 = vst [vmem:[#allocation3 + $0x468] sm:$0xff] %v1908
        %v1925 = vld [vmem:[%s1892 + $0x1] sm:$0xff]
        %v1926 = vld [vmem:[%s1892 + $0x9] sm:$0xff]
        %v1927 = vld [vmem:[%s1892 + $0x19] sm:$0xff]
        %v1928 = vld [vmem:[%s1892 + $0x21] sm:$0xff]
        %v1929 = vld [vmem:[%s1892 + $0x31] sm:$0xff]
        %v1930 = vld [vmem:[%s1892 + $0x39] sm:$0xff]
        %v1931 = vld [vmem:[%s1892 + $0x49] sm:$0xff]
        %v1932 = vld [vmem:[%s1892 + $0x51] sm:$0xff]
        %v1933 = vld [vmem:[%s1892 + $0x61] sm:$0xff]
        %v1934 = vld [vmem:[%s1892 + $0x69] sm:$0xff]
        %v1935 = vld [vmem:[%s1892 + $0x79] sm:$0xff]
        %v1936 = vld [vmem:[%s1892 + $0x81] sm:$0xff]
        %v1937 = vld [vmem:[%s1892 + $0x91] sm:$0xff]
        %v1938 = vld [vmem:[%s1892 + $0x99] sm:$0xff]
        %v1939 = vld [vmem:[%s1892 + $0xa9] sm:$0xff]
        %v1940 = vld [vmem:[%s1892 + $0xb1] sm:$0xff]
        %1941 = vst [vmem:[#allocation3 + $0x38] sm:$0xff] %v1925
        %1942 = vst [vmem:[#allocation3 + $0x80] sm:$0xff] %v1926
        %1943 = vst [vmem:[#allocation3 + $0xc8] sm:$0xff] %v1927
        %1944 = vst [vmem:[#allocation3 + $0x110] sm:$0xff] %v1928
        %1945 = vst [vmem:[#allocation3 + $0x158] sm:$0xff] %v1929
        %1946 = vst [vmem:[#allocation3 + $0x1a0] sm:$0xff] %v1930
        %1947 = vst [vmem:[#allocation3 + $0x1e8] sm:$0xff] %v1931
        %1948 = vst [vmem:[#allocation3 + $0x230] sm:$0xff] %v1932
        %1949 = vst [vmem:[#allocation3 + $0x278] sm:$0xff] %v1933
        %1950 = vst [vmem:[#allocation3 + $0x2c0] sm:$0xff] %v1934
        %1951 = vst [vmem:[#allocation3 + $0x308] sm:$0xff] %v1935
        %1952 = vst [vmem:[#allocation3 + $0x350] sm:$0xff] %v1936
        %1953 = vst [vmem:[#allocation3 + $0x398] sm:$0xff] %v1937
        %1954 = vst [vmem:[#allocation3 + $0x3e0] sm:$0xff] %v1938
        %1955 = vst [vmem:[#allocation3 + $0x428] sm:$0xff] %v1939
        %1956 = vst [vmem:[#allocation3 + $0x470] sm:$0xff] %v1940
        %v1957 = vld [vmem:[%s1892 + $0x2] sm:$0xff]
        %v1958 = vld [vmem:[%s1892 + $0xa] sm:$0xff]
        %v1959 = vld [vmem:[%s1892 + $0x1a] sm:$0xff]
        %v1960 = vld [vmem:[%s1892 + $0x22] sm:$0xff]
        %v1961 = vld [vmem:[%s1892 + $0x32] sm:$0xff]
        %v1962 = vld [vmem:[%s1892 + $0x3a] sm:$0xff]
        %v1963 = vld [vmem:[%s1892 + $0x4a] sm:$0xff]
        %v1964 = vld [vmem:[%s1892 + $0x52] sm:$0xff]
        %v1965 = vld [vmem:[%s1892 + $0x62] sm:$0xff]
        %v1966 = vld [vmem:[%s1892 + $0x6a] sm:$0xff]
        %v1967 = vld [vmem:[%s1892 + $0x7a] sm:$0xff]
        %v1968 = vld [vmem:[%s1892 + $0x82] sm:$0xff]
        %v1969 = vld [vmem:[%s1892 + $0x92] sm:$0xff]
        %v1970 = vld [vmem:[%s1892 + $0x9a] sm:$0xff]
        %v1971 = vld [vmem:[%s1892 + $0xaa] sm:$0xff]
        %v1972 = vld [vmem:[%s1892 + $0xb2] sm:$0xff]
        %1973 = vst [vmem:[#allocation3 + $0x40] sm:$0xff] %v1957
        %1974 = vst [vmem:[#allocation3 + $0x88] sm:$0xff] %v1958
        %1975 = vst [vmem:[#allocation3 + $0xd0] sm:$0xff] %v1959
        %1976 = vst [vmem:[#allocation3 + $0x118] sm:$0xff] %v1960
        %1977 = vst [vmem:[#allocation3 + $0x160] sm:$0xff] %v1961
        %1978 = vst [vmem:[#allocation3 + $0x1a8] sm:$0xff] %v1962
        %1979 = vst [vmem:[#allocation3 + $0x1f0] sm:$0xff] %v1963
        %1980 = vst [vmem:[#allocation3 + $0x238] sm:$0xff] %v1964
        %1981 = vst [vmem:[#allocation3 + $0x280] sm:$0xff] %v1965
        %1982 = vst [vmem:[#allocation3 + $0x2c8] sm:$0xff] %v1966
        %1983 = vst [vmem:[#allocation3 + $0x310] sm:$0xff] %v1967
        %1984 = vst [vmem:[#allocation3 + $0x358] sm:$0xff] %v1968
        %1985 = vst [vmem:[#allocation3 + $0x3a0] sm:$0xff] %v1969
        %1986 = vst [vmem:[#allocation3 + $0x3e8] sm:$0xff] %v1970
        %1987 = vst [vmem:[#allocation3 + $0x430] sm:$0xff] %v1971
        %1988 = vst [vmem:[#allocation3 + $0x478] sm:$0xff] %v1972
        %v1989 = vld [vmem:[#allocation3] sm:$0xff]
        %v1990 = vld [vmem:[#allocation3 + $0x8] sm:$0xff]
        %v1991 = vld [vmem:[#allocation3 + $0x10] sm:$0xff]
        %v1992 = vld [vmem:[#allocation3 + $0x18] sm:$0xff]
        %v1993 = vld [vmem:[#allocation3 + $0x20] sm:$0xff]
        %v1994 = vld [vmem:[#allocation3 + $0x28] sm:$0xff]
        %v1995 = vld [vmem:[#allocation3 + $0x30] sm:$0xff]
        %v1996 = vld [vmem:[#allocation3 + $0x38] sm:$0xff]
        %v1997 = vld [vmem:[#allocation3 + $0x40] sm:$0xff]
        %v1998 = vld [vmem:[#allocation3 + $0x48] sm:$0xff]
        %v1999 = vld [vmem:[#allocation3 + $0x50] sm:$0xff]
        %v2000 = vld [vmem:[#allocation3 + $0x58] sm:$0xff]
        %v2001 = vld [vmem:[#allocation3 + $0x60] sm:$0xff]
        %v2002 = vld [vmem:[#allocation3 + $0x68] sm:$0xff]
        %v2003 = vld [vmem:[#allocation3 + $0x70] sm:$0xff]
        %v2004 = vld [vmem:[#allocation3 + $0x78] sm:$0xff]
        %v2005 = vld [vmem:[#allocation3 + $0x80] sm:$0xff]
        %v2006 = vld [vmem:[#allocation3 + $0x88] sm:$0xff]
        %v2007 = vld [vmem:[#allocation3 + $0x90] sm:$0xff]
        %v2008 = vld [vmem:[#allocation3 + $0x98] sm:$0xff]
        %v2009 = vld [vmem:[#allocation3 + $0xa0] sm:$0xff]
        %v2010 = vld [vmem:[#allocation3 + $0xa8] sm:$0xff]
        %v2011 = vld [vmem:[#allocation3 + $0xb0] sm:$0xff]
        %v2012 = vld [vmem:[#allocation3 + $0xb8] sm:$0xff]
        %v2013 = vld [vmem:[#allocation3 + $0xc0] sm:$0xff]
        %v2014 = vld [vmem:[#allocation3 + $0xc8] sm:$0xff]
        %v2015 = vld [vmem:[#allocation3 + $0xd0] sm:$0xff]
        %v2016 = vld [vmem:[#allocation3 + $0xd8] sm:$0xff]
        %v2017 = vld [vmem:[#allocation3 + $0xe0] sm:$0xff]
        %v2018 = vld [vmem:[#allocation3 + $0xe8] sm:$0xff]
        %v2019 = vld [vmem:[#allocation3 + $0xf0] sm:$0xff]
        %v2020 = vld [vmem:[#allocation3 + $0xf8] sm:$0xff]
        %v2021 = vld [vmem:[#allocation3 + $0x100] sm:$0xff]
        %v2022 = vld [vmem:[#allocation3 + $0x108] sm:$0xff]
        %v2023 = vld [vmem:[#allocation3 + $0x110] sm:$0xff]
        %v2024 = vld [vmem:[#allocation3 + $0x118] sm:$0xff]
        %v2025 = vld [vmem:[#allocation3 + $0x120] sm:$0xff]
        %v2026 = vld [vmem:[#allocation3 + $0x128] sm:$0xff]
        %v2027 = vld [vmem:[#allocation3 + $0x130] sm:$0xff]
        %v2028 = vld [vmem:[#allocation3 + $0x138] sm:$0xff]
        %v2029 = vld [vmem:[#allocation3 + $0x140] sm:$0xff]
        %v2030 = vld [vmem:[#allocation3 + $0x148] sm:$0xff]
        %v2031 = vld [vmem:[#allocation3 + $0x150] sm:$0xff]
        %v2032 = vld [vmem:[#allocation3 + $0x158] sm:$0xff]
        %v2033 = vld [vmem:[#allocation3 + $0x160] sm:$0xff]
        %v2034 = vld [vmem:[#allocation3 + $0x168] sm:$0xff]
        %v2035 = vld [vmem:[#allocation3 + $0x170] sm:$0xff]
        %v2036 = vld [vmem:[#allocation3 + $0x178] sm:$0xff]
        %v2037 = vld [vmem:[#allocation3 + $0x180] sm:$0xff]
        %v2038 = vld [vmem:[#allocation3 + $0x188] sm:$0xff]
        %v2039 = vld [vmem:[#allocation3 + $0x190] sm:$0xff]
        %v2040 = vld [vmem:[#allocation3 + $0x198] sm:$0xff]
        %v2041 = vld [vmem:[#allocation3 + $0x1a0] sm:$0xff]
        %v2042 = vld [vmem:[#allocation3 + $0x1a8] sm:$0xff]
        %v2043 = vld [vmem:[#allocation3 + $0x1b0] sm:$0xff]
        %v2044 = vld [vmem:[#allocation3 + $0x1b8] sm:$0xff]
        %v2045 = vld [vmem:[#allocation3 + $0x1c0] sm:$0xff]
        %v2046 = vld [vmem:[#allocation3 + $0x1c8] sm:$0xff]
        %v2047 = vld [vmem:[#allocation3 + $0x1d0] sm:$0xff]
        %v2048 = vld [vmem:[#allocation3 + $0x1d8] sm:$0xff]
        %v2049 = vld [vmem:[#allocation3 + $0x1e0] sm:$0xff]
        %v2050 = vld [vmem:[#allocation3 + $0x1e8] sm:$0xff]
        %v2051 = vld [vmem:[#allocation3 + $0x1f0] sm:$0xff]
        %v2052 = vld [vmem:[#allocation3 + $0x1f8] sm:$0xff]
        %v2053 = vld [vmem:[#allocation3 + $0x200] sm:$0xff]
        %v2054 = vld [vmem:[#allocation3 + $0x208] sm:$0xff]
        %v2055 = vld [vmem:[#allocation3 + $0x210] sm:$0xff]
        %v2056 = vld [vmem:[#allocation3 + $0x218] sm:$0xff]
        %v2057 = vld [vmem:[#allocation3 + $0x220] sm:$0xff]
        %v2058 = vld [vmem:[#allocation3 + $0x228] sm:$0xff]
        %v2059 = vld [vmem:[#allocation3 + $0x230] sm:$0xff]
        %v2060 = vld [vmem:[#allocation3 + $0x238] sm:$0xff]
        %v2061 = vld [vmem:[#allocation3 + $0x240] sm:$0xff]
        %v2062 = vld [vmem:[#allocation3 + $0x248] sm:$0xff]
        %v2063 = vld [vmem:[#allocation3 + $0x250] sm:$0xff]
        %v2064 = vld [vmem:[#allocation3 + $0x258] sm:$0xff]
        %v2065 = vld [vmem:[#allocation3 + $0x260] sm:$0xff]
        %v2066 = vld [vmem:[#allocation3 + $0x268] sm:$0xff]
        %v2067 = vld [vmem:[#allocation3 + $0x270] sm:$0xff]
        %v2068 = vld [vmem:[#allocation3 + $0x278] sm:$0xff]
        %v2069 = vld [vmem:[#allocation3 + $0x280] sm:$0xff]
        %v2070 = vld [vmem:[#allocation3 + $0x288] sm:$0xff]
        %v2071 = vld [vmem:[#allocation3 + $0x290] sm:$0xff]
        %v2072 = vld [vmem:[#allocation3 + $0x298] sm:$0xff]
        %v2073 = vld [vmem:[#allocation3 + $0x2a0] sm:$0xff]
        %v2074 = vld [vmem:[#allocation3 + $0x2a8] sm:$0xff]
        %v2075 = vld [vmem:[#allocation3 + $0x2b0] sm:$0xff]
        %v2076 = vld [vmem:[#allocation3 + $0x2b8] sm:$0xff]
        %v2077 = vld [vmem:[#allocation3 + $0x2c0] sm:$0xff]
        %v2078 = vld [vmem:[#allocation3 + $0x2c8] sm:$0xff]
        %v2079 = vld [vmem:[#allocation3 + $0x2d0] sm:$0xff]
        %v2080 = vld [vmem:[#allocation3 + $0x2d8] sm:$0xff]
        %v2081 = vld [vmem:[#allocation3 + $0x2e0] sm:$0xff]
        %v2082 = vld [vmem:[#allocation3 + $0x2e8] sm:$0xff]
        %v2083 = vld [vmem:[#allocation3 + $0x2f0] sm:$0xff]
        %v2084 = vld [vmem:[#allocation3 + $0x2f8] sm:$0xff]
        %v2085 = vld [vmem:[#allocation3 + $0x300] sm:$0xff]
        %v2086 = vld [vmem:[#allocation3 + $0x308] sm:$0xff]
        %v2087 = vld [vmem:[#allocation3 + $0x310] sm:$0xff]
        %v2088 = vld [vmem:[#allocation3 + $0x318] sm:$0xff]
        %v2089 = vld [vmem:[#allocation3 + $0x320] sm:$0xff]
        %v2090 = vld [vmem:[#allocation3 + $0x328] sm:$0xff]
        %v2091 = vld [vmem:[#allocation3 + $0x330] sm:$0xff]
        %v2092 = vld [vmem:[#allocation3 + $0x338] sm:$0xff]
        %v2093 = vld [vmem:[#allocation3 + $0x340] sm:$0xff]
        %v2094 = vld [vmem:[#allocation3 + $0x348] sm:$0xff]
        %v2095 = vld [vmem:[#allocation3 + $0x350] sm:$0xff]
        %v2096 = vld [vmem:[#allocation3 + $0x358] sm:$0xff]
        %v2097 = vld [vmem:[#allocation3 + $0x360] sm:$0xff]
        %v2098 = vld [vmem:[#allocation3 + $0x368] sm:$0xff]
        %v2099 = vld [vmem:[#allocation3 + $0x370] sm:$0xff]
        %v2100 = vld [vmem:[#allocation3 + $0x378] sm:$0xff]
        %v2101 = vld [vmem:[#allocation3 + $0x380] sm:$0xff]
        %v2102 = vld [vmem:[#allocation3 + $0x388] sm:$0xff]
        %v2103 = vld [vmem:[#allocation3 + $0x390] sm:$0xff]
        %v2104 = vld [vmem:[#allocation3 + $0x398] sm:$0xff]
        %v2105 = vld [vmem:[#allocation3 + $0x3a0] sm:$0xff]
        %v2106 = vld [vmem:[#allocation3 + $0x3a8] sm:$0xff]
        %v2107 = vld [vmem:[#allocation3 + $0x3b0] sm:$0xff]
        %v2108 = vld [vmem:[#allocation3 + $0x3b8] sm:$0xff]
        %v2109 = vld [vmem:[#allocation3 + $0x3c0] sm:$0xff]
        %v2110 = vld [vmem:[#allocation3 + $0x3c8] sm:$0xff]
        %v2111 = vld [vmem:[#allocation3 + $0x3d0] sm:$0xff]
        %v2112 = vld [vmem:[#allocation3 + $0x3d8] sm:$0xff]
        %v2113 = vld [vmem:[#allocation3 + $0x3e0] sm:$0xff]
        %v2114 = vld [vmem:[#allocation3 + $0x3e8] sm:$0xff]
        %v2115 = vld [vmem:[#allocation3 + $0x3f0] sm:$0xff]
        %v2116 = vld [vmem:[#allocation3 + $0x3f8] sm:$0xff]
        %v2117 = vld [vmem:[#allocation3 + $0x400] sm:$0xff]
        %v2118 = vld [vmem:[#allocation3 + $0x408] sm:$0xff]
        %v2119 = vld [vmem:[#allocation3 + $0x410] sm:$0xff]
        %v2120 = vld [vmem:[#allocation3 + $0x418] sm:$0xff]
        %v2121 = vld [vmem:[#allocation3 + $0x420] sm:$0xff]
        %v2122 = vld [vmem:[#allocation3 + $0x428] sm:$0xff]
        %v2123 = vld [vmem:[#allocation3 + $0x430] sm:$0xff]
        %v2124 = vld [vmem:[#allocation3 + $0x438] sm:$0xff]
        %v2125 = vld [vmem:[#allocation3 + $0x440] sm:$0xff]
        %v2126 = vld [vmem:[#allocation3 + $0x448] sm:$0xff]
        %v2127 = vld [vmem:[#allocation3 + $0x450] sm:$0xff]
        %v2128 = vld [vmem:[#allocation3 + $0x458] sm:$0xff]
        %v2129 = vld [vmem:[#allocation3 + $0x460] sm:$0xff]
        %v2130 = vld [vmem:[#allocation3 + $0x468] sm:$0xff]
        %v2131 = vld [vmem:[#allocation3 + $0x470] sm:$0xff]
        %v2132 = vld [vmem:[#allocation3 + $0x478] sm:$0xff]
        %2133 = vmatprep.subr.mxu0 0.0
        %2134 = vmatpush1.msra.mxu0 %v177
        %2135 = vmatprep.subr.mxu0 0.0
        %2136 = vmatpush1.msra.mxu0 %v178
        %2137 = vmatprep.subr.mxu0 0.0
        %2138 = vmatpush1.msra.mxu0 %v179
        %2139 = vmatprep.subr.mxu0 0.0
        %2140 = vmatpush1.msra.mxu0 %v180
        %2141 = vmatprep.subr.mxu0 0.0
        %2142 = vmatpush1.msra.mxu0 %v181
        %2143 = vmatprep.subr.mxu0 0.0
        %2144 = vmatpush1.msra.mxu0 %v182
        %2145 = vmatprep.subr.mxu0 0.0
        %2146 = vmatpush1.msra.mxu0 %v183
        %2147 = vmatprep.subr.mxu0 0.0
        %2148 = vmatpush1.msra.mxu0 %v184
        %2149 = vmatprep.subr.mxu0 0.0
        %2150 = vmatpush1.msra.mxu0 %v185
        %2151 = vmatprep.subr.mxu0 0.0
        %2152 = vmatpush1.msra.mxu0 %v186
        %2153 = vmatprep.subr.mxu0 0.0
        %2154 = vmatpush1.msra.mxu0 %v187
        %2155 = vmatprep.subr.mxu0 0.0
        %2156 = vmatpush1.msra.mxu0 %v188
        %2157 = vmatprep.subr.mxu0 0.0
        %2158 = vmatpush1.msra.mxu0 %v189
        %2159 = vmatprep.subr.mxu0 0.0
        %2160 = vmatpush1.msra.mxu0 %v190
        %2161 = vmatprep.subr.mxu0 0.0
        %2162 = vmatpush1.msra.mxu0 %v191
        %2163 = vmatprep.subr.mxu0 0.0
        %2164 = vmatpush1.msra.mxu0 %v192
        %2165 = vmatprep.subr.mxu0 0.0
        %2166 = vmatpush1.msra.mxu0 %v193
        %2167 = vmatprep.subr.mxu0 0.0
        %2168 = vmatpush1.msra.mxu0 %v194
        %2169 = vmatprep.subr.mxu0 0.0
        %2170 = vmatpush1.msra.mxu0 %v195
        %2171 = vmatprep.subr.mxu0 0.0
        %2172 = vmatpush1.msra.mxu0 %v196
        %2173 = vmatprep.subr.mxu0 0.0
        %2174 = vmatpush1.msra.mxu0 %v197
        %2175 = vmatprep.subr.mxu0 0.0
        %2176 = vmatpush1.msra.mxu0 %v198
        %2177 = vmatprep.subr.mxu0 0.0
        %2178 = vmatpush1.msra.mxu0 %v199
        %2179 = vmatprep.subr.mxu0 0.0
        %2180 = vmatpush1.msra.mxu0 %v200
        %2181 = vmatprep.subr.mxu0 0.0
        %2182 = vmatpush1.msra.mxu0 %v201
        %2183 = vmatprep.subr.mxu0 0.0
        %2184 = vmatpush1.msra.mxu0 %v202
        %2185 = vmatprep.subr.mxu0 0.0
        %2186 = vmatpush1.msra.mxu0 %v203
        %2187 = vmatprep.subr.mxu0 0.0
        %2188 = vmatpush1.msra.mxu0 %v204
        %2189 = vmatprep.subr.mxu0 0.0
        %2190 = vmatpush1.msra.mxu0 %v205
        %2191 = vmatprep.subr.mxu0 0.0
        %2192 = vmatpush1.msra.mxu0 %v206
        %2193 = vmatprep.subr.mxu0 0.0
        %2194 = vmatpush1.msra.mxu0 %v207
        %2195 = vmatprep.subr.mxu0 0.0
        %2196 = vmatpush1.msra.mxu0 %v208
        %2197 = vmatprep.mubr.f32.mxu0 %v1990
        %2198 = vmatmul.mubr.f32.gmra.mrb[0].mxu0 %v1989
        %v2199 = vpop.f32.mrb[0].mxu0
        %v2200 = vadd.f32 0.0, %v2199
        %v2201 = vpop.f32.mrb[0].mxu0
        %2202 = vmatprep.mubr.f32.mxu0 %v1999
        %2203 = vmatmul.mubr.f32.gmra.mrb[0].mxu0 %v1998
        %v2204 = vpop.f32.mrb[0].mxu0
        %v2205 = vadd.f32 0.0, %v2204
        %v2206 = vpop.f32.mrb[0].mxu0
        %2207 = vmatprep.mubr.f32.mxu0 %v2008
        %2208 = vmatmul.mubr.f32.gmra.mrb[0].mxu0 %v2007
        %v2209 = vpop.f32.mrb[0].mxu0
        %v2210 = vadd.f32 0.0, %v2209
        %v2211 = vpop.f32.mrb[0].mxu0
        %2212 = vmatprep.mubr.f32.mxu0 %v2017
        %2213 = vmatmul.mubr.f32.gmra.mrb[0].mxu0 %v2016
        %v2214 = vpop.f32.mrb[0].mxu0
        %v2215 = vadd.f32 0.0, %v2214
        %v2216 = vpop.f32.mrb[0].mxu0
        %2217 = vmatprep.mubr.f32.mxu0 %v2026
        %2218 = vmatmul.mubr.f32.gmra.mrb[0].mxu0 %v2025
        %v2219 = vpop.f32.mrb[0].mxu0
        %v2220 = vadd.f32 0.0, %v2219
        %v2221 = vpop.f32.mrb[0].mxu0
        %2222 = vmatprep.mubr.f32.mxu0 %v2035
        %2223 = vmatmul.mubr.f32.gmra.mrb[0].mxu0 %v2034
        %v2224 = vpop.f32.mrb[0].mxu0
        %v2225 = vadd.f32 0.0, %v2224
        %v2226 = vpop.f32.mrb[0].mxu0
        %2227 = vmatprep.mubr.f32.mxu0 %v2044
        %2228 = vmatmul.mubr.f32.gmra.mrb[0].mxu0 %v2043
        %v2229 = vpop.f32.mrb[0].mxu0
        %v2230 = vadd.f32 0.0, %v2229
        %v2231 = vpop.f32.mrb[0].mxu0
        %2232 = vmatprep.mubr.f32.mxu0 %v2053
        %2233 = vmatmul.mubr.f32.gmra.mrb[0].mxu0 %v2052
        %v2234 = vpop.f32.mrb[0].mxu0
        %v2235 = vadd.f32 0.0, %v2234
        %v2236 = vpop.f32.mrb[0].mxu0
        %2237 = vmatprep.mubr.f32.mxu0 %v2062
        %2238 = vmatmul.mubr.f32.gmra.mrb[0].mxu0 %v2061
        %v2239 = vpop.f32.mrb[0].mxu0
        %v2240 = vadd.f32 0.0, %v2239
        %v2241 = vpop.f32.mrb[0].mxu0
        %2242 = vmatprep.mubr.f32.mxu0 %v2071
        %2243 = vmatmul.mubr.f32.gmra.mrb[0].mxu0 %v2070
        %v2244 = vpop.f32.mrb[0].mxu0
        %v2245 = vadd.f32 0.0, %v2244
        %v2246 = vpop.f32.mrb[0].mxu0
        %2247 = vmatprep.mubr.f32.mxu0 %v2080
        %2248 = vmatmul.mubr.f32.gmra.mrb[0].mxu0 %v2079
        %v2249 = vpop.f32.mrb[0].mxu0
        %v2250 = vadd.f32 0.0, %v2249
        %v2251 = vpop.f32.mrb[0].mxu0
        %2252 = vmatprep.mubr.f32.mxu0 %v2089
        %2253 = vmatmul.mubr.f32.gmra.mrb[0].mxu0 %v2088
        %v2254 = vpop.f32.mrb[0].mxu0
        %v2255 = vadd.f32 0.0, %v2254
        %v2256 = vpop.f32.mrb[0].mxu0
        %2257 = vmatprep.mubr.f32.mxu0 %v2098
        %2258 = vmatmul.mubr.f32.gmra.mrb[0].mxu0 %v2097
        %v2259 = vpop.f32.mrb[0].mxu0
        %v2260 = vadd.f32 0.0, %v2259
        %v2261 = vpop.f32.mrb[0].mxu0
        %2262 = vmatprep.mubr.f32.mxu0 %v2107
        %2263 = vmatmul.mubr.f32.gmra.mrb[0].mxu0 %v2106
        %v2264 = vpop.f32.mrb[0].mxu0
        %v2265 = vadd.f32 0.0, %v2264
        %v2266 = vpop.f32.mrb[0].mxu0
        %2267 = vmatprep.mubr.f32.mxu0 %v2116
        %2268 = vmatmul.mubr.f32.gmra.mrb[0].mxu0 %v2115
        %v2269 = vpop.f32.mrb[0].mxu0
        %v2270 = vadd.f32 0.0, %v2269
        %v2271 = vpop.f32.mrb[0].mxu0
        %2272 = vmatprep.mubr.f32.mxu0 %v2125
        %2273 = vmatmul.mubr.f32.gmra.mrb[0].mxu0 %v2124
        %v2274 = vpop.f32.mrb[0].mxu0
        %v2275 = vadd.f32 0.0, %v2274
        %v2276 = vpop.f32.mrb[0].mxu0
        %2277 = vdwg.mxu0
        %2278 = vmatprep.subr.mxu0 0.0
        %2279 = vmatpush1.msra.mxu0 %v209
        %2280 = vmatprep.subr.mxu0 0.0
        %2281 = vmatpush1.msra.mxu0 %v210
        %2282 = vmatprep.subr.mxu0 0.0
        %2283 = vmatpush1.msra.mxu0 %v211
        %2284 = vmatprep.subr.mxu0 0.0
        %2285 = vmatpush1.msra.mxu0 %v212
        %2286 = vmatprep.subr.mxu0 0.0
        %2287 = vmatpush1.msra.mxu0 %v213
        %2288 = vmatprep.subr.mxu0 0.0
        %2289 = vmatpush1.msra.mxu0 %v214
        %2290 = vmatprep.subr.mxu0 0.0
        %2291 = vmatpush1.msra.mxu0 %v215
        %2292 = vmatprep.subr.mxu0 0.0
        %2293 = vmatpush1.msra.mxu0 %v216
        %2294 = vmatprep.subr.mxu0 0.0
        %2295 = vmatpush1.msra.mxu0 %v217
        %2296 = vmatprep.subr.mxu0 0.0
        %2297 = vmatpush1.msra.mxu0 %v218
        %2298 = vmatprep.subr.mxu0 0.0
        %2299 = vmatpush1.msra.mxu0 %v219
        %2300 = vmatprep.subr.mxu0 0.0
        %2301 = vmatpush1.msra.mxu0 %v220
        %2302 = vmatprep.subr.mxu0 0.0
        %2303 = vmatpush1.msra.mxu0 %v221
        %2304 = vmatprep.subr.mxu0 0.0
        %2305 = vmatpush1.msra.mxu0 %v222
        %2306 = vmatprep.subr.mxu0 0.0
        %2307 = vmatpush1.msra.mxu0 %v223
        %2308 = vmatprep.subr.mxu0 0.0
        %2309 = vmatpush1.msra.mxu0 %v224
        %2310 = vmatprep.subr.mxu0 0.0
        %2311 = vmatpush1.msra.mxu0 %v225
        %2312 = vmatprep.subr.mxu0 0.0
        %2313 = vmatpush1.msra.mxu0 %v226
        %2314 = vmatprep.subr.mxu0 0.0
        %2315 = vmatpush1.msra.mxu0 %v227
        %2316 = vmatprep.subr.mxu0 0.0
        %2317 = vmatpush1.msra.mxu0 %v228
        %2318 = vmatprep.subr.mxu0 0.0
        %2319 = vmatpush1.msra.mxu0 %v229
        %2320 = vmatprep.subr.mxu0 0.0
        %2321 = vmatpush1.msra.mxu0 %v230
        %2322 = vmatprep.subr.mxu0 0.0
        %2323 = vmatpush1.msra.mxu0 %v231
        %2324 = vmatprep.subr.mxu0 0.0
        %2325 = vmatpush1.msra.mxu0 %v232
        %2326 = vmatprep.subr.mxu0 0.0
        %2327 = vmatpush1.msra.mxu0 %v233
        %2328 = vmatprep.subr.mxu0 0.0
        %2329 = vmatpush1.msra.mxu0 %v234
        %2330 = vmatprep.subr.mxu0 0.0
        %2331 = vmatpush1.msra.mxu0 %v235
        %2332 = vmatprep.subr.mxu0 0.0
        %2333 = vmatpush1.msra.mxu0 %v236
        %2334 = vmatprep.subr.mxu0 0.0
        %2335 = vmatpush1.msra.mxu0 %v237
        %2336 = vmatprep.subr.mxu0 0.0
        %2337 = vmatpush1.msra.mxu0 %v238
        %2338 = vmatprep.subr.mxu0 0.0
        %2339 = vmatpush1.msra.mxu0 %v239
        %2340 = vmatprep.subr.mxu0 0.0
        %2341 = vmatpush1.msra.mxu0 %v240
        %2342 = vmatprep.mubr.f32.mxu0 %v1992
        %2343 = vmatmul.mubr.f32.gmra.mrb[0].mxu0 %v1991
        %v2344 = vpop.f32.mrb[0].mxu0
        %v2345 = vadd.f32 %v2200, %v2344
        %v2346 = vpop.f32.mrb[0].mxu0
        %2347 = vmatprep.mubr.f32.mxu0 %v2001
        %2348 = vmatmul.mubr.f32.gmra.mrb[0].mxu0 %v2000
        %v2349 = vpop.f32.mrb[0].mxu0
        %v2350 = vadd.f32 %v2205, %v2349
        %v2351 = vpop.f32.mrb[0].mxu0
        %2352 = vmatprep.mubr.f32.mxu0 %v2010
        %2353 = vmatmul.mubr.f32.gmra.mrb[0].mxu0 %v2009
        %v2354 = vpop.f32.mrb[0].mxu0
        %v2355 = vadd.f32 %v2210, %v2354
        %v2356 = vpop.f32.mrb[0].mxu0
        %2357 = vmatprep.mubr.f32.mxu0 %v2019
        %2358 = vmatmul.mubr.f32.gmra.mrb[0].mxu0 %v2018
        %v2359 = vpop.f32.mrb[0].mxu0
        %v2360 = vadd.f32 %v2215, %v2359
        %v2361 = vpop.f32.mrb[0].mxu0
        %2362 = vmatprep.mubr.f32.mxu0 %v2028
        %2363 = vmatmul.mubr.f32.gmra.mrb[0].mxu0 %v2027
        %v2364 = vpop.f32.mrb[0].mxu0
        %v2365 = vadd.f32 %v2220, %v2364
        %v2366 = vpop.f32.mrb[0].mxu0
        %2367 = vmatprep.mubr.f32.mxu0 %v2037
        %2368 = vmatmul.mubr.f32.gmra.mrb[0].mxu0 %v2036
        %v2369 = vpop.f32.mrb[0].mxu0
        %v2370 = vadd.f32 %v2225, %v2369
        %v2371 = vpop.f32.mrb[0].mxu0
        %2372 = vmatprep.mubr.f32.mxu0 %v2046
        %2373 = vmatmul.mubr.f32.gmra.mrb[0].mxu0 %v2045
        %v2374 = vpop.f32.mrb[0].mxu0
        %v2375 = vadd.f32 %v2230, %v2374
        %v2376 = vpop.f32.mrb[0].mxu0
        %2377 = vmatprep.mubr.f32.mxu0 %v2055
        %2378 = vmatmul.mubr.f32.gmra.mrb[0].mxu0 %v2054
        %v2379 = vpop.f32.mrb[0].mxu0
        %v2380 = vadd.f32 %v2235, %v2379
        %v2381 = vpop.f32.mrb[0].mxu0
        %2382 = vmatprep.mubr.f32.mxu0 %v2064
        %2383 = vmatmul.mubr.f32.gmra.mrb[0].mxu0 %v2063
        %v2384 = vpop.f32.mrb[0].mxu0
        %v2385 = vadd.f32 %v2240, %v2384
        %v2386 = vpop.f32.mrb[0].mxu0
        %2387 = vmatprep.mubr.f32.mxu0 %v2073
        %2388 = vmatmul.mubr.f32.gmra.mrb[0].mxu0 %v2072
        %v2389 = vpop.f32.mrb[0].mxu0
        %v2390 = vadd.f32 %v2245, %v2389
        %v2391 = vpop.f32.mrb[0].mxu0
        %2392 = vmatprep.mubr.f32.mxu0 %v2082
        %2393 = vmatmul.mubr.f32.gmra.mrb[0].mxu0 %v2081
        %v2394 = vpop.f32.mrb[0].mxu0
        %v2395 = vadd.f32 %v2250, %v2394
        %v2396 = vpop.f32.mrb[0].mxu0
        %2397 = vmatprep.mubr.f32.mxu0 %v2091
        %2398 = vmatmul.mubr.f32.gmra.mrb[0].mxu0 %v2090
        %v2399 = vpop.f32.mrb[0].mxu0
        %v2400 = vadd.f32 %v2255, %v2399
        %v2401 = vpop.f32.mrb[0].mxu0
        %2402 = vmatprep.mubr.f32.mxu0 %v2100
        %2403 = vmatmul.mubr.f32.gmra.mrb[0].mxu0 %v2099
        %v2404 = vpop.f32.mrb[0].mxu0
        %v2405 = vadd.f32 %v2260, %v2404
        %v2406 = vpop.f32.mrb[0].mxu0
        %2407 = vmatprep.mubr.f32.mxu0 %v2109
        %2408 = vmatmul.mubr.f32.gmra.mrb[0].mxu0 %v2108
        %v2409 = vpop.f32.mrb[0].mxu0
        %v2410 = vadd.f32 %v2265, %v2409
        %v2411 = vpop.f32.mrb[0].mxu0
        %2412 = vmatprep.mubr.f32.mxu0 %v2118
        %2413 = vmatmul.mubr.f32.gmra.mrb[0].mxu0 %v2117
        %v2414 = vpop.f32.mrb[0].mxu0
        %v2415 = vadd.f32 %v2270, %v2414
        %v2416 = vpop.f32.mrb[0].mxu0
        %2417 = vmatprep.mubr.f32.mxu0 %v2127
        %2418 = vmatmul.mubr.f32.gmra.mrb[0].mxu0 %v2126
        %v2419 = vpop.f32.mrb[0].mxu0
        %v2420 = vadd.f32 %v2275, %v2419
        %v2421 = vpop.f32.mrb[0].mxu0
        %2422 = vdwg.mxu0
        %2423 = vmatprep.subr.mxu0 0.0
        %2424 = vmatpush1.msra.mxu0 %v241
        %2425 = vmatprep.subr.mxu0 0.0
        %2426 = vmatpush1.msra.mxu0 %v242
        %2427 = vmatprep.subr.mxu0 0.0
        %2428 = vmatpush1.msra.mxu0 %v243
        %2429 = vmatprep.subr.mxu0 0.0
        %2430 = vmatpush1.msra.mxu0 %v244
        %2431 = vmatprep.subr.mxu0 0.0
        %2432 = vmatpush1.msra.mxu0 %v245
        %2433 = vmatprep.subr.mxu0 0.0
        %2434 = vmatpush1.msra.mxu0 %v246
        %2435 = vmatprep.subr.mxu0 0.0
        %2436 = vmatpush1.msra.mxu0 %v247
        %2437 = vmatprep.subr.mxu0 0.0
        %2438 = vmatpush1.msra.mxu0 %v248
        %2439 = vmatprep.subr.mxu0 0.0
        %2440 = vmatpush1.msra.mxu0 %v249
        %2441 = vmatprep.subr.mxu0 0.0
        %2442 = vmatpush1.msra.mxu0 %v250
        %2443 = vmatprep.subr.mxu0 0.0
        %2444 = vmatpush1.msra.mxu0 %v251
        %2445 = vmatprep.subr.mxu0 0.0
        %2446 = vmatpush1.msra.mxu0 %v252
        %2447 = vmatprep.subr.mxu0 0.0
        %2448 = vmatpush1.msra.mxu0 %v253
        %2449 = vmatprep.subr.mxu0 0.0
        %2450 = vmatpush1.msra.mxu0 %v254
        %2451 = vmatprep.subr.mxu0 0.0
        %2452 = vmatpush1.msra.mxu0 %v255
        %2453 = vmatprep.subr.mxu0 0.0
        %2454 = vmatpush1.msra.mxu0 %v256
        %2455 = vmatprep.subr.mxu0 0.0
        %2456 = vmatpush1.msra.mxu0 %v257
        %2457 = vmatprep.subr.mxu0 0.0
        %2458 = vmatpush1.msra.mxu0 %v258
        %2459 = vmatprep.subr.mxu0 0.0
        %2460 = vmatpush1.msra.mxu0 %v259
        %2461 = vmatprep.subr.mxu0 0.0
        %2462 = vmatpush1.msra.mxu0 %v260
        %2463 = vmatprep.subr.mxu0 0.0
        %2464 = vmatpush1.msra.mxu0 %v261
        %2465 = vmatprep.subr.mxu0 0.0
        %2466 = vmatpush1.msra.mxu0 %v262
        %2467 = vmatprep.subr.mxu0 0.0
        %2468 = vmatpush1.msra.mxu0 %v263
        %2469 = vmatprep.subr.mxu0 0.0
        %2470 = vmatpush1.msra.mxu0 %v264
        %2471 = vmatprep.subr.mxu0 0.0
        %2472 = vmatpush1.msra.mxu0 %v265
        %2473 = vmatprep.subr.mxu0 0.0
        %2474 = vmatpush1.msra.mxu0 %v266
        %2475 = vmatprep.subr.mxu0 0.0
        %2476 = vmatpush1.msra.mxu0 %v267
        %2477 = vmatprep.subr.mxu0 0.0
        %2478 = vmatpush1.msra.mxu0 %v268
        %2479 = vmatprep.subr.mxu0 0.0
        %2480 = vmatpush1.msra.mxu0 %v269
        %2481 = vmatprep.subr.mxu0 0.0
        %2482 = vmatpush1.msra.mxu0 %v270
        %2483 = vmatprep.subr.mxu0 0.0
        %2484 = vmatpush1.msra.mxu0 %v271
        %2485 = vmatprep.subr.mxu0 0.0
        %2486 = vmatpush1.msra.mxu0 %v272
        %2487 = vmatprep.mubr.f32.mxu0 %v1994
        %2488 = vmatmul.mubr.f32.gmra.mrb[0].mxu0 %v1993
        %v2489 = vpop.f32.mrb[0].mxu0
        %v2490 = vadd.f32 %v2345, %v2489
        %v2491 = vpop.f32.mrb[0].mxu0
        %2492 = vmatprep.mubr.f32.mxu0 %v2003
        %2493 = vmatmul.mubr.f32.gmra.mrb[0].mxu0 %v2002
        %v2494 = vpop.f32.mrb[0].mxu0
        %v2495 = vadd.f32 %v2350, %v2494
        %v2496 = vpop.f32.mrb[0].mxu0
        %2497 = vmatprep.mubr.f32.mxu0 %v2012
        %2498 = vmatmul.mubr.f32.gmra.mrb[0].mxu0 %v2011
        %v2499 = vpop.f32.mrb[0].mxu0
        %v2500 = vadd.f32 %v2355, %v2499
        %v2501 = vpop.f32.mrb[0].mxu0
        %2502 = vmatprep.mubr.f32.mxu0 %v2021
        %2503 = vmatmul.mubr.f32.gmra.mrb[0].mxu0 %v2020
        %v2504 = vpop.f32.mrb[0].mxu0
        %v2505 = vadd.f32 %v2360, %v2504
        %v2506 = vpop.f32.mrb[0].mxu0
        %2507 = vmatprep.mubr.f32.mxu0 %v2030
        %2508 = vmatmul.mubr.f32.gmra.mrb[0].mxu0 %v2029
        %v2509 = vpop.f32.mrb[0].mxu0
        %v2510 = vadd.f32 %v2365, %v2509
        %v2511 = vpop.f32.mrb[0].mxu0
        %2512 = vmatprep.mubr.f32.mxu0 %v2039
        %2513 = vmatmul.mubr.f32.gmra.mrb[0].mxu0 %v2038
        %v2514 = vpop.f32.mrb[0].mxu0
        %v2515 = vadd.f32 %v2370, %v2514
        %v2516 = vpop.f32.mrb[0].mxu0
        %2517 = vmatprep.mubr.f32.mxu0 %v2048
        %2518 = vmatmul.mubr.f32.gmra.mrb[0].mxu0 %v2047
        %v2519 = vpop.f32.mrb[0].mxu0
        %v2520 = vadd.f32 %v2375, %v2519
        %v2521 = vpop.f32.mrb[0].mxu0
        %2522 = vmatprep.mubr.f32.mxu0 %v2057
        %2523 = vmatmul.mubr.f32.gmra.mrb[0].mxu0 %v2056
        %v2524 = vpop.f32.mrb[0].mxu0
        %v2525 = vadd.f32 %v2380, %v2524
        %v2526 = vpop.f32.mrb[0].mxu0
        %2527 = vmatprep.mubr.f32.mxu0 %v2066
        %2528 = vmatmul.mubr.f32.gmra.mrb[0].mxu0 %v2065
        %v2529 = vpop.f32.mrb[0].mxu0
        %v2530 = vadd.f32 %v2385, %v2529
        %v2531 = vpop.f32.mrb[0].mxu0
        %2532 = vmatprep.mubr.f32.mxu0 %v2075
        %2533 = vmatmul.mubr.f32.gmra.mrb[0].mxu0 %v2074
        %v2534 = vpop.f32.mrb[0].mxu0
        %v2535 = vadd.f32 %v2390, %v2534
        %v2536 = vpop.f32.mrb[0].mxu0
        %2537 = vmatprep.mubr.f32.mxu0 %v2084
        %2538 = vmatmul.mubr.f32.gmra.mrb[0].mxu0 %v2083
        %v2539 = vpop.f32.mrb[0].mxu0
        %v2540 = vadd.f32 %v2395, %v2539
        %v2541 = vpop.f32.mrb[0].mxu0
        %2542 = vmatprep.mubr.f32.mxu0 %v2093
        %2543 = vmatmul.mubr.f32.gmra.mrb[0].mxu0 %v2092
        %v2544 = vpop.f32.mrb[0].mxu0
        %v2545 = vadd.f32 %v2400, %v2544
        %v2546 = vpop.f32.mrb[0].mxu0
        %2547 = vmatprep.mubr.f32.mxu0 %v2102
        %2548 = vmatmul.mubr.f32.gmra.mrb[0].mxu0 %v2101
        %v2549 = vpop.f32.mrb[0].mxu0
        %v2550 = vadd.f32 %v2405, %v2549
        %v2551 = vpop.f32.mrb[0].mxu0
        %2552 = vmatprep.mubr.f32.mxu0 %v2111
        %2553 = vmatmul.mubr.f32.gmra.mrb[0].mxu0 %v2110
        %v2554 = vpop.f32.mrb[0].mxu0
        %v2555 = vadd.f32 %v2410, %v2554
        %v2556 = vpop.f32.mrb[0].mxu0
        %2557 = vmatprep.mubr.f32.mxu0 %v2120
        %2558 = vmatmul.mubr.f32.gmra.mrb[0].mxu0 %v2119
        %v2559 = vpop.f32.mrb[0].mxu0
        %v2560 = vadd.f32 %v2415, %v2559
        %v2561 = vpop.f32.mrb[0].mxu0
        %2562 = vmatprep.mubr.f32.mxu0 %v2129
        %2563 = vmatmul.mubr.f32.gmra.mrb[0].mxu0 %v2128
        %v2564 = vpop.f32.mrb[0].mxu0
        %v2565 = vadd.f32 %v2420, %v2564
        %v2566 = vpop.f32.mrb[0].mxu0
        %2567 = vdwg.mxu0
        %2568 = vmatprep.subr.mxu0 0.0
        %2569 = vmatpush1.msra.mxu0 %v273
        %2570 = vmatprep.subr.mxu0 0.0
        %2571 = vmatpush1.msra.mxu0 %v274
        %2572 = vmatprep.subr.mxu0 0.0
        %2573 = vmatpush1.msra.mxu0 %v275
        %2574 = vmatprep.subr.mxu0 0.0
        %2575 = vmatpush1.msra.mxu0 %v276
        %2576 = vmatprep.subr.mxu0 0.0
        %2577 = vmatpush1.msra.mxu0 %v277
        %2578 = vmatprep.subr.mxu0 0.0
        %2579 = vmatpush1.msra.mxu0 %v278
        %2580 = vmatprep.subr.mxu0 0.0
        %2581 = vmatpush1.msra.mxu0 %v279
        %2582 = vmatprep.subr.mxu0 0.0
        %2583 = vmatpush1.msra.mxu0 %v280
        %2584 = vmatprep.subr.mxu0 0.0
        %2585 = vmatpush1.msra.mxu0 %v281
        %2586 = vmatprep.subr.mxu0 0.0
        %2587 = vmatpush1.msra.mxu0 %v282
        %2588 = vmatprep.subr.mxu0 0.0
        %2589 = vmatpush1.msra.mxu0 %v283
        %2590 = vmatprep.subr.mxu0 0.0
        %2591 = vmatpush1.msra.mxu0 %v284
        %2592 = vmatprep.subr.mxu0 0.0
        %2593 = vmatpush1.msra.mxu0 %v285
        %2594 = vmatprep.subr.mxu0 0.0
        %2595 = vmatpush1.msra.mxu0 %v286
        %2596 = vmatprep.subr.mxu0 0.0
        %2597 = vmatpush1.msra.mxu0 %v287
        %2598 = vmatprep.subr.mxu0 0.0
        %2599 = vmatpush1.msra.mxu0 %v288
        %2600 = vmatprep.subr.mxu0 0.0
        %2601 = vmatpush1.msra.mxu0 %v289
        %2602 = vmatprep.subr.mxu0 0.0
        %2603 = vmatpush1.msra.mxu0 %v290
        %2604 = vmatprep.subr.mxu0 0.0
        %2605 = vmatpush1.msra.mxu0 %v291
        %2606 = vmatprep.subr.mxu0 0.0
        %2607 = vmatpush1.msra.mxu0 %v292
        %2608 = vmatprep.subr.mxu0 0.0
        %2609 = vmatpush1.msra.mxu0 %v293
        %2610 = vmatprep.subr.mxu0 0.0
        %2611 = vmatpush1.msra.mxu0 %v294
        %2612 = vmatprep.subr.mxu0 0.0
        %2613 = vmatpush1.msra.mxu0 %v295
        %2614 = vmatprep.subr.mxu0 0.0
        %2615 = vmatpush1.msra.mxu0 %v296
        %2616 = vmatprep.subr.mxu0 0.0
        %2617 = vmatpush1.msra.mxu0 %v297
        %2618 = vmatprep.subr.mxu0 0.0
        %2619 = vmatpush1.msra.mxu0 %v298
        %2620 = vmatprep.subr.mxu0 0.0
        %2621 = vmatpush1.msra.mxu0 %v299
        %2622 = vmatprep.subr.mxu0 0.0
        %2623 = vmatpush1.msra.mxu0 %v300
        %2624 = vmatprep.subr.mxu0 0.0
        %2625 = vmatpush1.msra.mxu0 %v301
        %2626 = vmatprep.subr.mxu0 0.0
        %2627 = vmatpush1.msra.mxu0 %v302
        %2628 = vmatprep.subr.mxu0 0.0
        %2629 = vmatpush1.msra.mxu0 %v303
        %2630 = vmatprep.subr.mxu0 0.0
        %2631 = vmatpush1.msra.mxu0 %v304
        %2632 = vmatprep.mubr.f32.mxu0 %v1996
        %2633 = vmatmul.mubr.f32.gmra.mrb[0].mxu0 %v1995
        %v2634 = vpop.f32.mrb[0].mxu0
        %v2635 = vadd.f32 %v2490, %v2634
        %v2636 = vpop.f32.mrb[0].mxu0
        %2637 = vmatprep.mubr.f32.mxu0 %v2005
        %2638 = vmatmul.mubr.f32.gmra.mrb[0].mxu0 %v2004
        %v2639 = vpop.f32.mrb[0].mxu0
        %v2640 = vadd.f32 %v2495, %v2639
        %v2641 = vpop.f32.mrb[0].mxu0
        %2642 = vmatprep.mubr.f32.mxu0 %v2014
        %2643 = vmatmul.mubr.f32.gmra.mrb[0].mxu0 %v2013
        %v2644 = vpop.f32.mrb[0].mxu0
        %v2645 = vadd.f32 %v2500, %v2644
        %v2646 = vpop.f32.mrb[0].mxu0
        %2647 = vmatprep.mubr.f32.mxu0 %v2023
        %2648 = vmatmul.mubr.f32.gmra.mrb[0].mxu0 %v2022
        %v2649 = vpop.f32.mrb[0].mxu0
        %v2650 = vadd.f32 %v2505, %v2649
        %v2651 = vpop.f32.mrb[0].mxu0
        %2652 = vmatprep.mubr.f32.mxu0 %v2032
        %2653 = vmatmul.mubr.f32.gmra.mrb[0].mxu0 %v2031
        %v2654 = vpop.f32.mrb[0].mxu0
        %v2655 = vadd.f32 %v2510, %v2654
        %v2656 = vpop.f32.mrb[0].mxu0
        %2657 = vmatprep.mubr.f32.mxu0 %v2041
        %2658 = vmatmul.mubr.f32.gmra.mrb[0].mxu0 %v2040
        %v2659 = vpop.f32.mrb[0].mxu0
        %v2660 = vadd.f32 %v2515, %v2659
        %v2661 = vpop.f32.mrb[0].mxu0
        %2662 = vmatprep.mubr.f32.mxu0 %v2050
        %2663 = vmatmul.mubr.f32.gmra.mrb[0].mxu0 %v2049
        %v2664 = vpop.f32.mrb[0].mxu0
        %v2665 = vadd.f32 %v2520, %v2664
        %v2666 = vpop.f32.mrb[0].mxu0
        %2667 = vmatprep.mubr.f32.mxu0 %v2059
        %2668 = vmatmul.mubr.f32.gmra.mrb[0].mxu0 %v2058
        %v2669 = vpop.f32.mrb[0].mxu0
        %v2670 = vadd.f32 %v2525, %v2669
        %v2671 = vpop.f32.mrb[0].mxu0
        %2672 = vmatprep.mubr.f32.mxu0 %v2068
        %2673 = vmatmul.mubr.f32.gmra.mrb[0].mxu0 %v2067
        %v2674 = vpop.f32.mrb[0].mxu0
        %v2675 = vadd.f32 %v2530, %v2674
        %v2676 = vpop.f32.mrb[0].mxu0
        %2677 = vmatprep.mubr.f32.mxu0 %v2077
        %2678 = vmatmul.mubr.f32.gmra.mrb[0].mxu0 %v2076
        %v2679 = vpop.f32.mrb[0].mxu0
        %v2680 = vadd.f32 %v2535, %v2679
        %v2681 = vpop.f32.mrb[0].mxu0
        %2682 = vmatprep.mubr.f32.mxu0 %v2086
        %2683 = vmatmul.mubr.f32.gmra.mrb[0].mxu0 %v2085
        %v2684 = vpop.f32.mrb[0].mxu0
        %v2685 = vadd.f32 %v2540, %v2684
        %v2686 = vpop.f32.mrb[0].mxu0
        %2687 = vmatprep.mubr.f32.mxu0 %v2095
        %2688 = vmatmul.mubr.f32.gmra.mrb[0].mxu0 %v2094
        %v2689 = vpop.f32.mrb[0].mxu0
        %v2690 = vadd.f32 %v2545, %v2689
        %v2691 = vpop.f32.mrb[0].mxu0
        %2692 = vmatprep.mubr.f32.mxu0 %v2104
        %2693 = vmatmul.mubr.f32.gmra.mrb[0].mxu0 %v2103
        %v2694 = vpop.f32.mrb[0].mxu0
        %v2695 = vadd.f32 %v2550, %v2694
        %v2696 = vpop.f32.mrb[0].mxu0
        %2697 = vmatprep.mubr.f32.mxu0 %v2113
        %2698 = vmatmul.mubr.f32.gmra.mrb[0].mxu0 %v2112
        %v2699 = vpop.f32.mrb[0].mxu0
        %v2700 = vadd.f32 %v2555, %v2699
        %v2701 = vpop.f32.mrb[0].mxu0
        %2702 = vmatprep.mubr.f32.mxu0 %v2122
        %2703 = vmatmul.mubr.f32.gmra.mrb[0].mxu0 %v2121
        %v2704 = vpop.f32.mrb[0].mxu0
        %v2705 = vadd.f32 %v2560, %v2704
        %v2706 = vpop.f32.mrb[0].mxu0
        %2707 = vmatprep.mubr.f32.mxu0 %v2131
        %2708 = vmatmul.mubr.f32.gmra.mrb[0].mxu0 %v2130
        %v2709 = vpop.f32.mrb[0].mxu0
        %v2710 = vadd.f32 %v2565, %v2709
        %v2711 = vpop.f32.mrb[0].mxu0
        %2712 = vdwg.mxu0
        %2713 = vmatprep.subr.mxu0 0.0
        %2714 = vmatpush1.msra.mxu0 %v305
        %2715 = vmatprep.subr.mxu0 0.0
        %2716 = vmatpush1.msra.mxu0 %v306
        %2717 = vmatprep.subr.mxu0 0.0
        %2718 = vmatpush1.msra.mxu0 %v307
        %2719 = vmatprep.subr.mxu0 0.0
        %2720 = vmatpush1.msra.mxu0 %v308
        %2721 = vmatprep.subr.mxu0 0.0
        %2722 = vmatpush1.msra.mxu0 %v309
        %2723 = vmatprep.subr.mxu0 0.0
        %2724 = vmatpush1.msra.mxu0 %v310
        %2725 = vmatprep.subr.mxu0 0.0
        %2726 = vmatpush1.msra.mxu0 %v311
        %2727 = vmatprep.subr.mxu0 0.0
        %2728 = vmatpush1.msra.mxu0 %v312
        %2729 = vmatprep.subr.mxu0 0.0
        %2730 = vmatpush1.msra.mxu0 %v313
        %2731 = vmatprep.subr.mxu0 0.0
        %2732 = vmatpush1.msra.mxu0 %v314
        %2733 = vmatprep.subr.mxu0 0.0
        %2734 = vmatpush1.msra.mxu0 %v315
        %2735 = vmatprep.subr.mxu0 0.0
        %2736 = vmatpush1.msra.mxu0 %v316
        %2737 = vmatprep.subr.mxu0 0.0
        %2738 = vmatpush1.msra.mxu0 %v317
        %2739 = vmatprep.subr.mxu0 0.0
        %2740 = vmatpush1.msra.mxu0 %v318
        %2741 = vmatprep.subr.mxu0 0.0
        %2742 = vmatpush1.msra.mxu0 %v319
        %2743 = vmatprep.subr.mxu0 0.0
        %2744 = vmatpush1.msra.mxu0 %v320
        %2745 = vmatprep.subr.mxu0 0.0
        %2746 = vmatpush1.msra.mxu0 0.0
        %2747 = vmatprep.subr.mxu0 0.0
        %2748 = vmatpush1.msra.mxu0 0.0
        %2749 = vmatprep.subr.mxu0 0.0
        %2750 = vmatpush1.msra.mxu0 0.0
        %2751 = vmatprep.subr.mxu0 0.0
        %2752 = vmatpush1.msra.mxu0 0.0
        %2753 = vmatprep.subr.mxu0 0.0
        %2754 = vmatpush1.msra.mxu0 0.0
        %2755 = vmatprep.subr.mxu0 0.0
        %2756 = vmatpush1.msra.mxu0 0.0
        %2757 = vmatprep.subr.mxu0 0.0
        %2758 = vmatpush1.msra.mxu0 0.0
        %2759 = vmatprep.subr.mxu0 0.0
        %2760 = vmatpush1.msra.mxu0 0.0
        %2761 = vmatprep.subr.mxu0 0.0
        %2762 = vmatpush1.msra.mxu0 0.0
        %2763 = vmatprep.subr.mxu0 0.0
        %2764 = vmatpush1.msra.mxu0 0.0
        %2765 = vmatprep.subr.mxu0 0.0
        %2766 = vmatpush1.msra.mxu0 0.0
        %2767 = vmatprep.subr.mxu0 0.0
        %2768 = vmatpush1.msra.mxu0 0.0
        %2769 = vmatprep.subr.mxu0 0.0
        %2770 = vmatpush1.msra.mxu0 0.0
        %2771 = vmatprep.subr.mxu0 0.0
        %2772 = vmatpush1.msra.mxu0 0.0
        %2773 = vmatprep.subr.mxu0 0.0
        %2774 = vmatpush1.msra.mxu0 0.0
        %2775 = vmatprep.subr.mxu0 0.0
        %2776 = vmatpush1.msra.mxu0 0.0
        %2777 = vmatprep.mubr.f32.mxu0 0.0
        %2778 = vmatmul.mubr.f32.gmra.mrb[0].mxu0 %v1997
        %v2779 = vpop.f32.mrb[0].mxu0
        %v2780 = vadd.f32 %v2635, %v2779
        %v2781 = vpop.f32.mrb[0].mxu0
        %2782 = vmatprep.mubr.f32.mxu0 0.0
        %2783 = vmatmul.mubr.f32.gmra.mrb[0].mxu0 %v2006
        %v2784 = vpop.f32.mrb[0].mxu0
        %v2785 = vadd.f32 %v2640, %v2784
        %v2786 = vpop.f32.mrb[0].mxu0
        %2787 = vmatprep.mubr.f32.mxu0 0.0
        %2788 = vmatmul.mubr.f32.gmra.mrb[0].mxu0 %v2015
        %v2789 = vpop.f32.mrb[0].mxu0
        %v2790 = vadd.f32 %v2645, %v2789
        %v2791 = vpop.f32.mrb[0].mxu0
        %2792 = vmatprep.mubr.f32.mxu0 0.0
        %2793 = vmatmul.mubr.f32.gmra.mrb[0].mxu0 %v2024
        %v2794 = vpop.f32.mrb[0].mxu0
        %v2795 = vadd.f32 %v2650, %v2794
        %v2796 = vpop.f32.mrb[0].mxu0
        %2797 = vmatprep.mubr.f32.mxu0 0.0
        %2798 = vmatmul.mubr.f32.gmra.mrb[0].mxu0 %v2033
        %v2799 = vpop.f32.mrb[0].mxu0
        %v2800 = vadd.f32 %v2655, %v2799
        %v2801 = vpop.f32.mrb[0].mxu0
        %2802 = vmatprep.mubr.f32.mxu0 0.0
        %2803 = vmatmul.mubr.f32.gmra.mrb[0].mxu0 %v2042
        %v2804 = vpop.f32.mrb[0].mxu0
        %v2805 = vadd.f32 %v2660, %v2804
        %v2806 = vpop.f32.mrb[0].mxu0
        %2807 = vmatprep.mubr.f32.mxu0 0.0
        %2808 = vmatmul.mubr.f32.gmra.mrb[0].mxu0 %v2051
        %v2809 = vpop.f32.mrb[0].mxu0
        %v2810 = vadd.f32 %v2665, %v2809
        %v2811 = vpop.f32.mrb[0].mxu0
        %2812 = vmatprep.mubr.f32.mxu0 0.0
        %2813 = vmatmul.mubr.f32.gmra.mrb[0].mxu0 %v2060
        %v2814 = vpop.f32.mrb[0].mxu0
        %v2815 = vadd.f32 %v2670, %v2814
        %v2816 = vpop.f32.mrb[0].mxu0
        %2817 = vmatprep.mubr.f32.mxu0 0.0
        %2818 = vmatmul.mubr.f32.gmra.mrb[0].mxu0 %v2069
        %v2819 = vpop.f32.mrb[0].mxu0
        %v2820 = vadd.f32 %v2675, %v2819
        %v2821 = vpop.f32.mrb[0].mxu0
        %2822 = vmatprep.mubr.f32.mxu0 0.0
        %2823 = vmatmul.mubr.f32.gmra.mrb[0].mxu0 %v2078
        %v2824 = vpop.f32.mrb[0].mxu0
        %v2825 = vadd.f32 %v2680, %v2824
        %v2826 = vpop.f32.mrb[0].mxu0
        %2827 = vmatprep.mubr.f32.mxu0 0.0
        %2828 = vmatmul.mubr.f32.gmra.mrb[0].mxu0 %v2087
        %v2829 = vpop.f32.mrb[0].mxu0
        %v2830 = vadd.f32 %v2685, %v2829
        %v2831 = vpop.f32.mrb[0].mxu0
        %2832 = vmatprep.mubr.f32.mxu0 0.0
        %2833 = vmatmul.mubr.f32.gmra.mrb[0].mxu0 %v2096
        %v2834 = vpop.f32.mrb[0].mxu0
        %v2835 = vadd.f32 %v2690, %v2834
        %v2836 = vpop.f32.mrb[0].mxu0
        %2837 = vmatprep.mubr.f32.mxu0 0.0
        %2838 = vmatmul.mubr.f32.gmra.mrb[0].mxu0 %v2105
        %v2839 = vpop.f32.mrb[0].mxu0
        %v2840 = vadd.f32 %v2695, %v2839
        %v2841 = vpop.f32.mrb[0].mxu0
        %2842 = vmatprep.mubr.f32.mxu0 0.0
        %2843 = vmatmul.mubr.f32.gmra.mrb[0].mxu0 %v2114
        %v2844 = vpop.f32.mrb[0].mxu0
        %v2845 = vadd.f32 %v2700, %v2844
        %v2846 = vpop.f32.mrb[0].mxu0
        %2847 = vmatprep.mubr.f32.mxu0 0.0
        %2848 = vmatmul.mubr.f32.gmra.mrb[0].mxu0 %v2123
        %v2849 = vpop.f32.mrb[0].mxu0
        %v2850 = vadd.f32 %v2705, %v2849
        %v2851 = vpop.f32.mrb[0].mxu0
        %2852 = vmatprep.mubr.f32.mxu0 0.0
        %2853 = vmatmul.mubr.f32.gmra.mrb[0].mxu0 %v2132
        %v2854 = vpop.f32.mrb[0].mxu0
        %v2855 = vadd.f32 %v2710, %v2854
        %v2856 = vpop.f32.mrb[0].mxu0
        %2857 = vdwg.mxu0
        %2858 = vst [vmem:[#allocation4 + $0x80] sm:$0xff] %v2780
        %2859 = vst [vmem:[#allocation4 + $0x88] sm:$0xff] %v2785
        %2860 = vst [vmem:[#allocation4 + $0x90] sm:$0xff] %v2790
        %2861 = vst [vmem:[#allocation4 + $0x98] sm:$0xff] %v2795
        %2862 = vst [vmem:[#allocation4 + $0xa0] sm:$0xff] %v2800
        %2863 = vst [vmem:[#allocation4 + $0xa8] sm:$0xff] %v2805
        %2864 = vst [vmem:[#allocation4 + $0xb0] sm:$0xff] %v2810
        %2865 = vst [vmem:[#allocation4 + $0xb8] sm:$0xff] %v2815
        %2866 = vst [vmem:[#allocation4 + $0xc0] sm:$0xff] %v2820
        %2867 = vst [vmem:[#allocation4 + $0xc8] sm:$0xff] %v2825
        %2868 = vst [vmem:[#allocation4 + $0xd0] sm:$0xff] %v2830
        %2869 = vst [vmem:[#allocation4 + $0xd8] sm:$0xff] %v2835
        %2870 = vst [vmem:[#allocation4 + $0xe0] sm:$0xff] %v2840
        %2871 = vst [vmem:[#allocation4 + $0xe8] sm:$0xff] %v2845
        %2872 = vst [vmem:[#allocation4 + $0xf0] sm:$0xff] %v2850
        %2873 = vst [vmem:[#allocation4 + $0xf8] sm:$0xff] %v2855
        %v2874 = vadd.f32 %v2780, %v2785
        %v2875 = vadd.f32 %v2874, %v2790
        %v2876 = vadd.f32 %v2875, %v2795
        %v2877 = vadd.f32 %v2876, %v2800
        %v2878 = vadd.f32 %v2877, %v2805
        %v2879 = vadd.f32 %v2878, %v2810
        %v2880 = vadd.f32 %v2879, %v2815
        %v2881 = vadd.f32 %v2880, %v2820
        %v2882 = vadd.f32 %v2881, %v2825
        %v2883 = vadd.f32 %v2882, %v2830
        %v2884 = vadd.f32 %v2883, %v2835
        %v2885 = vadd.f32 %v2884, %v2840
        %v2886 = vadd.f32 %v2885, %v2845
        %v2887 = vadd.f32 %v2886, %v2850
        %v2888 = vadd.f32 %v2887, %v2855
        %v2889 = vrot.slane %v2888, 4
        %v2890 = vadd.f32 %v2888, %v2889
        %v2891 = vrot.slane %v2890, 2
        %v2892 = vadd.f32 %v2890, %v2891
        %v2893 = vrot.slane %v2892, 1
        %v2894 = vadd.f32 %v2892, %v2893
        %v2895 = vadd.f32 %v1659, %v2894
        %v2896 = vmul.f32 %v2780, %v2780
        %v2897 = vmul.f32 %v2785, %v2785
        %v2898 = vmul.f32 %v2790, %v2790
        %v2899 = vmul.f32 %v2795, %v2795
        %v2900 = vmul.f32 %v2800, %v2800
        %v2901 = vmul.f32 %v2805, %v2805
        %v2902 = vmul.f32 %v2810, %v2810
        %v2903 = vmul.f32 %v2815, %v2815
        %v2904 = vmul.f32 %v2820, %v2820
        %v2905 = vmul.f32 %v2825, %v2825
        %v2906 = vmul.f32 %v2830, %v2830
        %v2907 = vmul.f32 %v2835, %v2835
        %v2908 = vmul.f32 %v2840, %v2840
        %v2909 = vmul.f32 %v2845, %v2845
        %v2910 = vmul.f32 %v2850, %v2850
        %v2911 = vmul.f32 %v2855, %v2855
        %v2912 = vadd.f32 %v2896, %v2897
        %v2913 = vadd.f32 %v2912, %v2898
        %v2914 = vadd.f32 %v2913, %v2899
        %v2915 = vadd.f32 %v2914, %v2900
        %v2916 = vadd.f32 %v2915, %v2901
        %v2917 = vadd.f32 %v2916, %v2902
        %v2918 = vadd.f32 %v2917, %v2903
        %v2919 = vadd.f32 %v2918, %v2904
        %v2920 = vadd.f32 %v2919, %v2905
        %v2921 = vadd.f32 %v2920, %v2906
        %v2922 = vadd.f32 %v2921, %v2907
        %v2923 = vadd.f32 %v2922, %v2908
        %v2924 = vadd.f32 %v2923, %v2909
        %v2925 = vadd.f32 %v2924, %v2910
        %v2926 = vadd.f32 %v2925, %v2911
        %v2927 = vrot.slane %v2926, 4
        %v2928 = vadd.f32 %v2926, %v2927
        %v2929 = vrot.slane %v2928, 2
        %v2930 = vadd.f32 %v2928, %v2929
        %v2931 = vrot.slane %v2930, 1
        %v2932 = vadd.f32 %v2930, %v2931
        %v2933 = vadd.f32 %v1697, %v2932
        %v2934 = vmul.f32 %v2895, 0.00390625
        %v2935 = vmul.f32 %v2933, 0.00390625
        %v2936 = vmul.f32 %v2934, %v2934
        %v2937 = vsub.f32 %v2935, %v2936
        %v2938 = vmax.f32 %v2937, 0.0
        %v2939 = vadd.f32 %v2938, 1e-05
        %v2940 = vrsqrt.pop %v2939
        %v2941 = vld [vmem:[#allocation4] sm:$0xff]
        %v2942 = vld [vmem:[#allocation4 + $0x8] sm:$0xff]
        %v2943 = vld [vmem:[#allocation4 + $0x10] sm:$0xff]
        %v2944 = vld [vmem:[#allocation4 + $0x18] sm:$0xff]
        %v2945 = vld [vmem:[#allocation4 + $0x20] sm:$0xff]
        %v2946 = vld [vmem:[#allocation4 + $0x28] sm:$0xff]
        %v2947 = vld [vmem:[#allocation4 + $0x30] sm:$0xff]
        %v2948 = vld [vmem:[#allocation4 + $0x38] sm:$0xff]
        %v2949 = vld [vmem:[#allocation4 + $0x40] sm:$0xff]
        %v2950 = vld [vmem:[#allocation4 + $0x48] sm:$0xff]
        %v2951 = vld [vmem:[#allocation4 + $0x50] sm:$0xff]
        %v2952 = vld [vmem:[#allocation4 + $0x58] sm:$0xff]
        %v2953 = vld [vmem:[#allocation4 + $0x60] sm:$0xff]
        %v2954 = vld [vmem:[#allocation4 + $0x68] sm:$0xff]
        %v2955 = vld [vmem:[#allocation4 + $0x70] sm:$0xff]
        %v2956 = vld [vmem:[#allocation4 + $0x78] sm:$0xff]
        %v2957 = vld [vmem:[#allocation4 + $0x80] sm:$0xff]
        %v2958 = vld [vmem:[#allocation4 + $0x88] sm:$0xff]
        %v2959 = vld [vmem:[#allocation4 + $0x90] sm:$0xff]
        %v2960 = vld [vmem:[#allocation4 + $0x98] sm:$0xff]
        %v2961 = vld [vmem:[#allocation4 + $0xa0] sm:$0xff]
        %v2962 = vld [vmem:[#allocation4 + $0xa8] sm:$0xff]
        %v2963 = vld [vmem:[#allocation4 + $0xb0] sm:$0xff]
        %v2964 = vld [vmem:[#allocation4 + $0xb8] sm:$0xff]
        %v2965 = vld [vmem:[#allocation4 + $0xc0] sm:$0xff]
        %v2966 = vld [vmem:[#allocation4 + $0xc8] sm:$0xff]
        %v2967 = vld [vmem:[#allocation4 + $0xd0] sm:$0xff]
        %v2968 = vld [vmem:[#allocation4 + $0xd8] sm:$0xff]
        %v2969 = vld [vmem:[#allocation4 + $0xe0] sm:$0xff]
        %v2970 = vld [vmem:[#allocation4 + $0xe8] sm:$0xff]
        %v2971 = vld [vmem:[#allocation4 + $0xf0] sm:$0xff]
        %v2972 = vld [vmem:[#allocation4 + $0xf8] sm:$0xff]
        %v2973 = vsub.f32 %v2941, %v2934
        %v2974 = vsub.f32 %v2942, %v2934
        %v2975 = vsub.f32 %v2943, %v2934
        %v2976 = vsub.f32 %v2944, %v2934
        %v2977 = vsub.f32 %v2945, %v2934
        %v2978 = vsub.f32 %v2946, %v2934
        %v2979 = vsub.f32 %v2947, %v2934
        %v2980 = vsub.f32 %v2948, %v2934
        %v2981 = vsub.f32 %v2949, %v2934
        %v2982 = vsub.f32 %v2950, %v2934
        %v2983 = vsub.f32 %v2951, %v2934
        %v2984 = vsub.f32 %v2952, %v2934
        %v2985 = vsub.f32 %v2953, %v2934
        %v2986 = vsub.f32 %v2954, %v2934
        %v2987 = vsub.f32 %v2955, %v2934
        %v2988 = vsub.f32 %v2956, %v2934
        %v2989 = vsub.f32 %v2957, %v2934
        %v2990 = vsub.f32 %v2958, %v2934
        %v2991 = vsub.f32 %v2959, %v2934
        %v2992 = vsub.f32 %v2960, %v2934
        %v2993 = vsub.f32 %v2961, %v2934
        %v2994 = vsub.f32 %v2962, %v2934
        %v2995 = vsub.f32 %v2963, %v2934
        %v2996 = vsub.f32 %v2964, %v2934
        %v2997 = vsub.f32 %v2965, %v2934
        %v2998 = vsub.f32 %v2966, %v2934
        %v2999 = vsub.f32 %v2967, %v2934
        %v3000 = vsub.f32 %v2968, %v2934
        %v3001 = vsub.f32 %v2969, %v2934
        %v3002 = vsub.f32 %v2970, %v2934
        %v3003 = vsub.f32 %v2971, %v2934
        %v3004 = vsub.f32 %v2972, %v2934
        %v3005 = vmul.f32 %v2973, %v2940
        %v3006 = vmul.f32 %v2974, %v2940
        %v3007 = vmul.f32 %v2975, %v2940
        %v3008 = vmul.f32 %v2976, %v2940
        %v3009 = vmul.f32 %v2977, %v2940
        %v3010 = vmul.f32 %v2978, %v2940
        %v3011 = vmul.f32 %v2979, %v2940
        %v3012 = vmul.f32 %v2980, %v2940
        %v3013 = vmul.f32 %v2981, %v2940
        %v3014 = vmul.f32 %v2982, %v2940
        %v3015 = vmul.f32 %v2983, %v2940
        %v3016 = vmul.f32 %v2984, %v2940
        %v3017 = vmul.f32 %v2985, %v2940
        %v3018 = vmul.f32 %v2986, %v2940
        %v3019 = vmul.f32 %v2987, %v2940
        %v3020 = vmul.f32 %v2988, %v2940
        %v3021 = vmul.f32 %v2989, %v2940
        %v3022 = vmul.f32 %v2990, %v2940
        %v3023 = vmul.f32 %v2991, %v2940
        %v3024 = vmul.f32 %v2992, %v2940
        %v3025 = vmul.f32 %v2993, %v2940
        %v3026 = vmul.f32 %v2994, %v2940
        %v3027 = vmul.f32 %v2995, %v2940
        %v3028 = vmul.f32 %v2996, %v2940
        %v3029 = vmul.f32 %v2997, %v2940
        %v3030 = vmul.f32 %v2998, %v2940
        %v3031 = vmul.f32 %v2999, %v2940
        %v3032 = vmul.f32 %v3000, %v2940
        %v3033 = vmul.f32 %v3001, %v2940
        %v3034 = vmul.f32 %v3002, %v2940
        %v3035 = vmul.f32 %v3003, %v2940
        %v3036 = vmul.f32 %v3004, %v2940
        %v3037 = vmax.f32 %v3005, 0.0
        %v3038 = vmax.f32 %v3006, 0.0
        %v3039 = vmax.f32 %v3007, 0.0
        %v3040 = vmax.f32 %v3008, 0.0
        %v3041 = vmax.f32 %v3009, 0.0
        %v3042 = vmax.f32 %v3010, 0.0
        %v3043 = vmax.f32 %v3011, 0.0
        %v3044 = vmax.f32 %v3012, 0.0
        %v3045 = vmax.f32 %v3013, 0.0
        %v3046 = vmax.f32 %v3014, 0.0
        %v3047 = vmax.f32 %v3015, 0.0
        %v3048 = vmax.f32 %v3016, 0.0
        %v3049 = vmax.f32 %v3017, 0.0
        %v3050 = vmax.f32 %v3018, 0.0
        %v3051 = vmax.f32 %v3019, 0.0
        %v3052 = vmax.f32 %v3020, 0.0
        %v3053 = vmax.f32 %v3021, 0.0
        %v3054 = vmax.f32 %v3022, 0.0
        %v3055 = vmax.f32 %v3023, 0.0
        %v3056 = vmax.f32 %v3024, 0.0
        %v3057 = vmax.f32 %v3025, 0.0
        %v3058 = vmax.f32 %v3026, 0.0
        %v3059 = vmax.f32 %v3027, 0.0
        %v3060 = vmax.f32 %v3028, 0.0
        %v3061 = vmax.f32 %v3029, 0.0
        %v3062 = vmax.f32 %v3030, 0.0
        %v3063 = vmax.f32 %v3031, 0.0
        %v3064 = vmax.f32 %v3032, 0.0
        %v3065 = vmax.f32 %v3033, 0.0
        %v3066 = vmax.f32 %v3034, 0.0
        %v3067 = vmax.f32 %v3035, 0.0
        %v3068 = vmax.f32 %v3036, 0.0
        %3069 = vst [vmem:[%s353 + $0x1] sm:$0xff] %v3037
        %3070 = vst [vmem:[%s353 + $0x9] sm:$0xff] %v3038
        %3071 = vst [vmem:[%s353 + $0x19] sm:$0xff] %v3039
        %3072 = vst [vmem:[%s353 + $0x21] sm:$0xff] %v3040
        %3073 = vst [vmem:[%s353 + $0x31] sm:$0xff] %v3041
        %3074 = vst [vmem:[%s353 + $0x39] sm:$0xff] %v3042
        %3075 = vst [vmem:[%s353 + $0x49] sm:$0xff] %v3043
        %3076 = vst [vmem:[%s353 + $0x51] sm:$0xff] %v3044
        %3077 = vst [vmem:[%s353 + $0x61] sm:$0xff] %v3045
        %3078 = vst [vmem:[%s353 + $0x69] sm:$0xff] %v3046
        %3079 = vst [vmem:[%s353 + $0x79] sm:$0xff] %v3047
        %3080 = vst [vmem:[%s353 + $0x81] sm:$0xff] %v3048
        %3081 = vst [vmem:[%s353 + $0x91] sm:$0xff] %v3049
        %3082 = vst [vmem:[%s353 + $0x99] sm:$0xff] %v3050
        %3083 = vst [vmem:[%s353 + $0xa9] sm:$0xff] %v3051
        %3084 = vst [vmem:[%s353 + $0xb1] sm:$0xff] %v3052
        %3085 = vst [vmem:[%s353 + $0xc1] sm:$0xff] %v3053
        %3086 = vst [vmem:[%s353 + $0xc9] sm:$0xff] %v3054
        %3087 = vst [vmem:[%s353 + $0xd9] sm:$0xff] %v3055
        %3088 = vst [vmem:[%s353 + $0xe1] sm:$0xff] %v3056
        %3089 = vst [vmem:[%s353 + $0xf1] sm:$0xff] %v3057
        %3090 = vst [vmem:[%s353 + $0xf9] sm:$0xff] %v3058
        %3091 = vst [vmem:[%s353 + $0x109] sm:$0xff] %v3059
        %3092 = vst [vmem:[%s353 + $0x111] sm:$0xff] %v3060
        %3093 = vst [vmem:[%s353 + $0x121] sm:$0xff] %v3061
        %3094 = vst [vmem:[%s353 + $0x129] sm:$0xff] %v3062
        %3095 = vst [vmem:[%s353 + $0x139] sm:$0xff] %v3063
        %3096 = vst [vmem:[%s353 + $0x141] sm:$0xff] %v3064
        %3097 = vst [vmem:[%s353 + $0x151] sm:$0xff] %v3065
        %3098 = vst [vmem:[%s353 + $0x159] sm:$0xff] %v3066
        %3099 = vst [vmem:[%s353 + $0x169] sm:$0xff] %v3067
        %3100 = vst [vmem:[%s353 + $0x171] sm:$0xff] %v3068
        %v3101 = vld [vmem:[%s353 + $0x2] sm:$0x1]
        %v3102 = vld [vmem:[%s353 + $0x1a] sm:$0x1]
        %v3103 = vld [vmem:[%s353 + $0x32] sm:$0x1]
        %v3104 = vld [vmem:[%s353 + $0x4a] sm:$0x1]
        %v3105 = vld [vmem:[%s353 + $0x62] sm:$0x1]
        %v3106 = vld [vmem:[%s353 + $0x7a] sm:$0x1]
        %v3107 = vld [vmem:[%s353 + $0x92] sm:$0x1]
        %v3108 = vld [vmem:[%s353 + $0xaa] sm:$0x1]
        %v3109 = vld [vmem:[%s353 + $0xc2] sm:$0x1]
        %v3110 = vld [vmem:[%s353 + $0xda] sm:$0x1]
        %v3111 = vld [vmem:[%s353 + $0xf2] sm:$0x1]
        %v3112 = vld [vmem:[%s353 + $0x10a] sm:$0x1]
        %v3113 = vld [vmem:[%s353 + $0x122] sm:$0x1]
        %v3114 = vld [vmem:[%s353 + $0x13a] sm:$0x1]
        %v3115 = vld [vmem:[%s353 + $0x152] sm:$0x1]
        %v3116 = vld [vmem:[%s353 + $0x16a] sm:$0x1]
        %3117 = vst [vmem:[%s353] sm:$0x1] %v3101
        %3118 = vst [vmem:[%s353 + $0x18] sm:$0x1] %v3102
        %3119 = vst [vmem:[%s353 + $0x30] sm:$0x1] %v3103
        %3120 = vst [vmem:[%s353 + $0x48] sm:$0x1] %v3104
        %3121 = vst [vmem:[%s353 + $0x60] sm:$0x1] %v3105
        %3122 = vst [vmem:[%s353 + $0x78] sm:$0x1] %v3106
        %3123 = vst [vmem:[%s353 + $0x90] sm:$0x1] %v3107
        %3124 = vst [vmem:[%s353 + $0xa8] sm:$0x1] %v3108
        %3125 = vst [vmem:[%s353 + $0xc0] sm:$0x1] %v3109
        %3126 = vst [vmem:[%s353 + $0xd8] sm:$0x1] %v3110
        %3127 = vst [vmem:[%s353 + $0xf0] sm:$0x1] %v3111
        %3128 = vst [vmem:[%s353 + $0x108] sm:$0x1] %v3112
        %3129 = vst [vmem:[%s353 + $0x120] sm:$0x1] %v3113
        %3130 = vst [vmem:[%s353 + $0x138] sm:$0x1] %v3114
        %3131 = vst [vmem:[%s353 + $0x150] sm:$0x1] %v3115
        %3132 = vst [vmem:[%s353 + $0x168] sm:$0x1] %v3116
        %v3133 = vld [vmem:[%s353 + $0xf] sm:$0x1]
        %v3134 = vld [vmem:[%s353 + $0x27] sm:$0x1]
        %v3135 = vld [vmem:[%s353 + $0x3f] sm:$0x1]
        %v3136 = vld [vmem:[%s353 + $0x57] sm:$0x1]
        %v3137 = vld [vmem:[%s353 + $0x6f] sm:$0x1]
        %v3138 = vld [vmem:[%s353 + $0x87] sm:$0x1]
        %v3139 = vld [vmem:[%s353 + $0x9f] sm:$0x1]
        %v3140 = vld [vmem:[%s353 + $0xb7] sm:$0x1]
        %v3141 = vld [vmem:[%s353 + $0xcf] sm:$0x1]
        %v3142 = vld [vmem:[%s353 + $0xe7] sm:$0x1]
        %v3143 = vld [vmem:[%s353 + $0xff] sm:$0x1]
        %v3144 = vld [vmem:[%s353 + $0x117] sm:$0x1]
        %v3145 = vld [vmem:[%s353 + $0x12f] sm:$0x1]
        %v3146 = vld [vmem:[%s353 + $0x147] sm:$0x1]
        %v3147 = vld [vmem:[%s353 + $0x15f] sm:$0x1]
        %v3148 = vld [vmem:[%s353 + $0x177] sm:$0x1]
        %3149 = vst [vmem:[%s353 + $0x11] sm:$0x1] %v3133
        %3150 = vst [vmem:[%s353 + $0x29] sm:$0x1] %v3134
        %3151 = vst [vmem:[%s353 + $0x41] sm:$0x1] %v3135
        %3152 = vst [vmem:[%s353 + $0x59] sm:$0x1] %v3136
        %3153 = vst [vmem:[%s353 + $0x71] sm:$0x1] %v3137
        %3154 = vst [vmem:[%s353 + $0x89] sm:$0x1] %v3138
        %3155 = vst [vmem:[%s353 + $0xa1] sm:$0x1] %v3139
        %3156 = vst [vmem:[%s353 + $0xb9] sm:$0x1] %v3140
        %3157 = vst [vmem:[%s353 + $0xd1] sm:$0x1] %v3141
        %3158 = vst [vmem:[%s353 + $0xe9] sm:$0x1] %v3142
        %3159 = vst [vmem:[%s353 + $0x101] sm:$0x1] %v3143
        %3160 = vst [vmem:[%s353 + $0x119] sm:$0x1] %v3144
        %3161 = vst [vmem:[%s353 + $0x131] sm:$0x1] %v3145
        %3162 = vst [vmem:[%s353 + $0x149] sm:$0x1] %v3146
        %3163 = vst [vmem:[%s353 + $0x161] sm:$0x1] %v3147
        %3164 = vst [vmem:[%s353 + $0x179] sm:$0x1] %v3148
        %v3165 = vld [vmem:[%s450] sm:$0xff]
        %v3166 = vld [vmem:[%s450 + $0x8] sm:$0xff]
        %v3167 = vld [vmem:[%s450 + $0x10] sm:$0xff]
        %3168 = vst [vmem:[#allocation2] sm:$0xff] %v3165
        %3169 = vst [vmem:[#allocation2 + $0x8] sm:$0xff] %v3166
        %3170 = vst [vmem:[#allocation2 + $0x10] sm:$0xff] %v3167
        %v3171 = vld [vmem:[%s457] sm:$0xff]
        %v3172 = vld [vmem:[%s457 + $0x8] sm:$0xff]
        %v3173 = vld [vmem:[%s457 + $0x10] sm:$0xff]
        %3174 = vst [vmem:[%s461] sm:$0xff] %v3171
        %3175 = vst [vmem:[%s461 + $0x8] sm:$0xff] %v3172
        %3176 = vst [vmem:[%s461 + $0x10] sm:$0xff] %v3173
        %v3177 = vld [vmem:[#allocation2] sm:$0xff]
        %v3178 = vld [vmem:[#allocation2 + $0x8] sm:$0xff]
        %v3179 = vld [vmem:[#allocation2 + $0x18] sm:$0xff]
        %v3180 = vld [vmem:[#allocation2 + $0x20] sm:$0xff]
        %v3181 = vld [vmem:[#allocation2 + $0x30] sm:$0xff]
        %v3182 = vld [vmem:[#allocation2 + $0x38] sm:$0xff]
        %v3183 = vld [vmem:[#allocation2 + $0x48] sm:$0xff]
        %v3184 = vld [vmem:[#allocation2 + $0x50] sm:$0xff]
        %v3185 = vld [vmem:[#allocation2 + $0x60] sm:$0xff]
        %v3186 = vld [vmem:[#allocation2 + $0x68] sm:$0xff]
        %v3187 = vld [vmem:[#allocation2 + $0x78] sm:$0xff]
        %v3188 = vld [vmem:[#allocation2 + $0x80] sm:$0xff]
        %v3189 = vld [vmem:[#allocation2 + $0x90] sm:$0xff]
        %v3190 = vld [vmem:[#allocation2 + $0x98] sm:$0xff]
        %v3191 = vld [vmem:[#allocation2 + $0xa8] sm:$0xff]
        %v3192 = vld [vmem:[#allocation2 + $0xb0] sm:$0xff]
        %3193 = vst [vmem:[#allocation3] sm:$0xff] %v3177
        %3194 = vst [vmem:[#allocation3 + $0x48] sm:$0xff] %v3178
        %3195 = vst [vmem:[#allocation3 + $0x90] sm:$0xff] %v3179
        %3196 = vst [vmem:[#allocation3 + $0xd8] sm:$0xff] %v3180
        %3197 = vst [vmem:[#allocation3 + $0x120] sm:$0xff] %v3181
        %3198 = vst [vmem:[#allocation3 + $0x168] sm:$0xff] %v3182
        %3199 = vst [vmem:[#allocation3 + $0x1b0] sm:$0xff] %v3183
        %3200 = vst [vmem:[#allocation3 + $0x1f8] sm:$0xff] %v3184
        %3201 = vst [vmem:[#allocation3 + $0x240] sm:$0xff] %v3185
        %3202 = vst [vmem:[#allocation3 + $0x288] sm:$0xff] %v3186
        %3203 = vst [vmem:[#allocation3 + $0x2d0] sm:$0xff] %v3187
        %3204 = vst [vmem:[#allocation3 + $0x318] sm:$0xff] %v3188
        %3205 = vst [vmem:[#allocation3 + $0x360] sm:$0xff] %v3189
        %3206 = vst [vmem:[#allocation3 + $0x3a8] sm:$0xff] %v3190
        %3207 = vst [vmem:[#allocation3 + $0x3f0] sm:$0xff] %v3191
        %3208 = vst [vmem:[#allocation3 + $0x438] sm:$0xff] %v3192
        %v3209 = vld [vmem:[#allocation2 + $0x1] sm:$0xff]
        %v3210 = vld [vmem:[#allocation2 + $0x9] sm:$0xff]
        %v3211 = vld [vmem:[#allocation2 + $0x19] sm:$0xff]
        %v3212 = vld [vmem:[#allocation2 + $0x21] sm:$0xff]
        %v3213 = vld [vmem:[#allocation2 + $0x31] sm:$0xff]
        %v3214 = vld [vmem:[#allocation2 + $0x39] sm:$0xff]
        %v3215 = vld [vmem:[#allocation2 + $0x49] sm:$0xff]
        %v3216 = vld [vmem:[#allocation2 + $0x51] sm:$0xff]
        %v3217 = vld [vmem:[#allocation2 + $0x61] sm:$0xff]
        %v3218 = vld [vmem:[#allocation2 + $0x69] sm:$0xff]
        %v3219 = vld [vmem:[#allocation2 + $0x79] sm:$0xff]
        %v3220 = vld [vmem:[#allocation2 + $0x81] sm:$0xff]
        %v3221 = vld [vmem:[#allocation2 + $0x91] sm:$0xff]
        %v3222 = vld [vmem:[#allocation2 + $0x99] sm:$0xff]
        %v3223 = vld [vmem:[#allocation2 + $0xa9] sm:$0xff]
        %v3224 = vld [vmem:[#allocation2 + $0xb1] sm:$0xff]
        %3225 = vst [vmem:[#allocation3 + $0x8] sm:$0xff] %v3209
        %3226 = vst [vmem:[#allocation3 + $0x50] sm:$0xff] %v3210
        %3227 = vst [vmem:[#allocation3 + $0x98] sm:$0xff] %v3211
        %3228 = vst [vmem:[#allocation3 + $0xe0] sm:$0xff] %v3212
        %3229 = vst [vmem:[#allocation3 + $0x128] sm:$0xff] %v3213
        %3230 = vst [vmem:[#allocation3 + $0x170] sm:$0xff] %v3214
        %3231 = vst [vmem:[#allocation3 + $0x1b8] sm:$0xff] %v3215
        %3232 = vst [vmem:[#allocation3 + $0x200] sm:$0xff] %v3216
        %3233 = vst [vmem:[#allocation3 + $0x248] sm:$0xff] %v3217
        %3234 = vst [vmem:[#allocation3 + $0x290] sm:$0xff] %v3218
        %3235 = vst [vmem:[#allocation3 + $0x2d8] sm:$0xff] %v3219
        %3236 = vst [vmem:[#allocation3 + $0x320] sm:$0xff] %v3220
        %3237 = vst [vmem:[#allocation3 + $0x368] sm:$0xff] %v3221
        %3238 = vst [vmem:[#allocation3 + $0x3b0] sm:$0xff] %v3222
        %3239 = vst [vmem:[#allocation3 + $0x3f8] sm:$0xff] %v3223
        %3240 = vst [vmem:[#allocation3 + $0x440] sm:$0xff] %v3224
        %v3241 = vld [vmem:[#allocation2 + $0x2] sm:$0xff]
        %v3242 = vld [vmem:[#allocation2 + $0xa] sm:$0xff]
        %v3243 = vld [vmem:[#allocation2 + $0x1a] sm:$0xff]
        %v3244 = vld [vmem:[#allocation2 + $0x22] sm:$0xff]
        %v3245 = vld [vmem:[#allocation2 + $0x32] sm:$0xff]
        %v3246 = vld [vmem:[#allocation2 + $0x3a] sm:$0xff]
        %v3247 = vld [vmem:[#allocation2 + $0x4a] sm:$0xff]
        %v3248 = vld [vmem:[#allocation2 + $0x52] sm:$0xff]
        %v3249 = vld [vmem:[#allocation2 + $0x62] sm:$0xff]
        %v3250 = vld [vmem:[#allocation2 + $0x6a] sm:$0xff]
        %v3251 = vld [vmem:[#allocation2 + $0x7a] sm:$0xff]
        %v3252 = vld [vmem:[#allocation2 + $0x82] sm:$0xff]
        %v3253 = vld [vmem:[#allocation2 + $0x92] sm:$0xff]
        %v3254 = vld [vmem:[#allocation2 + $0x9a] sm:$0xff]
        %v3255 = vld [vmem:[#allocation2 + $0xaa] sm:$0xff]
        %v3256 = vld [vmem:[#allocation2 + $0xb2] sm:$0xff]
        %3257 = vst [vmem:[#allocation3 + $0x10] sm:$0xff] %v3241
        %3258 = vst [vmem:[#allocation3 + $0x58] sm:$0xff] %v3242
        %3259 = vst [vmem:[#allocation3 + $0xa0] sm:$0xff] %v3243
        %3260 = vst [vmem:[#allocation3 + $0xe8] sm:$0xff] %v3244
        %3261 = vst [vmem:[#allocation3 + $0x130] sm:$0xff] %v3245
        %3262 = vst [vmem:[#allocation3 + $0x178] sm:$0xff] %v3246
        %3263 = vst [vmem:[#allocation3 + $0x1c0] sm:$0xff] %v3247
        %3264 = vst [vmem:[#allocation3 + $0x208] sm:$0xff] %v3248
        %3265 = vst [vmem:[#allocation3 + $0x250] sm:$0xff] %v3249
        %3266 = vst [vmem:[#allocation3 + $0x298] sm:$0xff] %v3250
        %3267 = vst [vmem:[#allocation3 + $0x2e0] sm:$0xff] %v3251
        %3268 = vst [vmem:[#allocation3 + $0x328] sm:$0xff] %v3252
        %3269 = vst [vmem:[#allocation3 + $0x370] sm:$0xff] %v3253
        %3270 = vst [vmem:[#allocation3 + $0x3b8] sm:$0xff] %v3254
        %3271 = vst [vmem:[#allocation3 + $0x400] sm:$0xff] %v3255
        %3272 = vst [vmem:[#allocation3 + $0x448] sm:$0xff] %v3256
        %v3273 = vld [vmem:[%s353] sm:$0xff]
        %v3274 = vld [vmem:[%s353 + $0x8] sm:$0xff]
        %v3275 = vld [vmem:[%s353 + $0x18] sm:$0xff]
        %v3276 = vld [vmem:[%s353 + $0x20] sm:$0xff]
        %v3277 = vld [vmem:[%s353 + $0x30] sm:$0xff]
        %v3278 = vld [vmem:[%s353 + $0x38] sm:$0xff]
        %v3279 = vld [vmem:[%s353 + $0x48] sm:$0xff]
        %v3280 = vld [vmem:[%s353 + $0x50] sm:$0xff]
        %v3281 = vld [vmem:[%s353 + $0x60] sm:$0xff]
        %v3282 = vld [vmem:[%s353 + $0x68] sm:$0xff]
        %v3283 = vld [vmem:[%s353 + $0x78] sm:$0xff]
        %v3284 = vld [vmem:[%s353 + $0x80] sm:$0xff]
        %v3285 = vld [vmem:[%s353 + $0x90] sm:$0xff]
        %v3286 = vld [vmem:[%s353 + $0x98] sm:$0xff]
        %v3287 = vld [vmem:[%s353 + $0xa8] sm:$0xff]
        %v3288 = vld [vmem:[%s353 + $0xb0] sm:$0xff]
        %3289 = vst [vmem:[#allocation3 + $0x18] sm:$0xff] %v3273
        %3290 = vst [vmem:[#allocation3 + $0x60] sm:$0xff] %v3274
        %3291 = vst [vmem:[#allocation3 + $0xa8] sm:$0xff] %v3275
        %3292 = vst [vmem:[#allocation3 + $0xf0] sm:$0xff] %v3276
        %3293 = vst [vmem:[#allocation3 + $0x138] sm:$0xff] %v3277
        %3294 = vst [vmem:[#allocation3 + $0x180] sm:$0xff] %v3278
        %3295 = vst [vmem:[#allocation3 + $0x1c8] sm:$0xff] %v3279
        %3296 = vst [vmem:[#allocation3 + $0x210] sm:$0xff] %v3280
        %3297 = vst [vmem:[#allocation3 + $0x258] sm:$0xff] %v3281
        %3298 = vst [vmem:[#allocation3 + $0x2a0] sm:$0xff] %v3282
        %3299 = vst [vmem:[#allocation3 + $0x2e8] sm:$0xff] %v3283
        %3300 = vst [vmem:[#allocation3 + $0x330] sm:$0xff] %v3284
        %3301 = vst [vmem:[#allocation3 + $0x378] sm:$0xff] %v3285
        %3302 = vst [vmem:[#allocation3 + $0x3c0] sm:$0xff] %v3286
        %3303 = vst [vmem:[#allocation3 + $0x408] sm:$0xff] %v3287
        %3304 = vst [vmem:[#allocation3 + $0x450] sm:$0xff] %v3288
        %v3305 = vld [vmem:[%s353 + $0x1] sm:$0xff]
        %v3306 = vld [vmem:[%s353 + $0x9] sm:$0xff]
        %v3307 = vld [vmem:[%s353 + $0x19] sm:$0xff]
        %v3308 = vld [vmem:[%s353 + $0x21] sm:$0xff]
        %v3309 = vld [vmem:[%s353 + $0x31] sm:$0xff]
        %v3310 = vld [vmem:[%s353 + $0x39] sm:$0xff]
        %v3311 = vld [vmem:[%s353 + $0x49] sm:$0xff]
        %v3312 = vld [vmem:[%s353 + $0x51] sm:$0xff]
        %v3313 = vld [vmem:[%s353 + $0x61] sm:$0xff]
        %v3314 = vld [vmem:[%s353 + $0x69] sm:$0xff]
        %v3315 = vld [vmem:[%s353 + $0x79] sm:$0xff]
        %v3316 = vld [vmem:[%s353 + $0x81] sm:$0xff]
        %v3317 = vld [vmem:[%s353 + $0x91] sm:$0xff]
        %v3318 = vld [vmem:[%s353 + $0x99] sm:$0xff]
        %v3319 = vld [vmem:[%s353 + $0xa9] sm:$0xff]
        %v3320 = vld [vmem:[%s353 + $0xb1] sm:$0xff]
        %3321 = vst [vmem:[#allocation3 + $0x20] sm:$0xff] %v3305
        %3322 = vst [vmem:[#allocation3 + $0x68] sm:$0xff] %v3306
        %3323 = vst [vmem:[#allocation3 + $0xb0] sm:$0xff] %v3307
        %3324 = vst [vmem:[#allocation3 + $0xf8] sm:$0xff] %v3308
        %3325 = vst [vmem:[#allocation3 + $0x140] sm:$0xff] %v3309
        %3326 = vst [vmem:[#allocation3 + $0x188] sm:$0xff] %v3310
        %3327 = vst [vmem:[#allocation3 + $0x1d0] sm:$0xff] %v3311
        %3328 = vst [vmem:[#allocation3 + $0x218] sm:$0xff] %v3312
        %3329 = vst [vmem:[#allocation3 + $0x260] sm:$0xff] %v3313
        %3330 = vst [vmem:[#allocation3 + $0x2a8] sm:$0xff] %v3314
        %3331 = vst [vmem:[#allocation3 + $0x2f0] sm:$0xff] %v3315
        %3332 = vst [vmem:[#allocation3 + $0x338] sm:$0xff] %v3316
        %3333 = vst [vmem:[#allocation3 + $0x380] sm:$0xff] %v3317
        %3334 = vst [vmem:[#allocation3 + $0x3c8] sm:$0xff] %v3318
        %3335 = vst [vmem:[#allocation3 + $0x410] sm:$0xff] %v3319
        %3336 = vst [vmem:[#allocation3 + $0x458] sm:$0xff] %v3320
        %v3337 = vld [vmem:[%s353 + $0x2] sm:$0xff]
        %v3338 = vld [vmem:[%s353 + $0xa] sm:$0xff]
        %v3339 = vld [vmem:[%s353 + $0x1a] sm:$0xff]
        %v3340 = vld [vmem:[%s353 + $0x22] sm:$0xff]
        %v3341 = vld [vmem:[%s353 + $0x32] sm:$0xff]
        %v3342 = vld [vmem:[%s353 + $0x3a] sm:$0xff]
        %v3343 = vld [vmem:[%s353 + $0x4a] sm:$0xff]
        %v3344 = vld [vmem:[%s353 + $0x52] sm:$0xff]
        %v3345 = vld [vmem:[%s353 + $0x62] sm:$0xff]
        %v3346 = vld [vmem:[%s353 + $0x6a] sm:$0xff]
        %v3347 = vld [vmem:[%s353 + $0x7a] sm:$0xff]
        %v3348 = vld [vmem:[%s353 + $0x82] sm:$0xff]
        %v3349 = vld [vmem:[%s353 + $0x92] sm:$0xff]
        %v3350 = vld [vmem:[%s353 + $0x9a] sm:$0xff]
        %v3351 = vld [vmem:[%s353 + $0xaa] sm:$0xff]
        %v3352 = vld [vmem:[%s353 + $0xb2] sm:$0xff]
        %3353 = vst [vmem:[#allocation3 + $0x28] sm:$0xff] %v3337
        %3354 = vst [vmem:[#allocation3 + $0x70] sm:$0xff] %v3338
        %3355 = vst [vmem:[#allocation3 + $0xb8] sm:$0xff] %v3339
        %3356 = vst [vmem:[#allocation3 + $0x100] sm:$0xff] %v3340
        %3357 = vst [vmem:[#allocation3 + $0x148] sm:$0xff] %v3341
        %3358 = vst [vmem:[#allocation3 + $0x190] sm:$0xff] %v3342
        %3359 = vst [vmem:[#allocation3 + $0x1d8] sm:$0xff] %v3343
        %3360 = vst [vmem:[#allocation3 + $0x220] sm:$0xff] %v3344
        %3361 = vst [vmem:[#allocation3 + $0x268] sm:$0xff] %v3345
        %3362 = vst [vmem:[#allocation3 + $0x2b0] sm:$0xff] %v3346
        %3363 = vst [vmem:[#allocation3 + $0x2f8] sm:$0xff] %v3347
        %3364 = vst [vmem:[#allocation3 + $0x340] sm:$0xff] %v3348
        %3365 = vst [vmem:[#allocation3 + $0x388] sm:$0xff] %v3349
        %3366 = vst [vmem:[#allocation3 + $0x3d0] sm:$0xff] %v3350
        %3367 = vst [vmem:[#allocation3 + $0x418] sm:$0xff] %v3351
        %3368 = vst [vmem:[#allocation3 + $0x460] sm:$0xff] %v3352
        %v3369 = vld [vmem:[%s450] sm:$0xff]
        %v3370 = vld [vmem:[%s450 + $0x8] sm:$0xff]
        %v3371 = vld [vmem:[%s450 + $0x18] sm:$0xff]
        %v3372 = vld [vmem:[%s450 + $0x20] sm:$0xff]
        %v3373 = vld [vmem:[%s450 + $0x30] sm:$0xff]
        %v3374 = vld [vmem:[%s450 + $0x38] sm:$0xff]
        %v3375 = vld [vmem:[%s450 + $0x48] sm:$0xff]
        %v3376 = vld [vmem:[%s450 + $0x50] sm:$0xff]
        %v3377 = vld [vmem:[%s450 + $0x60] sm:$0xff]
        %v3378 = vld [vmem:[%s450 + $0x68] sm:$0xff]
        %v3379 = vld [vmem:[%s450 + $0x78] sm:$0xff]
        %v3380 = vld [vmem:[%s450 + $0x80] sm:$0xff]
        %v3381 = vld [vmem:[%s450 + $0x90] sm:$0xff]
        %v3382 = vld [vmem:[%s450 + $0x98] sm:$0xff]
        %v3383 = vld [vmem:[%s450 + $0xa8] sm:$0xff]
        %v3384 = vld [vmem:[%s450 + $0xb0] sm:$0xff]
        %3385 = vst [vmem:[#allocation3 + $0x30] sm:$0xff] %v3369
        %3386 = vst [vmem:[#allocation3 + $0x78] sm:$0xff] %v3370
        %3387 = vst [vmem:[#allocation3 + $0xc0] sm:$0xff] %v3371
        %3388 = vst [vmem:[#allocation3 + $0x108] sm:$0xff] %v3372
        %3389 = vst [vmem:[#allocation3 + $0x150] sm:$0xff] %v3373
        %3390 = vst [vmem:[#allocation3 + $0x198] sm:$0xff] %v3374
        %3391 = vst [vmem:[#allocation3 + $0x1e0] sm:$0xff] %v3375
        %3392 = vst [vmem:[#allocation3 + $0x228] sm:$0xff] %v3376
        %3393 = vst [vmem:[#allocation3 + $0x270] sm:$0xff] %v3377
        %3394 = vst [vmem:[#allocation3 + $0x2b8] sm:$0xff] %v3378
        %3395 = vst [vmem:[#allocation3 + $0x300] sm:$0xff] %v3379
        %3396 = vst [vmem:[#allocation3 + $0x348] sm:$0xff] %v3380
        %3397 = vst [vmem:[#allocation3 + $0x390] sm:$0xff] %v3381
        %3398 = vst [vmem:[#allocation3 + $0x3d8] sm:$0xff] %v3382
        %3399 = vst [vmem:[#allocation3 + $0x420] sm:$0xff] %v3383
        %3400 = vst [vmem:[#allocation3 + $0x468] sm:$0xff] %v3384
        %v3401 = vld [vmem:[%s450 + $0x1] sm:$0xff]
        %v3402 = vld [vmem:[%s450 + $0x9] sm:$0xff]
        %v3403 = vld [vmem:[%s450 + $0x19] sm:$0xff]
        %v3404 = vld [vmem:[%s450 + $0x21] sm:$0xff]
        %v3405 = vld [vmem:[%s450 + $0x31] sm:$0xff]
        %v3406 = vld [vmem:[%s450 + $0x39] sm:$0xff]
        %v3407 = vld [vmem:[%s450 + $0x49] sm:$0xff]
        %v3408 = vld [vmem:[%s450 + $0x51] sm:$0xff]
        %v3409 = vld [vmem:[%s450 + $0x61] sm:$0xff]
        %v3410 = vld [vmem:[%s450 + $0x69] sm:$0xff]
        %v3411 = vld [vmem:[%s450 + $0x79] sm:$0xff]
        %v3412 = vld [vmem:[%s450 + $0x81] sm:$0xff]
        %v3413 = vld [vmem:[%s450 + $0x91] sm:$0xff]
        %v3414 = vld [vmem:[%s450 + $0x99] sm:$0xff]
        %v3415 = vld [vmem:[%s450 + $0xa9] sm:$0xff]
        %v3416 = vld [vmem:[%s450 + $0xb1] sm:$0xff]
        %3417 = vst [vmem:[#allocation3 + $0x38] sm:$0xff] %v3401
        %3418 = vst [vmem:[#allocation3 + $0x80] sm:$0xff] %v3402
        %3419 = vst [vmem:[#allocation3 + $0xc8] sm:$0xff] %v3403
        %3420 = vst [vmem:[#allocation3 + $0x110] sm:$0xff] %v3404
        %3421 = vst [vmem:[#allocation3 + $0x158] sm:$0xff] %v3405
        %3422 = vst [vmem:[#allocation3 + $0x1a0] sm:$0xff] %v3406
        %3423 = vst [vmem:[#allocation3 + $0x1e8] sm:$0xff] %v3407
        %3424 = vst [vmem:[#allocation3 + $0x230] sm:$0xff] %v3408
        %3425 = vst [vmem:[#allocation3 + $0x278] sm:$0xff] %v3409
        %3426 = vst [vmem:[#allocation3 + $0x2c0] sm:$0xff] %v3410
        %3427 = vst [vmem:[#allocation3 + $0x308] sm:$0xff] %v3411
        %3428 = vst [vmem:[#allocation3 + $0x350] sm:$0xff] %v3412
        %3429 = vst [vmem:[#allocation3 + $0x398] sm:$0xff] %v3413
        %3430 = vst [vmem:[#allocation3 + $0x3e0] sm:$0xff] %v3414
        %3431 = vst [vmem:[#allocation3 + $0x428] sm:$0xff] %v3415
        %3432 = vst [vmem:[#allocation3 + $0x470] sm:$0xff] %v3416
        %v3433 = vld [vmem:[%s450 + $0x2] sm:$0xff]
        %v3434 = vld [vmem:[%s450 + $0xa] sm:$0xff]
        %v3435 = vld [vmem:[%s450 + $0x1a] sm:$0xff]
        %v3436 = vld [vmem:[%s450 + $0x22] sm:$0xff]
        %v3437 = vld [vmem:[%s450 + $0x32] sm:$0xff]
        %v3438 = vld [vmem:[%s450 + $0x3a] sm:$0xff]
        %v3439 = vld [vmem:[%s450 + $0x4a] sm:$0xff]
        %v3440 = vld [vmem:[%s450 + $0x52] sm:$0xff]
        %v3441 = vld [vmem:[%s450 + $0x62] sm:$0xff]
        %v3442 = vld [vmem:[%s450 + $0x6a] sm:$0xff]
        %v3443 = vld [vmem:[%s450 + $0x7a] sm:$0xff]
        %v3444 = vld [vmem:[%s450 + $0x82] sm:$0xff]
        %v3445 = vld [vmem:[%s450 + $0x92] sm:$0xff]
        %v3446 = vld [vmem:[%s450 + $0x9a] sm:$0xff]
        %v3447 = vld [vmem:[%s450 + $0xaa] sm:$0xff]
        %v3448 = vld [vmem:[%s450 + $0xb2] sm:$0xff]
        %3449 = vst [vmem:[#allocation3 + $0x40] sm:$0xff] %v3433
        %3450 = vst [vmem:[#allocation3 + $0x88] sm:$0xff] %v3434
        %3451 = vst [vmem:[#allocation3 + $0xd0] sm:$0xff] %v3435
        %3452 = vst [vmem:[#allocation3 + $0x118] sm:$0xff] %v3436
        %3453 = vst [vmem:[#allocation3 + $0x160] sm:$0xff] %v3437
        %3454 = vst [vmem:[#allocation3 + $0x1a8] sm:$0xff] %v3438
        %3455 = vst [vmem:[#allocation3 + $0x1f0] sm:$0xff] %v3439
        %3456 = vst [vmem:[#allocation3 + $0x238] sm:$0xff] %v3440
        %3457 = vst [vmem:[#allocation3 + $0x280] sm:$0xff] %v3441
        %3458 = vst [vmem:[#allocation3 + $0x2c8] sm:$0xff] %v3442
        %3459 = vst [vmem:[#allocation3 + $0x310] sm:$0xff] %v3443
        %3460 = vst [vmem:[#allocation3 + $0x358] sm:$0xff] %v3444
        %3461 = vst [vmem:[#allocation3 + $0x3a0] sm:$0xff] %v3445
        %3462 = vst [vmem:[#allocation3 + $0x3e8] sm:$0xff] %v3446
        %3463 = vst [vmem:[#allocation3 + $0x430] sm:$0xff] %v3447
        %3464 = vst [vmem:[#allocation3 + $0x478] sm:$0xff] %v3448
        %v3465 = vld [vmem:[#allocation3] sm:$0xff]
        %v3466 = vld [vmem:[#allocation3 + $0x8] sm:$0xff]
        %v3467 = vld [vmem:[#allocation3 + $0x10] sm:$0xff]
        %v3468 = vld [vmem:[#allocation3 + $0x18] sm:$0xff]
        %v3469 = vld [vmem:[#allocation3 + $0x20] sm:$0xff]
        %v3470 = vld [vmem:[#allocation3 + $0x28] sm:$0xff]
        %v3471 = vld [vmem:[#allocation3 + $0x30] sm:$0xff]
        %v3472 = vld [vmem:[#allocation3 + $0x38] sm:$0xff]
        %v3473 = vld [vmem:[#allocation3 + $0x40] sm:$0xff]
        %v3474 = vld [vmem:[#allocation3 + $0x48] sm:$0xff]
        %v3475 = vld [vmem:[#allocation3 + $0x50] sm:$0xff]
        %v3476 = vld [vmem:[#allocation3 + $0x58] sm:$0xff]
        %v3477 = vld [vmem:[#allocation3 + $0x60] sm:$0xff]
        %v3478 = vld [vmem:[#allocation3 + $0x68] sm:$0xff]
        %v3479 = vld [vmem:[#allocation3 + $0x70] sm:$0xff]
        %v3480 = vld [vmem:[#allocation3 + $0x78] sm:$0xff]
        %v3481 = vld [vmem:[#allocation3 + $0x80] sm:$0xff]
        %v3482 = vld [vmem:[#allocation3 + $0x88] sm:$0xff]
        %v3483 = vld [vmem:[#allocation3 + $0x90] sm:$0xff]
        %v3484 = vld [vmem:[#allocation3 + $0x98] sm:$0xff]
        %v3485 = vld [vmem:[#allocation3 + $0xa0] sm:$0xff]
        %v3486 = vld [vmem:[#allocation3 + $0xa8] sm:$0xff]
        %v3487 = vld [vmem:[#allocation3 + $0xb0] sm:$0xff]
        %v3488 = vld [vmem:[#allocation3 + $0xb8] sm:$0xff]
        %v3489 = vld [vmem:[#allocation3 + $0xc0] sm:$0xff]
        %v3490 = vld [vmem:[#allocation3 + $0xc8] sm:$0xff]
        %v3491 = vld [vmem:[#allocation3 + $0xd0] sm:$0xff]
        %v3492 = vld [vmem:[#allocation3 + $0xd8] sm:$0xff]
        %v3493 = vld [vmem:[#allocation3 + $0xe0] sm:$0xff]
        %v3494 = vld [vmem:[#allocation3 + $0xe8] sm:$0xff]
        %v3495 = vld [vmem:[#allocation3 + $0xf0] sm:$0xff]
        %v3496 = vld [vmem:[#allocation3 + $0xf8] sm:$0xff]
        %v3497 = vld [vmem:[#allocation3 + $0x100] sm:$0xff]
        %v3498 = vld [vmem:[#allocation3 + $0x108] sm:$0xff]
        %v3499 = vld [vmem:[#allocation3 + $0x110] sm:$0xff]
        %v3500 = vld [vmem:[#allocation3 + $0x118] sm:$0xff]
        %v3501 = vld [vmem:[#allocation3 + $0x120] sm:$0xff]
        %v3502 = vld [vmem:[#allocation3 + $0x128] sm:$0xff]
        %v3503 = vld [vmem:[#allocation3 + $0x130] sm:$0xff]
        %v3504 = vld [vmem:[#allocation3 + $0x138] sm:$0xff]
        %v3505 = vld [vmem:[#allocation3 + $0x140] sm:$0xff]
        %v3506 = vld [vmem:[#allocation3 + $0x148] sm:$0xff]
        %v3507 = vld [vmem:[#allocation3 + $0x150] sm:$0xff]
        %v3508 = vld [vmem:[#allocation3 + $0x158] sm:$0xff]
        %v3509 = vld [vmem:[#allocation3 + $0x160] sm:$0xff]
        %v3510 = vld [vmem:[#allocation3 + $0x168] sm:$0xff]
        %v3511 = vld [vmem:[#allocation3 + $0x170] sm:$0xff]
        %v3512 = vld [vmem:[#allocation3 + $0x178] sm:$0xff]
        %v3513 = vld [vmem:[#allocation3 + $0x180] sm:$0xff]
        %v3514 = vld [vmem:[#allocation3 + $0x188] sm:$0xff]
        %v3515 = vld [vmem:[#allocation3 + $0x190] sm:$0xff]
        %v3516 = vld [vmem:[#allocation3 + $0x198] sm:$0xff]
        %v3517 = vld [vmem:[#allocation3 + $0x1a0] sm:$0xff]
        %v3518 = vld [vmem:[#allocation3 + $0x1a8] sm:$0xff]
        %v3519 = vld [vmem:[#allocation3 + $0x1b0] sm:$0xff]
        %v3520 = vld [vmem:[#allocation3 + $0x1b8] sm:$0xff]
        %v3521 = vld [vmem:[#allocation3 + $0x1c0] sm:$0xff]
        %v3522 = vld [vmem:[#allocation3 + $0x1c8] sm:$0xff]
        %v3523 = vld [vmem:[#allocation3 + $0x1d0] sm:$0xff]
        %v3524 = vld [vmem:[#allocation3 + $0x1d8] sm:$0xff]
        %v3525 = vld [vmem:[#allocation3 + $0x1e0] sm:$0xff]
        %v3526 = vld [vmem:[#allocation3 + $0x1e8] sm:$0xff]
        %v3527 = vld [vmem:[#allocation3 + $0x1f0] sm:$0xff]
        %v3528 = vld [vmem:[#allocation3 + $0x1f8] sm:$0xff]
        %v3529 = vld [vmem:[#allocation3 + $0x200] sm:$0xff]
        %v3530 = vld [vmem:[#allocation3 + $0x208] sm:$0xff]
        %v3531 = vld [vmem:[#allocation3 + $0x210] sm:$0xff]
        %v3532 = vld [vmem:[#allocation3 + $0x218] sm:$0xff]
        %v3533 = vld [vmem:[#allocation3 + $0x220] sm:$0xff]
        %v3534 = vld [vmem:[#allocation3 + $0x228] sm:$0xff]
        %v3535 = vld [vmem:[#allocation3 + $0x230] sm:$0xff]
        %v3536 = vld [vmem:[#allocation3 + $0x238] sm:$0xff]
        %v3537 = vld [vmem:[#allocation3 + $0x240] sm:$0xff]
        %v3538 = vld [vmem:[#allocation3 + $0x248] sm:$0xff]
        %v3539 = vld [vmem:[#allocation3 + $0x250] sm:$0xff]
        %v3540 = vld [vmem:[#allocation3 + $0x258] sm:$0xff]
        %v3541 = vld [vmem:[#allocation3 + $0x260] sm:$0xff]
        %v3542 = vld [vmem:[#allocation3 + $0x268] sm:$0xff]
        %v3543 = vld [vmem:[#allocation3 + $0x270] sm:$0xff]
        %v3544 = vld [vmem:[#allocation3 + $0x278] sm:$0xff]
        %v3545 = vld [vmem:[#allocation3 + $0x280] sm:$0xff]
        %v3546 = vld [vmem:[#allocation3 + $0x288] sm:$0xff]
        %v3547 = vld [vmem:[#allocation3 + $0x290] sm:$0xff]
        %v3548 = vld [vmem:[#allocation3 + $0x298] sm:$0xff]
        %v3549 = vld [vmem:[#allocation3 + $0x2a0] sm:$0xff]
        %v3550 = vld [vmem:[#allocation3 + $0x2a8] sm:$0xff]
        %v3551 = vld [vmem:[#allocation3 + $0x2b0] sm:$0xff]
        %v3552 = vld [vmem:[#allocation3 + $0x2b8] sm:$0xff]
        %v3553 = vld [vmem:[#allocation3 + $0x2c0] sm:$0xff]
        %v3554 = vld [vmem:[#allocation3 + $0x2c8] sm:$0xff]
        %v3555 = vld [vmem:[#allocation3 + $0x2d0] sm:$0xff]
        %v3556 = vld [vmem:[#allocation3 + $0x2d8] sm:$0xff]
        %v3557 = vld [vmem:[#allocation3 + $0x2e0] sm:$0xff]
        %v3558 = vld [vmem:[#allocation3 + $0x2e8] sm:$0xff]
        %v3559 = vld [vmem:[#allocation3 + $0x2f0] sm:$0xff]
        %v3560 = vld [vmem:[#allocation3 + $0x2f8] sm:$0xff]
        %v3561 = vld [vmem:[#allocation3 + $0x300] sm:$0xff]
        %v3562 = vld [vmem:[#allocation3 + $0x308] sm:$0xff]
        %v3563 = vld [vmem:[#allocation3 + $0x310] sm:$0xff]
        %v3564 = vld [vmem:[#allocation3 + $0x318] sm:$0xff]
        %v3565 = vld [vmem:[#allocation3 + $0x320] sm:$0xff]
        %v3566 = vld [vmem:[#allocation3 + $0x328] sm:$0xff]
        %v3567 = vld [vmem:[#allocation3 + $0x330] sm:$0xff]
        %v3568 = vld [vmem:[#allocation3 + $0x338] sm:$0xff]
        %v3569 = vld [vmem:[#allocation3 + $0x340] sm:$0xff]
        %v3570 = vld [vmem:[#allocation3 + $0x348] sm:$0xff]
        %v3571 = vld [vmem:[#allocation3 + $0x350] sm:$0xff]
        %v3572 = vld [vmem:[#allocation3 + $0x358] sm:$0xff]
        %v3573 = vld [vmem:[#allocation3 + $0x360] sm:$0xff]
        %v3574 = vld [vmem:[#allocation3 + $0x368] sm:$0xff]
        %v3575 = vld [vmem:[#allocation3 + $0x370] sm:$0xff]
        %v3576 = vld [vmem:[#allocation3 + $0x378] sm:$0xff]
        %v3577 = vld [vmem:[#allocation3 + $0x380] sm:$0xff]
        %v3578 = vld [vmem:[#allocation3 + $0x388] sm:$0xff]
        %v3579 = vld [vmem:[#allocation3 + $0x390] sm:$0xff]
        %v3580 = vld [vmem:[#allocation3 + $0x398] sm:$0xff]
        %v3581 = vld [vmem:[#allocation3 + $0x3a0] sm:$0xff]
        %v3582 = vld [vmem:[#allocation3 + $0x3a8] sm:$0xff]
        %v3583 = vld [vmem:[#allocation3 + $0x3b0] sm:$0xff]
        %v3584 = vld [vmem:[#allocation3 + $0x3b8] sm:$0xff]
        %v3585 = vld [vmem:[#allocation3 + $0x3c0] sm:$0xff]
        %v3586 = vld [vmem:[#allocation3 + $0x3c8] sm:$0xff]
        %v3587 = vld [vmem:[#allocation3 + $0x3d0] sm:$0xff]
        %v3588 = vld [vmem:[#allocation3 + $0x3d8] sm:$0xff]
        %v3589 = vld [vmem:[#allocation3 + $0x3e0] sm:$0xff]
        %v3590 = vld [vmem:[#allocation3 + $0x3e8] sm:$0xff]
        %v3591 = vld [vmem:[#allocation3 + $0x3f0] sm:$0xff]
        %v3592 = vld [vmem:[#allocation3 + $0x3f8] sm:$0xff]
        %v3593 = vld [vmem:[#allocation3 + $0x400] sm:$0xff]
        %v3594 = vld [vmem:[#allocation3 + $0x408] sm:$0xff]
        %v3595 = vld [vmem:[#allocation3 + $0x410] sm:$0xff]
        %v3596 = vld [vmem:[#allocation3 + $0x418] sm:$0xff]
        %v3597 = vld [vmem:[#allocation3 + $0x420] sm:$0xff]
        %v3598 = vld [vmem:[#allocation3 + $0x428] sm:$0xff]
        %v3599 = vld [vmem:[#allocation3 + $0x430] sm:$0xff]
        %v3600 = vld [vmem:[#allocation3 + $0x438] sm:$0xff]
        %v3601 = vld [vmem:[#allocation3 + $0x440] sm:$0xff]
        %v3602 = vld [vmem:[#allocation3 + $0x448] sm:$0xff]
        %v3603 = vld [vmem:[#allocation3 + $0x450] sm:$0xff]
        %v3604 = vld [vmem:[#allocation3 + $0x458] sm:$0xff]
        %v3605 = vld [vmem:[#allocation3 + $0x460] sm:$0xff]
        %v3606 = vld [vmem:[#allocation3 + $0x468] sm:$0xff]
        %v3607 = vld [vmem:[#allocation3 + $0x470] sm:$0xff]
        %v3608 = vld [vmem:[#allocation3 + $0x478] sm:$0xff]
        %3609 = vmatprep.subr.mxu0 0.0
        %3610 = vmatpush1.msra.mxu0 %v177
        %3611 = vmatprep.subr.mxu0 0.0
        %3612 = vmatpush1.msra.mxu0 %v178
        %3613 = vmatprep.subr.mxu0 0.0
        %3614 = vmatpush1.msra.mxu0 %v179
        %3615 = vmatprep.subr.mxu0 0.0
        %3616 = vmatpush1.msra.mxu0 %v180
        %3617 = vmatprep.subr.mxu0 0.0
        %3618 = vmatpush1.msra.mxu0 %v181
        %3619 = vmatprep.subr.mxu0 0.0
        %3620 = vmatpush1.msra.mxu0 %v182
        %3621 = vmatprep.subr.mxu0 0.0
        %3622 = vmatpush1.msra.mxu0 %v183
        %3623 = vmatprep.subr.mxu0 0.0
        %3624 = vmatpush1.msra.mxu0 %v184
        %3625 = vmatprep.subr.mxu0 0.0
        %3626 = vmatpush1.msra.mxu0 %v185
        %3627 = vmatprep.subr.mxu0 0.0
        %3628 = vmatpush1.msra.mxu0 %v186
        %3629 = vmatprep.subr.mxu0 0.0
        %3630 = vmatpush1.msra.mxu0 %v187
        %3631 = vmatprep.subr.mxu0 0.0
        %3632 = vmatpush1.msra.mxu0 %v188
        %3633 = vmatprep.subr.mxu0 0.0
        %3634 = vmatpush1.msra.mxu0 %v189
        %3635 = vmatprep.subr.mxu0 0.0
        %3636 = vmatpush1.msra.mxu0 %v190
        %3637 = vmatprep.subr.mxu0 0.0
        %3638 = vmatpush1.msra.mxu0 %v191
        %3639 = vmatprep.subr.mxu0 0.0
        %3640 = vmatpush1.msra.mxu0 %v192
        %3641 = vmatprep.subr.mxu0 0.0
        %3642 = vmatpush1.msra.mxu0 %v193
        %3643 = vmatprep.subr.mxu0 0.0
        %3644 = vmatpush1.msra.mxu0 %v194
        %3645 = vmatprep.subr.mxu0 0.0
        %3646 = vmatpush1.msra.mxu0 %v195
        %3647 = vmatprep.subr.mxu0 0.0
        %3648 = vmatpush1.msra.mxu0 %v196
        %3649 = vmatprep.subr.mxu0 0.0
        %3650 = vmatpush1.msra.mxu0 %v197
        %3651 = vmatprep.subr.mxu0 0.0
        %3652 = vmatpush1.msra.mxu0 %v198
        %3653 = vmatprep.subr.mxu0 0.0
        %3654 = vmatpush1.msra.mxu0 %v199
        %3655 = vmatprep.subr.mxu0 0.0
        %3656 = vmatpush1.msra.mxu0 %v200
        %3657 = vmatprep.subr.mxu0 0.0
        %3658 = vmatpush1.msra.mxu0 %v201
        %3659 = vmatprep.subr.mxu0 0.0
        %3660 = vmatpush1.msra.mxu0 %v202
        %3661 = vmatprep.subr.mxu0 0.0
        %3662 = vmatpush1.msra.mxu0 %v203
        %3663 = vmatprep.subr.mxu0 0.0
        %3664 = vmatpush1.msra.mxu0 %v204
        %3665 = vmatprep.subr.mxu0 0.0
        %3666 = vmatpush1.msra.mxu0 %v205
        %3667 = vmatprep.subr.mxu0 0.0
        %3668 = vmatpush1.msra.mxu0 %v206
        %3669 = vmatprep.subr.mxu0 0.0
        %3670 = vmatpush1.msra.mxu0 %v207
        %3671 = vmatprep.subr.mxu0 0.0
        %3672 = vmatpush1.msra.mxu0 %v208
        %3673 = vmatprep.mubr.f32.mxu0 %v3466
        %3674 = vmatmul.mubr.f32.gmra.mrb[0].mxu0 %v3465
        %v3675 = vpop.f32.mrb[0].mxu0
        %v3676 = vadd.f32 0.0, %v3675
        %v3677 = vpop.f32.mrb[0].mxu0
        %3678 = vmatprep.mubr.f32.mxu0 %v3475
        %3679 = vmatmul.mubr.f32.gmra.mrb[0].mxu0 %v3474
        %v3680 = vpop.f32.mrb[0].mxu0
        %v3681 = vadd.f32 0.0, %v3680
        %v3682 = vpop.f32.mrb[0].mxu0
        %3683 = vmatprep.mubr.f32.mxu0 %v3484
        %3684 = vmatmul.mubr.f32.gmra.mrb[0].mxu0 %v3483
        %v3685 = vpop.f32.mrb[0].mxu0
        %v3686 = vadd.f32 0.0, %v3685
        %v3687 = vpop.f32.mrb[0].mxu0
        %3688 = vmatprep.mubr.f32.mxu0 %v3493
        %3689 = vmatmul.mubr.f32.gmra.mrb[0].mxu0 %v3492
        %v3690 = vpop.f32.mrb[0].mxu0
        %v3691 = vadd.f32 0.0, %v3690
        %v3692 = vpop.f32.mrb[0].mxu0
        %3693 = vmatprep.mubr.f32.mxu0 %v3502
        %3694 = vmatmul.mubr.f32.gmra.mrb[0].mxu0 %v3501
        %v3695 = vpop.f32.mrb[0].mxu0
        %v3696 = vadd.f32 0.0, %v3695
        %v3697 = vpop.f32.mrb[0].mxu0
        %3698 = vmatprep.mubr.f32.mxu0 %v3511
        %3699 = vmatmul.mubr.f32.gmra.mrb[0].mxu0 %v3510
        %v3700 = vpop.f32.mrb[0].mxu0
        %v3701 = vadd.f32 0.0, %v3700
        %v3702 = vpop.f32.mrb[0].mxu0
        %3703 = vmatprep.mubr.f32.mxu0 %v3520
        %3704 = vmatmul.mubr.f32.gmra.mrb[0].mxu0 %v3519
        %v3705 = vpop.f32.mrb[0].mxu0
        %v3706 = vadd.f32 0.0, %v3705
        %v3707 = vpop.f32.mrb[0].mxu0
        %3708 = vmatprep.mubr.f32.mxu0 %v3529
        %3709 = vmatmul.mubr.f32.gmra.mrb[0].mxu0 %v3528
        %v3710 = vpop.f32.mrb[0].mxu0
        %v3711 = vadd.f32 0.0, %v3710
        %v3712 = vpop.f32.mrb[0].mxu0
        %3713 = vmatprep.mubr.f32.mxu0 %v3538
        %3714 = vmatmul.mubr.f32.gmra.mrb[0].mxu0 %v3537
        %v3715 = vpop.f32.mrb[0].mxu0
        %v3716 = vadd.f32 0.0, %v3715
        %v3717 = vpop.f32.mrb[0].mxu0
        %3718 = vmatprep.mubr.f32.mxu0 %v3547
        %3719 = vmatmul.mubr.f32.gmra.mrb[0].mxu0 %v3546
        %v3720 = vpop.f32.mrb[0].mxu0
        %v3721 = vadd.f32 0.0, %v3720
        %v3722 = vpop.f32.mrb[0].mxu0
        %3723 = vmatprep.mubr.f32.mxu0 %v3556
        %3724 = vmatmul.mubr.f32.gmra.mrb[0].mxu0 %v3555
        %v3725 = vpop.f32.mrb[0].mxu0
        %v3726 = vadd.f32 0.0, %v3725
        %v3727 = vpop.f32.mrb[0].mxu0
        %3728 = vmatprep.mubr.f32.mxu0 %v3565
        %3729 = vmatmul.mubr.f32.gmra.mrb[0].mxu0 %v3564
        %v3730 = vpop.f32.mrb[0].mxu0
        %v3731 = vadd.f32 0.0, %v3730
        %v3732 = vpop.f32.mrb[0].mxu0
        %3733 = vmatprep.mubr.f32.mxu0 %v3574
        %3734 = vmatmul.mubr.f32.gmra.mrb[0].mxu0 %v3573
        %v3735 = vpop.f32.mrb[0].mxu0
        %v3736 = vadd.f32 0.0, %v3735
        %v3737 = vpop.f32.mrb[0].mxu0
        %3738 = vmatprep.mubr.f32.mxu0 %v3583
        %3739 = vmatmul.mubr.f32.gmra.mrb[0].mxu0 %v3582
        %v3740 = vpop.f32.mrb[0].mxu0
        %v3741 = vadd.f32 0.0, %v3740
        %v3742 = vpop.f32.mrb[0].mxu0
        %3743 = vmatprep.mubr.f32.mxu0 %v3592
        %3744 = vmatmul.mubr.f32.gmra.mrb[0].mxu0 %v3591
        %v3745 = vpop.f32.mrb[0].mxu0
        %v3746 = vadd.f32 0.0, %v3745
        %v3747 = vpop.f32.mrb[0].mxu0
        %3748 = vmatprep.mubr.f32.mxu0 %v3601
        %3749 = vmatmul.mubr.f32.gmra.mrb[0].mxu0 %v3600
        %v3750 = vpop.f32.mrb[0].mxu0
        %v3751 = vadd.f32 0.0, %v3750
        %v3752 = vpop.f32.mrb[0].mxu0
        %3753 = vdwg.mxu0
        %3754 = vmatprep.subr.mxu0 0.0
        %3755 = vmatpush1.msra.mxu0 %v209
        %3756 = vmatprep.subr.mxu0 0.0
        %3757 = vmatpush1.msra.mxu0 %v210
        %3758 = vmatprep.subr.mxu0 0.0
        %3759 = vmatpush1.msra.mxu0 %v211
        %3760 = vmatprep.subr.mxu0 0.0
        %3761 = vmatpush1.msra.mxu0 %v212
        %3762 = vmatprep.subr.mxu0 0.0
        %3763 = vmatpush1.msra.mxu0 %v213
        %3764 = vmatprep.subr.mxu0 0.0
        %3765 = vmatpush1.msra.mxu0 %v214
        %3766 = vmatprep.subr.mxu0 0.0
        %3767 = vmatpush1.msra.mxu0 %v215
        %3768 = vmatprep.subr.mxu0 0.0
        %3769 = vmatpush1.msra.mxu0 %v216
        %3770 = vmatprep.subr.mxu0 0.0
        %3771 = vmatpush1.msra.mxu0 %v217
        %3772 = vmatprep.subr.mxu0 0.0
        %3773 = vmatpush1.msra.mxu0 %v218
        %3774 = vmatprep.subr.mxu0 0.0
        %3775 = vmatpush1.msra.mxu0 %v219
        %3776 = vmatprep.subr.mxu0 0.0
        %3777 = vmatpush1.msra.mxu0 %v220
        %3778 = vmatprep.subr.mxu0 0.0
        %3779 = vmatpush1.msra.mxu0 %v221
        %3780 = vmatprep.subr.mxu0 0.0
        %3781 = vmatpush1.msra.mxu0 %v222
        %3782 = vmatprep.subr.mxu0 0.0
        %3783 = vmatpush1.msra.mxu0 %v223
        %3784 = vmatprep.subr.mxu0 0.0
        %3785 = vmatpush1.msra.mxu0 %v224
        %3786 = vmatprep.subr.mxu0 0.0
        %3787 = vmatpush1.msra.mxu0 %v225
        %3788 = vmatprep.subr.mxu0 0.0
        %3789 = vmatpush1.msra.mxu0 %v226
        %3790 = vmatprep.subr.mxu0 0.0
        %3791 = vmatpush1.msra.mxu0 %v227
        %3792 = vmatprep.subr.mxu0 0.0
        %3793 = vmatpush1.msra.mxu0 %v228
        %3794 = vmatprep.subr.mxu0 0.0
        %3795 = vmatpush1.msra.mxu0 %v229
        %3796 = vmatprep.subr.mxu0 0.0
        %3797 = vmatpush1.msra.mxu0 %v230
        %3798 = vmatprep.subr.mxu0 0.0
        %3799 = vmatpush1.msra.mxu0 %v231
        %3800 = vmatprep.subr.mxu0 0.0
        %3801 = vmatpush1.msra.mxu0 %v232
        %3802 = vmatprep.subr.mxu0 0.0
        %3803 = vmatpush1.msra.mxu0 %v233
        %3804 = vmatprep.subr.mxu0 0.0
        %3805 = vmatpush1.msra.mxu0 %v234
        %3806 = vmatprep.subr.mxu0 0.0
        %3807 = vmatpush1.msra.mxu0 %v235
        %3808 = vmatprep.subr.mxu0 0.0
        %3809 = vmatpush1.msra.mxu0 %v236
        %3810 = vmatprep.subr.mxu0 0.0
        %3811 = vmatpush1.msra.mxu0 %v237
        %3812 = vmatprep.subr.mxu0 0.0
        %3813 = vmatpush1.msra.mxu0 %v238
        %3814 = vmatprep.subr.mxu0 0.0
        %3815 = vmatpush1.msra.mxu0 %v239
        %3816 = vmatprep.subr.mxu0 0.0
        %3817 = vmatpush1.msra.mxu0 %v240
        %3818 = vmatprep.mubr.f32.mxu0 %v3468
        %3819 = vmatmul.mubr.f32.gmra.mrb[0].mxu0 %v3467
        %v3820 = vpop.f32.mrb[0].mxu0
        %v3821 = vadd.f32 %v3676, %v3820
        %v3822 = vpop.f32.mrb[0].mxu0
        %3823 = vmatprep.mubr.f32.mxu0 %v3477
        %3824 = vmatmul.mubr.f32.gmra.mrb[0].mxu0 %v3476
        %v3825 = vpop.f32.mrb[0].mxu0
        %v3826 = vadd.f32 %v3681, %v3825
        %v3827 = vpop.f32.mrb[0].mxu0
        %3828 = vmatprep.mubr.f32.mxu0 %v3486
        %3829 = vmatmul.mubr.f32.gmra.mrb[0].mxu0 %v3485
        %v3830 = vpop.f32.mrb[0].mxu0
        %v3831 = vadd.f32 %v3686, %v3830
        %v3832 = vpop.f32.mrb[0].mxu0
        %3833 = vmatprep.mubr.f32.mxu0 %v3495
        %3834 = vmatmul.mubr.f32.gmra.mrb[0].mxu0 %v3494
        %v3835 = vpop.f32.mrb[0].mxu0
        %v3836 = vadd.f32 %v3691, %v3835
        %v3837 = vpop.f32.mrb[0].mxu0
        %3838 = vmatprep.mubr.f32.mxu0 %v3504
        %3839 = vmatmul.mubr.f32.gmra.mrb[0].mxu0 %v3503
        %v3840 = vpop.f32.mrb[0].mxu0
        %v3841 = vadd.f32 %v3696, %v3840
        %v3842 = vpop.f32.mrb[0].mxu0
        %3843 = vmatprep.mubr.f32.mxu0 %v3513
        %3844 = vmatmul.mubr.f32.gmra.mrb[0].mxu0 %v3512
        %v3845 = vpop.f32.mrb[0].mxu0
        %v3846 = vadd.f32 %v3701, %v3845
        %v3847 = vpop.f32.mrb[0].mxu0
        %3848 = vmatprep.mubr.f32.mxu0 %v3522
        %3849 = vmatmul.mubr.f32.gmra.mrb[0].mxu0 %v3521
        %v3850 = vpop.f32.mrb[0].mxu0
        %v3851 = vadd.f32 %v3706, %v3850
        %v3852 = vpop.f32.mrb[0].mxu0
        %3853 = vmatprep.mubr.f32.mxu0 %v3531
        %3854 = vmatmul.mubr.f32.gmra.mrb[0].mxu0 %v3530
        %v3855 = vpop.f32.mrb[0].mxu0
        %v3856 = vadd.f32 %v3711, %v3855
        %v3857 = vpop.f32.mrb[0].mxu0
        %3858 = vmatprep.mubr.f32.mxu0 %v3540
        %3859 = vmatmul.mubr.f32.gmra.mrb[0].mxu0 %v3539
        %v3860 = vpop.f32.mrb[0].mxu0
        %v3861 = vadd.f32 %v3716, %v3860
        %v3862 = vpop.f32.mrb[0].mxu0
        %3863 = vmatprep.mubr.f32.mxu0 %v3549
        %3864 = vmatmul.mubr.f32.gmra.mrb[0].mxu0 %v3548
        %v3865 = vpop.f32.mrb[0].mxu0
        %v3866 = vadd.f32 %v3721, %v3865
        %v3867 = vpop.f32.mrb[0].mxu0
        %3868 = vmatprep.mubr.f32.mxu0 %v3558
        %3869 = vmatmul.mubr.f32.gmra.mrb[0].mxu0 %v3557
        %v3870 = vpop.f32.mrb[0].mxu0
        %v3871 = vadd.f32 %v3726, %v3870
        %v3872 = vpop.f32.mrb[0].mxu0
        %3873 = vmatprep.mubr.f32.mxu0 %v3567
        %3874 = vmatmul.mubr.f32.gmra.mrb[0].mxu0 %v3566
        %v3875 = vpop.f32.mrb[0].mxu0
        %v3876 = vadd.f32 %v3731, %v3875
        %v3877 = vpop.f32.mrb[0].mxu0
        %3878 = vmatprep.mubr.f32.mxu0 %v3576
        %3879 = vmatmul.mubr.f32.gmra.mrb[0].mxu0 %v3575
        %v3880 = vpop.f32.mrb[0].mxu0
        %v3881 = vadd.f32 %v3736, %v3880
        %v3882 = vpop.f32.mrb[0].mxu0
        %3883 = vmatprep.mubr.f32.mxu0 %v3585
        %3884 = vmatmul.mubr.f32.gmra.mrb[0].mxu0 %v3584
        %v3885 = vpop.f32.mrb[0].mxu0
        %v3886 = vadd.f32 %v3741, %v3885
        %v3887 = vpop.f32.mrb[0].mxu0
        %3888 = vmatprep.mubr.f32.mxu0 %v3594
        %3889 = vmatmul.mubr.f32.gmra.mrb[0].mxu0 %v3593
        %v3890 = vpop.f32.mrb[0].mxu0
        %v3891 = vadd.f32 %v3746, %v3890
        %v3892 = vpop.f32.mrb[0].mxu0
        %3893 = vmatprep.mubr.f32.mxu0 %v3603
        %3894 = vmatmul.mubr.f32.gmra.mrb[0].mxu0 %v3602
        %v3895 = vpop.f32.mrb[0].mxu0
        %v3896 = vadd.f32 %v3751, %v3895
        %v3897 = vpop.f32.mrb[0].mxu0
        %3898 = vdwg.mxu0
        %3899 = vmatprep.subr.mxu0 0.0
        %3900 = vmatpush1.msra.mxu0 %v241
        %3901 = vmatprep.subr.mxu0 0.0
        %3902 = vmatpush1.msra.mxu0 %v242
        %3903 = vmatprep.subr.mxu0 0.0
        %3904 = vmatpush1.msra.mxu0 %v243
        %3905 = vmatprep.subr.mxu0 0.0
        %3906 = vmatpush1.msra.mxu0 %v244
        %3907 = vmatprep.subr.mxu0 0.0
        %3908 = vmatpush1.msra.mxu0 %v245
        %3909 = vmatprep.subr.mxu0 0.0
        %3910 = vmatpush1.msra.mxu0 %v246
        %3911 = vmatprep.subr.mxu0 0.0
        %3912 = vmatpush1.msra.mxu0 %v247
        %3913 = vmatprep.subr.mxu0 0.0
        %3914 = vmatpush1.msra.mxu0 %v248
        %3915 = vmatprep.subr.mxu0 0.0
        %3916 = vmatpush1.msra.mxu0 %v249
        %3917 = vmatprep.subr.mxu0 0.0
        %3918 = vmatpush1.msra.mxu0 %v250
        %3919 = vmatprep.subr.mxu0 0.0
        %3920 = vmatpush1.msra.mxu0 %v251
        %3921 = vmatprep.subr.mxu0 0.0
        %3922 = vmatpush1.msra.mxu0 %v252
        %3923 = vmatprep.subr.mxu0 0.0
        %3924 = vmatpush1.msra.mxu0 %v253
        %3925 = vmatprep.subr.mxu0 0.0
        %3926 = vmatpush1.msra.mxu0 %v254
        %3927 = vmatprep.subr.mxu0 0.0
        %3928 = vmatpush1.msra.mxu0 %v255
        %3929 = vmatprep.subr.mxu0 0.0
        %3930 = vmatpush1.msra.mxu0 %v256
        %3931 = vmatprep.subr.mxu0 0.0
        %3932 = vmatpush1.msra.mxu0 %v257
        %3933 = vmatprep.subr.mxu0 0.0
        %3934 = vmatpush1.msra.mxu0 %v258
        %3935 = vmatprep.subr.mxu0 0.0
        %3936 = vmatpush1.msra.mxu0 %v259
        %3937 = vmatprep.subr.mxu0 0.0
        %3938 = vmatpush1.msra.mxu0 %v260
        %3939 = vmatprep.subr.mxu0 0.0
        %3940 = vmatpush1.msra.mxu0 %v261
        %3941 = vmatprep.subr.mxu0 0.0
        %3942 = vmatpush1.msra.mxu0 %v262
        %3943 = vmatprep.subr.mxu0 0.0
        %3944 = vmatpush1.msra.mxu0 %v263
        %3945 = vmatprep.subr.mxu0 0.0
        %3946 = vmatpush1.msra.mxu0 %v264
        %3947 = vmatprep.subr.mxu0 0.0
        %3948 = vmatpush1.msra.mxu0 %v265
        %3949 = vmatprep.subr.mxu0 0.0
        %3950 = vmatpush1.msra.mxu0 %v266
        %3951 = vmatprep.subr.mxu0 0.0
        %3952 = vmatpush1.msra.mxu0 %v267
        %3953 = vmatprep.subr.mxu0 0.0
        %3954 = vmatpush1.msra.mxu0 %v268
        %3955 = vmatprep.subr.mxu0 0.0
        %3956 = vmatpush1.msra.mxu0 %v269
        %3957 = vmatprep.subr.mxu0 0.0
        %3958 = vmatpush1.msra.mxu0 %v270
        %3959 = vmatprep.subr.mxu0 0.0
        %3960 = vmatpush1.msra.mxu0 %v271
        %3961 = vmatprep.subr.mxu0 0.0
        %3962 = vmatpush1.msra.mxu0 %v272
        %3963 = vmatprep.mubr.f32.mxu0 %v3470
        %3964 = vmatmul.mubr.f32.gmra.mrb[0].mxu0 %v3469
        %v3965 = vpop.f32.mrb[0].mxu0
        %v3966 = vadd.f32 %v3821, %v3965
        %v3967 = vpop.f32.mrb[0].mxu0
        %3968 = vmatprep.mubr.f32.mxu0 %v3479
        %3969 = vmatmul.mubr.f32.gmra.mrb[0].mxu0 %v3478
        %v3970 = vpop.f32.mrb[0].mxu0
        %v3971 = vadd.f32 %v3826, %v3970
        %v3972 = vpop.f32.mrb[0].mxu0
        %3973 = vmatprep.mubr.f32.mxu0 %v3488
        %3974 = vmatmul.mubr.f32.gmra.mrb[0].mxu0 %v3487
        %v3975 = vpop.f32.mrb[0].mxu0
        %v3976 = vadd.f32 %v3831, %v3975
        %v3977 = vpop.f32.mrb[0].mxu0
        %3978 = vmatprep.mubr.f32.mxu0 %v3497
        %3979 = vmatmul.mubr.f32.gmra.mrb[0].mxu0 %v3496
        %v3980 = vpop.f32.mrb[0].mxu0
        %v3981 = vadd.f32 %v3836, %v3980
        %v3982 = vpop.f32.mrb[0].mxu0
        %3983 = vmatprep.mubr.f32.mxu0 %v3506
        %3984 = vmatmul.mubr.f32.gmra.mrb[0].mxu0 %v3505
        %v3985 = vpop.f32.mrb[0].mxu0
        %v3986 = vadd.f32 %v3841, %v3985
        %v3987 = vpop.f32.mrb[0].mxu0
        %3988 = vmatprep.mubr.f32.mxu0 %v3515
        %3989 = vmatmul.mubr.f32.gmra.mrb[0].mxu0 %v3514
        %v3990 = vpop.f32.mrb[0].mxu0
        %v3991 = vadd.f32 %v3846, %v3990
        %v3992 = vpop.f32.mrb[0].mxu0
        %3993 = vmatprep.mubr.f32.mxu0 %v3524
        %3994 = vmatmul.mubr.f32.gmra.mrb[0].mxu0 %v3523
        %v3995 = vpop.f32.mrb[0].mxu0
        %v3996 = vadd.f32 %v3851, %v3995
        %v3997 = vpop.f32.mrb[0].mxu0
        %3998 = vmatprep.mubr.f32.mxu0 %v3533
        %3999 = vmatmul.mubr.f32.gmra.mrb[0].mxu0 %v3532
        %v4000 = vpop.f32.mrb[0].mxu0
        %v4001 = vadd.f32 %v3856, %v4000
        %v4002 = vpop.f32.mrb[0].mxu0
        %4003 = vmatprep.mubr.f32.mxu0 %v3542
        %4004 = vmatmul.mubr.f32.gmra.mrb[0].mxu0 %v3541
        %v4005 = vpop.f32.mrb[0].mxu0
        %v4006 = vadd.f32 %v3861, %v4005
        %v4007 = vpop.f32.mrb[0].mxu0
        %4008 = vmatprep.mubr.f32.mxu0 %v3551
        %4009 = vmatmul.mubr.f32.gmra.mrb[0].mxu0 %v3550
        %v4010 = vpop.f32.mrb[0].mxu0
        %v4011 = vadd.f32 %v3866, %v4010
        %v4012 = vpop.f32.mrb[0].mxu0
        %4013 = vmatprep.mubr.f32.mxu0 %v3560
        %4014 = vmatmul.mubr.f32.gmra.mrb[0].mxu0 %v3559
        %v4015 = vpop.f32.mrb[0].mxu0
        %v4016 = vadd.f32 %v3871, %v4015
        %v4017 = vpop.f32.mrb[0].mxu0
        %4018 = vmatprep.mubr.f32.mxu0 %v3569
        %4019 = vmatmul.mubr.f32.gmra.mrb[0].mxu0 %v3568
        %v4020 = vpop.f32.mrb[0].mxu0
        %v4021 = vadd.f32 %v3876, %v4020
        %v4022 = vpop.f32.mrb[0].mxu0
        %4023 = vmatprep.mubr.f32.mxu0 %v3578
        %4024 = vmatmul.mubr.f32.gmra.mrb[0].mxu0 %v3577
        %v4025 = vpop.f32.mrb[0].mxu0
        %v4026 = vadd.f32 %v3881, %v4025
        %v4027 = vpop.f32.mrb[0].mxu0
        %4028 = vmatprep.mubr.f32.mxu0 %v3587
        %4029 = vmatmul.mubr.f32.gmra.mrb[0].mxu0 %v3586
        %v4030 = vpop.f32.mrb[0].mxu0
        %v4031 = vadd.f32 %v3886, %v4030
        %v4032 = vpop.f32.mrb[0].mxu0
        %4033 = vmatprep.mubr.f32.mxu0 %v3596
        %4034 = vmatmul.mubr.f32.gmra.mrb[0].mxu0 %v3595
        %v4035 = vpop.f32.mrb[0].mxu0
        %v4036 = vadd.f32 %v3891, %v4035
        %v4037 = vpop.f32.mrb[0].mxu0
        %4038 = vmatprep.mubr.f32.mxu0 %v3605
        %4039 = vmatmul.mubr.f32.gmra.mrb[0].mxu0 %v3604
        %v4040 = vpop.f32.mrb[0].mxu0
        %v4041 = vadd.f32 %v3896, %v4040
        %v4042 = vpop.f32.mrb[0].mxu0
        %4043 = vdwg.mxu0
        %4044 = vmatprep.subr.mxu0 0.0
        %4045 = vmatpush1.msra.mxu0 %v273
        %4046 = vmatprep.subr.mxu0 0.0
        %4047 = vmatpush1.msra.mxu0 %v274
        %4048 = vmatprep.subr.mxu0 0.0
        %4049 = vmatpush1.msra.mxu0 %v275
        %4050 = vmatprep.subr.mxu0 0.0
        %4051 = vmatpush1.msra.mxu0 %v276
        %4052 = vmatprep.subr.mxu0 0.0
        %4053 = vmatpush1.msra.mxu0 %v277
        %4054 = vmatprep.subr.mxu0 0.0
        %4055 = vmatpush1.msra.mxu0 %v278
        %4056 = vmatprep.subr.mxu0 0.0
        %4057 = vmatpush1.msra.mxu0 %v279
        %4058 = vmatprep.subr.mxu0 0.0
        %4059 = vmatpush1.msra.mxu0 %v280
        %4060 = vmatprep.subr.mxu0 0.0
        %4061 = vmatpush1.msra.mxu0 %v281
        %4062 = vmatprep.subr.mxu0 0.0
        %4063 = vmatpush1.msra.mxu0 %v282
        %4064 = vmatprep.subr.mxu0 0.0
        %4065 = vmatpush1.msra.mxu0 %v283
        %4066 = vmatprep.subr.mxu0 0.0
        %4067 = vmatpush1.msra.mxu0 %v284
        %4068 = vmatprep.subr.mxu0 0.0
        %4069 = vmatpush1.msra.mxu0 %v285
        %4070 = vmatprep.subr.mxu0 0.0
        %4071 = vmatpush1.msra.mxu0 %v286
        %4072 = vmatprep.subr.mxu0 0.0
        %4073 = vmatpush1.msra.mxu0 %v287
        %4074 = vmatprep.subr.mxu0 0.0
        %4075 = vmatpush1.msra.mxu0 %v288
        %4076 = vmatprep.subr.mxu0 0.0
        %4077 = vmatpush1.msra.mxu0 %v289
        %4078 = vmatprep.subr.mxu0 0.0
        %4079 = vmatpush1.msra.mxu0 %v290
        %4080 = vmatprep.subr.mxu0 0.0
        %4081 = vmatpush1.msra.mxu0 %v291
        %4082 = vmatprep.subr.mxu0 0.0
        %4083 = vmatpush1.msra.mxu0 %v292
        %4084 = vmatprep.subr.mxu0 0.0
        %4085 = vmatpush1.msra.mxu0 %v293
        %4086 = vmatprep.subr.mxu0 0.0
        %4087 = vmatpush1.msra.mxu0 %v294
        %4088 = vmatprep.subr.mxu0 0.0
        %4089 = vmatpush1.msra.mxu0 %v295
        %4090 = vmatprep.subr.mxu0 0.0
        %4091 = vmatpush1.msra.mxu0 %v296
        %4092 = vmatprep.subr.mxu0 0.0
        %4093 = vmatpush1.msra.mxu0 %v297
        %4094 = vmatprep.subr.mxu0 0.0
        %4095 = vmatpush1.msra.mxu0 %v298
        %4096 = vmatprep.subr.mxu0 0.0
        %4097 = vmatpush1.msra.mxu0 %v299
        %4098 = vmatprep.subr.mxu0 0.0
        %4099 = vmatpush1.msra.mxu0 %v300
        %4100 = vmatprep.subr.mxu0 0.0
        %4101 = vmatpush1.msra.mxu0 %v301
        %4102 = vmatprep.subr.mxu0 0.0
        %4103 = vmatpush1.msra.mxu0 %v302
        %4104 = vmatprep.subr.mxu0 0.0
        %4105 = vmatpush1.msra.mxu0 %v303
        %4106 = vmatprep.subr.mxu0 0.0
        %4107 = vmatpush1.msra.mxu0 %v304
        %4108 = vmatprep.mubr.f32.mxu0 %v3472
        %4109 = vmatmul.mubr.f32.gmra.mrb[0].mxu0 %v3471
        %v4110 = vpop.f32.mrb[0].mxu0
        %v4111 = vadd.f32 %v3966, %v4110
        %v4112 = vpop.f32.mrb[0].mxu0
        %4113 = vmatprep.mubr.f32.mxu0 %v3481
        %4114 = vmatmul.mubr.f32.gmra.mrb[0].mxu0 %v3480
        %v4115 = vpop.f32.mrb[0].mxu0
        %v4116 = vadd.f32 %v3971, %v4115
        %v4117 = vpop.f32.mrb[0].mxu0
        %4118 = vmatprep.mubr.f32.mxu0 %v3490
        %4119 = vmatmul.mubr.f32.gmra.mrb[0].mxu0 %v3489
        %v4120 = vpop.f32.mrb[0].mxu0
        %v4121 = vadd.f32 %v3976, %v4120
        %v4122 = vpop.f32.mrb[0].mxu0
        %4123 = vmatprep.mubr.f32.mxu0 %v3499
        %4124 = vmatmul.mubr.f32.gmra.mrb[0].mxu0 %v3498
        %v4125 = vpop.f32.mrb[0].mxu0
        %v4126 = vadd.f32 %v3981, %v4125
        %v4127 = vpop.f32.mrb[0].mxu0
        %4128 = vmatprep.mubr.f32.mxu0 %v3508
        %4129 = vmatmul.mubr.f32.gmra.mrb[0].mxu0 %v3507
        %v4130 = vpop.f32.mrb[0].mxu0
        %v4131 = vadd.f32 %v3986, %v4130
        %v4132 = vpop.f32.mrb[0].mxu0
        %4133 = vmatprep.mubr.f32.mxu0 %v3517
        %4134 = vmatmul.mubr.f32.gmra.mrb[0].mxu0 %v3516
        %v4135 = vpop.f32.mrb[0].mxu0
        %v4136 = vadd.f32 %v3991, %v4135
        %v4137 = vpop.f32.mrb[0].mxu0
        %4138 = vmatprep.mubr.f32.mxu0 %v3526
        %4139 = vmatmul.mubr.f32.gmra.mrb[0].mxu0 %v3525
        %v4140 = vpop.f32.mrb[0].mxu0
        %v4141 = vadd.f32 %v3996, %v4140
        %v4142 = vpop.f32.mrb[0].mxu0
        %4143 = vmatprep.mubr.f32.mxu0 %v3535
        %4144 = vmatmul.mubr.f32.gmra.mrb[0].mxu0 %v3534
        %v4145 = vpop.f32.mrb[0].mxu0
        %v4146 = vadd.f32 %v4001, %v4145
        %v4147 = vpop.f32.mrb[0].mxu0
        %4148 = vmatprep.mubr.f32.mxu0 %v3544
        %4149 = vmatmul.mubr.f32.gmra.mrb[0].mxu0 %v3543
        %v4150 = vpop.f32.mrb[0].mxu0
        %v4151 = vadd.f32 %v4006, %v4150
        %v4152 = vpop.f32.mrb[0].mxu0
        %4153 = vmatprep.mubr.f32.mxu0 %v3553
        %4154 = vmatmul.mubr.f32.gmra.mrb[0].mxu0 %v3552
        %v4155 = vpop.f32.mrb[0].mxu0
        %v4156 = vadd.f32 %v4011, %v4155
        %v4157 = vpop.f32.mrb[0].mxu0
        %4158 = vmatprep.mubr.f32.mxu0 %v3562
        %4159 = vmatmul.mubr.f32.gmra.mrb[0].mxu0 %v3561
        %v4160 = vpop.f32.mrb[0].mxu0
        %v4161 = vadd.f32 %v4016, %v4160
        %v4162 = vpop.f32.mrb[0].mxu0
        %4163 = vmatprep.mubr.f32.mxu0 %v3571
        %4164 = vmatmul.mubr.f32.gmra.mrb[0].mxu0 %v3570
        %v4165 = vpop.f32.mrb[0].mxu0
        %v4166 = vadd.f32 %v4021, %v4165
        %v4167 = vpop.f32.mrb[0].mxu0
        %4168 = vmatprep.mubr.f32.mxu0 %v3580
        %4169 = vmatmul.mubr.f32.gmra.mrb[0].mxu0 %v3579
        %v4170 = vpop.f32.mrb[0].mxu0
        %v4171 = vadd.f32 %v4026, %v4170
        %v4172 = vpop.f32.mrb[0].mxu0
        %4173 = vmatprep.mubr.f32.mxu0 %v3589
        %4174 = vmatmul.mubr.f32.gmra.mrb[0].mxu0 %v3588
        %v4175 = vpop.f32.mrb[0].mxu0
        %v4176 = vadd.f32 %v4031, %v4175
        %v4177 = vpop.f32.mrb[0].mxu0
        %4178 = vmatprep.mubr.f32.mxu0 %v3598
        %4179 = vmatmul.mubr.f32.gmra.mrb[0].mxu0 %v3597
        %v4180 = vpop.f32.mrb[0].mxu0
        %v4181 = vadd.f32 %v4036, %v4180
        %v4182 = vpop.f32.mrb[0].mxu0
        %4183 = vmatprep.mubr.f32.mxu0 %v3607
        %4184 = vmatmul.mubr.f32.gmra.mrb[0].mxu0 %v3606
        %v4185 = vpop.f32.mrb[0].mxu0
        %v4186 = vadd.f32 %v4041, %v4185
        %v4187 = vpop.f32.mrb[0].mxu0
        %4188 = vdwg.mxu0
        %4189 = vmatprep.subr.mxu0 0.0
        %4190 = vmatpush1.msra.mxu0 %v305
        %4191 = vmatprep.subr.mxu0 0.0
        %4192 = vmatpush1.msra.mxu0 %v306
        %4193 = vmatprep.subr.mxu0 0.0
        %4194 = vmatpush1.msra.mxu0 %v307
        %4195 = vmatprep.subr.mxu0 0.0
        %4196 = vmatpush1.msra.mxu0 %v308
        %4197 = vmatprep.subr.mxu0 0.0
        %4198 = vmatpush1.msra.mxu0 %v309
        %4199 = vmatprep.subr.mxu0 0.0
        %4200 = vmatpush1.msra.mxu0 %v310
        %4201 = vmatprep.subr.mxu0 0.0
        %4202 = vmatpush1.msra.mxu0 %v311
        %4203 = vmatprep.subr.mxu0 0.0
        %4204 = vmatpush1.msra.mxu0 %v312
        %4205 = vmatprep.subr.mxu0 0.0
        %4206 = vmatpush1.msra.mxu0 %v313
        %4207 = vmatprep.subr.mxu0 0.0
        %4208 = vmatpush1.msra.mxu0 %v314
        %4209 = vmatprep.subr.mxu0 0.0
        %4210 = vmatpush1.msra.mxu0 %v315
        %4211 = vmatprep.subr.mxu0 0.0
        %4212 = vmatpush1.msra.mxu0 %v316
        %4213 = vmatprep.subr.mxu0 0.0
        %4214 = vmatpush1.msra.mxu0 %v317
        %4215 = vmatprep.subr.mxu0 0.0
        %4216 = vmatpush1.msra.mxu0 %v318
        %4217 = vmatprep.subr.mxu0 0.0
        %4218 = vmatpush1.msra.mxu0 %v319
        %4219 = vmatprep.subr.mxu0 0.0
        %4220 = vmatpush1.msra.mxu0 %v320
        %4221 = vmatprep.subr.mxu0 0.0
        %4222 = vmatpush1.msra.mxu0 0.0
        %4223 = vmatprep.subr.mxu0 0.0
        %4224 = vmatpush1.msra.mxu0 0.0
        %4225 = vmatprep.subr.mxu0 0.0
        %4226 = vmatpush1.msra.mxu0 0.0
        %4227 = vmatprep.subr.mxu0 0.0
        %4228 = vmatpush1.msra.mxu0 0.0
        %4229 = vmatprep.subr.mxu0 0.0
        %4230 = vmatpush1.msra.mxu0 0.0
        %4231 = vmatprep.subr.mxu0 0.0
        %4232 = vmatpush1.msra.mxu0 0.0
        %4233 = vmatprep.subr.mxu0 0.0
        %4234 = vmatpush1.msra.mxu0 0.0
        %4235 = vmatprep.subr.mxu0 0.0
        %4236 = vmatpush1.msra.mxu0 0.0
        %4237 = vmatprep.subr.mxu0 0.0
        %4238 = vmatpush1.msra.mxu0 0.0
        %4239 = vmatprep.subr.mxu0 0.0
        %4240 = vmatpush1.msra.mxu0 0.0
        %4241 = vmatprep.subr.mxu0 0.0
        %4242 = vmatpush1.msra.mxu0 0.0
        %4243 = vmatprep.subr.mxu0 0.0
        %4244 = vmatpush1.msra.mxu0 0.0
        %4245 = vmatprep.subr.mxu0 0.0
        %4246 = vmatpush1.msra.mxu0 0.0
        %4247 = vmatprep.subr.mxu0 0.0
        %4248 = vmatpush1.msra.mxu0 0.0
        %4249 = vmatprep.subr.mxu0 0.0
        %4250 = vmatpush1.msra.mxu0 0.0
        %4251 = vmatprep.subr.mxu0 0.0
        %4252 = vmatpush1.msra.mxu0 0.0
        %4253 = vmatprep.mubr.f32.mxu0 0.0
        %4254 = vmatmul.mubr.f32.gmra.mrb[0].mxu0 %v3473
        %v4255 = vpop.f32.mrb[0].mxu0
        %v4256 = vadd.f32 %v4111, %v4255
        %v4257 = vpop.f32.mrb[0].mxu0
        %4258 = vmatprep.mubr.f32.mxu0 0.0
        %4259 = vmatmul.mubr.f32.gmra.mrb[0].mxu0 %v3482
        %v4260 = vpop.f32.mrb[0].mxu0
        %v4261 = vadd.f32 %v4116, %v4260
        %v4262 = vpop.f32.mrb[0].mxu0
        %4263 = vmatprep.mubr.f32.mxu0 0.0
        %4264 = vmatmul.mubr.f32.gmra.mrb[0].mxu0 %v3491
        %v4265 = vpop.f32.mrb[0].mxu0
        %v4266 = vadd.f32 %v4121, %v4265
        %v4267 = vpop.f32.mrb[0].mxu0
        %4268 = vmatprep.mubr.f32.mxu0 0.0
        %4269 = vmatmul.mubr.f32.gmra.mrb[0].mxu0 %v3500
        %v4270 = vpop.f32.mrb[0].mxu0
        %v4271 = vadd.f32 %v4126, %v4270
        %v4272 = vpop.f32.mrb[0].mxu0
        %4273 = vmatprep.mubr.f32.mxu0 0.0
        %4274 = vmatmul.mubr.f32.gmra.mrb[0].mxu0 %v3509
        %v4275 = vpop.f32.mrb[0].mxu0
        %v4276 = vadd.f32 %v4131, %v4275
        %v4277 = vpop.f32.mrb[0].mxu0
        %4278 = vmatprep.mubr.f32.mxu0 0.0
        %4279 = vmatmul.mubr.f32.gmra.mrb[0].mxu0 %v3518
        %v4280 = vpop.f32.mrb[0].mxu0
        %v4281 = vadd.f32 %v4136, %v4280
        %v4282 = vpop.f32.mrb[0].mxu0
        %4283 = vmatprep.mubr.f32.mxu0 0.0
        %4284 = vmatmul.mubr.f32.gmra.mrb[0].mxu0 %v3527
        %v4285 = vpop.f32.mrb[0].mxu0
        %v4286 = vadd.f32 %v4141, %v4285
        %v4287 = vpop.f32.mrb[0].mxu0
        %4288 = vmatprep.mubr.f32.mxu0 0.0
        %4289 = vmatmul.mubr.f32.gmra.mrb[0].mxu0 %v3536
        %v4290 = vpop.f32.mrb[0].mxu0
        %v4291 = vadd.f32 %v4146, %v4290
        %v4292 = vpop.f32.mrb[0].mxu0
        %4293 = vmatprep.mubr.f32.mxu0 0.0
        %4294 = vmatmul.mubr.f32.gmra.mrb[0].mxu0 %v3545
        %v4295 = vpop.f32.mrb[0].mxu0
        %v4296 = vadd.f32 %v4151, %v4295
        %v4297 = vpop.f32.mrb[0].mxu0
        %4298 = vmatprep.mubr.f32.mxu0 0.0
        %4299 = vmatmul.mubr.f32.gmra.mrb[0].mxu0 %v3554
        %v4300 = vpop.f32.mrb[0].mxu0
        %v4301 = vadd.f32 %v4156, %v4300
        %v4302 = vpop.f32.mrb[0].mxu0
        %4303 = vmatprep.mubr.f32.mxu0 0.0
        %4304 = vmatmul.mubr.f32.gmra.mrb[0].mxu0 %v3563
        %v4305 = vpop.f32.mrb[0].mxu0
        %v4306 = vadd.f32 %v4161, %v4305
        %v4307 = vpop.f32.mrb[0].mxu0
        %4308 = vmatprep.mubr.f32.mxu0 0.0
        %4309 = vmatmul.mubr.f32.gmra.mrb[0].mxu0 %v3572
        %v4310 = vpop.f32.mrb[0].mxu0
        %v4311 = vadd.f32 %v4166, %v4310
        %v4312 = vpop.f32.mrb[0].mxu0
        %4313 = vmatprep.mubr.f32.mxu0 0.0
        %4314 = vmatmul.mubr.f32.gmra.mrb[0].mxu0 %v3581
        %v4315 = vpop.f32.mrb[0].mxu0
        %v4316 = vadd.f32 %v4171, %v4315
        %v4317 = vpop.f32.mrb[0].mxu0
        %4318 = vmatprep.mubr.f32.mxu0 0.0
        %4319 = vmatmul.mubr.f32.gmra.mrb[0].mxu0 %v3590
        %v4320 = vpop.f32.mrb[0].mxu0
        %v4321 = vadd.f32 %v4176, %v4320
        %v4322 = vpop.f32.mrb[0].mxu0
        %4323 = vmatprep.mubr.f32.mxu0 0.0
        %4324 = vmatmul.mubr.f32.gmra.mrb[0].mxu0 %v3599
        %v4325 = vpop.f32.mrb[0].mxu0
        %v4326 = vadd.f32 %v4181, %v4325
        %v4327 = vpop.f32.mrb[0].mxu0
        %4328 = vmatprep.mubr.f32.mxu0 0.0
        %4329 = vmatmul.mubr.f32.gmra.mrb[0].mxu0 %v3608
        %v4330 = vpop.f32.mrb[0].mxu0
        %v4331 = vadd.f32 %v4186, %v4330
        %v4332 = vpop.f32.mrb[0].mxu0
        %4333 = vdwg.mxu0
        %4334 = vst [vmem:[#allocation4] sm:$0xff] %v4256
        %4335 = vst [vmem:[#allocation4 + $0x8] sm:$0xff] %v4261
        %4336 = vst [vmem:[#allocation4 + $0x10] sm:$0xff] %v4266
        %4337 = vst [vmem:[#allocation4 + $0x18] sm:$0xff] %v4271
        %4338 = vst [vmem:[#allocation4 + $0x20] sm:$0xff] %v4276
        %4339 = vst [vmem:[#allocation4 + $0x28] sm:$0xff] %v4281
        %4340 = vst [vmem:[#allocation4 + $0x30] sm:$0xff] %v4286
        %4341 = vst [vmem:[#allocation4 + $0x38] sm:$0xff] %v4291
        %4342 = vst [vmem:[#allocation4 + $0x40] sm:$0xff] %v4296
        %4343 = vst [vmem:[#allocation4 + $0x48] sm:$0xff] %v4301
        %4344 = vst [vmem:[#allocation4 + $0x50] sm:$0xff] %v4306
        %4345 = vst [vmem:[#allocation4 + $0x58] sm:$0xff] %v4311
        %4346 = vst [vmem:[#allocation4 + $0x60] sm:$0xff] %v4316
        %4347 = vst [vmem:[#allocation4 + $0x68] sm:$0xff] %v4321
        %4348 = vst [vmem:[#allocation4 + $0x70] sm:$0xff] %v4326
        %4349 = vst [vmem:[#allocation4 + $0x78] sm:$0xff] %v4331
        %v4350 = vadd.f32 %v4256, %v4261
        %v4351 = vadd.f32 %v4350, %v4266
        %v4352 = vadd.f32 %v4351, %v4271
        %v4353 = vadd.f32 %v4352, %v4276
        %v4354 = vadd.f32 %v4353, %v4281
        %v4355 = vadd.f32 %v4354, %v4286
        %v4356 = vadd.f32 %v4355, %v4291
        %v4357 = vadd.f32 %v4356, %v4296
        %v4358 = vadd.f32 %v4357, %v4301
        %v4359 = vadd.f32 %v4358, %v4306
        %v4360 = vadd.f32 %v4359, %v4311
        %v4361 = vadd.f32 %v4360, %v4316
        %v4362 = vadd.f32 %v4361, %v4321
        %v4363 = vadd.f32 %v4362, %v4326
        %v4364 = vadd.f32 %v4363, %v4331
        %v4365 = vrot.slane %v4364, 4
        %v4366 = vadd.f32 %v4364, %v4365
        %v4367 = vrot.slane %v4366, 2
        %v4368 = vadd.f32 %v4366, %v4367
        %v4369 = vrot.slane %v4368, 1
        %v4370 = vadd.f32 %v4368, %v4369
        %v4371 = vadd.f32 %v4370, 0.0
        %v4372 = vmul.f32 %v4256, %v4256
        %v4373 = vmul.f32 %v4261, %v4261
        %v4374 = vmul.f32 %v4266, %v4266
        %v4375 = vmul.f32 %v4271, %v4271
        %v4376 = vmul.f32 %v4276, %v4276
        %v4377 = vmul.f32 %v4281, %v4281
        %v4378 = vmul.f32 %v4286, %v4286
        %v4379 = vmul.f32 %v4291, %v4291
        %v4380 = vmul.f32 %v4296, %v4296
        %v4381 = vmul.f32 %v4301, %v4301
        %v4382 = vmul.f32 %v4306, %v4306
        %v4383 = vmul.f32 %v4311, %v4311
        %v4384 = vmul.f32 %v4316, %v4316
        %v4385 = vmul.f32 %v4321, %v4321
        %v4386 = vmul.f32 %v4326, %v4326
        %v4387 = vmul.f32 %v4331, %v4331
        %v4388 = vadd.f32 %v4372, %v4373
        %v4389 = vadd.f32 %v4388, %v4374
        %v4390 = vadd.f32 %v4389, %v4375
        %v4391 = vadd.f32 %v4390, %v4376
        %v4392 = vadd.f32 %v4391, %v4377
        %v4393 = vadd.f32 %v4392, %v4378
        %v4394 = vadd.f32 %v4393, %v4379
        %v4395 = vadd.f32 %v4394, %v4380
        %v4396 = vadd.f32 %v4395, %v4381
        %v4397 = vadd.f32 %v4396, %v4382
        %v4398 = vadd.f32 %v4397, %v4383
        %v4399 = vadd.f32 %v4398, %v4384
        %v4400 = vadd.f32 %v4399, %v4385
        %v4401 = vadd.f32 %v4400, %v4386
        %v4402 = vadd.f32 %v4401, %v4387
        %v4403 = vrot.slane %v4402, 4
        %v4404 = vadd.f32 %v4402, %v4403
        %v4405 = vrot.slane %v4404, 2
        %v4406 = vadd.f32 %v4404, %v4405
        %v4407 = vrot.slane %v4406, 1
        %v4408 = vadd.f32 %v4406, %v4407
        %v4409 = vadd.f32 %v4408, 0.0
        %v4410 = vld [vmem:[%s1698] sm:$0xff]
        %v4411 = vld [vmem:[%s1698 + $0x8] sm:$0xff]
        %v4412 = vld [vmem:[%s1698 + $0x18] sm:$0xff]
        %v4413 = vld [vmem:[%s1698 + $0x20] sm:$0xff]
        %v4414 = vld [vmem:[%s1698 + $0x30] sm:$0xff]
        %v4415 = vld [vmem:[%s1698 + $0x38] sm:$0xff]
        %v4416 = vld [vmem:[%s1698 + $0x48] sm:$0xff]
        %v4417 = vld [vmem:[%s1698 + $0x50] sm:$0xff]
        %v4418 = vld [vmem:[%s1698 + $0x60] sm:$0xff]
        %v4419 = vld [vmem:[%s1698 + $0x68] sm:$0xff]
        %v4420 = vld [vmem:[%s1698 + $0x78] sm:$0xff]
        %v4421 = vld [vmem:[%s1698 + $0x80] sm:$0xff]
        %v4422 = vld [vmem:[%s1698 + $0x90] sm:$0xff]
        %v4423 = vld [vmem:[%s1698 + $0x98] sm:$0xff]
        %v4424 = vld [vmem:[%s1698 + $0xa8] sm:$0xff]
        %v4425 = vld [vmem:[%s1698 + $0xb0] sm:$0xff]
        %4426 = vst [vmem:[#allocation3] sm:$0xff] %v4410
        %4427 = vst [vmem:[#allocation3 + $0x48] sm:$0xff] %v4411
        %4428 = vst [vmem:[#allocation3 + $0x90] sm:$0xff] %v4412
        %4429 = vst [vmem:[#allocation3 + $0xd8] sm:$0xff] %v4413
        %4430 = vst [vmem:[#allocation3 + $0x120] sm:$0xff] %v4414
        %4431 = vst [vmem:[#allocation3 + $0x168] sm:$0xff] %v4415
        %4432 = vst [vmem:[#allocation3 + $0x1b0] sm:$0xff] %v4416
        %4433 = vst [vmem:[#allocation3 + $0x1f8] sm:$0xff] %v4417
        %4434 = vst [vmem:[#allocation3 + $0x240] sm:$0xff] %v4418
        %4435 = vst [vmem:[#allocation3 + $0x288] sm:$0xff] %v4419
        %4436 = vst [vmem:[#allocation3 + $0x2d0] sm:$0xff] %v4420
        %4437 = vst [vmem:[#allocation3 + $0x318] sm:$0xff] %v4421
        %4438 = vst [vmem:[#allocation3 + $0x360] sm:$0xff] %v4422
        %4439 = vst [vmem:[#allocation3 + $0x3a8] sm:$0xff] %v4423
        %4440 = vst [vmem:[#allocation3 + $0x3f0] sm:$0xff] %v4424
        %4441 = vst [vmem:[#allocation3 + $0x438] sm:$0xff] %v4425
        %v4442 = vld [vmem:[%s1698 + $0x1] sm:$0xff]
        %v4443 = vld [vmem:[%s1698 + $0x9] sm:$0xff]
        %v4444 = vld [vmem:[%s1698 + $0x19] sm:$0xff]
        %v4445 = vld [vmem:[%s1698 + $0x21] sm:$0xff]
        %v4446 = vld [vmem:[%s1698 + $0x31] sm:$0xff]
        %v4447 = vld [vmem:[%s1698 + $0x39] sm:$0xff]
        %v4448 = vld [vmem:[%s1698 + $0x49] sm:$0xff]
        %v4449 = vld [vmem:[%s1698 + $0x51] sm:$0xff]
        %v4450 = vld [vmem:[%s1698 + $0x61] sm:$0xff]
        %v4451 = vld [vmem:[%s1698 + $0x69] sm:$0xff]
        %v4452 = vld [vmem:[%s1698 + $0x79] sm:$0xff]
        %v4453 = vld [vmem:[%s1698 + $0x81] sm:$0xff]
        %v4454 = vld [vmem:[%s1698 + $0x91] sm:$0xff]
        %v4455 = vld [vmem:[%s1698 + $0x99] sm:$0xff]
        %v4456 = vld [vmem:[%s1698 + $0xa9] sm:$0xff]
        %v4457 = vld [vmem:[%s1698 + $0xb1] sm:$0xff]
        %4458 = vst [vmem:[#allocation3 + $0x8] sm:$0xff] %v4442
        %4459 = vst [vmem:[#allocation3 + $0x50] sm:$0xff] %v4443
        %4460 = vst [vmem:[#allocation3 + $0x98] sm:$0xff] %v4444
        %4461 = vst [vmem:[#allocation3 + $0xe0] sm:$0xff] %v4445
        %4462 = vst [vmem:[#allocation3 + $0x128] sm:$0xff] %v4446
        %4463 = vst [vmem:[#allocation3 + $0x170] sm:$0xff] %v4447
        %4464 = vst [vmem:[#allocation3 + $0x1b8] sm:$0xff] %v4448
        %4465 = vst [vmem:[#allocation3 + $0x200] sm:$0xff] %v4449
        %4466 = vst [vmem:[#allocation3 + $0x248] sm:$0xff] %v4450
        %4467 = vst [vmem:[#allocation3 + $0x290] sm:$0xff] %v4451
        %4468 = vst [vmem:[#allocation3 + $0x2d8] sm:$0xff] %v4452
        %4469 = vst [vmem:[#allocation3 + $0x320] sm:$0xff] %v4453
        %4470 = vst [vmem:[#allocation3 + $0x368] sm:$0xff] %v4454
        %4471 = vst [vmem:[#allocation3 + $0x3b0] sm:$0xff] %v4455
        %4472 = vst [vmem:[#allocation3 + $0x3f8] sm:$0xff] %v4456
        %4473 = vst [vmem:[#allocation3 + $0x440] sm:$0xff] %v4457
        %v4474 = vld [vmem:[%s1698 + $0x2] sm:$0xff]
        %v4475 = vld [vmem:[%s1698 + $0xa] sm:$0xff]
        %v4476 = vld [vmem:[%s1698 + $0x1a] sm:$0xff]
        %v4477 = vld [vmem:[%s1698 + $0x22] sm:$0xff]
        %v4478 = vld [vmem:[%s1698 + $0x32] sm:$0xff]
        %v4479 = vld [vmem:[%s1698 + $0x3a] sm:$0xff]
        %v4480 = vld [vmem:[%s1698 + $0x4a] sm:$0xff]
        %v4481 = vld [vmem:[%s1698 + $0x52] sm:$0xff]
        %v4482 = vld [vmem:[%s1698 + $0x62] sm:$0xff]
        %v4483 = vld [vmem:[%s1698 + $0x6a] sm:$0xff]
        %v4484 = vld [vmem:[%s1698 + $0x7a] sm:$0xff]
        %v4485 = vld [vmem:[%s1698 + $0x82] sm:$0xff]
        %v4486 = vld [vmem:[%s1698 + $0x92] sm:$0xff]
        %v4487 = vld [vmem:[%s1698 + $0x9a] sm:$0xff]
        %v4488 = vld [vmem:[%s1698 + $0xaa] sm:$0xff]
        %v4489 = vld [vmem:[%s1698 + $0xb2] sm:$0xff]
        %4490 = vst [vmem:[#allocation3 + $0x10] sm:$0xff] %v4474
        %4491 = vst [vmem:[#allocation3 + $0x58] sm:$0xff] %v4475
        %4492 = vst [vmem:[#allocation3 + $0xa0] sm:$0xff] %v4476
        %4493 = vst [vmem:[#allocation3 + $0xe8] sm:$0xff] %v4477
        %4494 = vst [vmem:[#allocation3 + $0x130] sm:$0xff] %v4478
        %4495 = vst [vmem:[#allocation3 + $0x178] sm:$0xff] %v4479
        %4496 = vst [vmem:[#allocation3 + $0x1c0] sm:$0xff] %v4480
        %4497 = vst [vmem:[#allocation3 + $0x208] sm:$0xff] %v4481
        %4498 = vst [vmem:[#allocation3 + $0x250] sm:$0xff] %v4482
        %4499 = vst [vmem:[#allocation3 + $0x298] sm:$0xff] %v4483
        %4500 = vst [vmem:[#allocation3 + $0x2e0] sm:$0xff] %v4484
        %4501 = vst [vmem:[#allocation3 + $0x328] sm:$0xff] %v4485
        %4502 = vst [vmem:[#allocation3 + $0x370] sm:$0xff] %v4486
        %4503 = vst [vmem:[#allocation3 + $0x3b8] sm:$0xff] %v4487
        %4504 = vst [vmem:[#allocation3 + $0x400] sm:$0xff] %v4488
        %4505 = vst [vmem:[#allocation3 + $0x448] sm:$0xff] %v4489
        %v4506 = vld [vmem:[%s1795] sm:$0xff]
        %v4507 = vld [vmem:[%s1795 + $0x8] sm:$0xff]
        %v4508 = vld [vmem:[%s1795 + $0x18] sm:$0xff]
        %v4509 = vld [vmem:[%s1795 + $0x20] sm:$0xff]
        %v4510 = vld [vmem:[%s1795 + $0x30] sm:$0xff]
        %v4511 = vld [vmem:[%s1795 + $0x38] sm:$0xff]
        %v4512 = vld [vmem:[%s1795 + $0x48] sm:$0xff]
        %v4513 = vld [vmem:[%s1795 + $0x50] sm:$0xff]
        %v4514 = vld [vmem:[%s1795 + $0x60] sm:$0xff]
        %v4515 = vld [vmem:[%s1795 + $0x68] sm:$0xff]
        %v4516 = vld [vmem:[%s1795 + $0x78] sm:$0xff]
        %v4517 = vld [vmem:[%s1795 + $0x80] sm:$0xff]
        %v4518 = vld [vmem:[%s1795 + $0x90] sm:$0xff]
        %v4519 = vld [vmem:[%s1795 + $0x98] sm:$0xff]
        %v4520 = vld [vmem:[%s1795 + $0xa8] sm:$0xff]
        %v4521 = vld [vmem:[%s1795 + $0xb0] sm:$0xff]
        %4522 = vst [vmem:[#allocation3 + $0x18] sm:$0xff] %v4506
        %4523 = vst [vmem:[#allocation3 + $0x60] sm:$0xff] %v4507
        %4524 = vst [vmem:[#allocation3 + $0xa8] sm:$0xff] %v4508
        %4525 = vst [vmem:[#allocation3 + $0xf0] sm:$0xff] %v4509
        %4526 = vst [vmem:[#allocation3 + $0x138] sm:$0xff] %v4510
        %4527 = vst [vmem:[#allocation3 + $0x180] sm:$0xff] %v4511
        %4528 = vst [vmem:[#allocation3 + $0x1c8] sm:$0xff] %v4512
        %4529 = vst [vmem:[#allocation3 + $0x210] sm:$0xff] %v4513
        %4530 = vst [vmem:[#allocation3 + $0x258] sm:$0xff] %v4514
        %4531 = vst [vmem:[#allocation3 + $0x2a0] sm:$0xff] %v4515
        %4532 = vst [vmem:[#allocation3 + $0x2e8] sm:$0xff] %v4516
        %4533 = vst [vmem:[#allocation3 + $0x330] sm:$0xff] %v4517
        %4534 = vst [vmem:[#allocation3 + $0x378] sm:$0xff] %v4518
        %4535 = vst [vmem:[#allocation3 + $0x3c0] sm:$0xff] %v4519
        %4536 = vst [vmem:[#allocation3 + $0x408] sm:$0xff] %v4520
        %4537 = vst [vmem:[#allocation3 + $0x450] sm:$0xff] %v4521
        %v4538 = vld [vmem:[%s1795 + $0x1] sm:$0xff]
        %v4539 = vld [vmem:[%s1795 + $0x9] sm:$0xff]
        %v4540 = vld [vmem:[%s1795 + $0x19] sm:$0xff]
        %v4541 = vld [vmem:[%s1795 + $0x21] sm:$0xff]
        %v4542 = vld [vmem:[%s1795 + $0x31] sm:$0xff]
        %v4543 = vld [vmem:[%s1795 + $0x39] sm:$0xff]
        %v4544 = vld [vmem:[%s1795 + $0x49] sm:$0xff]
        %v4545 = vld [vmem:[%s1795 + $0x51] sm:$0xff]
        %v4546 = vld [vmem:[%s1795 + $0x61] sm:$0xff]
        %v4547 = vld [vmem:[%s1795 + $0x69] sm:$0xff]
        %v4548 = vld [vmem:[%s1795 + $0x79] sm:$0xff]
        %v4549 = vld [vmem:[%s1795 + $0x81] sm:$0xff]
        %v4550 = vld [vmem:[%s1795 + $0x91] sm:$0xff]
        %v4551 = vld [vmem:[%s1795 + $0x99] sm:$0xff]
        %v4552 = vld [vmem:[%s1795 + $0xa9] sm:$0xff]
        %v4553 = vld [vmem:[%s1795 + $0xb1] sm:$0xff]
        %4554 = vst [vmem:[#allocation3 + $0x20] sm:$0xff] %v4538
        %4555 = vst [vmem:[#allocation3 + $0x68] sm:$0xff] %v4539
        %4556 = vst [vmem:[#allocation3 + $0xb0] sm:$0xff] %v4540
        %4557 = vst [vmem:[#allocation3 + $0xf8] sm:$0xff] %v4541
        %4558 = vst [vmem:[#allocation3 + $0x140] sm:$0xff] %v4542
        %4559 = vst [vmem:[#allocation3 + $0x188] sm:$0xff] %v4543
        %4560 = vst [vmem:[#allocation3 + $0x1d0] sm:$0xff] %v4544
        %4561 = vst [vmem:[#allocation3 + $0x218] sm:$0xff] %v4545
        %4562 = vst [vmem:[#allocation3 + $0x260] sm:$0xff] %v4546
        %4563 = vst [vmem:[#allocation3 + $0x2a8] sm:$0xff] %v4547
        %4564 = vst [vmem:[#allocation3 + $0x2f0] sm:$0xff] %v4548
        %4565 = vst [vmem:[#allocation3 + $0x338] sm:$0xff] %v4549
        %4566 = vst [vmem:[#allocation3 + $0x380] sm:$0xff] %v4550
        %4567 = vst [vmem:[#allocation3 + $0x3c8] sm:$0xff] %v4551
        %4568 = vst [vmem:[#allocation3 + $0x410] sm:$0xff] %v4552
        %4569 = vst [vmem:[#allocation3 + $0x458] sm:$0xff] %v4553
        %v4570 = vld [vmem:[%s1795 + $0x2] sm:$0xff]
        %v4571 = vld [vmem:[%s1795 + $0xa] sm:$0xff]
        %v4572 = vld [vmem:[%s1795 + $0x1a] sm:$0xff]
        %v4573 = vld [vmem:[%s1795 + $0x22] sm:$0xff]
        %v4574 = vld [vmem:[%s1795 + $0x32] sm:$0xff]
        %v4575 = vld [vmem:[%s1795 + $0x3a] sm:$0xff]
        %v4576 = vld [vmem:[%s1795 + $0x4a] sm:$0xff]
        %v4577 = vld [vmem:[%s1795 + $0x52] sm:$0xff]
        %v4578 = vld [vmem:[%s1795 + $0x62] sm:$0xff]
        %v4579 = vld [vmem:[%s1795 + $0x6a] sm:$0xff]
        %v4580 = vld [vmem:[%s1795 + $0x7a] sm:$0xff]
        %v4581 = vld [vmem:[%s1795 + $0x82] sm:$0xff]
        %v4582 = vld [vmem:[%s1795 + $0x92] sm:$0xff]
        %v4583 = vld [vmem:[%s1795 + $0x9a] sm:$0xff]
        %v4584 = vld [vmem:[%s1795 + $0xaa] sm:$0xff]
        %v4585 = vld [vmem:[%s1795 + $0xb2] sm:$0xff]
        %4586 = vst [vmem:[#allocation3 + $0x28] sm:$0xff] %v4570
        %4587 = vst [vmem:[#allocation3 + $0x70] sm:$0xff] %v4571
        %4588 = vst [vmem:[#allocation3 + $0xb8] sm:$0xff] %v4572
        %4589 = vst [vmem:[#allocation3 + $0x100] sm:$0xff] %v4573
        %4590 = vst [vmem:[#allocation3 + $0x148] sm:$0xff] %v4574
        %4591 = vst [vmem:[#allocation3 + $0x190] sm:$0xff] %v4575
        %4592 = vst [vmem:[#allocation3 + $0x1d8] sm:$0xff] %v4576
        %4593 = vst [vmem:[#allocation3 + $0x220] sm:$0xff] %v4577
        %4594 = vst [vmem:[#allocation3 + $0x268] sm:$0xff] %v4578
        %4595 = vst [vmem:[#allocation3 + $0x2b0] sm:$0xff] %v4579
        %4596 = vst [vmem:[#allocation3 + $0x2f8] sm:$0xff] %v4580
        %4597 = vst [vmem:[#allocation3 + $0x340] sm:$0xff] %v4581
        %4598 = vst [vmem:[#allocation3 + $0x388] sm:$0xff] %v4582
        %4599 = vst [vmem:[#allocation3 + $0x3d0] sm:$0xff] %v4583
        %4600 = vst [vmem:[#allocation3 + $0x418] sm:$0xff] %v4584
        %4601 = vst [vmem:[#allocation3 + $0x460] sm:$0xff] %v4585
        %v4602 = vld [vmem:[%s1892] sm:$0xff]
        %v4603 = vld [vmem:[%s1892 + $0x8] sm:$0xff]
        %v4604 = vld [vmem:[%s1892 + $0x18] sm:$0xff]
        %v4605 = vld [vmem:[%s1892 + $0x20] sm:$0xff]
        %v4606 = vld [vmem:[%s1892 + $0x30] sm:$0xff]
        %v4607 = vld [vmem:[%s1892 + $0x38] sm:$0xff]
        %v4608 = vld [vmem:[%s1892 + $0x48] sm:$0xff]
        %v4609 = vld [vmem:[%s1892 + $0x50] sm:$0xff]
        %v4610 = vld [vmem:[%s1892 + $0x60] sm:$0xff]
        %v4611 = vld [vmem:[%s1892 + $0x68] sm:$0xff]
        %v4612 = vld [vmem:[%s1892 + $0x78] sm:$0xff]
        %v4613 = vld [vmem:[%s1892 + $0x80] sm:$0xff]
        %v4614 = vld [vmem:[%s1892 + $0x90] sm:$0xff]
        %v4615 = vld [vmem:[%s1892 + $0x98] sm:$0xff]
        %v4616 = vld [vmem:[%s1892 + $0xa8] sm:$0xff]
        %v4617 = vld [vmem:[%s1892 + $0xb0] sm:$0xff]
        %4618 = vst [vmem:[#allocation3 + $0x30] sm:$0xff] %v4602
        %4619 = vst [vmem:[#allocation3 + $0x78] sm:$0xff] %v4603
        %4620 = vst [vmem:[#allocation3 + $0xc0] sm:$0xff] %v4604
        %4621 = vst [vmem:[#allocation3 + $0x108] sm:$0xff] %v4605
        %4622 = vst [vmem:[#allocation3 + $0x150] sm:$0xff] %v4606
        %4623 = vst [vmem:[#allocation3 + $0x198] sm:$0xff] %v4607
        %4624 = vst [vmem:[#allocation3 + $0x1e0] sm:$0xff] %v4608
        %4625 = vst [vmem:[#allocation3 + $0x228] sm:$0xff] %v4609
        %4626 = vst [vmem:[#allocation3 + $0x270] sm:$0xff] %v4610
        %4627 = vst [vmem:[#allocation3 + $0x2b8] sm:$0xff] %v4611
        %4628 = vst [vmem:[#allocation3 + $0x300] sm:$0xff] %v4612
        %4629 = vst [vmem:[#allocation3 + $0x348] sm:$0xff] %v4613
        %4630 = vst [vmem:[#allocation3 + $0x390] sm:$0xff] %v4614
        %4631 = vst [vmem:[#allocation3 + $0x3d8] sm:$0xff] %v4615
        %4632 = vst [vmem:[#allocation3 + $0x420] sm:$0xff] %v4616
        %4633 = vst [vmem:[#allocation3 + $0x468] sm:$0xff] %v4617
        %v4634 = vld [vmem:[%s1892 + $0x1] sm:$0xff]
        %v4635 = vld [vmem:[%s1892 + $0x9] sm:$0xff]
        %v4636 = vld [vmem:[%s1892 + $0x19] sm:$0xff]
        %v4637 = vld [vmem:[%s1892 + $0x21] sm:$0xff]
        %v4638 = vld [vmem:[%s1892 + $0x31] sm:$0xff]
        %v4639 = vld [vmem:[%s1892 + $0x39] sm:$0xff]
        %v4640 = vld [vmem:[%s1892 + $0x49] sm:$0xff]
        %v4641 = vld [vmem:[%s1892 + $0x51] sm:$0xff]
        %v4642 = vld [vmem:[%s1892 + $0x61] sm:$0xff]
        %v4643 = vld [vmem:[%s1892 + $0x69] sm:$0xff]
        %v4644 = vld [vmem:[%s1892 + $0x79] sm:$0xff]
        %v4645 = vld [vmem:[%s1892 + $0x81] sm:$0xff]
        %v4646 = vld [vmem:[%s1892 + $0x91] sm:$0xff]
        %v4647 = vld [vmem:[%s1892 + $0x99] sm:$0xff]
        %v4648 = vld [vmem:[%s1892 + $0xa9] sm:$0xff]
        %v4649 = vld [vmem:[%s1892 + $0xb1] sm:$0xff]
        %4650 = vst [vmem:[#allocation3 + $0x38] sm:$0xff] %v4634
        %4651 = vst [vmem:[#allocation3 + $0x80] sm:$0xff] %v4635
        %4652 = vst [vmem:[#allocation3 + $0xc8] sm:$0xff] %v4636
        %4653 = vst [vmem:[#allocation3 + $0x110] sm:$0xff] %v4637
        %4654 = vst [vmem:[#allocation3 + $0x158] sm:$0xff] %v4638
        %4655 = vst [vmem:[#allocation3 + $0x1a0] sm:$0xff] %v4639
        %4656 = vst [vmem:[#allocation3 + $0x1e8] sm:$0xff] %v4640
        %4657 = vst [vmem:[#allocation3 + $0x230] sm:$0xff] %v4641
        %4658 = vst [vmem:[#allocation3 + $0x278] sm:$0xff] %v4642
        %4659 = vst [vmem:[#allocation3 + $0x2c0] sm:$0xff] %v4643
        %4660 = vst [vmem:[#allocation3 + $0x308] sm:$0xff] %v4644
        %4661 = vst [vmem:[#allocation3 + $0x350] sm:$0xff] %v4645
        %4662 = vst [vmem:[#allocation3 + $0x398] sm:$0xff] %v4646
        %4663 = vst [vmem:[#allocation3 + $0x3e0] sm:$0xff] %v4647
        %4664 = vst [vmem:[#allocation3 + $0x428] sm:$0xff] %v4648
        %4665 = vst [vmem:[#allocation3 + $0x470] sm:$0xff] %v4649
        %v4666 = vld [vmem:[%s1892 + $0x2] sm:$0xff]
        %v4667 = vld [vmem:[%s1892 + $0xa] sm:$0xff]
        %v4668 = vld [vmem:[%s1892 + $0x1a] sm:$0xff]
        %v4669 = vld [vmem:[%s1892 + $0x22] sm:$0xff]
        %v4670 = vld [vmem:[%s1892 + $0x32] sm:$0xff]
        %v4671 = vld [vmem:[%s1892 + $0x3a] sm:$0xff]
        %v4672 = vld [vmem:[%s1892 + $0x4a] sm:$0xff]
        %v4673 = vld [vmem:[%s1892 + $0x52] sm:$0xff]
        %v4674 = vld [vmem:[%s1892 + $0x62] sm:$0xff]
        %v4675 = vld [vmem:[%s1892 + $0x6a] sm:$0xff]
        %v4676 = vld [vmem:[%s1892 + $0x7a] sm:$0xff]
        %v4677 = vld [vmem:[%s1892 + $0x82] sm:$0xff]
        %v4678 = vld [vmem:[%s1892 + $0x92] sm:$0xff]
        %v4679 = vld [vmem:[%s1892 + $0x9a] sm:$0xff]
        %v4680 = vld [vmem:[%s1892 + $0xaa] sm:$0xff]
        %v4681 = vld [vmem:[%s1892 + $0xb2] sm:$0xff]
        %4682 = vst [vmem:[#allocation3 + $0x40] sm:$0xff] %v4666
        %4683 = vst [vmem:[#allocation3 + $0x88] sm:$0xff] %v4667
        %4684 = vst [vmem:[#allocation3 + $0xd0] sm:$0xff] %v4668
        %4685 = vst [vmem:[#allocation3 + $0x118] sm:$0xff] %v4669
        %4686 = vst [vmem:[#allocation3 + $0x160] sm:$0xff] %v4670
        %4687 = vst [vmem:[#allocation3 + $0x1a8] sm:$0xff] %v4671
        %4688 = vst [vmem:[#allocation3 + $0x1f0] sm:$0xff] %v4672
        %4689 = vst [vmem:[#allocation3 + $0x238] sm:$0xff] %v4673
        %4690 = vst [vmem:[#allocation3 + $0x280] sm:$0xff] %v4674
        %4691 = vst [vmem:[#allocation3 + $0x2c8] sm:$0xff] %v4675
        %4692 = vst [vmem:[#allocation3 + $0x310] sm:$0xff] %v4676
        %4693 = vst [vmem:[#allocation3 + $0x358] sm:$0xff] %v4677
        %4694 = vst [vmem:[#allocation3 + $0x3a0] sm:$0xff] %v4678
        %4695 = vst [vmem:[#allocation3 + $0x3e8] sm:$0xff] %v4679
        %4696 = vst [vmem:[#allocation3 + $0x430] sm:$0xff] %v4680
        %4697 = vst [vmem:[#allocation3 + $0x478] sm:$0xff] %v4681
        %v4698 = vld [vmem:[#allocation3] sm:$0xff]
        %v4699 = vld [vmem:[#allocation3 + $0x8] sm:$0xff]
        %v4700 = vld [vmem:[#allocation3 + $0x10] sm:$0xff]
        %v4701 = vld [vmem:[#allocation3 + $0x18] sm:$0xff]
        %v4702 = vld [vmem:[#allocation3 + $0x20] sm:$0xff]
        %v4703 = vld [vmem:[#allocation3 + $0x28] sm:$0xff]
        %v4704 = vld [vmem:[#allocation3 + $0x30] sm:$0xff]
        %v4705 = vld [vmem:[#allocation3 + $0x38] sm:$0xff]
        %v4706 = vld [vmem:[#allocation3 + $0x40] sm:$0xff]
        %v4707 = vld [vmem:[#allocation3 + $0x48] sm:$0xff]
        %v4708 = vld [vmem:[#allocation3 + $0x50] sm:$0xff]
        %v4709 = vld [vmem:[#allocation3 + $0x58] sm:$0xff]
        %v4710 = vld [vmem:[#allocation3 + $0x60] sm:$0xff]
        %v4711 = vld [vmem:[#allocation3 + $0x68] sm:$0xff]
        %v4712 = vld [vmem:[#allocation3 + $0x70] sm:$0xff]
        %v4713 = vld [vmem:[#allocation3 + $0x78] sm:$0xff]
        %v4714 = vld [vmem:[#allocation3 + $0x80] sm:$0xff]
        %v4715 = vld [vmem:[#allocation3 + $0x88] sm:$0xff]
        %v4716 = vld [vmem:[#allocation3 + $0x90] sm:$0xff]
        %v4717 = vld [vmem:[#allocation3 + $0x98] sm:$0xff]
        %v4718 = vld [vmem:[#allocation3 + $0xa0] sm:$0xff]
        %v4719 = vld [vmem:[#allocation3 + $0xa8] sm:$0xff]
        %v4720 = vld [vmem:[#allocation3 + $0xb0] sm:$0xff]
        %v4721 = vld [vmem:[#allocation3 + $0xb8] sm:$0xff]
        %v4722 = vld [vmem:[#allocation3 + $0xc0] sm:$0xff]
        %v4723 = vld [vmem:[#allocation3 + $0xc8] sm:$0xff]
        %v4724 = vld [vmem:[#allocation3 + $0xd0] sm:$0xff]
        %v4725 = vld [vmem:[#allocation3 + $0xd8] sm:$0xff]
        %v4726 = vld [vmem:[#allocation3 + $0xe0] sm:$0xff]
        %v4727 = vld [vmem:[#allocation3 + $0xe8] sm:$0xff]
        %v4728 = vld [vmem:[#allocation3 + $0xf0] sm:$0xff]
        %v4729 = vld [vmem:[#allocation3 + $0xf8] sm:$0xff]
        %v4730 = vld [vmem:[#allocation3 + $0x100] sm:$0xff]
        %v4731 = vld [vmem:[#allocation3 + $0x108] sm:$0xff]
        %v4732 = vld [vmem:[#allocation3 + $0x110] sm:$0xff]
        %v4733 = vld [vmem:[#allocation3 + $0x118] sm:$0xff]
        %v4734 = vld [vmem:[#allocation3 + $0x120] sm:$0xff]
        %v4735 = vld [vmem:[#allocation3 + $0x128] sm:$0xff]
        %v4736 = vld [vmem:[#allocation3 + $0x130] sm:$0xff]
        %v4737 = vld [vmem:[#allocation3 + $0x138] sm:$0xff]
        %v4738 = vld [vmem:[#allocation3 + $0x140] sm:$0xff]
        %v4739 = vld [vmem:[#allocation3 + $0x148] sm:$0xff]
        %v4740 = vld [vmem:[#allocation3 + $0x150] sm:$0xff]
        %v4741 = vld [vmem:[#allocation3 + $0x158] sm:$0xff]
        %v4742 = vld [vmem:[#allocation3 + $0x160] sm:$0xff]
        %v4743 = vld [vmem:[#allocation3 + $0x168] sm:$0xff]
        %v4744 = vld [vmem:[#allocation3 + $0x170] sm:$0xff]
        %v4745 = vld [vmem:[#allocation3 + $0x178] sm:$0xff]
        %v4746 = vld [vmem:[#allocation3 + $0x180] sm:$0xff]
        %v4747 = vld [vmem:[#allocation3 + $0x188] sm:$0xff]
        %v4748 = vld [vmem:[#allocation3 + $0x190] sm:$0xff]
        %v4749 = vld [vmem:[#allocation3 + $0x198] sm:$0xff]
        %v4750 = vld [vmem:[#allocation3 + $0x1a0] sm:$0xff]
        %v4751 = vld [vmem:[#allocation3 + $0x1a8] sm:$0xff]
        %v4752 = vld [vmem:[#allocation3 + $0x1b0] sm:$0xff]
        %v4753 = vld [vmem:[#allocation3 + $0x1b8] sm:$0xff]
        %v4754 = vld [vmem:[#allocation3 + $0x1c0] sm:$0xff]
        %v4755 = vld [vmem:[#allocation3 + $0x1c8] sm:$0xff]
        %v4756 = vld [vmem:[#allocation3 + $0x1d0] sm:$0xff]
        %v4757 = vld [vmem:[#allocation3 + $0x1d8] sm:$0xff]
        %v4758 = vld [vmem:[#allocation3 + $0x1e0] sm:$0xff]
        %v4759 = vld [vmem:[#allocation3 + $0x1e8] sm:$0xff]
        %v4760 = vld [vmem:[#allocation3 + $0x1f0] sm:$0xff]
        %v4761 = vld [vmem:[#allocation3 + $0x1f8] sm:$0xff]
        %v4762 = vld [vmem:[#allocation3 + $0x200] sm:$0xff]
        %v4763 = vld [vmem:[#allocation3 + $0x208] sm:$0xff]
        %v4764 = vld [vmem:[#allocation3 + $0x210] sm:$0xff]
        %v4765 = vld [vmem:[#allocation3 + $0x218] sm:$0xff]
        %v4766 = vld [vmem:[#allocation3 + $0x220] sm:$0xff]
        %v4767 = vld [vmem:[#allocation3 + $0x228] sm:$0xff]
        %v4768 = vld [vmem:[#allocation3 + $0x230] sm:$0xff]
        %v4769 = vld [vmem:[#allocation3 + $0x238] sm:$0xff]
        %v4770 = vld [vmem:[#allocation3 + $0x240] sm:$0xff]
        %v4771 = vld [vmem:[#allocation3 + $0x248] sm:$0xff]
        %v4772 = vld [vmem:[#allocation3 + $0x250] sm:$0xff]
        %v4773 = vld [vmem:[#allocation3 + $0x258] sm:$0xff]
        %v4774 = vld [vmem:[#allocation3 + $0x260] sm:$0xff]
        %v4775 = vld [vmem:[#allocation3 + $0x268] sm:$0xff]
        %v4776 = vld [vmem:[#allocation3 + $0x270] sm:$0xff]
        %v4777 = vld [vmem:[#allocation3 + $0x278] sm:$0xff]
        %v4778 = vld [vmem:[#allocation3 + $0x280] sm:$0xff]
        %v4779 = vld [vmem:[#allocation3 + $0x288] sm:$0xff]
        %v4780 = vld [vmem:[#allocation3 + $0x290] sm:$0xff]
        %v4781 = vld [vmem:[#allocation3 + $0x298] sm:$0xff]
        %v4782 = vld [vmem:[#allocation3 + $0x2a0] sm:$0xff]
        %v4783 = vld [vmem:[#allocation3 + $0x2a8] sm:$0xff]
        %v4784 = vld [vmem:[#allocation3 + $0x2b0] sm:$0xff]
        %v4785 = vld [vmem:[#allocation3 + $0x2b8] sm:$0xff]
        %v4786 = vld [vmem:[#allocation3 + $0x2c0] sm:$0xff]
        %v4787 = vld [vmem:[#allocation3 + $0x2c8] sm:$0xff]
        %v4788 = vld [vmem:[#allocation3 + $0x2d0] sm:$0xff]
        %v4789 = vld [vmem:[#allocation3 + $0x2d8] sm:$0xff]
        %v4790 = vld [vmem:[#allocation3 + $0x2e0] sm:$0xff]
        %v4791 = vld [vmem:[#allocation3 + $0x2e8] sm:$0xff]
        %v4792 = vld [vmem:[#allocation3 + $0x2f0] sm:$0xff]
        %v4793 = vld [vmem:[#allocation3 + $0x2f8] sm:$0xff]
        %v4794 = vld [vmem:[#allocation3 + $0x300] sm:$0xff]
        %v4795 = vld [vmem:[#allocation3 + $0x308] sm:$0xff]
        %v4796 = vld [vmem:[#allocation3 + $0x310] sm:$0xff]
        %v4797 = vld [vmem:[#allocation3 + $0x318] sm:$0xff]
        %v4798 = vld [vmem:[#allocation3 + $0x320] sm:$0xff]
        %v4799 = vld [vmem:[#allocation3 + $0x328] sm:$0xff]
        %v4800 = vld [vmem:[#allocation3 + $0x330] sm:$0xff]
        %v4801 = vld [vmem:[#allocation3 + $0x338] sm:$0xff]
        %v4802 = vld [vmem:[#allocation3 + $0x340] sm:$0xff]
        %v4803 = vld [vmem:[#allocation3 + $0x348] sm:$0xff]
        %v4804 = vld [vmem:[#allocation3 + $0x350] sm:$0xff]
        %v4805 = vld [vmem:[#allocation3 + $0x358] sm:$0xff]
        %v4806 = vld [vmem:[#allocation3 + $0x360] sm:$0xff]
        %v4807 = vld [vmem:[#allocation3 + $0x368] sm:$0xff]
        %v4808 = vld [vmem:[#allocation3 + $0x370] sm:$0xff]
        %v4809 = vld [vmem:[#allocation3 + $0x378] sm:$0xff]
        %v4810 = vld [vmem:[#allocation3 + $0x380] sm:$0xff]
        %v4811 = vld [vmem:[#allocation3 + $0x388] sm:$0xff]
        %v4812 = vld [vmem:[#allocation3 + $0x390] sm:$0xff]
        %v4813 = vld [vmem:[#allocation3 + $0x398] sm:$0xff]
        %v4814 = vld [vmem:[#allocation3 + $0x3a0] sm:$0xff]
        %v4815 = vld [vmem:[#allocation3 + $0x3a8] sm:$0xff]
        %v4816 = vld [vmem:[#allocation3 + $0x3b0] sm:$0xff]
        %v4817 = vld [vmem:[#allocation3 + $0x3b8] sm:$0xff]
        %v4818 = vld [vmem:[#allocation3 + $0x3c0] sm:$0xff]
        %v4819 = vld [vmem:[#allocation3 + $0x3c8] sm:$0xff]
        %v4820 = vld [vmem:[#allocation3 + $0x3d0] sm:$0xff]
        %v4821 = vld [vmem:[#allocation3 + $0x3d8] sm:$0xff]
        %v4822 = vld [vmem:[#allocation3 + $0x3e0] sm:$0xff]
        %v4823 = vld [vmem:[#allocation3 + $0x3e8] sm:$0xff]
        %v4824 = vld [vmem:[#allocation3 + $0x3f0] sm:$0xff]
        %v4825 = vld [vmem:[#allocation3 + $0x3f8] sm:$0xff]
        %v4826 = vld [vmem:[#allocation3 + $0x400] sm:$0xff]
        %v4827 = vld [vmem:[#allocation3 + $0x408] sm:$0xff]
        %v4828 = vld [vmem:[#allocation3 + $0x410] sm:$0xff]
        %v4829 = vld [vmem:[#allocation3 + $0x418] sm:$0xff]
        %v4830 = vld [vmem:[#allocation3 + $0x420] sm:$0xff]
        %v4831 = vld [vmem:[#allocation3 + $0x428] sm:$0xff]
        %v4832 = vld [vmem:[#allocation3 + $0x430] sm:$0xff]
        %v4833 = vld [vmem:[#allocation3 + $0x438] sm:$0xff]
        %v4834 = vld [vmem:[#allocation3 + $0x440] sm:$0xff]
        %v4835 = vld [vmem:[#allocation3 + $0x448] sm:$0xff]
        %v4836 = vld [vmem:[#allocation3 + $0x450] sm:$0xff]
        %v4837 = vld [vmem:[#allocation3 + $0x458] sm:$0xff]
        %v4838 = vld [vmem:[#allocation3 + $0x460] sm:$0xff]
        %v4839 = vld [vmem:[#allocation3 + $0x468] sm:$0xff]
        %v4840 = vld [vmem:[#allocation3 + $0x470] sm:$0xff]
        %v4841 = vld [vmem:[#allocation3 + $0x478] sm:$0xff]
        %4842 = vmatprep.subr.mxu0 0.0
        %4843 = vmatpush1.msra.mxu0 %v177
        %4844 = vmatprep.subr.mxu0 0.0
        %4845 = vmatpush1.msra.mxu0 %v178
        %4846 = vmatprep.subr.mxu0 0.0
        %4847 = vmatpush1.msra.mxu0 %v179
        %4848 = vmatprep.subr.mxu0 0.0
        %4849 = vmatpush1.msra.mxu0 %v180
        %4850 = vmatprep.subr.mxu0 0.0
        %4851 = vmatpush1.msra.mxu0 %v181
        %4852 = vmatprep.subr.mxu0 0.0
        %4853 = vmatpush1.msra.mxu0 %v182
        %4854 = vmatprep.subr.mxu0 0.0
        %4855 = vmatpush1.msra.mxu0 %v183
        %4856 = vmatprep.subr.mxu0 0.0
        %4857 = vmatpush1.msra.mxu0 %v184
        %4858 = vmatprep.subr.mxu0 0.0
        %4859 = vmatpush1.msra.mxu0 %v185
        %4860 = vmatprep.subr.mxu0 0.0
        %4861 = vmatpush1.msra.mxu0 %v186
        %4862 = vmatprep.subr.mxu0 0.0
        %4863 = vmatpush1.msra.mxu0 %v187
        %4864 = vmatprep.subr.mxu0 0.0
        %4865 = vmatpush1.msra.mxu0 %v188
        %4866 = vmatprep.subr.mxu0 0.0
        %4867 = vmatpush1.msra.mxu0 %v189
        %4868 = vmatprep.subr.mxu0 0.0
        %4869 = vmatpush1.msra.mxu0 %v190
        %4870 = vmatprep.subr.mxu0 0.0
        %4871 = vmatpush1.msra.mxu0 %v191
        %4872 = vmatprep.subr.mxu0 0.0
        %4873 = vmatpush1.msra.mxu0 %v192
        %4874 = vmatprep.subr.mxu0 0.0
        %4875 = vmatpush1.msra.mxu0 %v193
        %4876 = vmatprep.subr.mxu0 0.0
        %4877 = vmatpush1.msra.mxu0 %v194
        %4878 = vmatprep.subr.mxu0 0.0
        %4879 = vmatpush1.msra.mxu0 %v195
        %4880 = vmatprep.subr.mxu0 0.0
        %4881 = vmatpush1.msra.mxu0 %v196
        %4882 = vmatprep.subr.mxu0 0.0
        %4883 = vmatpush1.msra.mxu0 %v197
        %4884 = vmatprep.subr.mxu0 0.0
        %4885 = vmatpush1.msra.mxu0 %v198
        %4886 = vmatprep.subr.mxu0 0.0
        %4887 = vmatpush1.msra.mxu0 %v199
        %4888 = vmatprep.subr.mxu0 0.0
        %4889 = vmatpush1.msra.mxu0 %v200
        %4890 = vmatprep.subr.mxu0 0.0
        %4891 = vmatpush1.msra.mxu0 %v201
        %4892 = vmatprep.subr.mxu0 0.0
        %4893 = vmatpush1.msra.mxu0 %v202
        %4894 = vmatprep.subr.mxu0 0.0
        %4895 = vmatpush1.msra.mxu0 %v203
        %4896 = vmatprep.subr.mxu0 0.0
        %4897 = vmatpush1.msra.mxu0 %v204
        %4898 = vmatprep.subr.mxu0 0.0
        %4899 = vmatpush1.msra.mxu0 %v205
        %4900 = vmatprep.subr.mxu0 0.0
        %4901 = vmatpush1.msra.mxu0 %v206
        %4902 = vmatprep.subr.mxu0 0.0
        %4903 = vmatpush1.msra.mxu0 %v207
        %4904 = vmatprep.subr.mxu0 0.0
        %4905 = vmatpush1.msra.mxu0 %v208
        %4906 = vmatprep.mubr.f32.mxu0 %v4699
        %4907 = vmatmul.mubr.f32.gmra.mrb[0].mxu0 %v4698
        %v4908 = vpop.f32.mrb[0].mxu0
        %v4909 = vadd.f32 0.0, %v4908
        %v4910 = vpop.f32.mrb[0].mxu0
        %4911 = vmatprep.mubr.f32.mxu0 %v4708
        %4912 = vmatmul.mubr.f32.gmra.mrb[0].mxu0 %v4707
        %v4913 = vpop.f32.mrb[0].mxu0
        %v4914 = vadd.f32 0.0, %v4913
        %v4915 = vpop.f32.mrb[0].mxu0
        %4916 = vmatprep.mubr.f32.mxu0 %v4717
        %4917 = vmatmul.mubr.f32.gmra.mrb[0].mxu0 %v4716
        %v4918 = vpop.f32.mrb[0].mxu0
        %v4919 = vadd.f32 0.0, %v4918
        %v4920 = vpop.f32.mrb[0].mxu0
        %4921 = vmatprep.mubr.f32.mxu0 %v4726
        %4922 = vmatmul.mubr.f32.gmra.mrb[0].mxu0 %v4725
        %v4923 = vpop.f32.mrb[0].mxu0
        %v4924 = vadd.f32 0.0, %v4923
        %v4925 = vpop.f32.mrb[0].mxu0
        %4926 = vmatprep.mubr.f32.mxu0 %v4735
        %4927 = vmatmul.mubr.f32.gmra.mrb[0].mxu0 %v4734
        %v4928 = vpop.f32.mrb[0].mxu0
        %v4929 = vadd.f32 0.0, %v4928
        %v4930 = vpop.f32.mrb[0].mxu0
        %4931 = vmatprep.mubr.f32.mxu0 %v4744
        %4932 = vmatmul.mubr.f32.gmra.mrb[0].mxu0 %v4743
        %v4933 = vpop.f32.mrb[0].mxu0
        %v4934 = vadd.f32 0.0, %v4933
        %v4935 = vpop.f32.mrb[0].mxu0
        %4936 = vmatprep.mubr.f32.mxu0 %v4753
        %4937 = vmatmul.mubr.f32.gmra.mrb[0].mxu0 %v4752
        %v4938 = vpop.f32.mrb[0].mxu0
        %v4939 = vadd.f32 0.0, %v4938
        %v4940 = vpop.f32.mrb[0].mxu0
        %4941 = vmatprep.mubr.f32.mxu0 %v4762
        %4942 = vmatmul.mubr.f32.gmra.mrb[0].mxu0 %v4761
        %v4943 = vpop.f32.mrb[0].mxu0
        %v4944 = vadd.f32 0.0, %v4943
        %v4945 = vpop.f32.mrb[0].mxu0
        %4946 = vmatprep.mubr.f32.mxu0 %v4771
        %4947 = vmatmul.mubr.f32.gmra.mrb[0].mxu0 %v4770
        %v4948 = vpop.f32.mrb[0].mxu0
        %v4949 = vadd.f32 0.0, %v4948
        %v4950 = vpop.f32.mrb[0].mxu0
        %4951 = vmatprep.mubr.f32.mxu0 %v4780
        %4952 = vmatmul.mubr.f32.gmra.mrb[0].mxu0 %v4779
        %v4953 = vpop.f32.mrb[0].mxu0
        %v4954 = vadd.f32 0.0, %v4953
        %v4955 = vpop.f32.mrb[0].mxu0
        %4956 = vmatprep.mubr.f32.mxu0 %v4789
        %4957 = vmatmul.mubr.f32.gmra.mrb[0].mxu0 %v4788
        %v4958 = vpop.f32.mrb[0].mxu0
        %v4959 = vadd.f32 0.0, %v4958
        %v4960 = vpop.f32.mrb[0].mxu0
        %4961 = vmatprep.mubr.f32.mxu0 %v4798
        %4962 = vmatmul.mubr.f32.gmra.mrb[0].mxu0 %v4797
        %v4963 = vpop.f32.mrb[0].mxu0
        %v4964 = vadd.f32 0.0, %v4963
        %v4965 = vpop.f32.mrb[0].mxu0
        %4966 = vmatprep.mubr.f32.mxu0 %v4807
        %4967 = vmatmul.mubr.f32.gmra.mrb[0].mxu0 %v4806
        %v4968 = vpop.f32.mrb[0].mxu0
        %v4969 = vadd.f32 0.0, %v4968
        %v4970 = vpop.f32.mrb[0].mxu0
        %4971 = vmatprep.mubr.f32.mxu0 %v4816
        %4972 = vmatmul.mubr.f32.gmra.mrb[0].mxu0 %v4815
        %v4973 = vpop.f32.mrb[0].mxu0
        %v4974 = vadd.f32 0.0, %v4973
        %v4975 = vpop.f32.mrb[0].mxu0
        %4976 = vmatprep.mubr.f32.mxu0 %v4825
        %4977 = vmatmul.mubr.f32.gmra.mrb[0].mxu0 %v4824
        %v4978 = vpop.f32.mrb[0].mxu0
        %v4979 = vadd.f32 0.0, %v4978
        %v4980 = vpop.f32.mrb[0].mxu0
        %4981 = vmatprep.mubr.f32.mxu0 %v4834
        %4982 = vmatmul.mubr.f32.gmra.mrb[0].mxu0 %v4833
        %v4983 = vpop.f32.mrb[0].mxu0
        %v4984 = vadd.f32 0.0, %v4983
        %v4985 = vpop.f32.mrb[0].mxu0
        %4986 = vdwg.mxu0
        %4987 = vmatprep.subr.mxu0 0.0
        %4988 = vmatpush1.msra.mxu0 %v209
        %4989 = vmatprep.subr.mxu0 0.0
        %4990 = vmatpush1.msra.mxu0 %v210
        %4991 = vmatprep.subr.mxu0 0.0
        %4992 = vmatpush1.msra.mxu0 %v211
        %4993 = vmatprep.subr.mxu0 0.0
        %4994 = vmatpush1.msra.mxu0 %v212
        %4995 = vmatprep.subr.mxu0 0.0
        %4996 = vmatpush1.msra.mxu0 %v213
        %4997 = vmatprep.subr.mxu0 0.0
        %4998 = vmatpush1.msra.mxu0 %v214
        %4999 = vmatprep.subr.mxu0 0.0
        %5000 = vmatpush1.msra.mxu0 %v215
        %5001 = vmatprep.subr.mxu0 0.0
        %5002 = vmatpush1.msra.mxu0 %v216
        %5003 = vmatprep.subr.mxu0 0.0
        %5004 = vmatpush1.msra.mxu0 %v217
        %5005 = vmatprep.subr.mxu0 0.0
        %5006 = vmatpush1.msra.mxu0 %v218
        %5007 = vmatprep.subr.mxu0 0.0
        %5008 = vmatpush1.msra.mxu0 %v219
        %5009 = vmatprep.subr.mxu0 0.0
        %5010 = vmatpush1.msra.mxu0 %v220
        %5011 = vmatprep.subr.mxu0 0.0
        %5012 = vmatpush1.msra.mxu0 %v221
        %5013 = vmatprep.subr.mxu0 0.0
        %5014 = vmatpush1.msra.mxu0 %v222
        %5015 = vmatprep.subr.mxu0 0.0
        %5016 = vmatpush1.msra.mxu0 %v223
        %5017 = vmatprep.subr.mxu0 0.0
        %5018 = vmatpush1.msra.mxu0 %v224
        %5019 = vmatprep.subr.mxu0 0.0
        %5020 = vmatpush1.msra.mxu0 %v225
        %5021 = vmatprep.subr.mxu0 0.0
        %5022 = vmatpush1.msra.mxu0 %v226
        %5023 = vmatprep.subr.mxu0 0.0
        %5024 = vmatpush1.msra.mxu0 %v227
        %5025 = vmatprep.subr.mxu0 0.0
        %5026 = vmatpush1.msra.mxu0 %v228
        %5027 = vmatprep.subr.mxu0 0.0
        %5028 = vmatpush1.msra.mxu0 %v229
        %5029 = vmatprep.subr.mxu0 0.0
        %5030 = vmatpush1.msra.mxu0 %v230
        %5031 = vmatprep.subr.mxu0 0.0
        %5032 = vmatpush1.msra.mxu0 %v231
        %5033 = vmatprep.subr.mxu0 0.0
        %5034 = vmatpush1.msra.mxu0 %v232
        %5035 = vmatprep.subr.mxu0 0.0
        %5036 = vmatpush1.msra.mxu0 %v233
        %5037 = vmatprep.subr.mxu0 0.0
        %5038 = vmatpush1.msra.mxu0 %v234
        %5039 = vmatprep.subr.mxu0 0.0
        %5040 = vmatpush1.msra.mxu0 %v235
        %5041 = vmatprep.subr.mxu0 0.0
        %5042 = vmatpush1.msra.mxu0 %v236
        %5043 = vmatprep.subr.mxu0 0.0
        %5044 = vmatpush1.msra.mxu0 %v237
        %5045 = vmatprep.subr.mxu0 0.0
        %5046 = vmatpush1.msra.mxu0 %v238
        %5047 = vmatprep.subr.mxu0 0.0
        %5048 = vmatpush1.msra.mxu0 %v239
        %5049 = vmatprep.subr.mxu0 0.0
        %5050 = vmatpush1.msra.mxu0 %v240
        %5051 = vmatprep.mubr.f32.mxu0 %v4701
        %5052 = vmatmul.mubr.f32.gmra.mrb[0].mxu0 %v4700
        %v5053 = vpop.f32.mrb[0].mxu0
        %v5054 = vadd.f32 %v4909, %v5053
        %v5055 = vpop.f32.mrb[0].mxu0
        %5056 = vmatprep.mubr.f32.mxu0 %v4710
        %5057 = vmatmul.mubr.f32.gmra.mrb[0].mxu0 %v4709
        %v5058 = vpop.f32.mrb[0].mxu0
        %v5059 = vadd.f32 %v4914, %v5058
        %v5060 = vpop.f32.mrb[0].mxu0
        %5061 = vmatprep.mubr.f32.mxu0 %v4719
        %5062 = vmatmul.mubr.f32.gmra.mrb[0].mxu0 %v4718
        %v5063 = vpop.f32.mrb[0].mxu0
        %v5064 = vadd.f32 %v4919, %v5063
        %v5065 = vpop.f32.mrb[0].mxu0
        %5066 = vmatprep.mubr.f32.mxu0 %v4728
        %5067 = vmatmul.mubr.f32.gmra.mrb[0].mxu0 %v4727
        %v5068 = vpop.f32.mrb[0].mxu0
        %v5069 = vadd.f32 %v4924, %v5068
        %v5070 = vpop.f32.mrb[0].mxu0
        %5071 = vmatprep.mubr.f32.mxu0 %v4737
        %5072 = vmatmul.mubr.f32.gmra.mrb[0].mxu0 %v4736
        %v5073 = vpop.f32.mrb[0].mxu0
        %v5074 = vadd.f32 %v4929, %v5073
        %v5075 = vpop.f32.mrb[0].mxu0
        %5076 = vmatprep.mubr.f32.mxu0 %v4746
        %5077 = vmatmul.mubr.f32.gmra.mrb[0].mxu0 %v4745
        %v5078 = vpop.f32.mrb[0].mxu0
        %v5079 = vadd.f32 %v4934, %v5078
        %v5080 = vpop.f32.mrb[0].mxu0
        %5081 = vmatprep.mubr.f32.mxu0 %v4755
        %5082 = vmatmul.mubr.f32.gmra.mrb[0].mxu0 %v4754
        %v5083 = vpop.f32.mrb[0].mxu0
        %v5084 = vadd.f32 %v4939, %v5083
        %v5085 = vpop.f32.mrb[0].mxu0
        %5086 = vmatprep.mubr.f32.mxu0 %v4764
        %5087 = vmatmul.mubr.f32.gmra.mrb[0].mxu0 %v4763
        %v5088 = vpop.f32.mrb[0].mxu0
        %v5089 = vadd.f32 %v4944, %v5088
        %v5090 = vpop.f32.mrb[0].mxu0
        %5091 = vmatprep.mubr.f32.mxu0 %v4773
        %5092 = vmatmul.mubr.f32.gmra.mrb[0].mxu0 %v4772
        %v5093 = vpop.f32.mrb[0].mxu0
        %v5094 = vadd.f32 %v4949, %v5093
        %v5095 = vpop.f32.mrb[0].mxu0
        %5096 = vmatprep.mubr.f32.mxu0 %v4782
        %5097 = vmatmul.mubr.f32.gmra.mrb[0].mxu0 %v4781
        %v5098 = vpop.f32.mrb[0].mxu0
        %v5099 = vadd.f32 %v4954, %v5098
        %v5100 = vpop.f32.mrb[0].mxu0
        %5101 = vmatprep.mubr.f32.mxu0 %v4791
        %5102 = vmatmul.mubr.f32.gmra.mrb[0].mxu0 %v4790
        %v5103 = vpop.f32.mrb[0].mxu0
        %v5104 = vadd.f32 %v4959, %v5103
        %v5105 = vpop.f32.mrb[0].mxu0
        %5106 = vmatprep.mubr.f32.mxu0 %v4800
        %5107 = vmatmul.mubr.f32.gmra.mrb[0].mxu0 %v4799
        %v5108 = vpop.f32.mrb[0].mxu0
        %v5109 = vadd.f32 %v4964, %v5108
        %v5110 = vpop.f32.mrb[0].mxu0
        %5111 = vmatprep.mubr.f32.mxu0 %v4809
        %5112 = vmatmul.mubr.f32.gmra.mrb[0].mxu0 %v4808
        %v5113 = vpop.f32.mrb[0].mxu0
        %v5114 = vadd.f32 %v4969, %v5113
        %v5115 = vpop.f32.mrb[0].mxu0
        %5116 = vmatprep.mubr.f32.mxu0 %v4818
        %5117 = vmatmul.mubr.f32.gmra.mrb[0].mxu0 %v4817
        %v5118 = vpop.f32.mrb[0].mxu0
        %v5119 = vadd.f32 %v4974, %v5118
        %v5120 = vpop.f32.mrb[0].mxu0
        %5121 = vmatprep.mubr.f32.mxu0 %v4827
        %5122 = vmatmul.mubr.f32.gmra.mrb[0].mxu0 %v4826
        %v5123 = vpop.f32.mrb[0].mxu0
        %v5124 = vadd.f32 %v4979, %v5123
        %v5125 = vpop.f32.mrb[0].mxu0
        %5126 = vmatprep.mubr.f32.mxu0 %v4836
        %5127 = vmatmul.mubr.f32.gmra.mrb[0].mxu0 %v4835
        %v5128 = vpop.f32.mrb[0].mxu0
        %v5129 = vadd.f32 %v4984, %v5128
        %v5130 = vpop.f32.mrb[0].mxu0
        %5131 = vdwg.mxu0
        %5132 = vmatprep.subr.mxu0 0.0
        %5133 = vmatpush1.msra.mxu0 %v241
        %5134 = vmatprep.subr.mxu0 0.0
        %5135 = vmatpush1.msra.mxu0 %v242
        %5136 = vmatprep.subr.mxu0 0.0
        %5137 = vmatpush1.msra.mxu0 %v243
        %5138 = vmatprep.subr.mxu0 0.0
        %5139 = vmatpush1.msra.mxu0 %v244
        %5140 = vmatprep.subr.mxu0 0.0
        %5141 = vmatpush1.msra.mxu0 %v245
        %5142 = vmatprep.subr.mxu0 0.0
        %5143 = vmatpush1.msra.mxu0 %v246
        %5144 = vmatprep.subr.mxu0 0.0
        %5145 = vmatpush1.msra.mxu0 %v247
        %5146 = vmatprep.subr.mxu0 0.0
        %5147 = vmatpush1.msra.mxu0 %v248
        %5148 = vmatprep.subr.mxu0 0.0
        %5149 = vmatpush1.msra.mxu0 %v249
        %5150 = vmatprep.subr.mxu0 0.0
        %5151 = vmatpush1.msra.mxu0 %v250
        %5152 = vmatprep.subr.mxu0 0.0
        %5153 = vmatpush1.msra.mxu0 %v251
        %5154 = vmatprep.subr.mxu0 0.0
        %5155 = vmatpush1.msra.mxu0 %v252
        %5156 = vmatprep.subr.mxu0 0.0
        %5157 = vmatpush1.msra.mxu0 %v253
        %5158 = vmatprep.subr.mxu0 0.0
        %5159 = vmatpush1.msra.mxu0 %v254
        %5160 = vmatprep.subr.mxu0 0.0
        %5161 = vmatpush1.msra.mxu0 %v255
        %5162 = vmatprep.subr.mxu0 0.0
        %5163 = vmatpush1.msra.mxu0 %v256
        %5164 = vmatprep.subr.mxu0 0.0
        %5165 = vmatpush1.msra.mxu0 %v257
        %5166 = vmatprep.subr.mxu0 0.0
        %5167 = vmatpush1.msra.mxu0 %v258
        %5168 = vmatprep.subr.mxu0 0.0
        %5169 = vmatpush1.msra.mxu0 %v259
        %5170 = vmatprep.subr.mxu0 0.0
        %5171 = vmatpush1.msra.mxu0 %v260
        %5172 = vmatprep.subr.mxu0 0.0
        %5173 = vmatpush1.msra.mxu0 %v261
        %5174 = vmatprep.subr.mxu0 0.0
        %5175 = vmatpush1.msra.mxu0 %v262
        %5176 = vmatprep.subr.mxu0 0.0
        %5177 = vmatpush1.msra.mxu0 %v263
        %5178 = vmatprep.subr.mxu0 0.0
        %5179 = vmatpush1.msra.mxu0 %v264
        %5180 = vmatprep.subr.mxu0 0.0
        %5181 = vmatpush1.msra.mxu0 %v265
        %5182 = vmatprep.subr.mxu0 0.0
        %5183 = vmatpush1.msra.mxu0 %v266
        %5184 = vmatprep.subr.mxu0 0.0
        %5185 = vmatpush1.msra.mxu0 %v267
        %5186 = vmatprep.subr.mxu0 0.0
        %5187 = vmatpush1.msra.mxu0 %v268
        %5188 = vmatprep.subr.mxu0 0.0
        %5189 = vmatpush1.msra.mxu0 %v269
        %5190 = vmatprep.subr.mxu0 0.0
        %5191 = vmatpush1.msra.mxu0 %v270
        %5192 = vmatprep.subr.mxu0 0.0
        %5193 = vmatpush1.msra.mxu0 %v271
        %5194 = vmatprep.subr.mxu0 0.0
        %5195 = vmatpush1.msra.mxu0 %v272
        %5196 = vmatprep.mubr.f32.mxu0 %v4703
        %5197 = vmatmul.mubr.f32.gmra.mrb[0].mxu0 %v4702
        %v5198 = vpop.f32.mrb[0].mxu0
        %v5199 = vadd.f32 %v5054, %v5198
        %v5200 = vpop.f32.mrb[0].mxu0
        %5201 = vmatprep.mubr.f32.mxu0 %v4712
        %5202 = vmatmul.mubr.f32.gmra.mrb[0].mxu0 %v4711
        %v5203 = vpop.f32.mrb[0].mxu0
        %v5204 = vadd.f32 %v5059, %v5203
        %v5205 = vpop.f32.mrb[0].mxu0
        %5206 = vmatprep.mubr.f32.mxu0 %v4721
        %5207 = vmatmul.mubr.f32.gmra.mrb[0].mxu0 %v4720
        %v5208 = vpop.f32.mrb[0].mxu0
        %v5209 = vadd.f32 %v5064, %v5208
        %v5210 = vpop.f32.mrb[0].mxu0
        %5211 = vmatprep.mubr.f32.mxu0 %v4730
        %5212 = vmatmul.mubr.f32.gmra.mrb[0].mxu0 %v4729
        %v5213 = vpop.f32.mrb[0].mxu0
        %v5214 = vadd.f32 %v5069, %v5213
        %v5215 = vpop.f32.mrb[0].mxu0
        %5216 = vmatprep.mubr.f32.mxu0 %v4739
        %5217 = vmatmul.mubr.f32.gmra.mrb[0].mxu0 %v4738
        %v5218 = vpop.f32.mrb[0].mxu0
        %v5219 = vadd.f32 %v5074, %v5218
        %v5220 = vpop.f32.mrb[0].mxu0
        %5221 = vmatprep.mubr.f32.mxu0 %v4748
        %5222 = vmatmul.mubr.f32.gmra.mrb[0].mxu0 %v4747
        %v5223 = vpop.f32.mrb[0].mxu0
        %v5224 = vadd.f32 %v5079, %v5223
        %v5225 = vpop.f32.mrb[0].mxu0
        %5226 = vmatprep.mubr.f32.mxu0 %v4757
        %5227 = vmatmul.mubr.f32.gmra.mrb[0].mxu0 %v4756
        %v5228 = vpop.f32.mrb[0].mxu0
        %v5229 = vadd.f32 %v5084, %v5228
        %v5230 = vpop.f32.mrb[0].mxu0
        %5231 = vmatprep.mubr.f32.mxu0 %v4766
        %5232 = vmatmul.mubr.f32.gmra.mrb[0].mxu0 %v4765
        %v5233 = vpop.f32.mrb[0].mxu0
        %v5234 = vadd.f32 %v5089, %v5233
        %v5235 = vpop.f32.mrb[0].mxu0
        %5236 = vmatprep.mubr.f32.mxu0 %v4775
        %5237 = vmatmul.mubr.f32.gmra.mrb[0].mxu0 %v4774
        %v5238 = vpop.f32.mrb[0].mxu0
        %v5239 = vadd.f32 %v5094, %v5238
        %v5240 = vpop.f32.mrb[0].mxu0
        %5241 = vmatprep.mubr.f32.mxu0 %v4784
        %5242 = vmatmul.mubr.f32.gmra.mrb[0].mxu0 %v4783
        %v5243 = vpop.f32.mrb[0].mxu0
        %v5244 = vadd.f32 %v5099, %v5243
        %v5245 = vpop.f32.mrb[0].mxu0
        %5246 = vmatprep.mubr.f32.mxu0 %v4793
        %5247 = vmatmul.mubr.f32.gmra.mrb[0].mxu0 %v4792
        %v5248 = vpop.f32.mrb[0].mxu0
        %v5249 = vadd.f32 %v5104, %v5248
        %v5250 = vpop.f32.mrb[0].mxu0
        %5251 = vmatprep.mubr.f32.mxu0 %v4802
        %5252 = vmatmul.mubr.f32.gmra.mrb[0].mxu0 %v4801
        %v5253 = vpop.f32.mrb[0].mxu0
        %v5254 = vadd.f32 %v5109, %v5253
        %v5255 = vpop.f32.mrb[0].mxu0
        %5256 = vmatprep.mubr.f32.mxu0 %v4811
        %5257 = vmatmul.mubr.f32.gmra.mrb[0].mxu0 %v4810
        %v5258 = vpop.f32.mrb[0].mxu0
        %v5259 = vadd.f32 %v5114, %v5258
        %v5260 = vpop.f32.mrb[0].mxu0
        %5261 = vmatprep.mubr.f32.mxu0 %v4820
        %5262 = vmatmul.mubr.f32.gmra.mrb[0].mxu0 %v4819
        %v5263 = vpop.f32.mrb[0].mxu0
        %v5264 = vadd.f32 %v5119, %v5263
        %v5265 = vpop.f32.mrb[0].mxu0
        %5266 = vmatprep.mubr.f32.mxu0 %v4829
        %5267 = vmatmul.mubr.f32.gmra.mrb[0].mxu0 %v4828
        %v5268 = vpop.f32.mrb[0].mxu0
        %v5269 = vadd.f32 %v5124, %v5268
        %v5270 = vpop.f32.mrb[0].mxu0
        %5271 = vmatprep.mubr.f32.mxu0 %v4838
        %5272 = vmatmul.mubr.f32.gmra.mrb[0].mxu0 %v4837
        %v5273 = vpop.f32.mrb[0].mxu0
        %v5274 = vadd.f32 %v5129, %v5273
        %v5275 = vpop.f32.mrb[0].mxu0
        %5276 = vdwg.mxu0
        %5277 = vmatprep.subr.mxu0 0.0
        %5278 = vmatpush1.msra.mxu0 %v273
        %5279 = vmatprep.subr.mxu0 0.0
        %5280 = vmatpush1.msra.mxu0 %v274
        %5281 = vmatprep.subr.mxu0 0.0
        %5282 = vmatpush1.msra.mxu0 %v275
        %5283 = vmatprep.subr.mxu0 0.0
        %5284 = vmatpush1.msra.mxu0 %v276
        %5285 = vmatprep.subr.mxu0 0.0
        %5286 = vmatpush1.msra.mxu0 %v277
        %5287 = vmatprep.subr.mxu0 0.0
        %5288 = vmatpush1.msra.mxu0 %v278
        %5289 = vmatprep.subr.mxu0 0.0
        %5290 = vmatpush1.msra.mxu0 %v279
        %5291 = vmatprep.subr.mxu0 0.0
        %5292 = vmatpush1.msra.mxu0 %v280
        %5293 = vmatprep.subr.mxu0 0.0
        %5294 = vmatpush1.msra.mxu0 %v281
        %5295 = vmatprep.subr.mxu0 0.0
        %5296 = vmatpush1.msra.mxu0 %v282
        %5297 = vmatprep.subr.mxu0 0.0
        %5298 = vmatpush1.msra.mxu0 %v283
        %5299 = vmatprep.subr.mxu0 0.0
        %5300 = vmatpush1.msra.mxu0 %v284
        %5301 = vmatprep.subr.mxu0 0.0
        %5302 = vmatpush1.msra.mxu0 %v285
        %5303 = vmatprep.subr.mxu0 0.0
        %5304 = vmatpush1.msra.mxu0 %v286
        %5305 = vmatprep.subr.mxu0 0.0
        %5306 = vmatpush1.msra.mxu0 %v287
        %5307 = vmatprep.subr.mxu0 0.0
        %5308 = vmatpush1.msra.mxu0 %v288
        %5309 = vmatprep.subr.mxu0 0.0
        %5310 = vmatpush1.msra.mxu0 %v289
        %5311 = vmatprep.subr.mxu0 0.0
        %5312 = vmatpush1.msra.mxu0 %v290
        %5313 = vmatprep.subr.mxu0 0.0
        %5314 = vmatpush1.msra.mxu0 %v291
        %5315 = vmatprep.subr.mxu0 0.0
        %5316 = vmatpush1.msra.mxu0 %v292
        %5317 = vmatprep.subr.mxu0 0.0
        %5318 = vmatpush1.msra.mxu0 %v293
        %5319 = vmatprep.subr.mxu0 0.0
        %5320 = vmatpush1.msra.mxu0 %v294
        %5321 = vmatprep.subr.mxu0 0.0
        %5322 = vmatpush1.msra.mxu0 %v295
        %5323 = vmatprep.subr.mxu0 0.0
        %5324 = vmatpush1.msra.mxu0 %v296
        %5325 = vmatprep.subr.mxu0 0.0
        %5326 = vmatpush1.msra.mxu0 %v297
        %5327 = vmatprep.subr.mxu0 0.0
        %5328 = vmatpush1.msra.mxu0 %v298
        %5329 = vmatprep.subr.mxu0 0.0
        %5330 = vmatpush1.msra.mxu0 %v299
        %5331 = vmatprep.subr.mxu0 0.0
        %5332 = vmatpush1.msra.mxu0 %v300
        %5333 = vmatprep.subr.mxu0 0.0
        %5334 = vmatpush1.msra.mxu0 %v301
        %5335 = vmatprep.subr.mxu0 0.0
        %5336 = vmatpush1.msra.mxu0 %v302
        %5337 = vmatprep.subr.mxu0 0.0
        %5338 = vmatpush1.msra.mxu0 %v303
        %5339 = vmatprep.subr.mxu0 0.0
        %5340 = vmatpush1.msra.mxu0 %v304
        %5341 = vmatprep.mubr.f32.mxu0 %v4705
        %5342 = vmatmul.mubr.f32.gmra.mrb[0].mxu0 %v4704
        %v5343 = vpop.f32.mrb[0].mxu0
        %v5344 = vadd.f32 %v5199, %v5343
        %v5345 = vpop.f32.mrb[0].mxu0
        %5346 = vmatprep.mubr.f32.mxu0 %v4714
        %5347 = vmatmul.mubr.f32.gmra.mrb[0].mxu0 %v4713
        %v5348 = vpop.f32.mrb[0].mxu0
        %v5349 = vadd.f32 %v5204, %v5348
        %v5350 = vpop.f32.mrb[0].mxu0
        %5351 = vmatprep.mubr.f32.mxu0 %v4723
        %5352 = vmatmul.mubr.f32.gmra.mrb[0].mxu0 %v4722
        %v5353 = vpop.f32.mrb[0].mxu0
        %v5354 = vadd.f32 %v5209, %v5353
        %v5355 = vpop.f32.mrb[0].mxu0
        %5356 = vmatprep.mubr.f32.mxu0 %v4732
        %5357 = vmatmul.mubr.f32.gmra.mrb[0].mxu0 %v4731
        %v5358 = vpop.f32.mrb[0].mxu0
        %v5359 = vadd.f32 %v5214, %v5358
        %v5360 = vpop.f32.mrb[0].mxu0
        %5361 = vmatprep.mubr.f32.mxu0 %v4741
        %5362 = vmatmul.mubr.f32.gmra.mrb[0].mxu0 %v4740
        %v5363 = vpop.f32.mrb[0].mxu0
        %v5364 = vadd.f32 %v5219, %v5363
        %v5365 = vpop.f32.mrb[0].mxu0
        %5366 = vmatprep.mubr.f32.mxu0 %v4750
        %5367 = vmatmul.mubr.f32.gmra.mrb[0].mxu0 %v4749
        %v5368 = vpop.f32.mrb[0].mxu0
        %v5369 = vadd.f32 %v5224, %v5368
        %v5370 = vpop.f32.mrb[0].mxu0
        %5371 = vmatprep.mubr.f32.mxu0 %v4759
        %5372 = vmatmul.mubr.f32.gmra.mrb[0].mxu0 %v4758
        %v5373 = vpop.f32.mrb[0].mxu0
        %v5374 = vadd.f32 %v5229, %v5373
        %v5375 = vpop.f32.mrb[0].mxu0
        %5376 = vmatprep.mubr.f32.mxu0 %v4768
        %5377 = vmatmul.mubr.f32.gmra.mrb[0].mxu0 %v4767
        %v5378 = vpop.f32.mrb[0].mxu0
        %v5379 = vadd.f32 %v5234, %v5378
        %v5380 = vpop.f32.mrb[0].mxu0
        %5381 = vmatprep.mubr.f32.mxu0 %v4777
        %5382 = vmatmul.mubr.f32.gmra.mrb[0].mxu0 %v4776
        %v5383 = vpop.f32.mrb[0].mxu0
        %v5384 = vadd.f32 %v5239, %v5383
        %v5385 = vpop.f32.mrb[0].mxu0
        %5386 = vmatprep.mubr.f32.mxu0 %v4786
        %5387 = vmatmul.mubr.f32.gmra.mrb[0].mxu0 %v4785
        %v5388 = vpop.f32.mrb[0].mxu0
        %v5389 = vadd.f32 %v5244, %v5388
        %v5390 = vpop.f32.mrb[0].mxu0
        %5391 = vmatprep.mubr.f32.mxu0 %v4795
        %5392 = vmatmul.mubr.f32.gmra.mrb[0].mxu0 %v4794
        %v5393 = vpop.f32.mrb[0].mxu0
        %v5394 = vadd.f32 %v5249, %v5393
        %v5395 = vpop.f32.mrb[0].mxu0
        %5396 = vmatprep.mubr.f32.mxu0 %v4804
        %5397 = vmatmul.mubr.f32.gmra.mrb[0].mxu0 %v4803
        %v5398 = vpop.f32.mrb[0].mxu0
        %v5399 = vadd.f32 %v5254, %v5398
        %v5400 = vpop.f32.mrb[0].mxu0
        %5401 = vmatprep.mubr.f32.mxu0 %v4813
        %5402 = vmatmul.mubr.f32.gmra.mrb[0].mxu0 %v4812
        %v5403 = vpop.f32.mrb[0].mxu0
        %v5404 = vadd.f32 %v5259, %v5403
        %v5405 = vpop.f32.mrb[0].mxu0
        %5406 = vmatprep.mubr.f32.mxu0 %v4822
        %5407 = vmatmul.mubr.f32.gmra.mrb[0].mxu0 %v4821
        %v5408 = vpop.f32.mrb[0].mxu0
        %v5409 = vadd.f32 %v5264, %v5408
        %v5410 = vpop.f32.mrb[0].mxu0
        %5411 = vmatprep.mubr.f32.mxu0 %v4831
        %5412 = vmatmul.mubr.f32.gmra.mrb[0].mxu0 %v4830
        %v5413 = vpop.f32.mrb[0].mxu0
        %v5414 = vadd.f32 %v5269, %v5413
        %v5415 = vpop.f32.mrb[0].mxu0
        %5416 = vmatprep.mubr.f32.mxu0 %v4840
        %5417 = vmatmul.mubr.f32.gmra.mrb[0].mxu0 %v4839
        %v5418 = vpop.f32.mrb[0].mxu0
        %v5419 = vadd.f32 %v5274, %v5418
        %v5420 = vpop.f32.mrb[0].mxu0
        %5421 = vdwg.mxu0
        %5422 = vmatprep.subr.mxu0 0.0
        %5423 = vmatpush1.msra.mxu0 %v305
        %5424 = vmatprep.subr.mxu0 0.0
        %5425 = vmatpush1.msra.mxu0 %v306
        %5426 = vmatprep.subr.mxu0 0.0
        %5427 = vmatpush1.msra.mxu0 %v307
        %5428 = vmatprep.subr.mxu0 0.0
        %5429 = vmatpush1.msra.mxu0 %v308
        %5430 = vmatprep.subr.mxu0 0.0
        %5431 = vmatpush1.msra.mxu0 %v309
        %5432 = vmatprep.subr.mxu0 0.0
        %5433 = vmatpush1.msra.mxu0 %v310
        %5434 = vmatprep.subr.mxu0 0.0
        %5435 = vmatpush1.msra.mxu0 %v311
        %5436 = vmatprep.subr.mxu0 0.0
        %5437 = vmatpush1.msra.mxu0 %v312
        %5438 = vmatprep.subr.mxu0 0.0
        %5439 = vmatpush1.msra.mxu0 %v313
        %5440 = vmatprep.subr.mxu0 0.0
        %5441 = vmatpush1.msra.mxu0 %v314
        %5442 = vmatprep.subr.mxu0 0.0
        %5443 = vmatpush1.msra.mxu0 %v315
        %5444 = vmatprep.subr.mxu0 0.0
        %5445 = vmatpush1.msra.mxu0 %v316
        %5446 = vmatprep.subr.mxu0 0.0
        %5447 = vmatpush1.msra.mxu0 %v317
        %5448 = vmatprep.subr.mxu0 0.0
        %5449 = vmatpush1.msra.mxu0 %v318
        %5450 = vmatprep.subr.mxu0 0.0
        %5451 = vmatpush1.msra.mxu0 %v319
        %5452 = vmatprep.subr.mxu0 0.0
        %5453 = vmatpush1.msra.mxu0 %v320
        %5454 = vmatprep.subr.mxu0 0.0
        %5455 = vmatpush1.msra.mxu0 0.0
        %5456 = vmatprep.subr.mxu0 0.0
        %5457 = vmatpush1.msra.mxu0 0.0
        %5458 = vmatprep.subr.mxu0 0.0
        %5459 = vmatpush1.msra.mxu0 0.0
        %5460 = vmatprep.subr.mxu0 0.0
        %5461 = vmatpush1.msra.mxu0 0.0
        %5462 = vmatprep.subr.mxu0 0.0
        %5463 = vmatpush1.msra.mxu0 0.0
        %5464 = vmatprep.subr.mxu0 0.0
        %5465 = vmatpush1.msra.mxu0 0.0
        %5466 = vmatprep.subr.mxu0 0.0
        %5467 = vmatpush1.msra.mxu0 0.0
        %5468 = vmatprep.subr.mxu0 0.0
        %5469 = vmatpush1.msra.mxu0 0.0
        %5470 = vmatprep.subr.mxu0 0.0
        %5471 = vmatpush1.msra.mxu0 0.0
        %5472 = vmatprep.subr.mxu0 0.0
        %5473 = vmatpush1.msra.mxu0 0.0
        %5474 = vmatprep.subr.mxu0 0.0
        %5475 = vmatpush1.msra.mxu0 0.0
        %5476 = vmatprep.subr.mxu0 0.0
        %5477 = vmatpush1.msra.mxu0 0.0
        %5478 = vmatprep.subr.mxu0 0.0
        %5479 = vmatpush1.msra.mxu0 0.0
        %5480 = vmatprep.subr.mxu0 0.0
        %5481 = vmatpush1.msra.mxu0 0.0
        %5482 = vmatprep.subr.mxu0 0.0
        %5483 = vmatpush1.msra.mxu0 0.0
        %5484 = vmatprep.subr.mxu0 0.0
        %5485 = vmatpush1.msra.mxu0 0.0
        %5486 = vmatprep.mubr.f32.mxu0 0.0
        %5487 = vmatmul.mubr.f32.gmra.mrb[0].mxu0 %v4706
        %v5488 = vpop.f32.mrb[0].mxu0
        %v5489 = vadd.f32 %v5344, %v5488
        %v5490 = vpop.f32.mrb[0].mxu0
        %5491 = vmatprep.mubr.f32.mxu0 0.0
        %5492 = vmatmul.mubr.f32.gmra.mrb[0].mxu0 %v4715
        %v5493 = vpop.f32.mrb[0].mxu0
        %v5494 = vadd.f32 %v5349, %v5493
        %v5495 = vpop.f32.mrb[0].mxu0
        %5496 = vmatprep.mubr.f32.mxu0 0.0
        %5497 = vmatmul.mubr.f32.gmra.mrb[0].mxu0 %v4724
        %v5498 = vpop.f32.mrb[0].mxu0
        %v5499 = vadd.f32 %v5354, %v5498
        %v5500 = vpop.f32.mrb[0].mxu0
        %5501 = vmatprep.mubr.f32.mxu0 0.0
        %5502 = vmatmul.mubr.f32.gmra.mrb[0].mxu0 %v4733
        %v5503 = vpop.f32.mrb[0].mxu0
        %v5504 = vadd.f32 %v5359, %v5503
        %v5505 = vpop.f32.mrb[0].mxu0
        %5506 = vmatprep.mubr.f32.mxu0 0.0
        %5507 = vmatmul.mubr.f32.gmra.mrb[0].mxu0 %v4742
        %v5508 = vpop.f32.mrb[0].mxu0
        %v5509 = vadd.f32 %v5364, %v5508
        %v5510 = vpop.f32.mrb[0].mxu0
        %5511 = vmatprep.mubr.f32.mxu0 0.0
        %5512 = vmatmul.mubr.f32.gmra.mrb[0].mxu0 %v4751
        %v5513 = vpop.f32.mrb[0].mxu0
        %v5514 = vadd.f32 %v5369, %v5513
        %v5515 = vpop.f32.mrb[0].mxu0
        %5516 = vmatprep.mubr.f32.mxu0 0.0
        %5517 = vmatmul.mubr.f32.gmra.mrb[0].mxu0 %v4760
        %v5518 = vpop.f32.mrb[0].mxu0
        %v5519 = vadd.f32 %v5374, %v5518
        %v5520 = vpop.f32.mrb[0].mxu0
        %5521 = vmatprep.mubr.f32.mxu0 0.0
        %5522 = vmatmul.mubr.f32.gmra.mrb[0].mxu0 %v4769
        %v5523 = vpop.f32.mrb[0].mxu0
        %v5524 = vadd.f32 %v5379, %v5523
        %v5525 = vpop.f32.mrb[0].mxu0
        %5526 = vmatprep.mubr.f32.mxu0 0.0
        %5527 = vmatmul.mubr.f32.gmra.mrb[0].mxu0 %v4778
        %v5528 = vpop.f32.mrb[0].mxu0
        %v5529 = vadd.f32 %v5384, %v5528
        %v5530 = vpop.f32.mrb[0].mxu0
        %5531 = vmatprep.mubr.f32.mxu0 0.0
        %5532 = vmatmul.mubr.f32.gmra.mrb[0].mxu0 %v4787
        %v5533 = vpop.f32.mrb[0].mxu0
        %v5534 = vadd.f32 %v5389, %v5533
        %v5535 = vpop.f32.mrb[0].mxu0
        %5536 = vmatprep.mubr.f32.mxu0 0.0
        %5537 = vmatmul.mubr.f32.gmra.mrb[0].mxu0 %v4796
        %v5538 = vpop.f32.mrb[0].mxu0
        %v5539 = vadd.f32 %v5394, %v5538
        %v5540 = vpop.f32.mrb[0].mxu0
        %5541 = vmatprep.mubr.f32.mxu0 0.0
        %5542 = vmatmul.mubr.f32.gmra.mrb[0].mxu0 %v4805
        %v5543 = vpop.f32.mrb[0].mxu0
        %v5544 = vadd.f32 %v5399, %v5543
        %v5545 = vpop.f32.mrb[0].mxu0
        %5546 = vmatprep.mubr.f32.mxu0 0.0
        %5547 = vmatmul.mubr.f32.gmra.mrb[0].mxu0 %v4814
        %v5548 = vpop.f32.mrb[0].mxu0
        %v5549 = vadd.f32 %v5404, %v5548
        %v5550 = vpop.f32.mrb[0].mxu0
        %5551 = vmatprep.mubr.f32.mxu0 0.0
        %5552 = vmatmul.mubr.f32.gmra.mrb[0].mxu0 %v4823
        %v5553 = vpop.f32.mrb[0].mxu0
        %v5554 = vadd.f32 %v5409, %v5553
        %v5555 = vpop.f32.mrb[0].mxu0
        %5556 = vmatprep.mubr.f32.mxu0 0.0
        %5557 = vmatmul.mubr.f32.gmra.mrb[0].mxu0 %v4832
        %v5558 = vpop.f32.mrb[0].mxu0
        %v5559 = vadd.f32 %v5414, %v5558
        %v5560 = vpop.f32.mrb[0].mxu0
        %5561 = vmatprep.mubr.f32.mxu0 0.0
        %5562 = vmatmul.mubr.f32.gmra.mrb[0].mxu0 %v4841
        %v5563 = vpop.f32.mrb[0].mxu0
        %v5564 = vadd.f32 %v5419, %v5563
        %v5565 = vpop.f32.mrb[0].mxu0
        %5566 = vdwg.mxu0
        %5567 = vst [vmem:[#allocation4 + $0x80] sm:$0xff] %v5489
        %5568 = vst [vmem:[#allocation4 + $0x88] sm:$0xff] %v5494
        %5569 = vst [vmem:[#allocation4 + $0x90] sm:$0xff] %v5499
        %5570 = vst [vmem:[#allocation4 + $0x98] sm:$0xff] %v5504
        %5571 = vst [vmem:[#allocation4 + $0xa0] sm:$0xff] %v5509
        %5572 = vst [vmem:[#allocation4 + $0xa8] sm:$0xff] %v5514
        %5573 = vst [vmem:[#allocation4 + $0xb0] sm:$0xff] %v5519
        %5574 = vst [vmem:[#allocation4 + $0xb8] sm:$0xff] %v5524
        %5575 = vst [vmem:[#allocation4 + $0xc0] sm:$0xff] %v5529
        %5576 = vst [vmem:[#allocation4 + $0xc8] sm:$0xff] %v5534
        %5577 = vst [vmem:[#allocation4 + $0xd0] sm:$0xff] %v5539
        %5578 = vst [vmem:[#allocation4 + $0xd8] sm:$0xff] %v5544
        %5579 = vst [vmem:[#allocation4 + $0xe0] sm:$0xff] %v5549
        %5580 = vst [vmem:[#allocation4 + $0xe8] sm:$0xff] %v5554
        %5581 = vst [vmem:[#allocation4 + $0xf0] sm:$0xff] %v5559
        %5582 = vst [vmem:[#allocation4 + $0xf8] sm:$0xff] %v5564
        %v5583 = vadd.f32 %v5489, %v5494
        %v5584 = vadd.f32 %v5583, %v5499
        %v5585 = vadd.f32 %v5584, %v5504
        %v5586 = vadd.f32 %v5585, %v5509
        %v5587 = vadd.f32 %v5586, %v5514
        %v5588 = vadd.f32 %v5587, %v5519
        %v5589 = vadd.f32 %v5588, %v5524
        %v5590 = vadd.f32 %v5589, %v5529
        %v5591 = vadd.f32 %v5590, %v5534
        %v5592 = vadd.f32 %v5591, %v5539
        %v5593 = vadd.f32 %v5592, %v5544
        %v5594 = vadd.f32 %v5593, %v5549
        %v5595 = vadd.f32 %v5594, %v5554
        %v5596 = vadd.f32 %v5595, %v5559
        %v5597 = vadd.f32 %v5596, %v5564
        %v5598 = vrot.slane %v5597, 4
        %v5599 = vadd.f32 %v5597, %v5598
        %v5600 = vrot.slane %v5599, 2
        %v5601 = vadd.f32 %v5599, %v5600
        %v5602 = vrot.slane %v5601, 1
        %v5603 = vadd.f32 %v5601, %v5602
        %v5604 = vadd.f32 %v4371, %v5603
        %v5605 = vmul.f32 %v5489, %v5489
        %v5606 = vmul.f32 %v5494, %v5494
        %v5607 = vmul.f32 %v5499, %v5499
        %v5608 = vmul.f32 %v5504, %v5504
        %v5609 = vmul.f32 %v5509, %v5509
        %v5610 = vmul.f32 %v5514, %v5514
        %v5611 = vmul.f32 %v5519, %v5519
        %v5612 = vmul.f32 %v5524, %v5524
        %v5613 = vmul.f32 %v5529, %v5529
        %v5614 = vmul.f32 %v5534, %v5534
        %v5615 = vmul.f32 %v5539, %v5539
        %v5616 = vmul.f32 %v5544, %v5544
        %v5617 = vmul.f32 %v5549, %v5549
        %v5618 = vmul.f32 %v5554, %v5554
        %v5619 = vmul.f32 %v5559, %v5559
        %v5620 = vmul.f32 %v5564, %v5564
        %v5621 = vadd.f32 %v5605, %v5606
        %v5622 = vadd.f32 %v5621, %v5607
        %v5623 = vadd.f32 %v5622, %v5608
        %v5624 = vadd.f32 %v5623, %v5609
        %v5625 = vadd.f32 %v5624, %v5610
        %v5626 = vadd.f32 %v5625, %v5611
        %v5627 = vadd.f32 %v5626, %v5612
        %v5628 = vadd.f32 %v5627, %v5613
        %v5629 = vadd.f32 %v5628, %v5614
        %v5630 = vadd.f32 %v5629, %v5615
        %v5631 = vadd.f32 %v5630, %v5616
        %v5632 = vadd.f32 %v5631, %v5617
        %v5633 = vadd.f32 %v5632, %v5618
        %v5634 = vadd.f32 %v5633, %v5619
        %v5635 = vadd.f32 %v5634, %v5620
        %v5636 = vrot.slane %v5635, 4
        %v5637 = vadd.f32 %v5635, %v5636
        %v5638 = vrot.slane %v5637, 2
        %v5639 = vadd.f32 %v5637, %v5638
        %v5640 = vrot.slane %v5639, 1
        %v5641 = vadd.f32 %v5639, %v5640
        %v5642 = vadd.f32 %v4409, %v5641
        %v5643 = vmul.f32 %v5604, 0.00390625
        %v5644 = vmul.f32 %v5642, 0.00390625
        %v5645 = vmul.f32 %v5643, %v5643
        %v5646 = vsub.f32 %v5644, %v5645
        %v5647 = vmax.f32 %v5646, 0.0
        %v5648 = vadd.f32 %v5647, 1e-05
        %v5649 = vrsqrt.pop %v5648
        %v5650 = vld [vmem:[%s152] sm:$0xff]
        %v5651 = vld [vmem:[%s152 + $0x8] sm:$0xff]
        %v5652 = vld [vmem:[%s152 + $0x10] sm:$0xff]
        %v5653 = vld [vmem:[%s152 + $0x18] sm:$0xff]
        %v5654 = vld [vmem:[%s152 + $0x20] sm:$0xff]
        %v5655 = vld [vmem:[%s152 + $0x28] sm:$0xff]
        %v5656 = vld [vmem:[%s152 + $0x30] sm:$0xff]
        %v5657 = vld [vmem:[%s152 + $0x38] sm:$0xff]
        %v5658 = vld [vmem:[%s152 + $0x40] sm:$0xff]
        %v5659 = vld [vmem:[%s152 + $0x48] sm:$0xff]
        %v5660 = vld [vmem:[%s152 + $0x50] sm:$0xff]
        %v5661 = vld [vmem:[%s152 + $0x58] sm:$0xff]
        %v5662 = vld [vmem:[%s152 + $0x60] sm:$0xff]
        %v5663 = vld [vmem:[%s152 + $0x68] sm:$0xff]
        %v5664 = vld [vmem:[%s152 + $0x70] sm:$0xff]
        %v5665 = vld [vmem:[%s152 + $0x78] sm:$0xff]
        %v5666 = vld [vmem:[%s152 + $0x80] sm:$0xff]
        %v5667 = vld [vmem:[%s152 + $0x88] sm:$0xff]
        %v5668 = vld [vmem:[%s152 + $0x90] sm:$0xff]
        %v5669 = vld [vmem:[%s152 + $0x98] sm:$0xff]
        %v5670 = vld [vmem:[%s152 + $0xa0] sm:$0xff]
        %v5671 = vld [vmem:[%s152 + $0xa8] sm:$0xff]
        %v5672 = vld [vmem:[%s152 + $0xb0] sm:$0xff]
        %v5673 = vld [vmem:[%s152 + $0xb8] sm:$0xff]
        %v5674 = vld [vmem:[%s152 + $0xc0] sm:$0xff]
        %v5675 = vld [vmem:[%s152 + $0xc8] sm:$0xff]
        %v5676 = vld [vmem:[%s152 + $0xd0] sm:$0xff]
        %v5677 = vld [vmem:[%s152 + $0xd8] sm:$0xff]
        %v5678 = vld [vmem:[%s152 + $0xe0] sm:$0xff]
        %v5679 = vld [vmem:[%s152 + $0xe8] sm:$0xff]
        %v5680 = vld [vmem:[%s152 + $0xf0] sm:$0xff]
        %v5681 = vld [vmem:[%s152 + $0xf8] sm:$0xff]
        %v5682 = vld [vmem:[#allocation4] sm:$0xff]
        %v5683 = vld [vmem:[#allocation4 + $0x8] sm:$0xff]
        %v5684 = vld [vmem:[#allocation4 + $0x10] sm:$0xff]
        %v5685 = vld [vmem:[#allocation4 + $0x18] sm:$0xff]
        %v5686 = vld [vmem:[#allocation4 + $0x20] sm:$0xff]
        %v5687 = vld [vmem:[#allocation4 + $0x28] sm:$0xff]
        %v5688 = vld [vmem:[#allocation4 + $0x30] sm:$0xff]
        %v5689 = vld [vmem:[#allocation4 + $0x38] sm:$0xff]
        %v5690 = vld [vmem:[#allocation4 + $0x40] sm:$0xff]
        %v5691 = vld [vmem:[#allocation4 + $0x48] sm:$0xff]
        %v5692 = vld [vmem:[#allocation4 + $0x50] sm:$0xff]
        %v5693 = vld [vmem:[#allocation4 + $0x58] sm:$0xff]
        %v5694 = vld [vmem:[#allocation4 + $0x60] sm:$0xff]
        %v5695 = vld [vmem:[#allocation4 + $0x68] sm:$0xff]
        %v5696 = vld [vmem:[#allocation4 + $0x70] sm:$0xff]
        %v5697 = vld [vmem:[#allocation4 + $0x78] sm:$0xff]
        %v5698 = vld [vmem:[#allocation4 + $0x80] sm:$0xff]
        %v5699 = vld [vmem:[#allocation4 + $0x88] sm:$0xff]
        %v5700 = vld [vmem:[#allocation4 + $0x90] sm:$0xff]
        %v5701 = vld [vmem:[#allocation4 + $0x98] sm:$0xff]
        %v5702 = vld [vmem:[#allocation4 + $0xa0] sm:$0xff]
        %v5703 = vld [vmem:[#allocation4 + $0xa8] sm:$0xff]
        %v5704 = vld [vmem:[#allocation4 + $0xb0] sm:$0xff]
        %v5705 = vld [vmem:[#allocation4 + $0xb8] sm:$0xff]
        %v5706 = vld [vmem:[#allocation4 + $0xc0] sm:$0xff]
        %v5707 = vld [vmem:[#allocation4 + $0xc8] sm:$0xff]
        %v5708 = vld [vmem:[#allocation4 + $0xd0] sm:$0xff]
        %v5709 = vld [vmem:[#allocation4 + $0xd8] sm:$0xff]
        %v5710 = vld [vmem:[#allocation4 + $0xe0] sm:$0xff]
        %v5711 = vld [vmem:[#allocation4 + $0xe8] sm:$0xff]
        %v5712 = vld [vmem:[#allocation4 + $0xf0] sm:$0xff]
        %v5713 = vld [vmem:[#allocation4 + $0xf8] sm:$0xff]
        %v5714 = vsub.f32 %v5682, %v5643
        %v5715 = vsub.f32 %v5683, %v5643
        %v5716 = vsub.f32 %v5684, %v5643
        %v5717 = vsub.f32 %v5685, %v5643
        %v5718 = vsub.f32 %v5686, %v5643
        %v5719 = vsub.f32 %v5687, %v5643
        %v5720 = vsub.f32 %v5688, %v5643
        %v5721 = vsub.f32 %v5689, %v5643
        %v5722 = vsub.f32 %v5690, %v5643
        %v5723 = vsub.f32 %v5691, %v5643
        %v5724 = vsub.f32 %v5692, %v5643
        %v5725 = vsub.f32 %v5693, %v5643
        %v5726 = vsub.f32 %v5694, %v5643
        %v5727 = vsub.f32 %v5695, %v5643
        %v5728 = vsub.f32 %v5696, %v5643
        %v5729 = vsub.f32 %v5697, %v5643
        %v5730 = vsub.f32 %v5698, %v5643
        %v5731 = vsub.f32 %v5699, %v5643
        %v5732 = vsub.f32 %v5700, %v5643
        %v5733 = vsub.f32 %v5701, %v5643
        %v5734 = vsub.f32 %v5702, %v5643
        %v5735 = vsub.f32 %v5703, %v5643
        %v5736 = vsub.f32 %v5704, %v5643
        %v5737 = vsub.f32 %v5705, %v5643
        %v5738 = vsub.f32 %v5706, %v5643
        %v5739 = vsub.f32 %v5707, %v5643
        %v5740 = vsub.f32 %v5708, %v5643
        %v5741 = vsub.f32 %v5709, %v5643
        %v5742 = vsub.f32 %v5710, %v5643
        %v5743 = vsub.f32 %v5711, %v5643
        %v5744 = vsub.f32 %v5712, %v5643
        %v5745 = vsub.f32 %v5713, %v5643
        %v5746 = vmul.f32 %v5714, %v5649
        %v5747 = vmul.f32 %v5715, %v5649
        %v5748 = vmul.f32 %v5716, %v5649
        %v5749 = vmul.f32 %v5717, %v5649
        %v5750 = vmul.f32 %v5718, %v5649
        %v5751 = vmul.f32 %v5719, %v5649
        %v5752 = vmul.f32 %v5720, %v5649
        %v5753 = vmul.f32 %v5721, %v5649
        %v5754 = vmul.f32 %v5722, %v5649
        %v5755 = vmul.f32 %v5723, %v5649
        %v5756 = vmul.f32 %v5724, %v5649
        %v5757 = vmul.f32 %v5725, %v5649
        %v5758 = vmul.f32 %v5726, %v5649
        %v5759 = vmul.f32 %v5727, %v5649
        %v5760 = vmul.f32 %v5728, %v5649
        %v5761 = vmul.f32 %v5729, %v5649
        %v5762 = vmul.f32 %v5730, %v5649
        %v5763 = vmul.f32 %v5731, %v5649
        %v5764 = vmul.f32 %v5732, %v5649
        %v5765 = vmul.f32 %v5733, %v5649
        %v5766 = vmul.f32 %v5734, %v5649
        %v5767 = vmul.f32 %v5735, %v5649
        %v5768 = vmul.f32 %v5736, %v5649
        %v5769 = vmul.f32 %v5737, %v5649
        %v5770 = vmul.f32 %v5738, %v5649
        %v5771 = vmul.f32 %v5739, %v5649
        %v5772 = vmul.f32 %v5740, %v5649
        %v5773 = vmul.f32 %v5741, %v5649
        %v5774 = vmul.f32 %v5742, %v5649
        %v5775 = vmul.f32 %v5743, %v5649
        %v5776 = vmul.f32 %v5744, %v5649
        %v5777 = vmul.f32 %v5745, %v5649
        %v5778 = vadd.f32 %v5650, %v5746
        %v5779 = vadd.f32 %v5651, %v5747
        %v5780 = vadd.f32 %v5652, %v5748
        %v5781 = vadd.f32 %v5653, %v5749
        %v5782 = vadd.f32 %v5654, %v5750
        %v5783 = vadd.f32 %v5655, %v5751
        %v5784 = vadd.f32 %v5656, %v5752
        %v5785 = vadd.f32 %v5657, %v5753
        %v5786 = vadd.f32 %v5658, %v5754
        %v5787 = vadd.f32 %v5659, %v5755
        %v5788 = vadd.f32 %v5660, %v5756
        %v5789 = vadd.f32 %v5661, %v5757
        %v5790 = vadd.f32 %v5662, %v5758
        %v5791 = vadd.f32 %v5663, %v5759
        %v5792 = vadd.f32 %v5664, %v5760
        %v5793 = vadd.f32 %v5665, %v5761
        %v5794 = vadd.f32 %v5666, %v5762
        %v5795 = vadd.f32 %v5667, %v5763
        %v5796 = vadd.f32 %v5668, %v5764
        %v5797 = vadd.f32 %v5669, %v5765
        %v5798 = vadd.f32 %v5670, %v5766
        %v5799 = vadd.f32 %v5671, %v5767
        %v5800 = vadd.f32 %v5672, %v5768
        %v5801 = vadd.f32 %v5673, %v5769
        %v5802 = vadd.f32 %v5674, %v5770
        %v5803 = vadd.f32 %v5675, %v5771
        %v5804 = vadd.f32 %v5676, %v5772
        %v5805 = vadd.f32 %v5677, %v5773
        %v5806 = vadd.f32 %v5678, %v5774
        %v5807 = vadd.f32 %v5679, %v5775
        %v5808 = vadd.f32 %v5680, %v5776
        %v5809 = vadd.f32 %v5681, %v5777
        %5810 = vst [vmem:[%s176] sm:$0xff] %v5778
        %5811 = vst [vmem:[%s176 + $0x8] sm:$0xff] %v5779
        %5812 = vst [vmem:[%s176 + $0x10] sm:$0xff] %v5780
        %5813 = vst [vmem:[%s176 + $0x18] sm:$0xff] %v5781
        %5814 = vst [vmem:[%s176 + $0x20] sm:$0xff] %v5782
        %5815 = vst [vmem:[%s176 + $0x28] sm:$0xff] %v5783
        %5816 = vst [vmem:[%s176 + $0x30] sm:$0xff] %v5784
        %5817 = vst [vmem:[%s176 + $0x38] sm:$0xff] %v5785
        %5818 = vst [vmem:[%s176 + $0x40] sm:$0xff] %v5786
        %5819 = vst [vmem:[%s176 + $0x48] sm:$0xff] %v5787
        %5820 = vst [vmem:[%s176 + $0x50] sm:$0xff] %v5788
        %5821 = vst [vmem:[%s176 + $0x58] sm:$0xff] %v5789
        %5822 = vst [vmem:[%s176 + $0x60] sm:$0xff] %v5790
        %5823 = vst [vmem:[%s176 + $0x68] sm:$0xff] %v5791
        %5824 = vst [vmem:[%s176 + $0x70] sm:$0xff] %v5792
        %5825 = vst [vmem:[%s176 + $0x78] sm:$0xff] %v5793
        %5826 = vst [vmem:[%s176 + $0x80] sm:$0xff] %v5794
        %5827 = vst [vmem:[%s176 + $0x88] sm:$0xff] %v5795
        %5828 = vst [vmem:[%s176 + $0x90] sm:$0xff] %v5796
        %5829 = vst [vmem:[%s176 + $0x98] sm:$0xff] %v5797
        %5830 = vst [vmem:[%s176 + $0xa0] sm:$0xff] %v5798
        %5831 = vst [vmem:[%s176 + $0xa8] sm:$0xff] %v5799
        %5832 = vst [vmem:[%s176 + $0xb0] sm:$0xff] %v5800
        %5833 = vst [vmem:[%s176 + $0xb8] sm:$0xff] %v5801
        %5834 = vst [vmem:[%s176 + $0xc0] sm:$0xff] %v5802
        %5835 = vst [vmem:[%s176 + $0xc8] sm:$0xff] %v5803
        %5836 = vst [vmem:[%s176 + $0xd0] sm:$0xff] %v5804
        %5837 = vst [vmem:[%s176 + $0xd8] sm:$0xff] %v5805
        %5838 = vst [vmem:[%s176 + $0xe0] sm:$0xff] %v5806
        %5839 = vst [vmem:[%s176 + $0xe8] sm:$0xff] %v5807
        %5840 = vst [vmem:[%s176 + $0xf0] sm:$0xff] %v5808
        %5841 = vst [vmem:[%s176 + $0xf8] sm:$0xff] %v5809
        %s5842 = sand.u32 %s75, 1
        %s5843 = scalar_lea.sflag [#allocation7], %s5842
        %s5844 = sand.u32 %s75, 1
        %s5845 = smul.addr %s5844, 256
        %s5846 = scalar_lea.vmem [#allocation10], %s5845
        // Predicated region
        $region37: #{tpu_custom_call.1} parent=27 // pred_check
          %p5847 = pneg %p85
        $region38: #{tpu_custom_call.1} parent=27 // pred_check_branch
          %5849 = sbr.rel (%p5847) target = $region40
        $region39: #{tpu_custom_call.1} parent=27 // pred_region
          %s5851 = ssub.s32 4096, 4096
          %5852 = vsyncadd %s5843, %s5851
          %s5853 = smul.addr %s20, 32
          %s5854 = smul.addr %s5853, 128
          %s5855 = scalar_lea.hbm %s2, %s5854
          %s5856 = sshll.u32 %s5846, 4
          %s5857 = int_to_ptr.vmem [resolvable:$true] %s5856
          %5862 = dma.vmem_to_hbm [thread:$0]  %s5857, 4096, %s5855, %s5843, 128, 128, 8
        $region40: #{tpu_custom_call.1} parent=27 // pred_fallthru
          _
      $region28: #{tpu_custom_call.1} parent=5 // pred_fallthru
        _
      %p5863 = scmp.le.s32.totalorder 2, %s15
      // Predicated region
      $region41: #{tpu_custom_call.1} parent=5 // pred_check
        %p5864 = pneg %p5863
      $region42: #{tpu_custom_call.1} parent=5 // pred_check_branch
        %5866 = sbr.rel (%p5864) target = $region44
      $region43: #{tpu_custom_call.1} parent=5 // pred_region
        %s5867 = ssub.s32 %s15, 2
        // Predicated region
        $region45: #{tpu_custom_call.1} parent=43 // pred_check
          %p5868 = pneg %p91
        $region46: #{tpu_custom_call.1} parent=43 // pred_check_branch
          %5870 = sbr.rel (%p5868) target = $region48
        $region47: #{tpu_custom_call.1} parent=43 // pred_region
          %s5871 = sand.u32 %s76, 1
          %s5872 = scalar_lea.sflag [#allocation7], %s5871
          %s5873 = sand.u32 %s76, 1
          %s5874 = smul.addr %s5873, 256
          %s5875 = scalar_lea.vmem [#allocation10], %s5874
          %5876 = dma.done %s5872, 4096
        $region48: #{tpu_custom_call.1} parent=43 // pred_fallthru
          _
      $region44: #{tpu_custom_call.1} parent=5 // pred_fallthru
        _
    $region6: #{tpu_custom_call.1} parent=1 // loop_footer
      %s19 = sadd.s32 1, %s15
    $region7: #{tpu_custom_call.1} parent=1 // loop_footer_branch
      %14 = sbr.rel target = $region3
    $region8: #{tpu_custom_call.1} parent=1 // loop_exit
      _
    %5877 = vsyncpa [#allocation6], 1
    %s5878 = scalar_lea.sflag [#allocation6], 1
    %5879 = vsyncpa %s5878, 1
    %5880 = vsyncpa [#allocation9], 1
    %5881 = vsyncpa [#allocation7], 1
    %s5882 = scalar_lea.sflag [#allocation7], 1
    %5883 = vsyncpa %s5882, 1

</llo_original>
